<compile_context>
chip_gen: v7x
topology: tpu7x:2x2x1
jax: 0.10.0
libtpu: 0.0.40
codegen_flags: <defaults>
</compile_context>

<pallas_src>
import functools

import numpy as np
import jax
import jax.numpy as jnp
from jax import lax
from jax.experimental import pallas as pl
from jax.experimental.pallas import tpu as pltpu


# --------------------------------------------------------------------------
# Fused kernel: MaskPhasesToPSFs + Croplayer + BlurLayer (+ Normalize01)
# One grid step == one batch sample; static in-kernel loop over E emitters.
# --------------------------------------------------------------------------
def _fused_psf_kernel(cm_ref, sm_ref, per_ref, pei_ref, nph_ref,
                      ar_ref, ai_ref, as_ref, btr_ref, bti_ref, bts_ref,
                      grow_ref, gcol_ref, out_ref, *, E, Wc, norm_flag):
    f32, bf16 = jnp.float32, jnp.bfloat16
    b = pl.program_id(0)

    # shared, grid-invariant operands (loaded once per step)
    cm = cm_ref[...]                                  # cos(mask)  (Hm, Wm) f32
    sm = sm_ref[...]                                  # sin(mask)
    Ar, Ai, As = ar_ref[...], ai_ref[...], as_ref[...]        # row DFT (Hm, Hm) bf16
    Btr, Bti, Bts = btr_ref[...], bti_ref[...], bts_ref[...]  # col DFT (Wm, Wm) bf16
    Grow, Gcol = grow_ref[...], gcol_ref[...]                  # (Hc,Hm), (Wm,Wc_pad)

    Hc_k, Wc_pad = out_ref.shape[1], out_ref.shape[2]
    padded = Wc_pad > Wc
    lane_idx = (lax.broadcasted_iota(jnp.int32, (Hc_k, Wc_pad), 1)
                if (norm_flag and padded) else None)

    mn = mx = None
    for e in range(E):                                # static unroll, E is small
        # ---- MaskPhasesToPSFs: exp(i*mask) * phase_emitter (per emitter) ----
        pr = per_ref[e].astype(f32)                   # (Hm, Wm)
        pim = pei_ref[e].astype(f32)
        ur = cm * pr - sm * pim
        ui = cm * pim + sm * pr

        # ---- centered 2D DFT:  (Ar+iAi) @ U @ (Btr+iBti), fftshift baked in.
        #      Karatsuba 3-mult complex products, bf16 MXU inputs, f32 acc. ----
        ub_r, ub_i, ub_s = ur.astype(bf16), ui.astype(bf16), (ur + ui).astype(bf16)
        t1 = jnp.dot(Ar, ub_r, preferred_element_type=f32)
        t2 = jnp.dot(Ai, ub_i, preferred_element_type=f32)
        t3 = jnp.dot(As, ub_s, preferred_element_type=f32)
        tr, ti = t1 - t2, t3 - t1 - t2                # row-DFT real / imag

        tb_r, tb_i, tb_s = tr.astype(bf16), ti.astype(bf16), (tr + ti).astype(bf16)
        s1 = jnp.dot(tb_r, Btr, preferred_element_type=f32)
        s2 = jnp.dot(tb_i, Bti, preferred_element_type=f32)
        s3 = jnp.dot(tb_s, Bts, preferred_element_type=f32)
        fr, fi = s1 - s2, s3 - s1 - s2                # 2D-DFT real / imag

        inten = fr * fr + fi * fi                     # |FFT|^2, (Hm, Wm) f32
        tot = jnp.sum(inten, keepdims=True)           # (1,1) f32 energy (stays f32)

        # ---- Croplayer + BlurLayer as two banded MXU matmuls -----------------
        tmp = jnp.dot(Grow, inten.astype(bf16), preferred_element_type=f32)       # (Hc, Wm)
        img = jnp.dot(tmp.astype(bf16), Gcol, preferred_element_type=f32)         # (Hc, Wc_pad)

        # per-emitter photon normalization (blur/crop are linear -> scale after)
        img = img * (nph_ref[b, e] / tot)

        out_ref[e] = img                              # lane-dense (Hc, Wc_pad) store

        if norm_flag:
            # padding lanes of img are exact zeros (zero columns in Gcol):
            # they never raise the max, but must be excluded from the min.
            img_for_min = jnp.where(lane_idx < Wc, img, jnp.inf) if padded else img
            v_mn = jnp.min(img_for_min, keepdims=True)
            v_mx = jnp.max(img, keepdims=True)
            mn = v_mn if e == 0 else jnp.minimum(mn, v_mn)
            mx = v_mx if e == 0 else jnp.maximum(mx, v_mx)

    # TODO(synk): NoiseLayer (Poisson approx + read noise) is stochastic; only the
    # noise_flag=False branch of the reference forward is implemented.

    if norm_flag:
        # ---- Normalize01, fused: min/max over the whole batch sample ---------
        inv = 1.0 / jnp.maximum(mx - mn, 1e-30)       # (1,1), exact f32 division
        for e in range(E):
            out_ref[e] = (out_ref[e] - mn) * inv


# --------------------------------------------------------------------------
# Wrapper
# --------------------------------------------------------------------------
def physical_layer_visualization(mask, phase_emitter, nphotons, *,
                                 Hc, Wc, blur_sigma, blur_ksize=9,
                                 noise_flag=False, norm_flag=True):
    """mask: (Hm, Wm); phase_emitter: (B, E, Hm, Wm, 2); nphotons: (B, E)."""
    del noise_flag  # noise_flag=False branch only (see TODO in kernel)
    f32, bf16 = jnp.float32, jnp.bfloat16

    # natural (B, E, Hm, Wm) layout, no HBM transpose; bf16 halves the big DMA
    pe_re = phase_emitter[..., 0].astype(bf16)
    pe_im = phase_emitter[..., 1].astype(bf16)
    B, E, Hm, Wm = pe_re.shape
    P = (blur_ksize - 1) // 2
    r0, c0 = (Hm - Hc) // 2, (Wm - Wc) // 2            # central crop convention
    assert r0 >= P and r0 + Hc + P <= Hm
    assert c0 >= P and c0 + Wc + P <= Wm

    Wc_pad = ((Wc + 127) // 128) * 128                  # lane-dense output blocks

    cos_m = jnp.cos(mask).astype(f32)                   # (Hm, Wm), untiled
    sin_m = jnp.sin(mask).astype(f32)
    nph = nphotons.astype(f32)                          # (B, E) scalars -> SMEM

    # --- shifted, ortho-normalized DFT matrices (fftshift baked in) ----------
    def shifted_dft(n):
        k = (np.arange(n) + n // 2) % n
        m = np.arange(n)
        return np.exp(-2j * np.pi * np.outer(k, m) / n) / np.sqrt(n)

    wh = shifted_dft(Hm)                                # F = wh @ U @ wwT
    wwT = shifted_dft(Wm).T
    to_bf = lambda x: jnp.asarray(x, bf16)
    A_r, A_i, A_s = to_bf(wh.real), to_bf(wh.imag), to_bf(wh.real + wh.imag)
    Bt_r, Bt_i, Bt_s = to_bf(wwT.real), to_bf(wwT.imag), to_bf(wwT.real + wwT.imag)

    # --- crop + Gaussian blur (fixed std) folded into banded matrices --------
    d = np.arange(-P, P + 1)
    g1 = np.exp(-d * d / (2.0 * blur_sigma ** 2)) / np.sqrt(2.0 * np.pi * blur_sigma ** 2)
    Grow = np.zeros((Hc, Hm))
    for r in range(Hc):
        for dy in range(-P, P + 1):
            h = r0 + r + dy
            if r0 <= h < r0 + Hc:                       # zero "SAME" pad of crop
                Grow[r, h] = g1[dy + P]
    Gcol = np.zeros((Wm, Wc_pad))                       # padding columns stay zero
    for c in range(Wc):
        for dx in range(-P, P + 1):
            w = c0 + c + dx
            if c0 <= w < c0 + Wc:
                Gcol[w, c] = g1[dx + P]
    G_row, G_col = to_bf(Grow), to_bf(Gcol)

    kernel = functools.partial(_fused_psf_kernel, E=E, Wc=Wc, norm_flag=norm_flag)
    args = (cos_m, sin_m, pe_re, pe_im, nph,
            A_r, A_i, A_s, Bt_r, Bt_i, Bt_s, G_row, G_col)

    def build(single_buffer_consts):
        if single_buffer_consts:
            # grid-invariant constants: block index never changes -> 1 buffer
            const = lambda a: pl.BlockSpec(a.shape, lambda b, _n=a.ndim: (0,) * _n,
                                           pipeline_mode=pl.Buffered(1))
        else:
            const = lambda a: pl.BlockSpec(a.shape, lambda b, _n=a.ndim: (0,) * _n)
        return pl.pallas_call(
            kernel,
            out_shape=jax.ShapeDtypeStruct((B, E, Hc, Wc_pad), f32),
            grid=(B,),
            in_specs=[
                const(cos_m), const(sin_m),                               # mask fields
                pl.BlockSpec((None, E, Hm, Wm), lambda b: (b, 0, 0, 0)),  # pe real
                pl.BlockSpec((None, E, Hm, Wm), lambda b: (b, 0, 0, 0)),  # pe imag
                pl.BlockSpec(memory_space=pltpu.MemorySpace.SMEM),        # nphotons
                const(A_r), const(A_i), const(A_s),                       # row DFT
                const(Bt_r), const(Bt_i), const(Bt_s),                    # col DFT
                const(G_row), const(G_col),                               # crop+blur
            ],
            out_specs=pl.BlockSpec((None, E, Hc, Wc_pad), lambda b: (b, 0, 0, 0)),
            compiler_params=pltpu.CompilerParams(
                dimension_semantics=("parallel",),
                vmem_limit_bytes=48 * 1024 * 1024),
        )

    try:
        out_slab = build(True)(*args)
    except Exception:
        # Fallback if this JAX build rejects pipeline_mode / Buffered(1):
        # identical kernel, constants double-buffered by the default pipeliner.
        out_slab = build(False)(*args)

    # strip lane padding; output is already in natural (B, E, Hc, Wc) layout
    return out_slab[..., :Wc]


# --------------------------------------------------------------------------
# Pure-JAX reference (uses jnp.fft) for a correctness sanity check.
# --------------------------------------------------------------------------
def _reference(mask, phase_emitter, nphotons, Hc, Wc, sigma, K=9):
    pe = phase_emitter[..., 0] + 1j * phase_emitter[..., 1]
    B, E, Hm, Wm = pe.shape
    field = jnp.exp(1j * mask)[None, None] * pe
    F = jnp.fft.fftshift(jnp.fft.fft2(field, norm="ortho"), axes=(-2, -1))
    inten = jnp.abs(F) ** 2
    inten = (inten / jnp.sum(inten, axis=(-2, -1), keepdims=True)
             * nphotons[..., None, None])
    r0, c0 = (Hm - Hc) // 2, (Wm - Wc) // 2
    crop = inten[:, :, r0:r0 + Hc, c0:c0 + Wc]
    P = (K - 1) // 2
    yy, xx = np.mgrid[-P:P + 1, -P:P + 1]
    g = (np.exp(-(xx * xx + yy * yy) / (2.0 * sigma ** 2))
         / (2.0 * np.pi * sigma ** 2)).astype(np.float32)
    blurred = lax.conv_general_dilated(
        crop.reshape(B * E, 1, Hc, Wc).astype(jnp.float32),
        jnp.asarray(g)[None, None], (1, 1), "SAME",
        dimension_numbers=("NCHW", "OIHW", "NCHW")).reshape(B, E, Hc, Wc)
    mn = blurred.min(axis=(1, 2, 3), keepdims=True)
    mx = blurred.max(axis=(1, 2, 3), keepdims=True)
    return (blurred - mn) / (mx - mn)


if __name__ == "__main__":
    # Small synthetic setup_params: Hmask=Wmask=32, sensor H=W=16,
    # blur_std_range=[0.5, 1.0], blur_flag=True, noise_flag=False, norm_flag=True.
    B, E, Hm, Wm, Hc, Wc = 2, 4, 32, 32, 16, 16
    blur_std_range = [0.5, 1.0]
    blur_flag, noise_flag, norm_flag = True, False, True
    sigma = blur_std_range[1] if blur_flag else blur_std_range[0]

    key = jax.random.PRNGKey(0)
    k1, k2, k3 = jax.random.split(key, 3)
    mask = jax.random.uniform(k1, (Hm, Wm), jnp.float32, 0.0, 2.0 * np.pi)
    phi = jax.random.uniform(k2, (B, E, Hm, Wm), jnp.float32, 0.0, 2.0 * np.pi)
    # unit-modulus emitter pupil phases stored as (re, im) pairs (torch style)
    phase_emitter = jnp.stack([jnp.cos(phi), jnp.sin(phi)], axis=-1)
    nphotons = jax.random.uniform(k3, (B, E), jnp.float32, 1000.0, 10000.0)

    out = physical_layer_visualization(
        mask, phase_emitter, nphotons,
        Hc=Hc, Wc=Wc, blur_sigma=sigma,
        noise_flag=noise_flag, norm_flag=norm_flag)
    out = jax.block_until_ready(out)

    ref = _reference(mask, phase_emitter, nphotons, Hc, Wc, sigma)
    np.testing.assert_allclose(np.asarray(out), np.asarray(ref),
                               rtol=5e-2, atol=2e-2)
    assert out.shape == (B, E, Hc, Wc)
    print("KERNEL_OK")
</pallas_src>

<mosaic_0001>
module attributes {stable_mosaic.version = 11 : i64} {
  func.func @_fused_psf_kernel(%arg0: i32, %arg1: memref<32x32xf32, #tpu.memory_space<vmem>>, %arg2: memref<32x32xf32, #tpu.memory_space<vmem>>, %arg3: memref<1x4x32x32xbf16, #tpu.memory_space<vmem>>, %arg4: memref<1x4x32x32xbf16, #tpu.memory_space<vmem>>, %arg5: memref<2x4xf32, #tpu.memory_space<smem>>, %arg6: memref<32x32xbf16, #tpu.memory_space<vmem>>, %arg7: memref<32x32xbf16, #tpu.memory_space<vmem>>, %arg8: memref<32x32xbf16, #tpu.memory_space<vmem>>, %arg9: memref<32x32xbf16, #tpu.memory_space<vmem>>, %arg10: memref<32x32xbf16, #tpu.memory_space<vmem>>, %arg11: memref<32x32xbf16, #tpu.memory_space<vmem>>, %arg12: memref<16x32xbf16, #tpu.memory_space<vmem>>, %arg13: memref<32x128xbf16, #tpu.memory_space<vmem>>, %arg14: memref<1x4x16x128xf32, #tpu.memory_space<vmem>>) attributes {dimension_semantics = [#tpu.dimension_semantics<parallel>], iteration_bounds = array<i64: 2>, scalar_prefetch = 0 : i64, scratch_operands = 0 : i64, tpu.core_type = #tpu.core_type<tc>, window_params = [{pipeline_mode = #tpu.pipeline_mode<synchronous>, transform_indices = @transform_0, window_bounds = array<i64: 32, 32>}, {pipeline_mode = #tpu.pipeline_mode<synchronous>, transform_indices = @transform_1, window_bounds = array<i64: 32, 32>}, {transform_indices = @transform_2, window_bounds = array<i64: 1, 4, 32, 32>}, {transform_indices = @transform_3, window_bounds = array<i64: 1, 4, 32, 32>}, {transform_indices = @transform_4, window_bounds = array<i64: 2, 4>}, {pipeline_mode = #tpu.pipeline_mode<synchronous>, transform_indices = @transform_5, window_bounds = array<i64: 32, 32>}, {pipeline_mode = #tpu.pipeline_mode<synchronous>, transform_indices = @transform_6, window_bounds = array<i64: 32, 32>}, {pipeline_mode = #tpu.pipeline_mode<synchronous>, transform_indices = @transform_7, window_bounds = array<i64: 32, 32>}, {pipeline_mode = #tpu.pipeline_mode<synchronous>, transform_indices = @transform_8, window_bounds = array<i64: 32, 32>}, {pipeline_mode = #tpu.pipeline_mode<synchronous>, transform_indices = @transform_9, window_bounds = array<i64: 32, 32>}, {pipeline_mode = #tpu.pipeline_mode<synchronous>, transform_indices = @transform_10, window_bounds = array<i64: 32, 32>}, {pipeline_mode = #tpu.pipeline_mode<synchronous>, transform_indices = @transform_11, window_bounds = array<i64: 16, 32>}, {pipeline_mode = #tpu.pipeline_mode<synchronous>, transform_indices = @transform_12, window_bounds = array<i64: 32, 128>}, {transform_indices = @transform_13, window_bounds = array<i64: 1, 4, 16, 128>}]} {
    %c0 = arith.constant 0 : index
    %c0_0 = arith.constant 0 : index
    %0 = vector.load %arg1[%c0, %c0_0] : memref<32x32xf32, #tpu.memory_space<vmem>>, vector<32x32xf32>
    %c0_1 = arith.constant 0 : index
    %c0_2 = arith.constant 0 : index
    %1 = vector.load %arg2[%c0_1, %c0_2] : memref<32x32xf32, #tpu.memory_space<vmem>>, vector<32x32xf32>
    %c0_3 = arith.constant 0 : index
    %c0_4 = arith.constant 0 : index
    %2 = vector.load %arg6[%c0_3, %c0_4] : memref<32x32xbf16, #tpu.memory_space<vmem>>, vector<32x32xbf16>
    %c0_5 = arith.constant 0 : index
    %c0_6 = arith.constant 0 : index
    %3 = vector.load %arg7[%c0_5, %c0_6] : memref<32x32xbf16, #tpu.memory_space<vmem>>, vector<32x32xbf16>
    %c0_7 = arith.constant 0 : index
    %c0_8 = arith.constant 0 : index
    %4 = vector.load %arg8[%c0_7, %c0_8] : memref<32x32xbf16, #tpu.memory_space<vmem>>, vector<32x32xbf16>
    %c0_9 = arith.constant 0 : index
    %c0_10 = arith.constant 0 : index
    %5 = vector.load %arg9[%c0_9, %c0_10] : memref<32x32xbf16, #tpu.memory_space<vmem>>, vector<32x32xbf16>
    %c0_11 = arith.constant 0 : index
    %c0_12 = arith.constant 0 : index
    %6 = vector.load %arg10[%c0_11, %c0_12] : memref<32x32xbf16, #tpu.memory_space<vmem>>, vector<32x32xbf16>
    %c0_13 = arith.constant 0 : index
    %c0_14 = arith.constant 0 : index
    %7 = vector.load %arg11[%c0_13, %c0_14] : memref<32x32xbf16, #tpu.memory_space<vmem>>, vector<32x32xbf16>
    %c0_15 = arith.constant 0 : index
    %c0_16 = arith.constant 0 : index
    %8 = vector.load %arg12[%c0_15, %c0_16] : memref<16x32xbf16, #tpu.memory_space<vmem>>, vector<16x32xbf16>
    %c0_17 = arith.constant 0 : index
    %c0_18 = arith.constant 0 : index
    %9 = vector.load %arg13[%c0_17, %c0_18] : memref<32x128xbf16, #tpu.memory_space<vmem>>, vector<32x128xbf16>
    %10 = tpu.iota {dimensions = array<i32: 1>} : vector<16x128xi32>
    %c0_19 = arith.constant 0 : index
    %c0_20 = arith.constant 0 : index
    %c0_21 = arith.constant 0 : index
    %c0_22 = arith.constant 0 : index
    %11 = vector.load %arg3[%c0_19, %c0_20, %c0_21, %c0_22] : memref<1x4x32x32xbf16, #tpu.memory_space<vmem>>, vector<1x1x32x32xbf16>
    %12 = vector.shape_cast %11 : vector<1x1x32x32xbf16> to vector<32x32xbf16>
    %13 = arith.extf %12 : vector<32x32xbf16> to vector<32x32xf32>
    %c0_23 = arith.constant 0 : index
    %c0_24 = arith.constant 0 : index
    %c0_25 = arith.constant 0 : index
    %c0_26 = arith.constant 0 : index
    %14 = vector.load %arg4[%c0_23, %c0_24, %c0_25, %c0_26] : memref<1x4x32x32xbf16, #tpu.memory_space<vmem>>, vector<1x1x32x32xbf16>
    %15 = vector.shape_cast %14 : vector<1x1x32x32xbf16> to vector<32x32xbf16>
    %16 = arith.extf %15 : vector<32x32xbf16> to vector<32x32xf32>
    %17 = arith.mulf %0, %13 : vector<32x32xf32>
    %18 = arith.mulf %1, %16 : vector<32x32xf32>
    %19 = arith.subf %17, %18 : vector<32x32xf32>
    %20 = arith.mulf %0, %16 : vector<32x32xf32>
    %21 = arith.mulf %1, %13 : vector<32x32xf32>
    %22 = arith.addf %20, %21 : vector<32x32xf32>
    %23 = arith.truncf %19 : vector<32x32xf32> to vector<32x32xbf16>
    %24 = arith.truncf %22 : vector<32x32xf32> to vector<32x32xbf16>
    %25 = arith.addf %19, %22 : vector<32x32xf32>
    %26 = arith.truncf %25 : vector<32x32xf32> to vector<32x32xbf16>
    %cst = arith.constant dense<0.000000e+00> : vector<32x32xf32>
    %27 = tpu.matmul %2, %23, %cst {dimension_numbers = #tpu.dot_dimension_numbers<[1], [0], [0], [1], [0, 0, 1, 1], [], []>} : vector<32x32xbf16>, vector<32x32xbf16>, vector<32x32xf32> -> vector<32x32xf32>
    %cst_27 = arith.constant dense<0.000000e+00> : vector<32x32xf32>
    %28 = tpu.matmul %3, %24, %cst_27 {dimension_numbers = #tpu.dot_dimension_numbers<[1], [0], [0], [1], [0, 0, 1, 1], [], []>} : vector<32x32xbf16>, vector<32x32xbf16>, vector<32x32xf32> -> vector<32x32xf32>
    %cst_28 = arith.constant dense<0.000000e+00> : vector<32x32xf32>
    %29 = tpu.matmul %4, %26, %cst_28 {dimension_numbers = #tpu.dot_dimension_numbers<[1], [0], [0], [1], [0, 0, 1, 1], [], []>} : vector<32x32xbf16>, vector<32x32xbf16>, vector<32x32xf32> -> vector<32x32xf32>
    %30 = arith.subf %27, %28 : vector<32x32xf32>
    %31 = arith.subf %29, %27 : vector<32x32xf32>
    %32 = arith.subf %31, %28 : vector<32x32xf32>
    %33 = arith.truncf %30 : vector<32x32xf32> to vector<32x32xbf16>
    %34 = arith.truncf %32 : vector<32x32xf32> to vector<32x32xbf16>
    %35 = arith.addf %30, %32 : vector<32x32xf32>
    %36 = arith.truncf %35 : vector<32x32xf32> to vector<32x32xbf16>
    %cst_29 = arith.constant dense<0.000000e+00> : vector<32x32xf32>
    %37 = tpu.matmul %33, %5, %cst_29 {dimension_numbers = #tpu.dot_dimension_numbers<[1], [0], [0], [1], [0, 0, 1, 1], [], []>} : vector<32x32xbf16>, vector<32x32xbf16>, vector<32x32xf32> -> vector<32x32xf32>
    %cst_30 = arith.constant dense<0.000000e+00> : vector<32x32xf32>
    %38 = tpu.matmul %34, %6, %cst_30 {dimension_numbers = #tpu.dot_dimension_numbers<[1], [0], [0], [1], [0, 0, 1, 1], [], []>} : vector<32x32xbf16>, vector<32x32xbf16>, vector<32x32xf32> -> vector<32x32xf32>
    %cst_31 = arith.constant dense<0.000000e+00> : vector<32x32xf32>
    %39 = tpu.matmul %36, %7, %cst_31 {dimension_numbers = #tpu.dot_dimension_numbers<[1], [0], [0], [1], [0, 0, 1, 1], [], []>} : vector<32x32xbf16>, vector<32x32xbf16>, vector<32x32xf32> -> vector<32x32xf32>
    %40 = arith.subf %37, %38 : vector<32x32xf32>
    %41 = arith.subf %39, %37 : vector<32x32xf32>
    %42 = arith.subf %41, %38 : vector<32x32xf32>
    %43 = arith.mulf %40, %40 : vector<32x32xf32>
    %44 = arith.mulf %42, %42 : vector<32x32xf32>
    %45 = arith.addf %43, %44 : vector<32x32xf32>
    %46 = vector.shape_cast %45 : vector<32x32xf32> to vector<1x32x32xf32>
    %cst_32 = arith.constant dense<0.000000e+00> : vector<1xf32>
    %47 = vector.multi_reduction <add>, %46, %cst_32 [1, 2] : vector<1x32x32xf32> to vector<1xf32>
    %48 = vector.shape_cast %47 : vector<1xf32> to vector<1x1x1xf32>
    %49 = vector.extract %48[0, 0, 0] : f32 from vector<1x1x1xf32>
    %50 = vector.broadcast %49 : f32 to vector<1x1xf32>
    %51 = arith.truncf %45 : vector<32x32xf32> to vector<32x32xbf16>
    %cst_33 = arith.constant dense<0.000000e+00> : vector<16x32xf32>
    %52 = tpu.matmul %8, %51, %cst_33 {dimension_numbers = #tpu.dot_dimension_numbers<[1], [0], [0], [1], [0, 0, 1, 1], [], []>} : vector<16x32xbf16>, vector<32x32xbf16>, vector<16x32xf32> -> vector<16x32xf32>
    %53 = arith.truncf %52 : vector<16x32xf32> to vector<16x32xbf16>
    %cst_34 = arith.constant dense<0.000000e+00> : vector<16x128xf32>
    %54 = tpu.matmul %53, %9, %cst_34 {dimension_numbers = #tpu.dot_dimension_numbers<[1], [0], [0], [1], [0, 0, 1, 1], [], []>} : vector<16x32xbf16>, vector<32x128xbf16>, vector<16x128xf32> -> vector<16x128xf32>
    %55 = arith.index_cast %arg0 : i32 to index
    %c0_35 = arith.constant 0 : index
    %56 = memref.load %arg5[%55, %c0_35] : memref<2x4xf32, #tpu.memory_space<smem>>
    %57 = vector.broadcast %56 : f32 to vector<1x1xf32>
    %58 = arith.divf %57, %50 : vector<1x1xf32>
    %59 = vector.broadcast %58 : vector<1x1xf32> to vector<16x128xf32>
    %60 = arith.mulf %54, %59 : vector<16x128xf32>
    %c0_36 = arith.constant 0 : index
    %c0_37 = arith.constant 0 : index
    %c0_38 = arith.constant 0 : index
    %c0_39 = arith.constant 0 : index
    %61 = vector.load %arg14[%c0_36, %c0_37, %c0_38, %c0_39] : memref<1x4x16x128xf32, #tpu.memory_space<vmem>>, vector<1x1x16x128xf32>
    %62 = vector.shape_cast %61 : vector<1x1x16x128xf32> to vector<16x128xf32>
    %63 = vector.shape_cast %60 : vector<16x128xf32> to vector<1x1x16x128xf32>
    tpu.vector_store %arg14[%c0_36, %c0_37, %c0_38, %c0_39], %63 {strides = array<i32>} : memref<1x4x16x128xf32, #tpu.memory_space<vmem>>, vector<1x1x16x128xf32>,
    %c16_i32 = arith.constant 16 : i32
    %64 = vector.broadcast %c16_i32 : i32 to vector<16x128xi32>
    %65 = arith.cmpi slt, %10, %64 : vector<16x128xi32>
    %cst_40 = arith.constant 0x7F800000 : f32
    %66 = vector.broadcast %cst_40 : f32 to vector<16x128xf32>
    %67 = arith.select %65, %60, %66 : vector<16x128xi1>, vector<16x128xf32>
    %68 = vector.shape_cast %67 : vector<16x128xf32> to vector<1x16x128xf32>
    %cst_41 = arith.constant dense<0x7F800000> : vector<1xf32>
    %69 = vector.multi_reduction <minimumf>, %68, %cst_41 [1, 2] : vector<1x16x128xf32> to vector<1xf32>
    %70 = vector.shape_cast %69 : vector<1xf32> to vector<1x1x1xf32>
    %71 = vector.extract %70[0, 0, 0] : f32 from vector<1x1x1xf32>
    %72 = vector.broadcast %71 : f32 to vector<1x1xf32>
    %73 = vector.shape_cast %60 : vector<16x128xf32> to vector<1x16x128xf32>
    %cst_42 = arith.constant dense<0xFF800000> : vector<1xf32>
    %74 = vector.multi_reduction <maximumf>, %73, %cst_42 [1, 2] : vector<1x16x128xf32> to vector<1xf32>
    %75 = vector.shape_cast %74 : vector<1xf32> to vector<1x1x1xf32>
    %76 = vector.extract %75[0, 0, 0] : f32 from vector<1x1x1xf32>
    %77 = vector.broadcast %76 : f32 to vector<1x1xf32>
    %c0_43 = arith.constant 0 : index
    %c1 = arith.constant 1 : index
    %c0_44 = arith.constant 0 : index
    %c0_45 = arith.constant 0 : index
    %78 = vector.load %arg3[%c0_43, %c1, %c0_44, %c0_45] : memref<1x4x32x32xbf16, #tpu.memory_space<vmem>>, vector<1x1x32x32xbf16>
    %79 = vector.shape_cast %78 : vector<1x1x32x32xbf16> to vector<32x32xbf16>
    %80 = arith.extf %79 : vector<32x32xbf16> to vector<32x32xf32>
    %c0_46 = arith.constant 0 : index
    %c1_47 = arith.constant 1 : index
    %c0_48 = arith.constant 0 : index
    %c0_49 = arith.constant 0 : index
    %81 = vector.load %arg4[%c0_46, %c1_47, %c0_48, %c0_49] : memref<1x4x32x32xbf16, #tpu.memory_space<vmem>>, vector<1x1x32x32xbf16>
    %82 = vector.shape_cast %81 : vector<1x1x32x32xbf16> to vector<32x32xbf16>
    %83 = arith.extf %82 : vector<32x32xbf16> to vector<32x32xf32>
    %84 = arith.mulf %0, %80 : vector<32x32xf32>
    %85 = arith.mulf %1, %83 : vector<32x32xf32>
    %86 = arith.subf %84, %85 : vector<32x32xf32>
    %87 = arith.mulf %0, %83 : vector<32x32xf32>
    %88 = arith.mulf %1, %80 : vector<32x32xf32>
    %89 = arith.addf %87, %88 : vector<32x32xf32>
    %90 = arith.truncf %86 : vector<32x32xf32> to vector<32x32xbf16>
    %91 = arith.truncf %89 : vector<32x32xf32> to vector<32x32xbf16>
    %92 = arith.addf %86, %89 : vector<32x32xf32>
    %93 = arith.truncf %92 : vector<32x32xf32> to vector<32x32xbf16>
    %cst_50 = arith.constant dense<0.000000e+00> : vector<32x32xf32>
    %94 = tpu.matmul %2, %90, %cst_50 {dimension_numbers = #tpu.dot_dimension_numbers<[1], [0], [0], [1], [0, 0, 1, 1], [], []>} : vector<32x32xbf16>, vector<32x32xbf16>, vector<32x32xf32> -> vector<32x32xf32>
    %cst_51 = arith.constant dense<0.000000e+00> : vector<32x32xf32>
    %95 = tpu.matmul %3, %91, %cst_51 {dimension_numbers = #tpu.dot_dimension_numbers<[1], [0], [0], [1], [0, 0, 1, 1], [], []>} : vector<32x32xbf16>, vector<32x32xbf16>, vector<32x32xf32> -> vector<32x32xf32>
    %cst_52 = arith.constant dense<0.000000e+00> : vector<32x32xf32>
    %96 = tpu.matmul %4, %93, %cst_52 {dimension_numbers = #tpu.dot_dimension_numbers<[1], [0], [0], [1], [0, 0, 1, 1], [], []>} : vector<32x32xbf16>, vector<32x32xbf16>, vector<32x32xf32> -> vector<32x32xf32>
    %97 = arith.subf %94, %95 : vector<32x32xf32>
    %98 = arith.subf %96, %94 : vector<32x32xf32>
    %99 = arith.subf %98, %95 : vector<32x32xf32>
    %100 = arith.truncf %97 : vector<32x32xf32> to vector<32x32xbf16>
    %101 = arith.truncf %99 : vector<32x32xf32> to vector<32x32xbf16>
    %102 = arith.addf %97, %99 : vector<32x32xf32>
    %103 = arith.truncf %102 : vector<32x32xf32> to vector<32x32xbf16>
    %cst_53 = arith.constant dense<0.000000e+00> : vector<32x32xf32>
    %104 = tpu.matmul %100, %5, %cst_53 {dimension_numbers = #tpu.dot_dimension_numbers<[1], [0], [0], [1], [0, 0, 1, 1], [], []>} : vector<32x32xbf16>, vector<32x32xbf16>, vector<32x32xf32> -> vector<32x32xf32>
    %cst_54 = arith.constant dense<0.000000e+00> : vector<32x32xf32>
    %105 = tpu.matmul %101, %6, %cst_54 {dimension_numbers = #tpu.dot_dimension_numbers<[1], [0], [0], [1], [0, 0, 1, 1], [], []>} : vector<32x32xbf16>, vector<32x32xbf16>, vector<32x32xf32> -> vector<32x32xf32>
    %cst_55 = arith.constant dense<0.000000e+00> : vector<32x32xf32>
    %106 = tpu.matmul %103, %7, %cst_55 {dimension_numbers = #tpu.dot_dimension_numbers<[1], [0], [0], [1], [0, 0, 1, 1], [], []>} : vector<32x32xbf16>, vector<32x32xbf16>, vector<32x32xf32> -> vector<32x32xf32>
    %107 = arith.subf %104, %105 : vector<32x32xf32>
    %108 = arith.subf %106, %104 : vector<32x32xf32>
    %109 = arith.subf %108, %105 : vector<32x32xf32>
    %110 = arith.mulf %107, %107 : vector<32x32xf32>
    %111 = arith.mulf %109, %109 : vector<32x32xf32>
    %112 = arith.addf %110, %111 : vector<32x32xf32>
    %113 = vector.shape_cast %112 : vector<32x32xf32> to vector<1x32x32xf32>
    %cst_56 = arith.constant dense<0.000000e+00> : vector<1xf32>
    %114 = vector.multi_reduction <add>, %113, %cst_56 [1, 2] : vector<1x32x32xf32> to vector<1xf32>
    %115 = vector.shape_cast %114 : vector<1xf32> to vector<1x1x1xf32>
    %116 = vector.extract %115[0, 0, 0] : f32 from vector<1x1x1xf32>
    %117 = vector.broadcast %116 : f32 to vector<1x1xf32>
    %118 = arith.truncf %112 : vector<32x32xf32> to vector<32x32xbf16>
    %cst_57 = arith.constant dense<0.000000e+00> : vector<16x32xf32>
    %119 = tpu.matmul %8, %118, %cst_57 {dimension_numbers = #tpu.dot_dimension_numbers<[1], [0], [0], [1], [0, 0, 1, 1], [], []>} : vector<16x32xbf16>, vector<32x32xbf16>, vector<16x32xf32> -> vector<16x32xf32>
    %120 = arith.truncf %119 : vector<16x32xf32> to vector<16x32xbf16>
    %cst_58 = arith.constant dense<0.000000e+00> : vector<16x128xf32>
    %121 = tpu.matmul %120, %9, %cst_58 {dimension_numbers = #tpu.dot_dimension_numbers<[1], [0], [0], [1], [0, 0, 1, 1], [], []>} : vector<16x32xbf16>, vector<32x128xbf16>, vector<16x128xf32> -> vector<16x128xf32>
    %122 = arith.index_cast %arg0 : i32 to index
    %c1_59 = arith.constant 1 : index
    %123 = memref.load %arg5[%122, %c1_59] : memref<2x4xf32, #tpu.memory_space<smem>>
    %124 = vector.broadcast %123 : f32 to vector<1x1xf32>
    %125 = arith.divf %124, %117 : vector<1x1xf32>
    %126 = vector.broadcast %125 : vector<1x1xf32> to vector<16x128xf32>
    %127 = arith.mulf %121, %126 : vector<16x128xf32>
    %c0_60 = arith.constant 0 : index
    %c1_61 = arith.constant 1 : index
    %c0_62 = arith.constant 0 : index
    %c0_63 = arith.constant 0 : index
    %128 = vector.load %arg14[%c0_60, %c1_61, %c0_62, %c0_63] : memref<1x4x16x128xf32, #tpu.memory_space<vmem>>, vector<1x1x16x128xf32>
    %129 = vector.shape_cast %128 : vector<1x1x16x128xf32> to vector<16x128xf32>
    %130 = vector.shape_cast %127 : vector<16x128xf32> to vector<1x1x16x128xf32>
    tpu.vector_store %arg14[%c0_60, %c1_61, %c0_62, %c0_63], %130 {strides = array<i32>} : memref<1x4x16x128xf32, #tpu.memory_space<vmem>>, vector<1x1x16x128xf32>,
    %c16_i32_64 = arith.constant 16 : i32
    %131 = vector.broadcast %c16_i32_64 : i32 to vector<16x128xi32>
    %132 = arith.cmpi slt, %10, %131 : vector<16x128xi32>
    %cst_65 = arith.constant 0x7F800000 : f32
    %133 = vector.broadcast %cst_65 : f32 to vector<16x128xf32>
    %134 = arith.select %132, %127, %133 : vector<16x128xi1>, vector<16x128xf32>
    %135 = vector.shape_cast %134 : vector<16x128xf32> to vector<1x16x128xf32>
    %cst_66 = arith.constant dense<0x7F800000> : vector<1xf32>
    %136 = vector.multi_reduction <minimumf>, %135, %cst_66 [1, 2] : vector<1x16x128xf32> to vector<1xf32>
    %137 = vector.shape_cast %136 : vector<1xf32> to vector<1x1x1xf32>
    %138 = vector.extract %137[0, 0, 0] : f32 from vector<1x1x1xf32>
    %139 = vector.broadcast %138 : f32 to vector<1x1xf32>
    %140 = vector.shape_cast %127 : vector<16x128xf32> to vector<1x16x128xf32>
    %cst_67 = arith.constant dense<0xFF800000> : vector<1xf32>
    %141 = vector.multi_reduction <maximumf>, %140, %cst_67 [1, 2] : vector<1x16x128xf32> to vector<1xf32>
    %142 = vector.shape_cast %141 : vector<1xf32> to vector<1x1x1xf32>
    %143 = vector.extract %142[0, 0, 0] : f32 from vector<1x1x1xf32>
    %144 = vector.broadcast %143 : f32 to vector<1x1xf32>
    %145 = arith.minimumf %72, %139 : vector<1x1xf32>
    %146 = arith.maximumf %77, %144 : vector<1x1xf32>
    %c0_68 = arith.constant 0 : index
    %c2 = arith.constant 2 : index
    %c0_69 = arith.constant 0 : index
    %c0_70 = arith.constant 0 : index
    %147 = vector.load %arg3[%c0_68, %c2, %c0_69, %c0_70] : memref<1x4x32x32xbf16, #tpu.memory_space<vmem>>, vector<1x1x32x32xbf16>
    %148 = vector.shape_cast %147 : vector<1x1x32x32xbf16> to vector<32x32xbf16>
    %149 = arith.extf %148 : vector<32x32xbf16> to vector<32x32xf32>
    %c0_71 = arith.constant 0 : index
    %c2_72 = arith.constant 2 : index
    %c0_73 = arith.constant 0 : index
    %c0_74 = arith.constant 0 : index
    %150 = vector.load %arg4[%c0_71, %c2_72, %c0_73, %c0_74] : memref<1x4x32x32xbf16, #tpu.memory_space<vmem>>, vector<1x1x32x32xbf16>
    %151 = vector.shape_cast %150 : vector<1x1x32x32xbf16> to vector<32x32xbf16>
    %152 = arith.extf %151 : vector<32x32xbf16> to vector<32x32xf32>
    %153 = arith.mulf %0, %149 : vector<32x32xf32>
    %154 = arith.mulf %1, %152 : vector<32x32xf32>
    %155 = arith.subf %153, %154 : vector<32x32xf32>
    %156 = arith.mulf %0, %152 : vector<32x32xf32>
    %157 = arith.mulf %1, %149 : vector<32x32xf32>
    %158 = arith.addf %156, %157 : vector<32x32xf32>
    %159 = arith.truncf %155 : vector<32x32xf32> to vector<32x32xbf16>
    %160 = arith.truncf %158 : vector<32x32xf32> to vector<32x32xbf16>
    %161 = arith.addf %155, %158 : vector<32x32xf32>
    %162 = arith.truncf %161 : vector<32x32xf32> to vector<32x32xbf16>
    %cst_75 = arith.constant dense<0.000000e+00> : vector<32x32xf32>
    %163 = tpu.matmul %2, %159, %cst_75 {dimension_numbers = #tpu.dot_dimension_numbers<[1], [0], [0], [1], [0, 0, 1, 1], [], []>} : vector<32x32xbf16>, vector<32x32xbf16>, vector<32x32xf32> -> vector<32x32xf32>
    %cst_76 = arith.constant dense<0.000000e+00> : vector<32x32xf32>
    %164 = tpu.matmul %3, %160, %cst_76 {dimension_numbers = #tpu.dot_dimension_numbers<[1], [0], [0], [1], [0, 0, 1, 1], [], []>} : vector<32x32xbf16>, vector<32x32xbf16>, vector<32x32xf32> -> vector<32x32xf32>
    %cst_77 = arith.constant dense<0.000000e+00> : vector<32x32xf32>
    %165 = tpu.matmul %4, %162, %cst_77 {dimension_numbers = #tpu.dot_dimension_numbers<[1], [0], [0], [1], [0, 0, 1, 1], [], []>} : vector<32x32xbf16>, vector<32x32xbf16>, vector<32x32xf32> -> vector<32x32xf32>
    %166 = arith.subf %163, %164 : vector<32x32xf32>
    %167 = arith.subf %165, %163 : vector<32x32xf32>
    %168 = arith.subf %167, %164 : vector<32x32xf32>
    %169 = arith.truncf %166 : vector<32x32xf32> to vector<32x32xbf16>
    %170 = arith.truncf %168 : vector<32x32xf32> to vector<32x32xbf16>
    %171 = arith.addf %166, %168 : vector<32x32xf32>
    %172 = arith.truncf %171 : vector<32x32xf32> to vector<32x32xbf16>
    %cst_78 = arith.constant dense<0.000000e+00> : vector<32x32xf32>
    %173 = tpu.matmul %169, %5, %cst_78 {dimension_numbers = #tpu.dot_dimension_numbers<[1], [0], [0], [1], [0, 0, 1, 1], [], []>} : vector<32x32xbf16>, vector<32x32xbf16>, vector<32x32xf32> -> vector<32x32xf32>
    %cst_79 = arith.constant dense<0.000000e+00> : vector<32x32xf32>
    %174 = tpu.matmul %170, %6, %cst_79 {dimension_numbers = #tpu.dot_dimension_numbers<[1], [0], [0], [1], [0, 0, 1, 1], [], []>} : vector<32x32xbf16>, vector<32x32xbf16>, vector<32x32xf32> -> vector<32x32xf32>
    %cst_80 = arith.constant dense<0.000000e+00> : vector<32x32xf32>
    %175 = tpu.matmul %172, %7, %cst_80 {dimension_numbers = #tpu.dot_dimension_numbers<[1], [0], [0], [1], [0, 0, 1, 1], [], []>} : vector<32x32xbf16>, vector<32x32xbf16>, vector<32x32xf32> -> vector<32x32xf32>
    %176 = arith.subf %173, %174 : vector<32x32xf32>
    %177 = arith.subf %175, %173 : vector<32x32xf32>
    %178 = arith.subf %177, %174 : vector<32x32xf32>
    %179 = arith.mulf %176, %176 : vector<32x32xf32>
    %180 = arith.mulf %178, %178 : vector<32x32xf32>
    %181 = arith.addf %179, %180 : vector<32x32xf32>
    %182 = vector.shape_cast %181 : vector<32x32xf32> to vector<1x32x32xf32>
    %cst_81 = arith.constant dense<0.000000e+00> : vector<1xf32>
    %183 = vector.multi_reduction <add>, %182, %cst_81 [1, 2] : vector<1x32x32xf32> to vector<1xf32>
    %184 = vector.shape_cast %183 : vector<1xf32> to vector<1x1x1xf32>
    %185 = vector.extract %184[0, 0, 0] : f32 from vector<1x1x1xf32>
    %186 = vector.broadcast %185 : f32 to vector<1x1xf32>
    %187 = arith.truncf %181 : vector<32x32xf32> to vector<32x32xbf16>
    %cst_82 = arith.constant dense<0.000000e+00> : vector<16x32xf32>
    %188 = tpu.matmul %8, %187, %cst_82 {dimension_numbers = #tpu.dot_dimension_numbers<[1], [0], [0], [1], [0, 0, 1, 1], [], []>} : vector<16x32xbf16>, vector<32x32xbf16>, vector<16x32xf32> -> vector<16x32xf32>
    %189 = arith.truncf %188 : vector<16x32xf32> to vector<16x32xbf16>
    %cst_83 = arith.constant dense<0.000000e+00> : vector<16x128xf32>
    %190 = tpu.matmul %189, %9, %cst_83 {dimension_numbers = #tpu.dot_dimension_numbers<[1], [0], [0], [1], [0, 0, 1, 1], [], []>} : vector<16x32xbf16>, vector<32x128xbf16>, vector<16x128xf32> -> vector<16x128xf32>
    %191 = arith.index_cast %arg0 : i32 to index
    %c2_84 = arith.constant 2 : index
    %192 = memref.load %arg5[%191, %c2_84] : memref<2x4xf32, #tpu.memory_space<smem>>
    %193 = vector.broadcast %192 : f32 to vector<1x1xf32>
    %194 = arith.divf %193, %186 : vector<1x1xf32>
    %195 = vector.broadcast %194 : vector<1x1xf32> to vector<16x128xf32>
    %196 = arith.mulf %190, %195 : vector<16x128xf32>
    %c0_85 = arith.constant 0 : index
    %c2_86 = arith.constant 2 : index
    %c0_87 = arith.constant 0 : index
    %c0_88 = arith.constant 0 : index
    %197 = vector.load %arg14[%c0_85, %c2_86, %c0_87, %c0_88] : memref<1x4x16x128xf32, #tpu.memory_space<vmem>>, vector<1x1x16x128xf32>
    %198 = vector.shape_cast %197 : vector<1x1x16x128xf32> to vector<16x128xf32>
    %199 = vector.shape_cast %196 : vector<16x128xf32> to vector<1x1x16x128xf32>
    tpu.vector_store %arg14[%c0_85, %c2_86, %c0_87, %c0_88], %199 {strides = array<i32>} : memref<1x4x16x128xf32, #tpu.memory_space<vmem>>, vector<1x1x16x128xf32>,
    %c16_i32_89 = arith.constant 16 : i32
    %200 = vector.broadcast %c16_i32_89 : i32 to vector<16x128xi32>
    %201 = arith.cmpi slt, %10, %200 : vector<16x128xi32>
    %cst_90 = arith.constant 0x7F800000 : f32
    %202 = vector.broadcast %cst_90 : f32 to vector<16x128xf32>
    %203 = arith.select %201, %196, %202 : vector<16x128xi1>, vector<16x128xf32>
    %204 = vector.shape_cast %203 : vector<16x128xf32> to vector<1x16x128xf32>
    %cst_91 = arith.constant dense<0x7F800000> : vector<1xf32>
    %205 = vector.multi_reduction <minimumf>, %204, %cst_91 [1, 2] : vector<1x16x128xf32> to vector<1xf32>
    %206 = vector.shape_cast %205 : vector<1xf32> to vector<1x1x1xf32>
    %207 = vector.extract %206[0, 0, 0] : f32 from vector<1x1x1xf32>
    %208 = vector.broadcast %207 : f32 to vector<1x1xf32>
    %209 = vector.shape_cast %196 : vector<16x128xf32> to vector<1x16x128xf32>
    %cst_92 = arith.constant dense<0xFF800000> : vector<1xf32>
    %210 = vector.multi_reduction <maximumf>, %209, %cst_92 [1, 2] : vector<1x16x128xf32> to vector<1xf32>
    %211 = vector.shape_cast %210 : vector<1xf32> to vector<1x1x1xf32>
    %212 = vector.extract %211[0, 0, 0] : f32 from vector<1x1x1xf32>
    %213 = vector.broadcast %212 : f32 to vector<1x1xf32>
    %214 = arith.minimumf %145, %208 : vector<1x1xf32>
    %215 = arith.maximumf %146, %213 : vector<1x1xf32>
    %c0_93 = arith.constant 0 : index
    %c3 = arith.constant 3 : index
    %c0_94 = arith.constant 0 : index
    %c0_95 = arith.constant 0 : index
    %216 = vector.load %arg3[%c0_93, %c3, %c0_94, %c0_95] : memref<1x4x32x32xbf16, #tpu.memory_space<vmem>>, vector<1x1x32x32xbf16>
    %217 = vector.shape_cast %216 : vector<1x1x32x32xbf16> to vector<32x32xbf16>
    %218 = arith.extf %217 : vector<32x32xbf16> to vector<32x32xf32>
    %c0_96 = arith.constant 0 : index
    %c3_97 = arith.constant 3 : index
    %c0_98 = arith.constant 0 : index
    %c0_99 = arith.constant 0 : index
    %219 = vector.load %arg4[%c0_96, %c3_97, %c0_98, %c0_99] : memref<1x4x32x32xbf16, #tpu.memory_space<vmem>>, vector<1x1x32x32xbf16>
    %220 = vector.shape_cast %219 : vector<1x1x32x32xbf16> to vector<32x32xbf16>
    %221 = arith.extf %220 : vector<32x32xbf16> to vector<32x32xf32>
    %222 = arith.mulf %0, %218 : vector<32x32xf32>
    %223 = arith.mulf %1, %221 : vector<32x32xf32>
    %224 = arith.subf %222, %223 : vector<32x32xf32>
    %225 = arith.mulf %0, %221 : vector<32x32xf32>
    %226 = arith.mulf %1, %218 : vector<32x32xf32>
    %227 = arith.addf %225, %226 : vector<32x32xf32>
    %228 = arith.truncf %224 : vector<32x32xf32> to vector<32x32xbf16>
    %229 = arith.truncf %227 : vector<32x32xf32> to vector<32x32xbf16>
    %230 = arith.addf %224, %227 : vector<32x32xf32>
    %231 = arith.truncf %230 : vector<32x32xf32> to vector<32x32xbf16>
    %cst_100 = arith.constant dense<0.000000e+00> : vector<32x32xf32>
    %232 = tpu.matmul %2, %228, %cst_100 {dimension_numbers = #tpu.dot_dimension_numbers<[1], [0], [0], [1], [0, 0, 1, 1], [], []>} : vector<32x32xbf16>, vector<32x32xbf16>, vector<32x32xf32> -> vector<32x32xf32>
    %cst_101 = arith.constant dense<0.000000e+00> : vector<32x32xf32>
    %233 = tpu.matmul %3, %229, %cst_101 {dimension_numbers = #tpu.dot_dimension_numbers<[1], [0], [0], [1], [0, 0, 1, 1], [], []>} : vector<32x32xbf16>, vector<32x32xbf16>, vector<32x32xf32> -> vector<32x32xf32>
    %cst_102 = arith.constant dense<0.000000e+00> : vector<32x32xf32>
    %234 = tpu.matmul %4, %231, %cst_102 {dimension_numbers = #tpu.dot_dimension_numbers<[1], [0], [0], [1], [0, 0, 1, 1], [], []>} : vector<32x32xbf16>, vector<32x32xbf16>, vector<32x32xf32> -> vector<32x32xf32>
    %235 = arith.subf %232, %233 : vector<32x32xf32>
    %236 = arith.subf %234, %232 : vector<32x32xf32>
    %237 = arith.subf %236, %233 : vector<32x32xf32>
    %238 = arith.truncf %235 : vector<32x32xf32> to vector<32x32xbf16>
    %239 = arith.truncf %237 : vector<32x32xf32> to vector<32x32xbf16>
    %240 = arith.addf %235, %237 : vector<32x32xf32>
    %241 = arith.truncf %240 : vector<32x32xf32> to vector<32x32xbf16>
    %cst_103 = arith.constant dense<0.000000e+00> : vector<32x32xf32>
    %242 = tpu.matmul %238, %5, %cst_103 {dimension_numbers = #tpu.dot_dimension_numbers<[1], [0], [0], [1], [0, 0, 1, 1], [], []>} : vector<32x32xbf16>, vector<32x32xbf16>, vector<32x32xf32> -> vector<32x32xf32>
    %cst_104 = arith.constant dense<0.000000e+00> : vector<32x32xf32>
    %243 = tpu.matmul %239, %6, %cst_104 {dimension_numbers = #tpu.dot_dimension_numbers<[1], [0], [0], [1], [0, 0, 1, 1], [], []>} : vector<32x32xbf16>, vector<32x32xbf16>, vector<32x32xf32> -> vector<32x32xf32>
    %cst_105 = arith.constant dense<0.000000e+00> : vector<32x32xf32>
    %244 = tpu.matmul %241, %7, %cst_105 {dimension_numbers = #tpu.dot_dimension_numbers<[1], [0], [0], [1], [0, 0, 1, 1], [], []>} : vector<32x32xbf16>, vector<32x32xbf16>, vector<32x32xf32> -> vector<32x32xf32>
    %245 = arith.subf %242, %243 : vector<32x32xf32>
    %246 = arith.subf %244, %242 : vector<32x32xf32>
    %247 = arith.subf %246, %243 : vector<32x32xf32>
    %248 = arith.mulf %245, %245 : vector<32x32xf32>
    %249 = arith.mulf %247, %247 : vector<32x32xf32>
    %250 = arith.addf %248, %249 : vector<32x32xf32>
    %251 = vector.shape_cast %250 : vector<32x32xf32> to vector<1x32x32xf32>
    %cst_106 = arith.constant dense<0.000000e+00> : vector<1xf32>
    %252 = vector.multi_reduction <add>, %251, %cst_106 [1, 2] : vector<1x32x32xf32> to vector<1xf32>
    %253 = vector.shape_cast %252 : vector<1xf32> to vector<1x1x1xf32>
    %254 = vector.extract %253[0, 0, 0] : f32 from vector<1x1x1xf32>
    %255 = vector.broadcast %254 : f32 to vector<1x1xf32>
    %256 = arith.truncf %250 : vector<32x32xf32> to vector<32x32xbf16>
    %cst_107 = arith.constant dense<0.000000e+00> : vector<16x32xf32>
    %257 = tpu.matmul %8, %256, %cst_107 {dimension_numbers = #tpu.dot_dimension_numbers<[1], [0], [0], [1], [0, 0, 1, 1], [], []>} : vector<16x32xbf16>, vector<32x32xbf16>, vector<16x32xf32> -> vector<16x32xf32>
    %258 = arith.truncf %257 : vector<16x32xf32> to vector<16x32xbf16>
    %cst_108 = arith.constant dense<0.000000e+00> : vector<16x128xf32>
    %259 = tpu.matmul %258, %9, %cst_108 {dimension_numbers = #tpu.dot_dimension_numbers<[1], [0], [0], [1], [0, 0, 1, 1], [], []>} : vector<16x32xbf16>, vector<32x128xbf16>, vector<16x128xf32> -> vector<16x128xf32>
    %260 = arith.index_cast %arg0 : i32 to index
    %c3_109 = arith.constant 3 : index
    %261 = memref.load %arg5[%260, %c3_109] : memref<2x4xf32, #tpu.memory_space<smem>>
    %262 = vector.broadcast %261 : f32 to vector<1x1xf32>
    %263 = arith.divf %262, %255 : vector<1x1xf32>
    %264 = vector.broadcast %263 : vector<1x1xf32> to vector<16x128xf32>
    %265 = arith.mulf %259, %264 : vector<16x128xf32>
    %c0_110 = arith.constant 0 : index
    %c3_111 = arith.constant 3 : index
    %c0_112 = arith.constant 0 : index
    %c0_113 = arith.constant 0 : index
    %266 = vector.load %arg14[%c0_110, %c3_111, %c0_112, %c0_113] : memref<1x4x16x128xf32, #tpu.memory_space<vmem>>, vector<1x1x16x128xf32>
    %267 = vector.shape_cast %266 : vector<1x1x16x128xf32> to vector<16x128xf32>
    %268 = vector.shape_cast %265 : vector<16x128xf32> to vector<1x1x16x128xf32>
    tpu.vector_store %arg14[%c0_110, %c3_111, %c0_112, %c0_113], %268 {strides = array<i32>} : memref<1x4x16x128xf32, #tpu.memory_space<vmem>>, vector<1x1x16x128xf32>,
    %c16_i32_114 = arith.constant 16 : i32
    %269 = vector.broadcast %c16_i32_114 : i32 to vector<16x128xi32>
    %270 = arith.cmpi slt, %10, %269 : vector<16x128xi32>
    %cst_115 = arith.constant 0x7F800000 : f32
    %271 = vector.broadcast %cst_115 : f32 to vector<16x128xf32>
    %272 = arith.select %270, %265, %271 : vector<16x128xi1>, vector<16x128xf32>
    %273 = vector.shape_cast %272 : vector<16x128xf32> to vector<1x16x128xf32>
    %cst_116 = arith.constant dense<0x7F800000> : vector<1xf32>
    %274 = vector.multi_reduction <minimumf>, %273, %cst_116 [1, 2] : vector<1x16x128xf32> to vector<1xf32>
    %275 = vector.shape_cast %274 : vector<1xf32> to vector<1x1x1xf32>
    %276 = vector.extract %275[0, 0, 0] : f32 from vector<1x1x1xf32>
    %277 = vector.broadcast %276 : f32 to vector<1x1xf32>
    %278 = vector.shape_cast %265 : vector<16x128xf32> to vector<1x16x128xf32>
    %cst_117 = arith.constant dense<0xFF800000> : vector<1xf32>
    %279 = vector.multi_reduction <maximumf>, %278, %cst_117 [1, 2] : vector<1x16x128xf32> to vector<1xf32>
    %280 = vector.shape_cast %279 : vector<1xf32> to vector<1x1x1xf32>
    %281 = vector.extract %280[0, 0, 0] : f32 from vector<1x1x1xf32>
    %282 = vector.broadcast %281 : f32 to vector<1x1xf32>
    %283 = arith.minimumf %214, %277 : vector<1x1xf32>
    %284 = arith.maximumf %215, %282 : vector<1x1xf32>
    %285 = arith.subf %284, %283 : vector<1x1xf32>
    %cst_118 = arith.constant 1.000000e-30 : f32
    %286 = vector.broadcast %cst_118 : f32 to vector<1x1xf32>
    %287 = arith.maximumf %285, %286 : vector<1x1xf32>
    %cst_119 = arith.constant 1.000000e+00 : f32
    %288 = vector.broadcast %cst_119 : f32 to vector<1x1xf32>
    %289 = arith.divf %288, %287 : vector<1x1xf32>
    %c0_120 = arith.constant 0 : index
    %c0_121 = arith.constant 0 : index
    %c0_122 = arith.constant 0 : index
    %c0_123 = arith.constant 0 : index
    %290 = vector.load %arg14[%c0_120, %c0_121, %c0_122, %c0_123] : memref<1x4x16x128xf32, #tpu.memory_space<vmem>>, vector<1x1x16x128xf32>
    %291 = vector.shape_cast %290 : vector<1x1x16x128xf32> to vector<16x128xf32>
    %292 = vector.broadcast %283 : vector<1x1xf32> to vector<16x128xf32>
    %293 = arith.subf %291, %292 : vector<16x128xf32>
    %294 = vector.broadcast %289 : vector<1x1xf32> to vector<16x128xf32>
    %295 = arith.mulf %293, %294 : vector<16x128xf32>
    %c0_124 = arith.constant 0 : index
    %c0_125 = arith.constant 0 : index
    %c0_126 = arith.constant 0 : index
    %c0_127 = arith.constant 0 : index
    %296 = vector.load %arg14[%c0_124, %c0_125, %c0_126, %c0_127] : memref<1x4x16x128xf32, #tpu.memory_space<vmem>>, vector<1x1x16x128xf32>
    %297 = vector.shape_cast %296 : vector<1x1x16x128xf32> to vector<16x128xf32>
    %298 = vector.shape_cast %295 : vector<16x128xf32> to vector<1x1x16x128xf32>
    tpu.vector_store %arg14[%c0_124, %c0_125, %c0_126, %c0_127], %298 {strides = array<i32>} : memref<1x4x16x128xf32, #tpu.memory_space<vmem>>, vector<1x1x16x128xf32>,
    %c0_128 = arith.constant 0 : index
    %c1_129 = arith.constant 1 : index
    %c0_130 = arith.constant 0 : index
    %c0_131 = arith.constant 0 : index
    %299 = vector.load %arg14[%c0_128, %c1_129, %c0_130, %c0_131] : memref<1x4x16x128xf32, #tpu.memory_space<vmem>>, vector<1x1x16x128xf32>
    %300 = vector.shape_cast %299 : vector<1x1x16x128xf32> to vector<16x128xf32>
    %301 = vector.broadcast %283 : vector<1x1xf32> to vector<16x128xf32>
    %302 = arith.subf %300, %301 : vector<16x128xf32>
    %303 = vector.broadcast %289 : vector<1x1xf32> to vector<16x128xf32>
    %304 = arith.mulf %302, %303 : vector<16x128xf32>
    %c0_132 = arith.constant 0 : index
    %c1_133 = arith.constant 1 : index
    %c0_134 = arith.constant 0 : index
    %c0_135 = arith.constant 0 : index
    %305 = vector.load %arg14[%c0_132, %c1_133, %c0_134, %c0_135] : memref<1x4x16x128xf32, #tpu.memory_space<vmem>>, vector<1x1x16x128xf32>
    %306 = vector.shape_cast %305 : vector<1x1x16x128xf32> to vector<16x128xf32>
    %307 = vector.shape_cast %304 : vector<16x128xf32> to vector<1x1x16x128xf32>
    tpu.vector_store %arg14[%c0_132, %c1_133, %c0_134, %c0_135], %307 {strides = array<i32>} : memref<1x4x16x128xf32, #tpu.memory_space<vmem>>, vector<1x1x16x128xf32>,
    %c0_136 = arith.constant 0 : index
    %c2_137 = arith.constant 2 : index
    %c0_138 = arith.constant 0 : index
    %c0_139 = arith.constant 0 : index
    %308 = vector.load %arg14[%c0_136, %c2_137, %c0_138, %c0_139] : memref<1x4x16x128xf32, #tpu.memory_space<vmem>>, vector<1x1x16x128xf32>
    %309 = vector.shape_cast %308 : vector<1x1x16x128xf32> to vector<16x128xf32>
    %310 = vector.broadcast %283 : vector<1x1xf32> to vector<16x128xf32>
    %311 = arith.subf %309, %310 : vector<16x128xf32>
    %312 = vector.broadcast %289 : vector<1x1xf32> to vector<16x128xf32>
    %313 = arith.mulf %311, %312 : vector<16x128xf32>
    %c0_140 = arith.constant 0 : index
    %c2_141 = arith.constant 2 : index
    %c0_142 = arith.constant 0 : index
    %c0_143 = arith.constant 0 : index
    %314 = vector.load %arg14[%c0_140, %c2_141, %c0_142, %c0_143] : memref<1x4x16x128xf32, #tpu.memory_space<vmem>>, vector<1x1x16x128xf32>
    %315 = vector.shape_cast %314 : vector<1x1x16x128xf32> to vector<16x128xf32>
    %316 = vector.shape_cast %313 : vector<16x128xf32> to vector<1x1x16x128xf32>
    tpu.vector_store %arg14[%c0_140, %c2_141, %c0_142, %c0_143], %316 {strides = array<i32>} : memref<1x4x16x128xf32, #tpu.memory_space<vmem>>, vector<1x1x16x128xf32>,
    %c0_144 = arith.constant 0 : index
    %c3_145 = arith.constant 3 : index
    %c0_146 = arith.constant 0 : index
    %c0_147 = arith.constant 0 : index
    %317 = vector.load %arg14[%c0_144, %c3_145, %c0_146, %c0_147] : memref<1x4x16x128xf32, #tpu.memory_space<vmem>>, vector<1x1x16x128xf32>
    %318 = vector.shape_cast %317 : vector<1x1x16x128xf32> to vector<16x128xf32>
    %319 = vector.broadcast %283 : vector<1x1xf32> to vector<16x128xf32>
    %320 = arith.subf %318, %319 : vector<16x128xf32>
    %321 = vector.broadcast %289 : vector<1x1xf32> to vector<16x128xf32>
    %322 = arith.mulf %320, %321 : vector<16x128xf32>
    %c0_148 = arith.constant 0 : index
    %c3_149 = arith.constant 3 : index
    %c0_150 = arith.constant 0 : index
    %c0_151 = arith.constant 0 : index
    %323 = vector.load %arg14[%c0_148, %c3_149, %c0_150, %c0_151] : memref<1x4x16x128xf32, #tpu.memory_space<vmem>>, vector<1x1x16x128xf32>
    %324 = vector.shape_cast %323 : vector<1x1x16x128xf32> to vector<16x128xf32>
    %325 = vector.shape_cast %322 : vector<16x128xf32> to vector<1x1x16x128xf32>
    tpu.vector_store %arg14[%c0_148, %c3_149, %c0_150, %c0_151], %325 {strides = array<i32>} : memref<1x4x16x128xf32, #tpu.memory_space<vmem>>, vector<1x1x16x128xf32>,
    return
  }
  func.func @transform_0(%arg0: i32) -> (i32, i32) {
    %c0_i32 = arith.constant 0 : i32
    %c0_i32_0 = arith.constant 0 : i32
    %c0_i32_1 = arith.constant 0 : i32
    return %c0_i32, %c0_i32_0 : i32, i32
  }
  func.func @transform_1(%arg0: i32) -> (i32, i32) {
    %c0_i32 = arith.constant 0 : i32
    %c0_i32_0 = arith.constant 0 : i32
    %c0_i32_1 = arith.constant 0 : i32
    return %c0_i32, %c0_i32_0 : i32, i32
  }
  func.func @transform_2(%arg0: i32) -> (i32, i32, i32, i32) {
    %c0_i32 = arith.constant 0 : i32
    %c0_i32_0 = arith.constant 0 : i32
    %c0_i32_1 = arith.constant 0 : i32
    %c0_i32_2 = arith.constant 0 : i32
    return %arg0, %c0_i32, %c0_i32_0, %c0_i32_1 : i32, i32, i32, i32
  }
  func.func @transform_3(%arg0: i32) -> (i32, i32, i32, i32) {
    %c0_i32 = arith.constant 0 : i32
    %c0_i32_0 = arith.constant 0 : i32
    %c0_i32_1 = arith.constant 0 : i32
    %c0_i32_2 = arith.constant 0 : i32
    return %arg0, %c0_i32, %c0_i32_0, %c0_i32_1 : i32, i32, i32, i32
  }
  func.func @transform_4(%arg0: i32) -> (i32, i32) {
    %c0_i32 = arith.constant 0 : i32
    %c0_i32_0 = arith.constant 0 : i32
    %c0_i32_1 = arith.constant 0 : i32
    return %c0_i32, %c0_i32_0 : i32, i32
  }
  func.func @transform_5(%arg0: i32) -> (i32, i32) {
    %c0_i32 = arith.constant 0 : i32
    %c0_i32_0 = arith.constant 0 : i32
    %c0_i32_1 = arith.constant 0 : i32
    return %c0_i32, %c0_i32_0 : i32, i32
  }
  func.func @transform_6(%arg0: i32) -> (i32, i32) {
    %c0_i32 = arith.constant 0 : i32
    %c0_i32_0 = arith.constant 0 : i32
    %c0_i32_1 = arith.constant 0 : i32
    return %c0_i32, %c0_i32_0 : i32, i32
  }
  func.func @transform_7(%arg0: i32) -> (i32, i32) {
    %c0_i32 = arith.constant 0 : i32
    %c0_i32_0 = arith.constant 0 : i32
    %c0_i32_1 = arith.constant 0 : i32
    return %c0_i32, %c0_i32_0 : i32, i32
  }
  func.func @transform_8(%arg0: i32) -> (i32, i32) {
    %c0_i32 = arith.constant 0 : i32
    %c0_i32_0 = arith.constant 0 : i32
    %c0_i32_1 = arith.constant 0 : i32
    return %c0_i32, %c0_i32_0 : i32, i32
  }
  func.func @transform_9(%arg0: i32) -> (i32, i32) {
    %c0_i32 = arith.constant 0 : i32
    %c0_i32_0 = arith.constant 0 : i32
    %c0_i32_1 = arith.constant 0 : i32
    return %c0_i32, %c0_i32_0 : i32, i32
  }
  func.func @transform_10(%arg0: i32) -> (i32, i32) {
    %c0_i32 = arith.constant 0 : i32
    %c0_i32_0 = arith.constant 0 : i32
    %c0_i32_1 = arith.constant 0 : i32
    return %c0_i32, %c0_i32_0 : i32, i32
  }
  func.func @transform_11(%arg0: i32) -> (i32, i32) {
    %c0_i32 = arith.constant 0 : i32
    %c0_i32_0 = arith.constant 0 : i32
    %c0_i32_1 = arith.constant 0 : i32
    return %c0_i32, %c0_i32_0 : i32, i32
  }
  func.func @transform_12(%arg0: i32) -> (i32, i32) {
    %c0_i32 = arith.constant 0 : i32
    %c0_i32_0 = arith.constant 0 : i32
    %c0_i32_1 = arith.constant 0 : i32
    return %c0_i32, %c0_i32_0 : i32, i32
  }
  func.func @transform_13(%arg0: i32) -> (i32, i32, i32, i32) {
    %c0_i32 = arith.constant 0 : i32
    %c0_i32_0 = arith.constant 0 : i32
    %c0_i32_1 = arith.constant 0 : i32
    %c0_i32_2 = arith.constant 0 : i32
    return %arg0, %c0_i32, %c0_i32_0, %c0_i32_1 : i32, i32, i32, i32
  }
}

module attributes {stable_mosaic.version = 11 : i64} {
  func.func @_fused_psf_kernel(%arg0: i32, %arg1: memref<32x32xf32, #tpu.memory_space<vmem>>, %arg2: memref<32x32xf32, #tpu.memory_space<vmem>>, %arg3: memref<1x4x32x32xbf16, #tpu.memory_space<vmem>>, %arg4: memref<1x4x32x32xbf16, #tpu.memory_space<vmem>>, %arg5: memref<2x4xf32, #tpu.memory_space<smem>>, %arg6: memref<32x32xbf16, #tpu.memory_space<vmem>>, %arg7: memref<32x32xbf16, #tpu.memory_space<vmem>>, %arg8: memref<32x32xbf16, #tpu.memory_space<vmem>>, %arg9: memref<32x32xbf16, #tpu.memory_space<vmem>>, %arg10: memref<32x32xbf16, #tpu.memory_space<vmem>>, %arg11: memref<32x32xbf16, #tpu.memory_space<vmem>>, %arg12: memref<16x32xbf16, #tpu.memory_space<vmem>>, %arg13: memref<32x128xbf16, #tpu.memory_space<vmem>>, %arg14: memref<1x4x16x128xf32, #tpu.memory_space<vmem>>) attributes {dimension_semantics = [#tpu.dimension_semantics<parallel>], iteration_bounds = array<i64: 2>, scalar_prefetch = 0 : i64, scratch_operands = 0 : i64, tpu.core_type = #tpu.core_type<tc>, window_params = [{pipeline_mode = #tpu.pipeline_mode<synchronous>, transform_indices = @transform_0, window_bounds = array<i64: 32, 32>}, {pipeline_mode = #tpu.pipeline_mode<synchronous>, transform_indices = @transform_1, window_bounds = array<i64: 32, 32>}, {transform_indices = @transform_2, window_bounds = array<i64: 1, 4, 32, 32>}, {transform_indices = @transform_3, window_bounds = array<i64: 1, 4, 32, 32>}, {transform_indices = @transform_4, window_bounds = array<i64: 2, 4>}, {pipeline_mode = #tpu.pipeline_mode<synchronous>, transform_indices = @transform_5, window_bounds = array<i64: 32, 32>}, {pipeline_mode = #tpu.pipeline_mode<synchronous>, transform_indices = @transform_6, window_bounds = array<i64: 32, 32>}, {pipeline_mode = #tpu.pipeline_mode<synchronous>, transform_indices = @transform_7, window_bounds = array<i64: 32, 32>}, {pipeline_mode = #tpu.pipeline_mode<synchronous>, transform_indices = @transform_8, window_bounds = array<i64: 32, 32>}, {pipeline_mode = #tpu.pipeline_mode<synchronous>, transform_indices = @transform_9, window_bounds = array<i64: 32, 32>}, {pipeline_mode = #tpu.pipeline_mode<synchronous>, transform_indices = @transform_10, window_bounds = array<i64: 32, 32>}, {pipeline_mode = #tpu.pipeline_mode<synchronous>, transform_indices = @transform_11, window_bounds = array<i64: 16, 32>}, {pipeline_mode = #tpu.pipeline_mode<synchronous>, transform_indices = @transform_12, window_bounds = array<i64: 32, 128>}, {transform_indices = @transform_13, window_bounds = array<i64: 1, 4, 16, 128>}]} {
    %c0 = arith.constant 0 : index
    %c0_0 = arith.constant 0 : index
    %0 = vector.load %arg1[%c0, %c0_0] : memref<32x32xf32, #tpu.memory_space<vmem>>, vector<32x32xf32>
    %c0_1 = arith.constant 0 : index
    %c0_2 = arith.constant 0 : index
    %1 = vector.load %arg2[%c0_1, %c0_2] : memref<32x32xf32, #tpu.memory_space<vmem>>, vector<32x32xf32>
    %c0_3 = arith.constant 0 : index
    %c0_4 = arith.constant 0 : index
    %2 = vector.load %arg6[%c0_3, %c0_4] : memref<32x32xbf16, #tpu.memory_space<vmem>>, vector<32x32xbf16>
    %c0_5 = arith.constant 0 : index
    %c0_6 = arith.constant 0 : index
    %3 = vector.load %arg7[%c0_5, %c0_6] : memref<32x32xbf16, #tpu.memory_space<vmem>>, vector<32x32xbf16>
    %c0_7 = arith.constant 0 : index
    %c0_8 = arith.constant 0 : index
    %4 = vector.load %arg8[%c0_7, %c0_8] : memref<32x32xbf16, #tpu.memory_space<vmem>>, vector<32x32xbf16>
    %c0_9 = arith.constant 0 : index
    %c0_10 = arith.constant 0 : index
    %5 = vector.load %arg9[%c0_9, %c0_10] : memref<32x32xbf16, #tpu.memory_space<vmem>>, vector<32x32xbf16>
    %c0_11 = arith.constant 0 : index
    %c0_12 = arith.constant 0 : index
    %6 = vector.load %arg10[%c0_11, %c0_12] : memref<32x32xbf16, #tpu.memory_space<vmem>>, vector<32x32xbf16>
    %c0_13 = arith.constant 0 : index
    %c0_14 = arith.constant 0 : index
    %7 = vector.load %arg11[%c0_13, %c0_14] : memref<32x32xbf16, #tpu.memory_space<vmem>>, vector<32x32xbf16>
    %c0_15 = arith.constant 0 : index
    %c0_16 = arith.constant 0 : index
    %8 = vector.load %arg12[%c0_15, %c0_16] : memref<16x32xbf16, #tpu.memory_space<vmem>>, vector<16x32xbf16>
    %c0_17 = arith.constant 0 : index
    %c0_18 = arith.constant 0 : index
    %9 = vector.load %arg13[%c0_17, %c0_18] : memref<32x128xbf16, #tpu.memory_space<vmem>>, vector<32x128xbf16>
    %10 = tpu.iota {dimensions = array<i32: 1>} : vector<16x128xi32>
    %c0_19 = arith.constant 0 : index
    %c0_20 = arith.constant 0 : index
    %c0_21 = arith.constant 0 : index
    %c0_22 = arith.constant 0 : index
    %11 = vector.load %arg3[%c0_19, %c0_20, %c0_21, %c0_22] : memref<1x4x32x32xbf16, #tpu.memory_space<vmem>>, vector<1x1x32x32xbf16>
    %12 = vector.shape_cast %11 : vector<1x1x32x32xbf16> to vector<32x32xbf16>
    %13 = arith.extf %12 : vector<32x32xbf16> to vector<32x32xf32>
    %c0_23 = arith.constant 0 : index
    %c0_24 = arith.constant 0 : index
    %c0_25 = arith.constant 0 : index
    %c0_26 = arith.constant 0 : index
    %14 = vector.load %arg4[%c0_23, %c0_24, %c0_25, %c0_26] : memref<1x4x32x32xbf16, #tpu.memory_space<vmem>>, vector<1x1x32x32xbf16>
    %15 = vector.shape_cast %14 : vector<1x1x32x32xbf16> to vector<32x32xbf16>
    %16 = arith.extf %15 : vector<32x32xbf16> to vector<32x32xf32>
    %17 = arith.mulf %0, %13 : vector<32x32xf32>
    %18 = arith.mulf %1, %16 : vector<32x32xf32>
    %19 = arith.subf %17, %18 : vector<32x32xf32>
    %20 = arith.mulf %0, %16 : vector<32x32xf32>
    %21 = arith.mulf %1, %13 : vector<32x32xf32>
    %22 = arith.addf %20, %21 : vector<32x32xf32>
    %23 = arith.truncf %19 : vector<32x32xf32> to vector<32x32xbf16>
    %24 = arith.truncf %22 : vector<32x32xf32> to vector<32x32xbf16>
    %25 = arith.addf %19, %22 : vector<32x32xf32>
    %26 = arith.truncf %25 : vector<32x32xf32> to vector<32x32xbf16>
    %cst = arith.constant dense<0.000000e+00> : vector<32x32xf32>
    %27 = tpu.matmul %2, %23, %cst {dimension_numbers = #tpu.dot_dimension_numbers<[1], [0], [0], [1], [0, 0, 1, 1], [], []>} : vector<32x32xbf16>, vector<32x32xbf16>, vector<32x32xf32> -> vector<32x32xf32>
    %cst_27 = arith.constant dense<0.000000e+00> : vector<32x32xf32>
    %28 = tpu.matmul %3, %24, %cst_27 {dimension_numbers = #tpu.dot_dimension_numbers<[1], [0], [0], [1], [0, 0, 1, 1], [], []>} : vector<32x32xbf16>, vector<32x32xbf16>, vector<32x32xf32> -> vector<32x32xf32>
    %cst_28 = arith.constant dense<0.000000e+00> : vector<32x32xf32>
    %29 = tpu.matmul %4, %26, %cst_28 {dimension_numbers = #tpu.dot_dimension_numbers<[1], [0], [0], [1], [0, 0, 1, 1], [], []>} : vector<32x32xbf16>, vector<32x32xbf16>, vector<32x32xf32> -> vector<32x32xf32>
    %30 = arith.subf %27, %28 : vector<32x32xf32>
    %31 = arith.subf %29, %27 : vector<32x32xf32>
    %32 = arith.subf %31, %28 : vector<32x32xf32>
    %33 = arith.truncf %30 : vector<32x32xf32> to vector<32x32xbf16>
    %34 = arith.truncf %32 : vector<32x32xf32> to vector<32x32xbf16>
    %35 = arith.addf %30, %32 : vector<32x32xf32>
    %36 = arith.truncf %35 : vector<32x32xf32> to vector<32x32xbf16>
    %cst_29 = arith.constant dense<0.000000e+00> : vector<32x32xf32>
    %37 = tpu.matmul %33, %5, %cst_29 {dimension_numbers = #tpu.dot_dimension_numbers<[1], [0], [0], [1], [0, 0, 1, 1], [], []>} : vector<32x32xbf16>, vector<32x32xbf16>, vector<32x32xf32> -> vector<32x32xf32>
    %cst_30 = arith.constant dense<0.000000e+00> : vector<32x32xf32>
    %38 = tpu.matmul %34, %6, %cst_30 {dimension_numbers = #tpu.dot_dimension_numbers<[1], [0], [0], [1], [0, 0, 1, 1], [], []>} : vector<32x32xbf16>, vector<32x32xbf16>, vector<32x32xf32> -> vector<32x32xf32>
    %cst_31 = arith.constant dense<0.000000e+00> : vector<32x32xf32>
    %39 = tpu.matmul %36, %7, %cst_31 {dimension_numbers = #tpu.dot_dimension_numbers<[1], [0], [0], [1], [0, 0, 1, 1], [], []>} : vector<32x32xbf16>, vector<32x32xbf16>, vector<32x32xf32> -> vector<32x32xf32>
    %40 = arith.subf %37, %38 : vector<32x32xf32>
    %41 = arith.subf %39, %37 : vector<32x32xf32>
    %42 = arith.subf %41, %38 : vector<32x32xf32>
    %43 = arith.mulf %40, %40 : vector<32x32xf32>
    %44 = arith.mulf %42, %42 : vector<32x32xf32>
    %45 = arith.addf %43, %44 : vector<32x32xf32>
    %46 = vector.shape_cast %45 : vector<32x32xf32> to vector<1x32x32xf32>
    %cst_32 = arith.constant dense<0.000000e+00> : vector<1xf32>
    %47 = vector.multi_reduction <add>, %46, %cst_32 [1, 2] : vector<1x32x32xf32> to vector<1xf32>
    %48 = vector.shape_cast %47 : vector<1xf32> to vector<1x1x1xf32>
    %49 = vector.extract %48[0, 0, 0] : f32 from vector<1x1x1xf32>
    %50 = vector.broadcast %49 : f32 to vector<1x1xf32>
    %51 = arith.truncf %45 : vector<32x32xf32> to vector<32x32xbf16>
    %cst_33 = arith.constant dense<0.000000e+00> : vector<16x32xf32>
    %52 = tpu.matmul %8, %51, %cst_33 {dimension_numbers = #tpu.dot_dimension_numbers<[1], [0], [0], [1], [0, 0, 1, 1], [], []>} : vector<16x32xbf16>, vector<32x32xbf16>, vector<16x32xf32> -> vector<16x32xf32>
    %53 = arith.truncf %52 : vector<16x32xf32> to vector<16x32xbf16>
    %cst_34 = arith.constant dense<0.000000e+00> : vector<16x128xf32>
    %54 = tpu.matmul %53, %9, %cst_34 {dimension_numbers = #tpu.dot_dimension_numbers<[1], [0], [0], [1], [0, 0, 1, 1], [], []>} : vector<16x32xbf16>, vector<32x128xbf16>, vector<16x128xf32> -> vector<16x128xf32>
    %55 = arith.index_cast %arg0 : i32 to index
    %c0_35 = arith.constant 0 : index
    %56 = memref.load %arg5[%55, %c0_35] : memref<2x4xf32, #tpu.memory_space<smem>>
    %57 = vector.broadcast %56 : f32 to vector<1x1xf32>
    %58 = arith.divf %57, %50 : vector<1x1xf32>
    %59 = vector.broadcast %58 : vector<1x1xf32> to vector<16x128xf32>
    %60 = arith.mulf %54, %59 : vector<16x128xf32>
    %c0_36 = arith.constant 0 : index
    %c0_37 = arith.constant 0 : index
    %c0_38 = arith.constant 0 : index
    %c0_39 = arith.constant 0 : index
    %61 = vector.load %arg14[%c0_36, %c0_37, %c0_38, %c0_39] : memref<1x4x16x128xf32, #tpu.memory_space<vmem>>, vector<1x1x16x128xf32>
    %62 = vector.shape_cast %61 : vector<1x1x16x128xf32> to vector<16x128xf32>
    %63 = vector.shape_cast %60 : vector<16x128xf32> to vector<1x1x16x128xf32>
    tpu.vector_store %arg14[%c0_36, %c0_37, %c0_38, %c0_39], %63 {strides = array<i32>} : memref<1x4x16x128xf32, #tpu.memory_space<vmem>>, vector<1x1x16x128xf32>,
    %c16_i32 = arith.constant 16 : i32
    %64 = vector.broadcast %c16_i32 : i32 to vector<16x128xi32>
    %65 = arith.cmpi slt, %10, %64 : vector<16x128xi32>
    %cst_40 = arith.constant 0x7F800000 : f32
    %66 = vector.broadcast %cst_40 : f32 to vector<16x128xf32>
    %67 = arith.select %65, %60, %66 : vector<16x128xi1>, vector<16x128xf32>
    %68 = vector.shape_cast %67 : vector<16x128xf32> to vector<1x16x128xf32>
    %cst_41 = arith.constant dense<0x7F800000> : vector<1xf32>
    %69 = vector.multi_reduction <minimumf>, %68, %cst_41 [1, 2] : vector<1x16x128xf32> to vector<1xf32>
    %70 = vector.shape_cast %69 : vector<1xf32> to vector<1x1x1xf32>
    %71 = vector.extract %70[0, 0, 0] : f32 from vector<1x1x1xf32>
    %72 = vector.broadcast %71 : f32 to vector<1x1xf32>
    %73 = vector.shape_cast %60 : vector<16x128xf32> to vector<1x16x128xf32>
    %cst_42 = arith.constant dense<0xFF800000> : vector<1xf32>
    %74 = vector.multi_reduction <maximumf>, %73, %cst_42 [1, 2] : vector<1x16x128xf32> to vector<1xf32>
    %75 = vector.shape_cast %74 : vector<1xf32> to vector<1x1x1xf32>
    %76 = vector.extract %75[0, 0, 0] : f32 from vector<1x1x1xf32>
    %77 = vector.broadcast %76 : f32 to vector<1x1xf32>
    %c0_43 = arith.constant 0 : index
    %c1 = arith.constant 1 : index
    %c0_44 = arith.constant 0 : index
    %c0_45 = arith.constant 0 : index
    %78 = vector.load %arg3[%c0_43, %c1, %c0_44, %c0_45] : memref<1x4x32x32xbf16, #tpu.memory_space<vmem>>, vector<1x1x32x32xbf16>
    %79 = vector.shape_cast %78 : vector<1x1x32x32xbf16> to vector<32x32xbf16>
    %80 = arith.extf %79 : vector<32x32xbf16> to vector<32x32xf32>
    %c0_46 = arith.constant 0 : index
    %c1_47 = arith.constant 1 : index
    %c0_48 = arith.constant 0 : index
    %c0_49 = arith.constant 0 : index
    %81 = vector.load %arg4[%c0_46, %c1_47, %c0_48, %c0_49] : memref<1x4x32x32xbf16, #tpu.memory_space<vmem>>, vector<1x1x32x32xbf16>
    %82 = vector.shape_cast %81 : vector<1x1x32x32xbf16> to vector<32x32xbf16>
    %83 = arith.extf %82 : vector<32x32xbf16> to vector<32x32xf32>
    %84 = arith.mulf %0, %80 : vector<32x32xf32>
    %85 = arith.mulf %1, %83 : vector<32x32xf32>
    %86 = arith.subf %84, %85 : vector<32x32xf32>
    %87 = arith.mulf %0, %83 : vector<32x32xf32>
    %88 = arith.mulf %1, %80 : vector<32x32xf32>
    %89 = arith.addf %87, %88 : vector<32x32xf32>
    %90 = arith.truncf %86 : vector<32x32xf32> to vector<32x32xbf16>
    %91 = arith.truncf %89 : vector<32x32xf32> to vector<32x32xbf16>
    %92 = arith.addf %86, %89 : vector<32x32xf32>
    %93 = arith.truncf %92 : vector<32x32xf32> to vector<32x32xbf16>
    %cst_50 = arith.constant dense<0.000000e+00> : vector<32x32xf32>
    %94 = tpu.matmul %2, %90, %cst_50 {dimension_numbers = #tpu.dot_dimension_numbers<[1], [0], [0], [1], [0, 0, 1, 1], [], []>} : vector<32x32xbf16>, vector<32x32xbf16>, vector<32x32xf32> -> vector<32x32xf32>
    %cst_51 = arith.constant dense<0.000000e+00> : vector<32x32xf32>
    %95 = tpu.matmul %3, %91, %cst_51 {dimension_numbers = #tpu.dot_dimension_numbers<[1], [0], [0], [1], [0, 0, 1, 1], [], []>} : vector<32x32xbf16>, vector<32x32xbf16>, vector<32x32xf32> -> vector<32x32xf32>
    %cst_52 = arith.constant dense<0.000000e+00> : vector<32x32xf32>
    %96 = tpu.matmul %4, %93, %cst_52 {dimension_numbers = #tpu.dot_dimension_numbers<[1], [0], [0], [1], [0, 0, 1, 1], [], []>} : vector<32x32xbf16>, vector<32x32xbf16>, vector<32x32xf32> -> vector<32x32xf32>
    %97 = arith.subf %94, %95 : vector<32x32xf32>
    %98 = arith.subf %96, %94 : vector<32x32xf32>
    %99 = arith.subf %98, %95 : vector<32x32xf32>
    %100 = arith.truncf %97 : vector<32x32xf32> to vector<32x32xbf16>
    %101 = arith.truncf %99 : vector<32x32xf32> to vector<32x32xbf16>
    %102 = arith.addf %97, %99 : vector<32x32xf32>
    %103 = arith.truncf %102 : vector<32x32xf32> to vector<32x32xbf16>
    %cst_53 = arith.constant dense<0.000000e+00> : vector<32x32xf32>
    %104 = tpu.matmul %100, %5, %cst_53 {dimension_numbers = #tpu.dot_dimension_numbers<[1], [0], [0], [1], [0, 0, 1, 1], [], []>} : vector<32x32xbf16>, vector<32x32xbf16>, vector<32x32xf32> -> vector<32x32xf32>
    %cst_54 = arith.constant dense<0.000000e+00> : vector<32x32xf32>
    %105 = tpu.matmul %101, %6, %cst_54 {dimension_numbers = #tpu.dot_dimension_numbers<[1], [0], [0], [1], [0, 0, 1, 1], [], []>} : vector<32x32xbf16>, vector<32x32xbf16>, vector<32x32xf32> -> vector<32x32xf32>
    %cst_55 = arith.constant dense<0.000000e+00> : vector<32x32xf32>
    %106 = tpu.matmul %103, %7, %cst_55 {dimension_numbers = #tpu.dot_dimension_numbers<[1], [0], [0], [1], [0, 0, 1, 1], [], []>} : vector<32x32xbf16>, vector<32x32xbf16>, vector<32x32xf32> -> vector<32x32xf32>
    %107 = arith.subf %104, %105 : vector<32x32xf32>
    %108 = arith.subf %106, %104 : vector<32x32xf32>
    %109 = arith.subf %108, %105 : vector<32x32xf32>
    %110 = arith.mulf %107, %107 : vector<32x32xf32>
    %111 = arith.mulf %109, %109 : vector<32x32xf32>
    %112 = arith.addf %110, %111 : vector<32x32xf32>
    %113 = vector.shape_cast %112 : vector<32x32xf32> to vector<1x32x32xf32>
    %cst_56 = arith.constant dense<0.000000e+00> : vector<1xf32>
    %114 = vector.multi_reduction <add>, %113, %cst_56 [1, 2] : vector<1x32x32xf32> to vector<1xf32>
    %115 = vector.shape_cast %114 : vector<1xf32> to vector<1x1x1xf32>
    %116 = vector.extract %115[0, 0, 0] : f32 from vector<1x1x1xf32>
    %117 = vector.broadcast %116 : f32 to vector<1x1xf32>
    %118 = arith.truncf %112 : vector<32x32xf32> to vector<32x32xbf16>
    %cst_57 = arith.constant dense<0.000000e+00> : vector<16x32xf32>
    %119 = tpu.matmul %8, %118, %cst_57 {dimension_numbers = #tpu.dot_dimension_numbers<[1], [0], [0], [1], [0, 0, 1, 1], [], []>} : vector<16x32xbf16>, vector<32x32xbf16>, vector<16x32xf32> -> vector<16x32xf32>
    %120 = arith.truncf %119 : vector<16x32xf32> to vector<16x32xbf16>
    %cst_58 = arith.constant dense<0.000000e+00> : vector<16x128xf32>
    %121 = tpu.matmul %120, %9, %cst_58 {dimension_numbers = #tpu.dot_dimension_numbers<[1], [0], [0], [1], [0, 0, 1, 1], [], []>} : vector<16x32xbf16>, vector<32x128xbf16>, vector<16x128xf32> -> vector<16x128xf32>
    %122 = arith.index_cast %arg0 : i32 to index
    %c1_59 = arith.constant 1 : index
    %123 = memref.load %arg5[%122, %c1_59] : memref<2x4xf32, #tpu.memory_space<smem>>
    %124 = vector.broadcast %123 : f32 to vector<1x1xf32>
    %125 = arith.divf %124, %117 : vector<1x1xf32>
    %126 = vector.broadcast %125 : vector<1x1xf32> to vector<16x128xf32>
    %127 = arith.mulf %121, %126 : vector<16x128xf32>
    %c0_60 = arith.constant 0 : index
    %c1_61 = arith.constant 1 : index
    %c0_62 = arith.constant 0 : index
    %c0_63 = arith.constant 0 : index
    %128 = vector.load %arg14[%c0_60, %c1_61, %c0_62, %c0_63] : memref<1x4x16x128xf32, #tpu.memory_space<vmem>>, vector<1x1x16x128xf32>
    %129 = vector.shape_cast %128 : vector<1x1x16x128xf32> to vector<16x128xf32>
    %130 = vector.shape_cast %127 : vector<16x128xf32> to vector<1x1x16x128xf32>
    tpu.vector_store %arg14[%c0_60, %c1_61, %c0_62, %c0_63], %130 {strides = array<i32>} : memref<1x4x16x128xf32, #tpu.memory_space<vmem>>, vector<1x1x16x128xf32>,
    %c16_i32_64 = arith.constant 16 : i32
    %131 = vector.broadcast %c16_i32_64 : i32 to vector<16x128xi32>
    %132 = arith.cmpi slt, %10, %131 : vector<16x128xi32>
    %cst_65 = arith.constant 0x7F800000 : f32
    %133 = vector.broadcast %cst_65 : f32 to vector<16x128xf32>
    %134 = arith.select %132, %127, %133 : vector<16x128xi1>, vector<16x128xf32>
    %135 = vector.shape_cast %134 : vector<16x128xf32> to vector<1x16x128xf32>
    %cst_66 = arith.constant dense<0x7F800000> : vector<1xf32>
    %136 = vector.multi_reduction <minimumf>, %135, %cst_66 [1, 2] : vector<1x16x128xf32> to vector<1xf32>
    %137 = vector.shape_cast %136 : vector<1xf32> to vector<1x1x1xf32>
    %138 = vector.extract %137[0, 0, 0] : f32 from vector<1x1x1xf32>
    %139 = vector.broadcast %138 : f32 to vector<1x1xf32>
    %140 = vector.shape_cast %127 : vector<16x128xf32> to vector<1x16x128xf32>
    %cst_67 = arith.constant dense<0xFF800000> : vector<1xf32>
    %141 = vector.multi_reduction <maximumf>, %140, %cst_67 [1, 2] : vector<1x16x128xf32> to vector<1xf32>
    %142 = vector.shape_cast %141 : vector<1xf32> to vector<1x1x1xf32>
    %143 = vector.extract %142[0, 0, 0] : f32 from vector<1x1x1xf32>
    %144 = vector.broadcast %143 : f32 to vector<1x1xf32>
    %145 = arith.minimumf %72, %139 : vector<1x1xf32>
    %146 = arith.maximumf %77, %144 : vector<1x1xf32>
    %c0_68 = arith.constant 0 : index
    %c2 = arith.constant 2 : index
    %c0_69 = arith.constant 0 : index
    %c0_70 = arith.constant 0 : index
    %147 = vector.load %arg3[%c0_68, %c2, %c0_69, %c0_70] : memref<1x4x32x32xbf16, #tpu.memory_space<vmem>>, vector<1x1x32x32xbf16>
    %148 = vector.shape_cast %147 : vector<1x1x32x32xbf16> to vector<32x32xbf16>
    %149 = arith.extf %148 : vector<32x32xbf16> to vector<32x32xf32>
    %c0_71 = arith.constant 0 : index
    %c2_72 = arith.constant 2 : index
    %c0_73 = arith.constant 0 : index
    %c0_74 = arith.constant 0 : index
    %150 = vector.load %arg4[%c0_71, %c2_72, %c0_73, %c0_74] : memref<1x4x32x32xbf16, #tpu.memory_space<vmem>>, vector<1x1x32x32xbf16>
    %151 = vector.shape_cast %150 : vector<1x1x32x32xbf16> to vector<32x32xbf16>
    %152 = arith.extf %151 : vector<32x32xbf16> to vector<32x32xf32>
    %153 = arith.mulf %0, %149 : vector<32x32xf32>
    %154 = arith.mulf %1, %152 : vector<32x32xf32>
    %155 = arith.subf %153, %154 : vector<32x32xf32>
    %156 = arith.mulf %0, %152 : vector<32x32xf32>
    %157 = arith.mulf %1, %149 : vector<32x32xf32>
    %158 = arith.addf %156, %157 : vector<32x32xf32>
    %159 = arith.truncf %155 : vector<32x32xf32> to vector<32x32xbf16>
    %160 = arith.truncf %158 : vector<32x32xf32> to vector<32x32xbf16>
    %161 = arith.addf %155, %158 : vector<32x32xf32>
    %162 = arith.truncf %161 : vector<32x32xf32> to vector<32x32xbf16>
    %cst_75 = arith.constant dense<0.000000e+00> : vector<32x32xf32>
    %163 = tpu.matmul %2, %159, %cst_75 {dimension_numbers = #tpu.dot_dimension_numbers<[1], [0], [0], [1], [0, 0, 1, 1], [], []>} : vector<32x32xbf16>, vector<32x32xbf16>, vector<32x32xf32> -> vector<32x32xf32>
    %cst_76 = arith.constant dense<0.000000e+00> : vector<32x32xf32>
    %164 = tpu.matmul %3, %160, %cst_76 {dimension_numbers = #tpu.dot_dimension_numbers<[1], [0], [0], [1], [0, 0, 1, 1], [], []>} : vector<32x32xbf16>, vector<32x32xbf16>, vector<32x32xf32> -> vector<32x32xf32>
    %cst_77 = arith.constant dense<0.000000e+00> : vector<32x32xf32>
    %165 = tpu.matmul %4, %162, %cst_77 {dimension_numbers = #tpu.dot_dimension_numbers<[1], [0], [0], [1], [0, 0, 1, 1], [], []>} : vector<32x32xbf16>, vector<32x32xbf16>, vector<32x32xf32> -> vector<32x32xf32>
    %166 = arith.subf %163, %164 : vector<32x32xf32>
    %167 = arith.subf %165, %163 : vector<32x32xf32>
    %168 = arith.subf %167, %164 : vector<32x32xf32>
    %169 = arith.truncf %166 : vector<32x32xf32> to vector<32x32xbf16>
    %170 = arith.truncf %168 : vector<32x32xf32> to vector<32x32xbf16>
    %171 = arith.addf %166, %168 : vector<32x32xf32>
    %172 = arith.truncf %171 : vector<32x32xf32> to vector<32x32xbf16>
    %cst_78 = arith.constant dense<0.000000e+00> : vector<32x32xf32>
    %173 = tpu.matmul %169, %5, %cst_78 {dimension_numbers = #tpu.dot_dimension_numbers<[1], [0], [0], [1], [0, 0, 1, 1], [], []>} : vector<32x32xbf16>, vector<32x32xbf16>, vector<32x32xf32> -> vector<32x32xf32>
    %cst_79 = arith.constant dense<0.000000e+00> : vector<32x32xf32>
    %174 = tpu.matmul %170, %6, %cst_79 {dimension_numbers = #tpu.dot_dimension_numbers<[1], [0], [0], [1], [0, 0, 1, 1], [], []>} : vector<32x32xbf16>, vector<32x32xbf16>, vector<32x32xf32> -> vector<32x32xf32>
    %cst_80 = arith.constant dense<0.000000e+00> : vector<32x32xf32>
    %175 = tpu.matmul %172, %7, %cst_80 {dimension_numbers = #tpu.dot_dimension_numbers<[1], [0], [0], [1], [0, 0, 1, 1], [], []>} : vector<32x32xbf16>, vector<32x32xbf16>, vector<32x32xf32> -> vector<32x32xf32>
    %176 = arith.subf %173, %174 : vector<32x32xf32>
    %177 = arith.subf %175, %173 : vector<32x32xf32>
    %178 = arith.subf %177, %174 : vector<32x32xf32>
    %179 = arith.mulf %176, %176 : vector<32x32xf32>
    %180 = arith.mulf %178, %178 : vector<32x32xf32>
    %181 = arith.addf %179, %180 : vector<32x32xf32>
    %182 = vector.shape_cast %181 : vector<32x32xf32> to vector<1x32x32xf32>
    %cst_81 = arith.constant dense<0.000000e+00> : vector<1xf32>
    %183 = vector.multi_reduction <add>, %182, %cst_81 [1, 2] : vector<1x32x32xf32> to vector<1xf32>
    %184 = vector.shape_cast %183 : vector<1xf32> to vector<1x1x1xf32>
    %185 = vector.extract %184[0, 0, 0] : f32 from vector<1x1x1xf32>
    %186 = vector.broadcast %185 : f32 to vector<1x1xf32>
    %187 = arith.truncf %181 : vector<32x32xf32> to vector<32x32xbf16>
    %cst_82 = arith.constant dense<0.000000e+00> : vector<16x32xf32>
    %188 = tpu.matmul %8, %187, %cst_82 {dimension_numbers = #tpu.dot_dimension_numbers<[1], [0], [0], [1], [0, 0, 1, 1], [], []>} : vector<16x32xbf16>, vector<32x32xbf16>, vector<16x32xf32> -> vector<16x32xf32>
    %189 = arith.truncf %188 : vector<16x32xf32> to vector<16x32xbf16>
    %cst_83 = arith.constant dense<0.000000e+00> : vector<16x128xf32>
    %190 = tpu.matmul %189, %9, %cst_83 {dimension_numbers = #tpu.dot_dimension_numbers<[1], [0], [0], [1], [0, 0, 1, 1], [], []>} : vector<16x32xbf16>, vector<32x128xbf16>, vector<16x128xf32> -> vector<16x128xf32>
    %191 = arith.index_cast %arg0 : i32 to index
    %c2_84 = arith.constant 2 : index
    %192 = memref.load %arg5[%191, %c2_84] : memref<2x4xf32, #tpu.memory_space<smem>>
    %193 = vector.broadcast %192 : f32 to vector<1x1xf32>
    %194 = arith.divf %193, %186 : vector<1x1xf32>
    %195 = vector.broadcast %194 : vector<1x1xf32> to vector<16x128xf32>
    %196 = arith.mulf %190, %195 : vector<16x128xf32>
    %c0_85 = arith.constant 0 : index
    %c2_86 = arith.constant 2 : index
    %c0_87 = arith.constant 0 : index
    %c0_88 = arith.constant 0 : index
    %197 = vector.load %arg14[%c0_85, %c2_86, %c0_87, %c0_88] : memref<1x4x16x128xf32, #tpu.memory_space<vmem>>, vector<1x1x16x128xf32>
    %198 = vector.shape_cast %197 : vector<1x1x16x128xf32> to vector<16x128xf32>
    %199 = vector.shape_cast %196 : vector<16x128xf32> to vector<1x1x16x128xf32>
    tpu.vector_store %arg14[%c0_85, %c2_86, %c0_87, %c0_88], %199 {strides = array<i32>} : memref<1x4x16x128xf32, #tpu.memory_space<vmem>>, vector<1x1x16x128xf32>,
    %c16_i32_89 = arith.constant 16 : i32
    %200 = vector.broadcast %c16_i32_89 : i32 to vector<16x128xi32>
    %201 = arith.cmpi slt, %10, %200 : vector<16x128xi32>
    %cst_90 = arith.constant 0x7F800000 : f32
    %202 = vector.broadcast %cst_90 : f32 to vector<16x128xf32>
    %203 = arith.select %201, %196, %202 : vector<16x128xi1>, vector<16x128xf32>
    %204 = vector.shape_cast %203 : vector<16x128xf32> to vector<1x16x128xf32>
    %cst_91 = arith.constant dense<0x7F800000> : vector<1xf32>
    %205 = vector.multi_reduction <minimumf>, %204, %cst_91 [1, 2] : vector<1x16x128xf32> to vector<1xf32>
    %206 = vector.shape_cast %205 : vector<1xf32> to vector<1x1x1xf32>
    %207 = vector.extract %206[0, 0, 0] : f32 from vector<1x1x1xf32>
    %208 = vector.broadcast %207 : f32 to vector<1x1xf32>
    %209 = vector.shape_cast %196 : vector<16x128xf32> to vector<1x16x128xf32>
    %cst_92 = arith.constant dense<0xFF800000> : vector<1xf32>
    %210 = vector.multi_reduction <maximumf>, %209, %cst_92 [1, 2] : vector<1x16x128xf32> to vector<1xf32>
    %211 = vector.shape_cast %210 : vector<1xf32> to vector<1x1x1xf32>
    %212 = vector.extract %211[0, 0, 0] : f32 from vector<1x1x1xf32>
    %213 = vector.broadcast %212 : f32 to vector<1x1xf32>
    %214 = arith.minimumf %145, %208 : vector<1x1xf32>
    %215 = arith.maximumf %146, %213 : vector<1x1xf32>
    %c0_93 = arith.constant 0 : index
    %c3 = arith.constant 3 : index
    %c0_94 = arith.constant 0 : index
    %c0_95 = arith.constant 0 : index
    %216 = vector.load %arg3[%c0_93, %c3, %c0_94, %c0_95] : memref<1x4x32x32xbf16, #tpu.memory_space<vmem>>, vector<1x1x32x32xbf16>
    %217 = vector.shape_cast %216 : vector<1x1x32x32xbf16> to vector<32x32xbf16>
    %218 = arith.extf %217 : vector<32x32xbf16> to vector<32x32xf32>
    %c0_96 = arith.constant 0 : index
    %c3_97 = arith.constant 3 : index
    %c0_98 = arith.constant 0 : index
    %c0_99 = arith.constant 0 : index
    %219 = vector.load %arg4[%c0_96, %c3_97, %c0_98, %c0_99] : memref<1x4x32x32xbf16, #tpu.memory_space<vmem>>, vector<1x1x32x32xbf16>
    %220 = vector.shape_cast %219 : vector<1x1x32x32xbf16> to vector<32x32xbf16>
    %221 = arith.extf %220 : vector<32x32xbf16> to vector<32x32xf32>
    %222 = arith.mulf %0, %218 : vector<32x32xf32>
    %223 = arith.mulf %1, %221 : vector<32x32xf32>
    %224 = arith.subf %222, %223 : vector<32x32xf32>
    %225 = arith.mulf %0, %221 : vector<32x32xf32>
    %226 = arith.mulf %1, %218 : vector<32x32xf32>
    %227 = arith.addf %225, %226 : vector<32x32xf32>
    %228 = arith.truncf %224 : vector<32x32xf32> to vector<32x32xbf16>
    %229 = arith.truncf %227 : vector<32x32xf32> to vector<32x32xbf16>
    %230 = arith.addf %224, %227 : vector<32x32xf32>
    %231 = arith.truncf %230 : vector<32x32xf32> to vector<32x32xbf16>
    %cst_100 = arith.constant dense<0.000000e+00> : vector<32x32xf32>
    %232 = tpu.matmul %2, %228, %cst_100 {dimension_numbers = #tpu.dot_dimension_numbers<[1], [0], [0], [1], [0, 0, 1, 1], [], []>} : vector<32x32xbf16>, vector<32x32xbf16>, vector<32x32xf32> -> vector<32x32xf32>
    %cst_101 = arith.constant dense<0.000000e+00> : vector<32x32xf32>
    %233 = tpu.matmul %3, %229, %cst_101 {dimension_numbers = #tpu.dot_dimension_numbers<[1], [0], [0], [1], [0, 0, 1, 1], [], []>} : vector<32x32xbf16>, vector<32x32xbf16>, vector<32x32xf32> -> vector<32x32xf32>
    %cst_102 = arith.constant dense<0.000000e+00> : vector<32x32xf32>
    %234 = tpu.matmul %4, %231, %cst_102 {dimension_numbers = #tpu.dot_dimension_numbers<[1], [0], [0], [1], [0, 0, 1, 1], [], []>} : vector<32x32xbf16>, vector<32x32xbf16>, vector<32x32xf32> -> vector<32x32xf32>
    %235 = arith.subf %232, %233 : vector<32x32xf32>
    %236 = arith.subf %234, %232 : vector<32x32xf32>
    %237 = arith.subf %236, %233 : vector<32x32xf32>
    %238 = arith.truncf %235 : vector<32x32xf32> to vector<32x32xbf16>
    %239 = arith.truncf %237 : vector<32x32xf32> to vector<32x32xbf16>
    %240 = arith.addf %235, %237 : vector<32x32xf32>
    %241 = arith.truncf %240 : vector<32x32xf32> to vector<32x32xbf16>
    %cst_103 = arith.constant dense<0.000000e+00> : vector<32x32xf32>
    %242 = tpu.matmul %238, %5, %cst_103 {dimension_numbers = #tpu.dot_dimension_numbers<[1], [0], [0], [1], [0, 0, 1, 1], [], []>} : vector<32x32xbf16>, vector<32x32xbf16>, vector<32x32xf32> -> vector<32x32xf32>
    %cst_104 = arith.constant dense<0.000000e+00> : vector<32x32xf32>
    %243 = tpu.matmul %239, %6, %cst_104 {dimension_numbers = #tpu.dot_dimension_numbers<[1], [0], [0], [1], [0, 0, 1, 1], [], []>} : vector<32x32xbf16>, vector<32x32xbf16>, vector<32x32xf32> -> vector<32x32xf32>
    %cst_105 = arith.constant dense<0.000000e+00> : vector<32x32xf32>
    %244 = tpu.matmul %241, %7, %cst_105 {dimension_numbers = #tpu.dot_dimension_numbers<[1], [0], [0], [1], [0, 0, 1, 1], [], []>} : vector<32x32xbf16>, vector<32x32xbf16>, vector<32x32xf32> -> vector<32x32xf32>
    %245 = arith.subf %242, %243 : vector<32x32xf32>
    %246 = arith.subf %244, %242 : vector<32x32xf32>
    %247 = arith.subf %246, %243 : vector<32x32xf32>
    %248 = arith.mulf %245, %245 : vector<32x32xf32>
    %249 = arith.mulf %247, %247 : vector<32x32xf32>
    %250 = arith.addf %248, %249 : vector<32x32xf32>
    %251 = vector.shape_cast %250 : vector<32x32xf32> to vector<1x32x32xf32>
    %cst_106 = arith.constant dense<0.000000e+00> : vector<1xf32>
    %252 = vector.multi_reduction <add>, %251, %cst_106 [1, 2] : vector<1x32x32xf32> to vector<1xf32>
    %253 = vector.shape_cast %252 : vector<1xf32> to vector<1x1x1xf32>
    %254 = vector.extract %253[0, 0, 0] : f32 from vector<1x1x1xf32>
    %255 = vector.broadcast %254 : f32 to vector<1x1xf32>
    %256 = arith.truncf %250 : vector<32x32xf32> to vector<32x32xbf16>
    %cst_107 = arith.constant dense<0.000000e+00> : vector<16x32xf32>
    %257 = tpu.matmul %8, %256, %cst_107 {dimension_numbers = #tpu.dot_dimension_numbers<[1], [0], [0], [1], [0, 0, 1, 1], [], []>} : vector<16x32xbf16>, vector<32x32xbf16>, vector<16x32xf32> -> vector<16x32xf32>
    %258 = arith.truncf %257 : vector<16x32xf32> to vector<16x32xbf16>
    %cst_108 = arith.constant dense<0.000000e+00> : vector<16x128xf32>
    %259 = tpu.matmul %258, %9, %cst_108 {dimension_numbers = #tpu.dot_dimension_numbers<[1], [0], [0], [1], [0, 0, 1, 1], [], []>} : vector<16x32xbf16>, vector<32x128xbf16>, vector<16x128xf32> -> vector<16x128xf32>
    %260 = arith.index_cast %arg0 : i32 to index
    %c3_109 = arith.constant 3 : index
    %261 = memref.load %arg5[%260, %c3_109] : memref<2x4xf32, #tpu.memory_space<smem>>
    %262 = vector.broadcast %261 : f32 to vector<1x1xf32>
    %263 = arith.divf %262, %255 : vector<1x1xf32>
    %264 = vector.broadcast %263 : vector<1x1xf32> to vector<16x128xf32>
    %265 = arith.mulf %259, %264 : vector<16x128xf32>
    %c0_110 = arith.constant 0 : index
    %c3_111 = arith.constant 3 : index
    %c0_112 = arith.constant 0 : index
    %c0_113 = arith.constant 0 : index
    %266 = vector.load %arg14[%c0_110, %c3_111, %c0_112, %c0_113] : memref<1x4x16x128xf32, #tpu.memory_space<vmem>>, vector<1x1x16x128xf32>
    %267 = vector.shape_cast %266 : vector<1x1x16x128xf32> to vector<16x128xf32>
    %268 = vector.shape_cast %265 : vector<16x128xf32> to vector<1x1x16x128xf32>
    tpu.vector_store %arg14[%c0_110, %c3_111, %c0_112, %c0_113], %268 {strides = array<i32>} : memref<1x4x16x128xf32, #tpu.memory_space<vmem>>, vector<1x1x16x128xf32>,
    %c16_i32_114 = arith.constant 16 : i32
    %269 = vector.broadcast %c16_i32_114 : i32 to vector<16x128xi32>
    %270 = arith.cmpi slt, %10, %269 : vector<16x128xi32>
    %cst_115 = arith.constant 0x7F800000 : f32
    %271 = vector.broadcast %cst_115 : f32 to vector<16x128xf32>
    %272 = arith.select %270, %265, %271 : vector<16x128xi1>, vector<16x128xf32>
    %273 = vector.shape_cast %272 : vector<16x128xf32> to vector<1x16x128xf32>
    %cst_116 = arith.constant dense<0x7F800000> : vector<1xf32>
    %274 = vector.multi_reduction <minimumf>, %273, %cst_116 [1, 2] : vector<1x16x128xf32> to vector<1xf32>
    %275 = vector.shape_cast %274 : vector<1xf32> to vector<1x1x1xf32>
    %276 = vector.extract %275[0, 0, 0] : f32 from vector<1x1x1xf32>
    %277 = vector.broadcast %276 : f32 to vector<1x1xf32>
    %278 = vector.shape_cast %265 : vector<16x128xf32> to vector<1x16x128xf32>
    %cst_117 = arith.constant dense<0xFF800000> : vector<1xf32>
    %279 = vector.multi_reduction <maximumf>, %278, %cst_117 [1, 2] : vector<1x16x128xf32> to vector<1xf32>
    %280 = vector.shape_cast %279 : vector<1xf32> to vector<1x1x1xf32>
    %281 = vector.extract %280[0, 0, 0] : f32 from vector<1x1x1xf32>
    %282 = vector.broadcast %281 : f32 to vector<1x1xf32>
    %283 = arith.minimumf %214, %277 : vector<1x1xf32>
    %284 = arith.maximumf %215, %282 : vector<1x1xf32>
    %285 = arith.subf %284, %283 : vector<1x1xf32>
    %cst_118 = arith.constant 1.000000e-30 : f32
    %286 = vector.broadcast %cst_118 : f32 to vector<1x1xf32>
    %287 = arith.maximumf %285, %286 : vector<1x1xf32>
    %cst_119 = arith.constant 1.000000e+00 : f32
    %288 = vector.broadcast %cst_119 : f32 to vector<1x1xf32>
    %289 = arith.divf %288, %287 : vector<1x1xf32>
    %c0_120 = arith.constant 0 : index
    %c0_121 = arith.constant 0 : index
    %c0_122 = arith.constant 0 : index
    %c0_123 = arith.constant 0 : index
    %290 = vector.load %arg14[%c0_120, %c0_121, %c0_122, %c0_123] : memref<1x4x16x128xf32, #tpu.memory_space<vmem>>, vector<1x1x16x128xf32>
    %291 = vector.shape_cast %290 : vector<1x1x16x128xf32> to vector<16x128xf32>
    %292 = vector.broadcast %283 : vector<1x1xf32> to vector<16x128xf32>
    %293 = arith.subf %291, %292 : vector<16x128xf32>
    %294 = vector.broadcast %289 : vector<1x1xf32> to vector<16x128xf32>
    %295 = arith.mulf %293, %294 : vector<16x128xf32>
    %c0_124 = arith.constant 0 : index
    %c0_125 = arith.constant 0 : index
    %c0_126 = arith.constant 0 : index
    %c0_127 = arith.constant 0 : index
    %296 = vector.load %arg14[%c0_124, %c0_125, %c0_126, %c0_127] : memref<1x4x16x128xf32, #tpu.memory_space<vmem>>, vector<1x1x16x128xf32>
    %297 = vector.shape_cast %296 : vector<1x1x16x128xf32> to vector<16x128xf32>
    %298 = vector.shape_cast %295 : vector<16x128xf32> to vector<1x1x16x128xf32>
    tpu.vector_store %arg14[%c0_124, %c0_125, %c0_126, %c0_127], %298 {strides = array<i32>} : memref<1x4x16x128xf32, #tpu.memory_space<vmem>>, vector<1x1x16x128xf32>,
    %c0_128 = arith.constant 0 : index
    %c1_129 = arith.constant 1 : index
    %c0_130 = arith.constant 0 : index
    %c0_131 = arith.constant 0 : index
    %299 = vector.load %arg14[%c0_128, %c1_129, %c0_130, %c0_131] : memref<1x4x16x128xf32, #tpu.memory_space<vmem>>, vector<1x1x16x128xf32>
    %300 = vector.shape_cast %299 : vector<1x1x16x128xf32> to vector<16x128xf32>
    %301 = vector.broadcast %283 : vector<1x1xf32> to vector<16x128xf32>
    %302 = arith.subf %300, %301 : vector<16x128xf32>
    %303 = vector.broadcast %289 : vector<1x1xf32> to vector<16x128xf32>
    %304 = arith.mulf %302, %303 : vector<16x128xf32>
    %c0_132 = arith.constant 0 : index
    %c1_133 = arith.constant 1 : index
    %c0_134 = arith.constant 0 : index
    %c0_135 = arith.constant 0 : index
    %305 = vector.load %arg14[%c0_132, %c1_133, %c0_134, %c0_135] : memref<1x4x16x128xf32, #tpu.memory_space<vmem>>, vector<1x1x16x128xf32>
    %306 = vector.shape_cast %305 : vector<1x1x16x128xf32> to vector<16x128xf32>
    %307 = vector.shape_cast %304 : vector<16x128xf32> to vector<1x1x16x128xf32>
    tpu.vector_store %arg14[%c0_132, %c1_133, %c0_134, %c0_135], %307 {strides = array<i32>} : memref<1x4x16x128xf32, #tpu.memory_space<vmem>>, vector<1x1x16x128xf32>,
    %c0_136 = arith.constant 0 : index
    %c2_137 = arith.constant 2 : index
    %c0_138 = arith.constant 0 : index
    %c0_139 = arith.constant 0 : index
    %308 = vector.load %arg14[%c0_136, %c2_137, %c0_138, %c0_139] : memref<1x4x16x128xf32, #tpu.memory_space<vmem>>, vector<1x1x16x128xf32>
    %309 = vector.shape_cast %308 : vector<1x1x16x128xf32> to vector<16x128xf32>
    %310 = vector.broadcast %283 : vector<1x1xf32> to vector<16x128xf32>
    %311 = arith.subf %309, %310 : vector<16x128xf32>
    %312 = vector.broadcast %289 : vector<1x1xf32> to vector<16x128xf32>
    %313 = arith.mulf %311, %312 : vector<16x128xf32>
    %c0_140 = arith.constant 0 : index
    %c2_141 = arith.constant 2 : index
    %c0_142 = arith.constant 0 : index
    %c0_143 = arith.constant 0 : index
    %314 = vector.load %arg14[%c0_140, %c2_141, %c0_142, %c0_143] : memref<1x4x16x128xf32, #tpu.memory_space<vmem>>, vector<1x1x16x128xf32>
    %315 = vector.shape_cast %314 : vector<1x1x16x128xf32> to vector<16x128xf32>
    %316 = vector.shape_cast %313 : vector<16x128xf32> to vector<1x1x16x128xf32>
    tpu.vector_store %arg14[%c0_140, %c2_141, %c0_142, %c0_143], %316 {strides = array<i32>} : memref<1x4x16x128xf32, #tpu.memory_space<vmem>>, vector<1x1x16x128xf32>,
    %c0_144 = arith.constant 0 : index
    %c3_145 = arith.constant 3 : index
    %c0_146 = arith.constant 0 : index
    %c0_147 = arith.constant 0 : index
    %317 = vector.load %arg14[%c0_144, %c3_145, %c0_146, %c0_147] : memref<1x4x16x128xf32, #tpu.memory_space<vmem>>, vector<1x1x16x128xf32>
    %318 = vector.shape_cast %317 : vector<1x1x16x128xf32> to vector<16x128xf32>
    %319 = vector.broadcast %283 : vector<1x1xf32> to vector<16x128xf32>
    %320 = arith.subf %318, %319 : vector<16x128xf32>
    %321 = vector.broadcast %289 : vector<1x1xf32> to vector<16x128xf32>
    %322 = arith.mulf %320, %321 : vector<16x128xf32>
    %c0_148 = arith.constant 0 : index
    %c3_149 = arith.constant 3 : index
    %c0_150 = arith.constant 0 : index
    %c0_151 = arith.constant 0 : index
    %323 = vector.load %arg14[%c0_148, %c3_149, %c0_150, %c0_151] : memref<1x4x16x128xf32, #tpu.memory_space<vmem>>, vector<1x1x16x128xf32>
    %324 = vector.shape_cast %323 : vector<1x1x16x128xf32> to vector<16x128xf32>
    %325 = vector.shape_cast %322 : vector<16x128xf32> to vector<1x1x16x128xf32>
    tpu.vector_store %arg14[%c0_148, %c3_149, %c0_150, %c0_151], %325 {strides = array<i32>} : memref<1x4x16x128xf32, #tpu.memory_space<vmem>>, vector<1x1x16x128xf32>,
    return
  }
  func.func @transform_0(%arg0: i32) -> (i32, i32) {
    %c0_i32 = arith.constant 0 : i32
    %c0_i32_0 = arith.constant 0 : i32
    %c0_i32_1 = arith.constant 0 : i32
    return %c0_i32, %c0_i32_0 : i32, i32
  }
  func.func @transform_1(%arg0: i32) -> (i32, i32) {
    %c0_i32 = arith.constant 0 : i32
    %c0_i32_0 = arith.constant 0 : i32
    %c0_i32_1 = arith.constant 0 : i32
    return %c0_i32, %c0_i32_0 : i32, i32
  }
  func.func @transform_2(%arg0: i32) -> (i32, i32, i32, i32) {
    %c0_i32 = arith.constant 0 : i32
    %c0_i32_0 = arith.constant 0 : i32
    %c0_i32_1 = arith.constant 0 : i32
    %c0_i32_2 = arith.constant 0 : i32
    return %arg0, %c0_i32, %c0_i32_0, %c0_i32_1 : i32, i32, i32, i32
  }
  func.func @transform_3(%arg0: i32) -> (i32, i32, i32, i32) {
    %c0_i32 = arith.constant 0 : i32
    %c0_i32_0 = arith.constant 0 : i32
    %c0_i32_1 = arith.constant 0 : i32
    %c0_i32_2 = arith.constant 0 : i32
    return %arg0, %c0_i32, %c0_i32_0, %c0_i32_1 : i32, i32, i32, i32
  }
  func.func @transform_4(%arg0: i32) -> (i32, i32) {
    %c0_i32 = arith.constant 0 : i32
    %c0_i32_0 = arith.constant 0 : i32
    %c0_i32_1 = arith.constant 0 : i32
    return %c0_i32, %c0_i32_0 : i32, i32
  }
  func.func @transform_5(%arg0: i32) -> (i32, i32) {
    %c0_i32 = arith.constant 0 : i32
    %c0_i32_0 = arith.constant 0 : i32
    %c0_i32_1 = arith.constant 0 : i32
    return %c0_i32, %c0_i32_0 : i32, i32
  }
  func.func @transform_6(%arg0: i32) -> (i32, i32) {
    %c0_i32 = arith.constant 0 : i32
    %c0_i32_0 = arith.constant 0 : i32
    %c0_i32_1 = arith.constant 0 : i32
    return %c0_i32, %c0_i32_0 : i32, i32
  }
  func.func @transform_7(%arg0: i32) -> (i32, i32) {
    %c0_i32 = arith.constant 0 : i32
    %c0_i32_0 = arith.constant 0 : i32
    %c0_i32_1 = arith.constant 0 : i32
    return %c0_i32, %c0_i32_0 : i32, i32
  }
  func.func @transform_8(%arg0: i32) -> (i32, i32) {
    %c0_i32 = arith.constant 0 : i32
    %c0_i32_0 = arith.constant 0 : i32
    %c0_i32_1 = arith.constant 0 : i32
    return %c0_i32, %c0_i32_0 : i32, i32
  }
  func.func @transform_9(%arg0: i32) -> (i32, i32) {
    %c0_i32 = arith.constant 0 : i32
    %c0_i32_0 = arith.constant 0 : i32
    %c0_i32_1 = arith.constant 0 : i32
    return %c0_i32, %c0_i32_0 : i32, i32
  }
  func.func @transform_10(%arg0: i32) -> (i32, i32) {
    %c0_i32 = arith.constant 0 : i32
    %c0_i32_0 = arith.constant 0 : i32
    %c0_i32_1 = arith.constant 0 : i32
    return %c0_i32, %c0_i32_0 : i32, i32
  }
  func.func @transform_11(%arg0: i32) -> (i32, i32) {
    %c0_i32 = arith.constant 0 : i32
    %c0_i32_0 = arith.constant 0 : i32
    %c0_i32_1 = arith.constant 0 : i32
    return %c0_i32, %c0_i32_0 : i32, i32
  }
  func.func @transform_12(%arg0: i32) -> (i32, i32) {
    %c0_i32 = arith.constant 0 : i32
    %c0_i32_0 = arith.constant 0 : i32
    %c0_i32_1 = arith.constant 0 : i32
    return %c0_i32, %c0_i32_0 : i32, i32
  }
  func.func @transform_13(%arg0: i32) -> (i32, i32, i32, i32) {
    %c0_i32 = arith.constant 0 : i32
    %c0_i32_0 = arith.constant 0 : i32
    %c0_i32_1 = arith.constant 0 : i32
    %c0_i32_2 = arith.constant 0 : i32
    return %arg0, %c0_i32, %c0_i32_0, %c0_i32_1 : i32, i32, i32, i32
  }
}

</mosaic_0001>

<llo_original>
// kernel: tpu_custom_call.1
$region0: #{tpu_custom_call.1}
  #allocation0 [shape = 'u32[]', space=smem, size = 0x4, offset = 0x4, fixed_abs, tag = 'smem constant byte address 0x4 - core index']
  #allocation1 [shape = 'u32[144,128]{1,0:T(1,128)}', space=vmem, size = 0x12000, scoped, tag = 'internal scratch']
  %s0 = inlined_call_operand.hbm [shape: f32[32,32], index: 0, kind: input, shape index: {}]
  %s1 = inlined_call_operand.hbm [shape: f32[32,32], index: 1, kind: input, shape index: {}]
  %s2 = inlined_call_operand.hbm [shape: bf16[2,4,32,32], index: 2, kind: input, shape index: {}]
  %s3 = inlined_call_operand.hbm [shape: bf16[2,4,32,32], index: 3, kind: input, shape index: {}]
  %s4 = inlined_call_operand.hbm [shape: f32[2,4], index: 4, kind: input, shape index: {}]
  %s5 = inlined_call_operand.vmem [shape: bf16[32,32], index: 5, kind: input, shape index: {}]
  %s6 = inlined_call_operand.hbm [shape: bf16[32,32], index: 6, kind: input, shape index: {}]
  %s7 = inlined_call_operand.hbm [shape: bf16[32,32], index: 7, kind: input, shape index: {}]
  %s8 = inlined_call_operand.hbm [shape: bf16[32,32], index: 8, kind: input, shape index: {}]
  %s9 = inlined_call_operand.vmem [shape: bf16[32,32], index: 9, kind: input, shape index: {}]
  %s10 = inlined_call_operand.hbm [shape: bf16[32,32], index: 10, kind: input, shape index: {}]
  %s11 = inlined_call_operand.vmem [shape: bf16[16,32], index: 11, kind: input, shape index: {}]
  %s12 = inlined_call_operand.hbm [shape: bf16[32,128], index: 12, kind: input, shape index: {}]
  %s13 = inlined_call_operand.hbm [shape: f32[2,4,16,128], index: 13, kind: output, shape index: {}]
  %s14 = sld [smem:[#allocation0]]
  $region125: #{tpu_custom_call.1} parent=0
    _
  %s16 = ssub.s32 1, %s14
  %s17 = scalar_select 0, %s16, %s14
  $region1: #{tpu_custom_call.1} parent=0
    #allocation2 [shape = 'u8[16384]{0}', space=vmem, size = 0x4000, scoped, tag = 'input window, operand 0, single buffered']
    #allocation3 [shape = 's32[2]{0}', space=sflag, size = 0x8, scoped, tag = 'scoped memory for tpu_custom_call.1']
    #allocation4 [shape = 's32[2]{0}', space=sflag, size = 0x8, scoped, tag = 'scoped memory for tpu_custom_call.1']
    #allocation5 [shape = 's32[2]{0}', space=sflag, size = 0x8, scoped, tag = 'scoped memory for tpu_custom_call.1']
    #allocation6 [shape = 'u8[16384]{0}', space=vmem, size = 0x4000, scoped, tag = 'input window, operand 1, single buffered']
    #allocation7 [shape = 's32[1]{0}', space=sflag, size = 0x4, scoped, tag = 'scoped memory for tpu_custom_call.1']
    #allocation8 [shape = 'u8[65536]{0}', space=vmem, size = 0x10000, scoped, tag = 'input window, operand 2']
    #allocation9 [shape = 'u8[65536]{0}', space=vmem, size = 0x10000, scoped, tag = 'input window, operand 3']
    #allocation10 [shape = 'u8[1024]{0}', space=smem, size = 0x400, scoped, tag = 'input window, operand 4, single buffered']
    #allocation11 [shape = 'u8[8192]{0}', space=vmem, size = 0x2000, scoped, tag = 'input window, operand 6, single buffered']
    #allocation12 [shape = 'u8[8192]{0}', space=vmem, size = 0x2000, scoped, tag = 'input window, operand 7, single buffered']
    #allocation13 [shape = 's32[1]{0}', space=sflag, size = 0x4, scoped, tag = 'scoped memory for tpu_custom_call.1']
    #allocation14 [shape = 'u8[8192]{0}', space=vmem, size = 0x2000, scoped, tag = 'input window, operand 8, single buffered']
    #allocation15 [shape = 'u8[8192]{0}', space=vmem, size = 0x2000, scoped, tag = 'input window, operand 10, single buffered']
    #allocation16 [shape = 's32[1]{0}', space=sflag, size = 0x4, scoped, tag = 'scoped memory for tpu_custom_call.1']
    #allocation17 [shape = 'u8[8192]{0}', space=vmem, size = 0x2000, scoped, tag = 'input window, operand 12, single buffered']
    #allocation18 [shape = 'u8[65536]{0}', space=vmem, size = 0x10000, scoped, tag = 'output window, operand 0']
    %18 = vsyncpa [#allocation3], 0
    %19 = vsyncpa [#allocation7], 0
    %20 = vsyncpa [#allocation5], 0
    %21 = vsyncpa [#allocation13], 0
    %22 = vsyncpa [#allocation16], 0
    %23 = vsyncpa [#allocation4], 0
    %s24 = scalar_lea.sflag [#allocation4], 1
    %25 = vsyncpa %s24, 0
    loop: start=0, step=1, limit=4
    $region2: #{tpu_custom_call.1} parent=1 // loop_pre_header
      _
    $region3: #{tpu_custom_call.1} parent=1 // loop_header
      %s27 = sphi 0, %s31
      %p28 = scmp.ge.s32.totalorder %s27, 4
      %s35 = sphi 0, %s35
      %s37 = sphi 0, %s35
      %s38 = sphi 0, %s37
      %s52 = sphi 0, %s38
      %s56 = sphi 0, %s56
      %s58 = sphi 0, %s56
      %s59 = sphi 0, %s58
      %s73 = sphi 0, %s59
      %s79 = sphi 0, %s81
      %s82 = sphi 0, %s79
      %s83 = sphi 0, %s82
      %s99 = sphi 0, %s83
      %s105 = sphi 0, %s107
      %s108 = sphi 0, %s105
      %s109 = sphi 0, %s108
      %s125 = sphi 0, %s109
      %s129 = sphi 0, %s129
      %s131 = sphi 0, %s129
      %s132 = sphi 0, %s131
      %s146 = sphi 0, %s132
      %s150 = sphi 0, %s150
      %s152 = sphi 0, %s150
      %s153 = sphi 0, %s152
      %s167 = sphi 0, %s153
      %s171 = sphi 0, %s171
      %s173 = sphi 0, %s171
      %s174 = sphi 0, %s173
      %s188 = sphi 0, %s174
      %s192 = sphi 0, %s192
      %s194 = sphi 0, %s192
      %s195 = sphi 0, %s194
      %s209 = sphi 0, %s195
      %s213 = sphi 0, %s213
      %s215 = sphi 0, %s213
      %s216 = sphi 0, %s215
      %s230 = sphi 0, %s216
      %s234 = sphi 0, %s234
      %s236 = sphi 0, %s234
      %s237 = sphi 0, %s236
      %s251 = sphi 0, %s237
      %s255 = sphi 0, %s255
      %s257 = sphi 0, %s255
      %s258 = sphi 0, %s257
      %s272 = sphi 0, %s258
      %s276 = sphi 0, %s276
      %s278 = sphi 0, %s276
      %s279 = sphi 0, %s278
      %s293 = sphi 0, %s279
      %s297 = sphi 0, %s297
      %s299 = sphi 0, %s297
      %s300 = sphi 0, %s299
      %s314 = sphi 0, %s300
      %s320 = sphi 0, %s322
      %s323 = sphi 0, %s320
      %s324 = sphi 0, %s323
      %s340 = sphi 0, %s324
    $region4: #{tpu_custom_call.1} parent=1 // loop_header_branch
      %30 = sbr.rel (%p28) target = $region8
    $region5: #{tpu_custom_call.1} parent=1 // loop_body
      %s32 = ssub.s32 %s27, 1
      %s33 = ssub.s32 %s27, 2
      %s34 = sadd.s32 %s27, 1
      %s36 = sadd.s32 %s35, 1
      %p39 = scmp.eq.s32.totalorder %s27, 1
      %p40 = scmp.ne.s32.totalorder %s35, %s37
      %p41 = scmp.eq.s32.totalorder %s27, 0
      %p42 = por %p40, %p41
      %p43 = scmp.ne.s32.totalorder %s35, %s37
      %p44 = scmp.eq.s32.totalorder %s32, 1
      %p45 = por %p43, %p44
      %p46 = scmp.ne.s32.totalorder %s37, %s38
      %p47 = scmp.eq.s32.totalorder %s32, 0
      %p48 = por %p46, %p47
      %p49 = scmp.ne.s32.totalorder %s37, %s38
      %p50 = scmp.eq.s32.totalorder %s33, 1
      %p51 = por %p49, %p50
      %p53 = scmp.ne.s32.totalorder %s38, %s52
      %p54 = scmp.eq.s32.totalorder %s33, 0
      %p55 = por %p53, %p54
      %s57 = sadd.s32 %s56, 1
      %p60 = scmp.eq.s32.totalorder %s27, 1
      %p61 = scmp.ne.s32.totalorder %s56, %s58
      %p62 = scmp.eq.s32.totalorder %s27, 0
      %p63 = por %p61, %p62
      %p64 = scmp.ne.s32.totalorder %s56, %s58
      %p65 = scmp.eq.s32.totalorder %s32, 1
      %p66 = por %p64, %p65
      %p67 = scmp.ne.s32.totalorder %s58, %s59
      %p68 = scmp.eq.s32.totalorder %s32, 0
      %p69 = por %p67, %p68
      %p70 = scmp.ne.s32.totalorder %s58, %s59
      %p71 = scmp.eq.s32.totalorder %s33, 1
      %p72 = por %p70, %p71
      %p74 = scmp.ne.s32.totalorder %s59, %s73
      %p75 = scmp.eq.s32.totalorder %s33, 0
      %p76 = por %p74, %p75
      %s77 = ssub.s32 %s27, %s34
      %p78 = scmp.eq.s32.totalorder %s77, 0
      %s80 = sadd.s32 %s79, 1
      %s81 = scalar_select %p78, %s79, %s80
      %p84 = pneg %p78
      %p85 = scmp.eq.s32.totalorder %s27, 1
      %p86 = por %p84, %p85
      %p87 = scmp.ne.s32.totalorder %s79, %s82
      %p88 = scmp.eq.s32.totalorder %s27, 0
      %p89 = por %p87, %p88
      %p90 = scmp.ne.s32.totalorder %s79, %s82
      %p91 = scmp.eq.s32.totalorder %s32, 1
      %p92 = por %p90, %p91
      %p93 = scmp.ne.s32.totalorder %s82, %s83
      %p94 = scmp.eq.s32.totalorder %s32, 0
      %p95 = por %p93, %p94
      %p96 = scmp.ne.s32.totalorder %s82, %s83
      %p97 = scmp.eq.s32.totalorder %s33, 1
      %p98 = por %p96, %p97
      %p100 = scmp.ne.s32.totalorder %s83, %s99
      %p101 = scmp.eq.s32.totalorder %s33, 0
      %p102 = por %p100, %p101
      %s103 = ssub.s32 %s27, %s34
      %p104 = scmp.eq.s32.totalorder %s103, 0
      %s106 = sadd.s32 %s105, 1
      %s107 = scalar_select %p104, %s105, %s106
      %p110 = pneg %p104
      %p111 = scmp.eq.s32.totalorder %s27, 1
      %p112 = por %p110, %p111
      %p113 = scmp.ne.s32.totalorder %s105, %s108
      %p114 = scmp.eq.s32.totalorder %s27, 0
      %p115 = por %p113, %p114
      %p116 = scmp.ne.s32.totalorder %s105, %s108
      %p117 = scmp.eq.s32.totalorder %s32, 1
      %p118 = por %p116, %p117
      %p119 = scmp.ne.s32.totalorder %s108, %s109
      %p120 = scmp.eq.s32.totalorder %s32, 0
      %p121 = por %p119, %p120
      %p122 = scmp.ne.s32.totalorder %s108, %s109
      %p123 = scmp.eq.s32.totalorder %s33, 1
      %p124 = por %p122, %p123
      %p126 = scmp.ne.s32.totalorder %s109, %s125
      %p127 = scmp.eq.s32.totalorder %s33, 0
      %p128 = por %p126, %p127
      %s130 = sadd.s32 %s129, 1
      %p133 = scmp.eq.s32.totalorder %s27, 1
      %p134 = scmp.ne.s32.totalorder %s129, %s131
      %p135 = scmp.eq.s32.totalorder %s27, 0
      %p136 = por %p134, %p135
      %p137 = scmp.ne.s32.totalorder %s129, %s131
      %p138 = scmp.eq.s32.totalorder %s32, 1
      %p139 = por %p137, %p138
      %p140 = scmp.ne.s32.totalorder %s131, %s132
      %p141 = scmp.eq.s32.totalorder %s32, 0
      %p142 = por %p140, %p141
      %p143 = scmp.ne.s32.totalorder %s131, %s132
      %p144 = scmp.eq.s32.totalorder %s33, 1
      %p145 = por %p143, %p144
      %p147 = scmp.ne.s32.totalorder %s132, %s146
      %p148 = scmp.eq.s32.totalorder %s33, 0
      %p149 = por %p147, %p148
      %s151 = sadd.s32 %s150, 1
      %p154 = scmp.eq.s32.totalorder %s27, 1
      %p155 = scmp.ne.s32.totalorder %s150, %s152
      %p156 = scmp.eq.s32.totalorder %s27, 0
      %p157 = por %p155, %p156
      %p158 = scmp.ne.s32.totalorder %s150, %s152
      %p159 = scmp.eq.s32.totalorder %s32, 1
      %p160 = por %p158, %p159
      %p161 = scmp.ne.s32.totalorder %s152, %s153
      %p162 = scmp.eq.s32.totalorder %s32, 0
      %p163 = por %p161, %p162
      %p164 = scmp.ne.s32.totalorder %s152, %s153
      %p165 = scmp.eq.s32.totalorder %s33, 1
      %p166 = por %p164, %p165
      %p168 = scmp.ne.s32.totalorder %s153, %s167
      %p169 = scmp.eq.s32.totalorder %s33, 0
      %p170 = por %p168, %p169
      %s172 = sadd.s32 %s171, 1
      %p175 = scmp.eq.s32.totalorder %s27, 1
      %p176 = scmp.ne.s32.totalorder %s171, %s173
      %p177 = scmp.eq.s32.totalorder %s27, 0
      %p178 = por %p176, %p177
      %p179 = scmp.ne.s32.totalorder %s171, %s173
      %p180 = scmp.eq.s32.totalorder %s32, 1
      %p181 = por %p179, %p180
      %p182 = scmp.ne.s32.totalorder %s173, %s174
      %p183 = scmp.eq.s32.totalorder %s32, 0
      %p184 = por %p182, %p183
      %p185 = scmp.ne.s32.totalorder %s173, %s174
      %p186 = scmp.eq.s32.totalorder %s33, 1
      %p187 = por %p185, %p186
      %p189 = scmp.ne.s32.totalorder %s174, %s188
      %p190 = scmp.eq.s32.totalorder %s33, 0
      %p191 = por %p189, %p190
      %s193 = sadd.s32 %s192, 1
      %p196 = scmp.eq.s32.totalorder %s27, 1
      %p197 = scmp.ne.s32.totalorder %s192, %s194
      %p198 = scmp.eq.s32.totalorder %s27, 0
      %p199 = por %p197, %p198
      %p200 = scmp.ne.s32.totalorder %s192, %s194
      %p201 = scmp.eq.s32.totalorder %s32, 1
      %p202 = por %p200, %p201
      %p203 = scmp.ne.s32.totalorder %s194, %s195
      %p204 = scmp.eq.s32.totalorder %s32, 0
      %p205 = por %p203, %p204
      %p206 = scmp.ne.s32.totalorder %s194, %s195
      %p207 = scmp.eq.s32.totalorder %s33, 1
      %p208 = por %p206, %p207
      %p210 = scmp.ne.s32.totalorder %s195, %s209
      %p211 = scmp.eq.s32.totalorder %s33, 0
      %p212 = por %p210, %p211
      %s214 = sadd.s32 %s213, 1
      %p217 = scmp.eq.s32.totalorder %s27, 1
      %p218 = scmp.ne.s32.totalorder %s213, %s215
      %p219 = scmp.eq.s32.totalorder %s27, 0
      %p220 = por %p218, %p219
      %p221 = scmp.ne.s32.totalorder %s213, %s215
      %p222 = scmp.eq.s32.totalorder %s32, 1
      %p223 = por %p221, %p222
      %p224 = scmp.ne.s32.totalorder %s215, %s216
      %p225 = scmp.eq.s32.totalorder %s32, 0
      %p226 = por %p224, %p225
      %p227 = scmp.ne.s32.totalorder %s215, %s216
      %p228 = scmp.eq.s32.totalorder %s33, 1
      %p229 = por %p227, %p228
      %p231 = scmp.ne.s32.totalorder %s216, %s230
      %p232 = scmp.eq.s32.totalorder %s33, 0
      %p233 = por %p231, %p232
      %s235 = sadd.s32 %s234, 1
      %p238 = scmp.eq.s32.totalorder %s27, 1
      %p239 = scmp.ne.s32.totalorder %s234, %s236
      %p240 = scmp.eq.s32.totalorder %s27, 0
      %p241 = por %p239, %p240
      %p242 = scmp.ne.s32.totalorder %s234, %s236
      %p243 = scmp.eq.s32.totalorder %s32, 1
      %p244 = por %p242, %p243
      %p245 = scmp.ne.s32.totalorder %s236, %s237
      %p246 = scmp.eq.s32.totalorder %s32, 0
      %p247 = por %p245, %p246
      %p248 = scmp.ne.s32.totalorder %s236, %s237
      %p249 = scmp.eq.s32.totalorder %s33, 1
      %p250 = por %p248, %p249
      %p252 = scmp.ne.s32.totalorder %s237, %s251
      %p253 = scmp.eq.s32.totalorder %s33, 0
      %p254 = por %p252, %p253
      %s256 = sadd.s32 %s255, 1
      %p259 = scmp.eq.s32.totalorder %s27, 1
      %p260 = scmp.ne.s32.totalorder %s255, %s257
      %p261 = scmp.eq.s32.totalorder %s27, 0
      %p262 = por %p260, %p261
      %p263 = scmp.ne.s32.totalorder %s255, %s257
      %p264 = scmp.eq.s32.totalorder %s32, 1
      %p265 = por %p263, %p264
      %p266 = scmp.ne.s32.totalorder %s257, %s258
      %p267 = scmp.eq.s32.totalorder %s32, 0
      %p268 = por %p266, %p267
      %p269 = scmp.ne.s32.totalorder %s257, %s258
      %p270 = scmp.eq.s32.totalorder %s33, 1
      %p271 = por %p269, %p270
      %p273 = scmp.ne.s32.totalorder %s258, %s272
      %p274 = scmp.eq.s32.totalorder %s33, 0
      %p275 = por %p273, %p274
      %s277 = sadd.s32 %s276, 1
      %p280 = scmp.eq.s32.totalorder %s27, 1
      %p281 = scmp.ne.s32.totalorder %s276, %s278
      %p282 = scmp.eq.s32.totalorder %s27, 0
      %p283 = por %p281, %p282
      %p284 = scmp.ne.s32.totalorder %s276, %s278
      %p285 = scmp.eq.s32.totalorder %s32, 1
      %p286 = por %p284, %p285
      %p287 = scmp.ne.s32.totalorder %s278, %s279
      %p288 = scmp.eq.s32.totalorder %s32, 0
      %p289 = por %p287, %p288
      %p290 = scmp.ne.s32.totalorder %s278, %s279
      %p291 = scmp.eq.s32.totalorder %s33, 1
      %p292 = por %p290, %p291
      %p294 = scmp.ne.s32.totalorder %s279, %s293
      %p295 = scmp.eq.s32.totalorder %s33, 0
      %p296 = por %p294, %p295
      %s298 = sadd.s32 %s297, 1
      %p301 = scmp.eq.s32.totalorder %s27, 1
      %p302 = scmp.ne.s32.totalorder %s297, %s299
      %p303 = scmp.eq.s32.totalorder %s27, 0
      %p304 = por %p302, %p303
      %p305 = scmp.ne.s32.totalorder %s297, %s299
      %p306 = scmp.eq.s32.totalorder %s32, 1
      %p307 = por %p305, %p306
      %p308 = scmp.ne.s32.totalorder %s299, %s300
      %p309 = scmp.eq.s32.totalorder %s32, 0
      %p310 = por %p308, %p309
      %p311 = scmp.ne.s32.totalorder %s299, %s300
      %p312 = scmp.eq.s32.totalorder %s33, 1
      %p313 = por %p311, %p312
      %p315 = scmp.ne.s32.totalorder %s300, %s314
      %p316 = scmp.eq.s32.totalorder %s33, 0
      %p317 = por %p315, %p316
      %s318 = ssub.s32 %s27, %s34
      %p319 = scmp.eq.s32.totalorder %s318, 0
      %s321 = sadd.s32 %s320, 1
      %s322 = scalar_select %p319, %s320, %s321
      %p325 = pneg %p319
      %p326 = scmp.eq.s32.totalorder %s27, 1
      %p327 = por %p325, %p326
      %p328 = scmp.ne.s32.totalorder %s320, %s323
      %p329 = scmp.eq.s32.totalorder %s27, 0
      %p330 = por %p328, %p329
      %p331 = scmp.ne.s32.totalorder %s320, %s323
      %p332 = scmp.eq.s32.totalorder %s32, 1
      %p333 = por %p331, %p332
      %p334 = scmp.ne.s32.totalorder %s323, %s324
      %p335 = scmp.eq.s32.totalorder %s32, 0
      %p336 = por %p334, %p335
      %p337 = scmp.ne.s32.totalorder %s323, %s324
      %p338 = scmp.eq.s32.totalorder %s33, 1
      %p339 = por %p337, %p338
      %p341 = scmp.ne.s32.totalorder %s324, %s340
      %p342 = scmp.eq.s32.totalorder %s33, 0
      %p343 = por %p341, %p342
      %p344 = scmp.le.s32.totalorder 1, %s27
      %p345 = scmp.lt.s32.totalorder %s27, 3
      %p346 = pnand %p344, %p345
      %p347 = pneg %p346
      // Predicated region
      $region9: #{tpu_custom_call.1} parent=5 // pred_check
        _
      $region10: #{tpu_custom_call.1} parent=5 // pred_check_branch
        %349 = sbr.rel (%p346) target = $region12
      $region11: #{tpu_custom_call.1} parent=5 // pred_region
        %s350 = ssub.s32 %s27, 1
        // Predicated region
        $region13: #{tpu_custom_call.1} parent=11 // pred_check
          %p351 = pneg %p48
        $region14: #{tpu_custom_call.1} parent=11 // pred_check_branch
          %353 = sbr.rel (%p351) target = $region16
        $region15: #{tpu_custom_call.1} parent=11 // pred_region
          %s355 = ssub.s32 512, 512
          %356 = vsyncadd [#allocation3], %s355
          %s357 = sshll.u32 [#allocation2], 4
          %s358 = int_to_ptr.vmem [resolvable:$true] %s357
          %363 = dma.hbm_to_vmem [thread:$0]  %s0, 512, %s358, [#allocation3], 128, 128, 8
        $region16: #{tpu_custom_call.1} parent=11 // pred_fallthru
          _
        // Predicated region
        $region17: #{tpu_custom_call.1} parent=11 // pred_check
          %p364 = pneg %p69
        $region18: #{tpu_custom_call.1} parent=11 // pred_check_branch
          %366 = sbr.rel (%p364) target = $region20
        $region19: #{tpu_custom_call.1} parent=11 // pred_region
          %s368 = ssub.s32 512, 512
          %369 = vsyncadd [#allocation7], %s368
          %s370 = sshll.u32 [#allocation6], 4
          %s371 = int_to_ptr.vmem [resolvable:$true] %s370
          %376 = dma.hbm_to_vmem [thread:$0]  %s1, 512, %s371, [#allocation7], 128, 128, 8
        $region20: #{tpu_custom_call.1} parent=11 // pred_fallthru
          _
        // Predicated region
        $region21: #{tpu_custom_call.1} parent=11 // pred_check
          %p377 = pneg %p142
        $region22: #{tpu_custom_call.1} parent=11 // pred_check_branch
          %379 = sbr.rel (%p377) target = $region24
        $region23: #{tpu_custom_call.1} parent=11 // pred_region
          %s381 = ssub.s32 32, 32
          %382 = vsyncadd [#allocation5], %s381
          %385 = dma.hbm_to_smem %s4, 32, [#allocation10], [#allocation5]
        $region24: #{tpu_custom_call.1} parent=11 // pred_fallthru
          _
        // Predicated region
        $region25: #{tpu_custom_call.1} parent=11 // pred_check
          %p386 = pneg %p163
        $region26: #{tpu_custom_call.1} parent=11 // pred_check_branch
          %388 = sbr.rel (%p386) target = $region28
        $region27: #{tpu_custom_call.1} parent=11 // pred_region
          _
        $region28: #{tpu_custom_call.1} parent=11 // pred_fallthru
          _
        // Predicated region
        $region29: #{tpu_custom_call.1} parent=11 // pred_check
          %p389 = pneg %p184
        $region30: #{tpu_custom_call.1} parent=11 // pred_check_branch
          %391 = sbr.rel (%p389) target = $region32
        $region31: #{tpu_custom_call.1} parent=11 // pred_region
          %s393 = ssub.s32 256, 256
          %394 = vsyncadd [#allocation7], %s393
          %s395 = sshll.u32 [#allocation11], 4
          %s396 = int_to_ptr.vmem [resolvable:$true] %s395
          %401 = dma.hbm_to_vmem [thread:$0]  %s6, 256, %s396, [#allocation7], 64, 64, 4
        $region32: #{tpu_custom_call.1} parent=11 // pred_fallthru
          _
        // Predicated region
        $region33: #{tpu_custom_call.1} parent=11 // pred_check
          %p402 = pneg %p205
        $region34: #{tpu_custom_call.1} parent=11 // pred_check_branch
          %404 = sbr.rel (%p402) target = $region36
        $region35: #{tpu_custom_call.1} parent=11 // pred_region
          %s406 = ssub.s32 256, 256
          %407 = vsyncadd [#allocation13], %s406
          %s408 = sshll.u32 [#allocation12], 4
          %s409 = int_to_ptr.vmem [resolvable:$true] %s408
          %414 = dma.hbm_to_vmem [thread:$0]  %s7, 256, %s409, [#allocation13], 64, 64, 4
        $region36: #{tpu_custom_call.1} parent=11 // pred_fallthru
          _
        // Predicated region
        $region37: #{tpu_custom_call.1} parent=11 // pred_check
          %p415 = pneg %p226
        $region38: #{tpu_custom_call.1} parent=11 // pred_check_branch
          %417 = sbr.rel (%p415) target = $region40
        $region39: #{tpu_custom_call.1} parent=11 // pred_region
          %s419 = ssub.s32 256, 256
          %420 = vsyncadd [#allocation13], %s419
          %s421 = sshll.u32 [#allocation14], 4
          %s422 = int_to_ptr.vmem [resolvable:$true] %s421
          %427 = dma.hbm_to_vmem [thread:$0]  %s8, 256, %s422, [#allocation13], 64, 64, 4
        $region40: #{tpu_custom_call.1} parent=11 // pred_fallthru
          _
        // Predicated region
        $region41: #{tpu_custom_call.1} parent=11 // pred_check
          %p428 = pneg %p247
        $region42: #{tpu_custom_call.1} parent=11 // pred_check_branch
          %430 = sbr.rel (%p428) target = $region44
        $region43: #{tpu_custom_call.1} parent=11 // pred_region
          _
        $region44: #{tpu_custom_call.1} parent=11 // pred_fallthru
          _
        // Predicated region
        $region45: #{tpu_custom_call.1} parent=11 // pred_check
          %p431 = pneg %p268
        $region46: #{tpu_custom_call.1} parent=11 // pred_check_branch
          %433 = sbr.rel (%p431) target = $region48
        $region47: #{tpu_custom_call.1} parent=11 // pred_region
          %s435 = ssub.s32 256, 256
          %436 = vsyncadd [#allocation16], %s435
          %s437 = sshll.u32 [#allocation15], 4
          %s438 = int_to_ptr.vmem [resolvable:$true] %s437
          %443 = dma.hbm_to_vmem [thread:$0]  %s10, 256, %s438, [#allocation16], 64, 64, 4
        $region48: #{tpu_custom_call.1} parent=11 // pred_fallthru
          _
        // Predicated region
        $region49: #{tpu_custom_call.1} parent=11 // pred_check
          %p444 = pneg %p289
        $region50: #{tpu_custom_call.1} parent=11 // pred_check_branch
          %446 = sbr.rel (%p444) target = $region52
        $region51: #{tpu_custom_call.1} parent=11 // pred_region
          _
        $region52: #{tpu_custom_call.1} parent=11 // pred_fallthru
          _
        // Predicated region
        $region53: #{tpu_custom_call.1} parent=11 // pred_check
          %p447 = pneg %p310
        $region54: #{tpu_custom_call.1} parent=11 // pred_check_branch
          %449 = sbr.rel (%p447) target = $region56
        $region55: #{tpu_custom_call.1} parent=11 // pred_region
          %s451 = ssub.s32 256, 256
          %452 = vsyncadd [#allocation16], %s451
          %s453 = sshll.u32 [#allocation17], 4
          %s454 = int_to_ptr.vmem [resolvable:$true] %s453
          %459 = dma.hbm_to_vmem [thread:$0]  %s12, 256, %s454, [#allocation16], 64, 64, 4
        $region56: #{tpu_custom_call.1} parent=11 // pred_fallthru
          _
      $region12: #{tpu_custom_call.1} parent=5 // pred_fallthru
        _
      %p460 = scmp.lt.s32.totalorder %s27, 2
      // Predicated region
      $region57: #{tpu_custom_call.1} parent=5 // pred_check
        %p461 = pneg %p460
      $region58: #{tpu_custom_call.1} parent=5 // pred_check_branch
        %463 = sbr.rel (%p461) target = $region60
      $region59: #{tpu_custom_call.1} parent=5 // pred_region
        // Predicated region
        $region61: #{tpu_custom_call.1} parent=59 // pred_check
          %p464 = pneg %p89
        $region62: #{tpu_custom_call.1} parent=59 // pred_check_branch
          %466 = sbr.rel (%p464) target = $region64
        $region63: #{tpu_custom_call.1} parent=59 // pred_region
          %s467 = sand.u32 %s27, 1
          %s468 = scalar_lea.sflag [#allocation3], %s467
          %s469 = sand.u32 %s79, 1
          %s470 = smul.addr %s469, 64
          %s471 = scalar_lea.vmem [#allocation8], %s470
          %s473 = ssub.s32 1024, 1024
          %474 = vsyncadd %s468, %s473
          %s475 = smul.addr %s27, 16
          %s476 = smul.addr %s475, 64
          %s477 = scalar_lea.hbm %s2, %s476
          %s478 = sshll.u32 %s471, 4
          %s479 = int_to_ptr.vmem [resolvable:$true] %s478
          %484 = dma.hbm_to_vmem [thread:$0]  %s477, 1024, %s479, %s468, 64, 64, 4
        $region64: #{tpu_custom_call.1} parent=59 // pred_fallthru
          _
        // Predicated region
        $region65: #{tpu_custom_call.1} parent=59 // pred_check
          %p485 = pneg %p115
        $region66: #{tpu_custom_call.1} parent=59 // pred_check_branch
          %487 = sbr.rel (%p485) target = $region68
        $region67: #{tpu_custom_call.1} parent=59 // pred_region
          %s488 = sand.u32 %s27, 1
          %s489 = scalar_lea.sflag [#allocation3], %s488
          %s490 = sand.u32 %s105, 1
          %s491 = smul.addr %s490, 64
          %s492 = scalar_lea.vmem [#allocation9], %s491
          %s494 = ssub.s32 1024, 1024
          %495 = vsyncadd %s489, %s494
          %s496 = smul.addr %s27, 16
          %s497 = smul.addr %s496, 64
          %s498 = scalar_lea.hbm %s3, %s497
          %s499 = sshll.u32 %s492, 4
          %s500 = int_to_ptr.vmem [resolvable:$true] %s499
          %505 = dma.hbm_to_vmem [thread:$0]  %s498, 1024, %s500, %s489, 64, 64, 4
        $region68: #{tpu_custom_call.1} parent=59 // pred_fallthru
          _
      $region60: #{tpu_custom_call.1} parent=5 // pred_fallthru
        _
      %p506 = scmp.le.s32.totalorder 1, %s27
      %p507 = scmp.lt.s32.totalorder %s27, 3
      %p508 = pnand %p506, %p507
      %p509 = pneg %p508
      // Predicated region
      $region69: #{tpu_custom_call.1} parent=5 // pred_check
        _
      $region70: #{tpu_custom_call.1} parent=5 // pred_check_branch
        %511 = sbr.rel (%p508) target = $region72
      $region71: #{tpu_custom_call.1} parent=5 // pred_region
        %s512 = ssub.s32 %s27, 1
        // Predicated region
        $region73: #{tpu_custom_call.1} parent=71 // pred_check
          %p513 = pneg %p48
        $region74: #{tpu_custom_call.1} parent=71 // pred_check_branch
          %515 = sbr.rel (%p513) target = $region76
        $region75: #{tpu_custom_call.1} parent=71 // pred_region
          %516 = dma.done [#allocation3], 512
        $region76: #{tpu_custom_call.1} parent=71 // pred_fallthru
          _
        // Predicated region
        $region77: #{tpu_custom_call.1} parent=71 // pred_check
          %p517 = pneg %p69
        $region78: #{tpu_custom_call.1} parent=71 // pred_check_branch
          %519 = sbr.rel (%p517) target = $region80
        $region79: #{tpu_custom_call.1} parent=71 // pred_region
          %520 = dma.done [#allocation7], 512
        $region80: #{tpu_custom_call.1} parent=71 // pred_fallthru
          _
        %s521 = sand.u32 %s32, 1
        %s522 = scalar_lea.sflag [#allocation3], %s521
        %s523 = sand.u32 %s82, 1
        %s524 = smul.addr %s523, 64
        %s525 = scalar_lea.vmem [#allocation8], %s524
        // Predicated region
        $region81: #{tpu_custom_call.1} parent=71 // pred_check
          %p526 = pneg %p95
        $region82: #{tpu_custom_call.1} parent=71 // pred_check_branch
          %528 = sbr.rel (%p526) target = $region84
        $region83: #{tpu_custom_call.1} parent=71 // pred_region
          %529 = dma.done %s522, 1024
        $region84: #{tpu_custom_call.1} parent=71 // pred_fallthru
          _
        %s530 = sand.u32 %s32, 1
        %s531 = scalar_lea.sflag [#allocation3], %s530
        %s532 = sand.u32 %s108, 1
        %s533 = smul.addr %s532, 64
        %s534 = scalar_lea.vmem [#allocation9], %s533
        // Predicated region
        $region85: #{tpu_custom_call.1} parent=71 // pred_check
          %p535 = pneg %p121
        $region86: #{tpu_custom_call.1} parent=71 // pred_check_branch
          %537 = sbr.rel (%p535) target = $region88
        $region87: #{tpu_custom_call.1} parent=71 // pred_region
          %538 = dma.done %s531, 1024
        $region88: #{tpu_custom_call.1} parent=71 // pred_fallthru
          _
        // Predicated region
        $region89: #{tpu_custom_call.1} parent=71 // pred_check
          %p539 = pneg %p142
        $region90: #{tpu_custom_call.1} parent=71 // pred_check_branch
          %541 = sbr.rel (%p539) target = $region92
        $region91: #{tpu_custom_call.1} parent=71 // pred_region
          %542 = dma.done [#allocation5], 32
        $region92: #{tpu_custom_call.1} parent=71 // pred_fallthru
          _
        // Predicated region
        $region93: #{tpu_custom_call.1} parent=71 // pred_check
          %p543 = pneg %p184
        $region94: #{tpu_custom_call.1} parent=71 // pred_check_branch
          %545 = sbr.rel (%p543) target = $region96
        $region95: #{tpu_custom_call.1} parent=71 // pred_region
          %546 = dma.done [#allocation7], 256
        $region96: #{tpu_custom_call.1} parent=71 // pred_fallthru
          _
        // Predicated region
        $region97: #{tpu_custom_call.1} parent=71 // pred_check
          %p547 = pneg %p205
        $region98: #{tpu_custom_call.1} parent=71 // pred_check_branch
          %549 = sbr.rel (%p547) target = $region100
        $region99: #{tpu_custom_call.1} parent=71 // pred_region
          %550 = dma.done [#allocation13], 256
        $region100: #{tpu_custom_call.1} parent=71 // pred_fallthru
          _
        // Predicated region
        $region101: #{tpu_custom_call.1} parent=71 // pred_check
          %p551 = pneg %p226
        $region102: #{tpu_custom_call.1} parent=71 // pred_check_branch
          %553 = sbr.rel (%p551) target = $region104
        $region103: #{tpu_custom_call.1} parent=71 // pred_region
          %554 = dma.done [#allocation13], 256
        $region104: #{tpu_custom_call.1} parent=71 // pred_fallthru
          _
        // Predicated region
        $region105: #{tpu_custom_call.1} parent=71 // pred_check
          %p555 = pneg %p268
        $region106: #{tpu_custom_call.1} parent=71 // pred_check_branch
          %557 = sbr.rel (%p555) target = $region108
        $region107: #{tpu_custom_call.1} parent=71 // pred_region
          %558 = dma.done [#allocation16], 256
        $region108: #{tpu_custom_call.1} parent=71 // pred_fallthru
          _
        // Predicated region
        $region109: #{tpu_custom_call.1} parent=71 // pred_check
          %p559 = pneg %p310
        $region110: #{tpu_custom_call.1} parent=71 // pred_check_branch
          %561 = sbr.rel (%p559) target = $region112
        $region111: #{tpu_custom_call.1} parent=71 // pred_region
          %562 = dma.done [#allocation16], 256
        $region112: #{tpu_custom_call.1} parent=71 // pred_fallthru
          _
        %563 = sfence
        %p564 = pneg %p48
        %p565 = pneg %p45
        %p566 = pneg %p69
        %p567 = pneg %p66
        %s568 = sand.u32 %s32, 1
        %s569 = scalar_lea.sflag [#allocation3], %s568
        %s570 = sand.u32 %s82, 1
        %s571 = smul.addr %s570, 64
        %s572 = scalar_lea.vmem [#allocation8], %s571
        %p573 = pneg %p95
        %p574 = pneg %p92
        %s575 = sand.u32 %s32, 1
        %s576 = scalar_lea.sflag [#allocation3], %s575
        %s577 = sand.u32 %s108, 1
        %s578 = smul.addr %s577, 64
        %s579 = scalar_lea.vmem [#allocation9], %s578
        %p580 = pneg %p121
        %p581 = pneg %p118
        %p582 = pneg %p142
        %p583 = pneg %p139
        %p584 = pneg %p163
        %p585 = pneg %p160
        %p586 = pneg %p184
        %p587 = pneg %p181
        %p588 = pneg %p205
        %p589 = pneg %p202
        %p590 = pneg %p226
        %p591 = pneg %p223
        %p592 = pneg %p247
        %p593 = pneg %p244
        %p594 = pneg %p268
        %p595 = pneg %p265
        %p596 = pneg %p289
        %p597 = pneg %p286
        %p598 = pneg %p310
        %p599 = pneg %p307
        %p600 = pneg %p336
        %p601 = pneg %p333
        %s602 = sand.u32 %s323, 1
        %s603 = scalar_lea.sflag [#allocation4], %s602
        %s604 = sand.u32 %s323, 1
        %s605 = smul.addr %s604, 64
        %s606 = scalar_lea.vmem [#allocation18], %s605
        %v608 = vld [vmem:[#allocation2] sm:$0xff]
        %v609 = vld [vmem:[#allocation2 + $0x8] sm:$0xff]
        %v610 = vld [vmem:[#allocation2 + $0x10] sm:$0xff]
        %v611 = vld [vmem:[#allocation2 + $0x18] sm:$0xff]
        %v612 = vld [vmem:[#allocation6] sm:$0xff]
        %v613 = vld [vmem:[#allocation6 + $0x8] sm:$0xff]
        %v614 = vld [vmem:[#allocation6 + $0x10] sm:$0xff]
        %v615 = vld [vmem:[#allocation6 + $0x18] sm:$0xff]
        %v616 = vld [vmem:[%s5] sm:$0xf]
        %v617 = vld [vmem:[%s5 + $0x4] sm:$0xf]
        %v618 = vld [vmem:[%s5 + $0x8] sm:$0xf]
        %v619 = vld [vmem:[%s5 + $0xc] sm:$0xf]
        %v620 = vld [vmem:[#allocation11] sm:$0xf]
        %v621 = vld [vmem:[#allocation11 + $0x4] sm:$0xf]
        %v622 = vld [vmem:[#allocation11 + $0x8] sm:$0xf]
        %v623 = vld [vmem:[#allocation11 + $0xc] sm:$0xf]
        %v624 = vld [vmem:[#allocation12] sm:$0xf]
        %v625 = vld [vmem:[#allocation12 + $0x4] sm:$0xf]
        %v626 = vld [vmem:[#allocation12 + $0x8] sm:$0xf]
        %v627 = vld [vmem:[#allocation12 + $0xc] sm:$0xf]
        %v628 = vld [vmem:[#allocation14] sm:$0xf]
        %v629 = vld [vmem:[#allocation14 + $0x4] sm:$0xf]
        %v630 = vld [vmem:[#allocation14 + $0x8] sm:$0xf]
        %v631 = vld [vmem:[#allocation14 + $0xc] sm:$0xf]
        %v632 = vld [vmem:[%s9] sm:$0xf]
        %v633 = vld [vmem:[%s9 + $0x4] sm:$0xf]
        %v634 = vld [vmem:[%s9 + $0x8] sm:$0xf]
        %v635 = vld [vmem:[%s9 + $0xc] sm:$0xf]
        %v636 = vld [vmem:[#allocation15] sm:$0xf]
        %v637 = vld [vmem:[#allocation15 + $0x4] sm:$0xf]
        %v638 = vld [vmem:[#allocation15 + $0x8] sm:$0xf]
        %v639 = vld [vmem:[#allocation15 + $0xc] sm:$0xf]
        %v640 = vld [vmem:[%s11] sm:$0xf]
        %v641 = vld [vmem:[%s11 + $0x4] sm:$0xf]
        %v642 = vld [vmem:[#allocation17] sm:$0xf]
        %v643 = vld [vmem:[#allocation17 + $0x4] sm:$0xf]
        %v644 = vld [vmem:[#allocation17 + $0x8] sm:$0xf]
        %v645 = vld [vmem:[#allocation17 + $0xc] sm:$0xf]
        %v646 = vlaneseq
        %v647 = vand.u32 %v646, 127
        %v648 = vld [vmem:[%s525] sm:$0xf]
        %v649 = vld [vmem:[%s525 + $0x4] sm:$0xf]
        %v650 = vld [vmem:[%s525 + $0x8] sm:$0xf]
        %v651 = vld [vmem:[%s525 + $0xc] sm:$0xf]
        %v652 = vunpack.c.l.bf16 %v648
        %v653 = vunpack.c.l.bf16 %v649
        %v654 = vunpack.c.l.bf16 %v650
        %v655 = vunpack.c.l.bf16 %v651
        %v656 = vld [vmem:[%s534] sm:$0xf]
        %v657 = vld [vmem:[%s534 + $0x4] sm:$0xf]
        %v658 = vld [vmem:[%s534 + $0x8] sm:$0xf]
        %v659 = vld [vmem:[%s534 + $0xc] sm:$0xf]
        %v660 = vunpack.c.l.bf16 %v656
        %v661 = vunpack.c.l.bf16 %v657
        %v662 = vunpack.c.l.bf16 %v658
        %v663 = vunpack.c.l.bf16 %v659
        %v664 = vmul.f32 %v608, %v652
        %v665 = vmul.f32 %v609, %v653
        %v666 = vmul.f32 %v610, %v654
        %v667 = vmul.f32 %v611, %v655
        %v668 = vmul.f32 %v612, %v660
        %v669 = vmul.f32 %v613, %v661
        %v670 = vmul.f32 %v614, %v662
        %v671 = vmul.f32 %v615, %v663
        %v672 = vsub.f32 %v664, %v668
        %v673 = vsub.f32 %v665, %v669
        %v674 = vsub.f32 %v666, %v670
        %v675 = vsub.f32 %v667, %v671
        %v676 = vmul.f32 %v608, %v660
        %v677 = vmul.f32 %v609, %v661
        %v678 = vmul.f32 %v610, %v662
        %v679 = vmul.f32 %v611, %v663
        %v680 = vmul.f32 %v612, %v652
        %v681 = vmul.f32 %v613, %v653
        %v682 = vmul.f32 %v614, %v654
        %v683 = vmul.f32 %v615, %v655
        %v684 = vadd.f32 %v676, %v680
        %v685 = vadd.f32 %v677, %v681
        %v686 = vadd.f32 %v678, %v682
        %v687 = vadd.f32 %v679, %v683
        %v688 = vpack.c.bf16 %v673, %v672
        %v689 = vpack.c.bf16 %v675, %v674
        %v690 = vpack.c.bf16 %v685, %v684
        %v691 = vpack.c.bf16 %v687, %v686
        %v692 = vadd.f32 %v672, %v684
        %v693 = vadd.f32 %v673, %v685
        %v694 = vadd.f32 %v674, %v686
        %v695 = vadd.f32 %v675, %v687
        %v696 = vpack.c.bf16 %v693, %v692
        %v697 = vpack.c.bf16 %v695, %v694
        %v702 = vunpack.c.l.b16 %v616
        %v703 = vunpack.c.l.b16 %v617
        %v704 = vunpack.c.l.b16 %v618
        %v705 = vunpack.c.l.b16 %v619
        %v706 = vpack.c.b16 %v703, %v702
        %v707 = vpack.c.b16 %v705, %v704
        %vm708 = vcmask 261120
        %v710 = vsel %vm708, %v706, 0
        %v713 = vsel %vm708, %v707, 0
        %715 = vmatprep.subr.bf16.mxu0 0
        %716 = vmatpush1.bf16.msra.mxu0 %v688
        %717 = vmatprep.subr.bf16.mxu0 0
        %718 = vmatpush1.bf16.msra.mxu0 %v689
        %719 = vmatprep.subr.bf16.mxu0 0
        %720 = vmatpush1.bf16.msra.mxu0 0
        %721 = vmatprep.subr.bf16.mxu0 0
        %722 = vmatpush1.bf16.msra.mxu0 0
        %723 = vmatprep.subr.bf16.mxu0 0
        %724 = vmatpush1.bf16.msra.mxu0 0
        %725 = vmatprep.subr.bf16.mxu0 0
        %726 = vmatpush1.bf16.msra.mxu0 0
        %727 = vmatprep.subr.bf16.mxu0 0
        %728 = vmatpush1.bf16.msra.mxu0 0
        %729 = vmatprep.subr.bf16.mxu0 0
        %730 = vmatpush1.bf16.msra.mxu0 0
        %731 = vmatprep.subr.bf16.mxu0 0
        %732 = vmatpush1.bf16.msra.mxu0 0
        %733 = vmatprep.subr.bf16.mxu0 0
        %734 = vmatpush1.bf16.msra.mxu0 0
        %735 = vmatprep.subr.bf16.mxu0 0
        %736 = vmatpush1.bf16.msra.mxu0 0
        %737 = vmatprep.subr.bf16.mxu0 0
        %738 = vmatpush1.bf16.msra.mxu0 0
        %739 = vmatprep.subr.bf16.mxu0 0
        %740 = vmatpush1.bf16.msra.mxu0 0
        %741 = vmatprep.subr.bf16.mxu0 0
        %742 = vmatpush1.bf16.msra.mxu0 0
        %743 = vmatprep.subr.bf16.mxu0 0
        %744 = vmatpush1.bf16.msra.mxu0 0
        %745 = vmatprep.subr.bf16.mxu0 0
        %746 = vmatpush1.bf16.msra.mxu0 0
        %747 = vmatprep.mubr.bf16.mxu0 0
        %748 = vmatmul.mubr.bf16.gmra.mrb[0].mxu0 %v710
        %v749 = vpop.f32.mrb[0].mxu0
        %v750 = vadd.f32 0.0, %v749
        %v751 = vpop.f32.mrb[0].mxu0
        %v752 = vpop.f32.mrb[0].mxu0
        %v753 = vadd.f32 0.0, %v752
        %v754 = vpop.f32.mrb[0].mxu0
        %755 = vmatprep.mubr.bf16.mxu0 0
        %756 = vmatmul.mubr.bf16.gmra.mrb[0].mxu0 %v713
        %v757 = vpop.f32.mrb[0].mxu0
        %v758 = vadd.f32 0.0, %v757
        %v759 = vpop.f32.mrb[0].mxu0
        %v760 = vpop.f32.mrb[0].mxu0
        %v761 = vadd.f32 0.0, %v760
        %v762 = vpop.f32.mrb[0].mxu0
        %763 = vdwg.mxu0
        %v768 = vunpack.c.l.b16 %v620
        %v769 = vunpack.c.l.b16 %v621
        %v770 = vunpack.c.l.b16 %v622
        %v771 = vunpack.c.l.b16 %v623
        %v772 = vpack.c.b16 %v769, %v768
        %v773 = vpack.c.b16 %v771, %v770
        %v775 = vsel %vm708, %v772, 0
        %v778 = vsel %vm708, %v773, 0
        %780 = vmatprep.subr.bf16.mxu0 0
        %781 = vmatpush1.bf16.msra.mxu0 %v690
        %782 = vmatprep.subr.bf16.mxu0 0
        %783 = vmatpush1.bf16.msra.mxu0 %v691
        %784 = vmatprep.subr.bf16.mxu0 0
        %785 = vmatpush1.bf16.msra.mxu0 0
        %786 = vmatprep.subr.bf16.mxu0 0
        %787 = vmatpush1.bf16.msra.mxu0 0
        %788 = vmatprep.subr.bf16.mxu0 0
        %789 = vmatpush1.bf16.msra.mxu0 0
        %790 = vmatprep.subr.bf16.mxu0 0
        %791 = vmatpush1.bf16.msra.mxu0 0
        %792 = vmatprep.subr.bf16.mxu0 0
        %793 = vmatpush1.bf16.msra.mxu0 0
        %794 = vmatprep.subr.bf16.mxu0 0
        %795 = vmatpush1.bf16.msra.mxu0 0
        %796 = vmatprep.subr.bf16.mxu0 0
        %797 = vmatpush1.bf16.msra.mxu0 0
        %798 = vmatprep.subr.bf16.mxu0 0
        %799 = vmatpush1.bf16.msra.mxu0 0
        %800 = vmatprep.subr.bf16.mxu0 0
        %801 = vmatpush1.bf16.msra.mxu0 0
        %802 = vmatprep.subr.bf16.mxu0 0
        %803 = vmatpush1.bf16.msra.mxu0 0
        %804 = vmatprep.subr.bf16.mxu0 0
        %805 = vmatpush1.bf16.msra.mxu0 0
        %806 = vmatprep.subr.bf16.mxu0 0
        %807 = vmatpush1.bf16.msra.mxu0 0
        %808 = vmatprep.subr.bf16.mxu0 0
        %809 = vmatpush1.bf16.msra.mxu0 0
        %810 = vmatprep.subr.bf16.mxu0 0
        %811 = vmatpush1.bf16.msra.mxu0 0
        %812 = vmatprep.mubr.bf16.mxu0 0
        %813 = vmatmul.mubr.bf16.gmra.mrb[0].mxu0 %v775
        %v814 = vpop.f32.mrb[0].mxu0
        %v815 = vadd.f32 0.0, %v814
        %v816 = vpop.f32.mrb[0].mxu0
        %v817 = vpop.f32.mrb[0].mxu0
        %v818 = vadd.f32 0.0, %v817
        %v819 = vpop.f32.mrb[0].mxu0
        %820 = vmatprep.mubr.bf16.mxu0 0
        %821 = vmatmul.mubr.bf16.gmra.mrb[0].mxu0 %v778
        %v822 = vpop.f32.mrb[0].mxu0
        %v823 = vadd.f32 0.0, %v822
        %v824 = vpop.f32.mrb[0].mxu0
        %v825 = vpop.f32.mrb[0].mxu0
        %v826 = vadd.f32 0.0, %v825
        %v827 = vpop.f32.mrb[0].mxu0
        %828 = vdwg.mxu0
        %v833 = vunpack.c.l.b16 %v624
        %v834 = vunpack.c.l.b16 %v625
        %v835 = vunpack.c.l.b16 %v626
        %v836 = vunpack.c.l.b16 %v627
        %v837 = vpack.c.b16 %v834, %v833
        %v838 = vpack.c.b16 %v836, %v835
        %v840 = vsel %vm708, %v837, 0
        %v843 = vsel %vm708, %v838, 0
        %845 = vmatprep.subr.bf16.mxu0 0
        %846 = vmatpush1.bf16.msra.mxu0 %v696
        %847 = vmatprep.subr.bf16.mxu0 0
        %848 = vmatpush1.bf16.msra.mxu0 %v697
        %849 = vmatprep.subr.bf16.mxu0 0
        %850 = vmatpush1.bf16.msra.mxu0 0
        %851 = vmatprep.subr.bf16.mxu0 0
        %852 = vmatpush1.bf16.msra.mxu0 0
        %853 = vmatprep.subr.bf16.mxu0 0
        %854 = vmatpush1.bf16.msra.mxu0 0
        %855 = vmatprep.subr.bf16.mxu0 0
        %856 = vmatpush1.bf16.msra.mxu0 0
        %857 = vmatprep.subr.bf16.mxu0 0
        %858 = vmatpush1.bf16.msra.mxu0 0
        %859 = vmatprep.subr.bf16.mxu0 0
        %860 = vmatpush1.bf16.msra.mxu0 0
        %861 = vmatprep.subr.bf16.mxu0 0
        %862 = vmatpush1.bf16.msra.mxu0 0
        %863 = vmatprep.subr.bf16.mxu0 0
        %864 = vmatpush1.bf16.msra.mxu0 0
        %865 = vmatprep.subr.bf16.mxu0 0
        %866 = vmatpush1.bf16.msra.mxu0 0
        %867 = vmatprep.subr.bf16.mxu0 0
        %868 = vmatpush1.bf16.msra.mxu0 0
        %869 = vmatprep.subr.bf16.mxu0 0
        %870 = vmatpush1.bf16.msra.mxu0 0
        %871 = vmatprep.subr.bf16.mxu0 0
        %872 = vmatpush1.bf16.msra.mxu0 0
        %873 = vmatprep.subr.bf16.mxu0 0
        %874 = vmatpush1.bf16.msra.mxu0 0
        %875 = vmatprep.subr.bf16.mxu0 0
        %876 = vmatpush1.bf16.msra.mxu0 0
        %877 = vmatprep.mubr.bf16.mxu0 0
        %878 = vmatmul.mubr.bf16.gmra.mrb[0].mxu0 %v840
        %v879 = vpop.f32.mrb[0].mxu0
        %v880 = vadd.f32 0.0, %v879
        %v881 = vpop.f32.mrb[0].mxu0
        %v882 = vpop.f32.mrb[0].mxu0
        %v883 = vadd.f32 0.0, %v882
        %v884 = vpop.f32.mrb[0].mxu0
        %885 = vmatprep.mubr.bf16.mxu0 0
        %886 = vmatmul.mubr.bf16.gmra.mrb[0].mxu0 %v843
        %v887 = vpop.f32.mrb[0].mxu0
        %v888 = vadd.f32 0.0, %v887
        %v889 = vpop.f32.mrb[0].mxu0
        %v890 = vpop.f32.mrb[0].mxu0
        %v891 = vadd.f32 0.0, %v890
        %v892 = vpop.f32.mrb[0].mxu0
        %893 = vdwg.mxu0
        %v894 = vsub.f32 %v750, %v815
        %v895 = vsub.f32 %v753, %v818
        %v896 = vsub.f32 %v758, %v823
        %v897 = vsub.f32 %v761, %v826
        %v898 = vsub.f32 %v880, %v750
        %v899 = vsub.f32 %v883, %v753
        %v900 = vsub.f32 %v888, %v758
        %v901 = vsub.f32 %v891, %v761
        %v902 = vsub.f32 %v898, %v815
        %v903 = vsub.f32 %v899, %v818
        %v904 = vsub.f32 %v900, %v823
        %v905 = vsub.f32 %v901, %v826
        %v906 = vpack.c.bf16 %v895, %v894
        %v907 = vpack.c.bf16 %v897, %v896
        %v908 = vpack.c.bf16 %v903, %v902
        %v909 = vpack.c.bf16 %v905, %v904
        %v910 = vadd.f32 %v894, %v902
        %v911 = vadd.f32 %v895, %v903
        %v912 = vadd.f32 %v896, %v904
        %v913 = vadd.f32 %v897, %v905
        %v914 = vpack.c.bf16 %v911, %v910
        %v915 = vpack.c.bf16 %v913, %v912
        %v920 = vunpack.c.l.b16 %v628
        %v921 = vunpack.c.l.b16 %v629
        %v922 = vunpack.c.l.b16 %v630
        %v923 = vunpack.c.l.b16 %v631
        %v924 = vpack.c.b16 %v921, %v920
        %v925 = vpack.c.b16 %v923, %v922
        %v929 = vsel %vm708, %v906, 0
        %v932 = vsel %vm708, %v907, 0
        %934 = vmatprep.subr.bf16.mxu0 0
        %935 = vmatpush1.bf16.msra.mxu0 %v924
        %936 = vmatprep.subr.bf16.mxu0 0
        %937 = vmatpush1.bf16.msra.mxu0 %v925
        %938 = vmatprep.subr.bf16.mxu0 0
        %939 = vmatpush1.bf16.msra.mxu0 0
        %940 = vmatprep.subr.bf16.mxu0 0
        %941 = vmatpush1.bf16.msra.mxu0 0
        %942 = vmatprep.subr.bf16.mxu0 0
        %943 = vmatpush1.bf16.msra.mxu0 0
        %944 = vmatprep.subr.bf16.mxu0 0
        %945 = vmatpush1.bf16.msra.mxu0 0
        %946 = vmatprep.subr.bf16.mxu0 0
        %947 = vmatpush1.bf16.msra.mxu0 0
        %948 = vmatprep.subr.bf16.mxu0 0
        %949 = vmatpush1.bf16.msra.mxu0 0
        %950 = vmatprep.subr.bf16.mxu0 0
        %951 = vmatpush1.bf16.msra.mxu0 0
        %952 = vmatprep.subr.bf16.mxu0 0
        %953 = vmatpush1.bf16.msra.mxu0 0
        %954 = vmatprep.subr.bf16.mxu0 0
        %955 = vmatpush1.bf16.msra.mxu0 0
        %956 = vmatprep.subr.bf16.mxu0 0
        %957 = vmatpush1.bf16.msra.mxu0 0
        %958 = vmatprep.subr.bf16.mxu0 0
        %959 = vmatpush1.bf16.msra.mxu0 0
        %960 = vmatprep.subr.bf16.mxu0 0
        %961 = vmatpush1.bf16.msra.mxu0 0
        %962 = vmatprep.subr.bf16.mxu0 0
        %963 = vmatpush1.bf16.msra.mxu0 0
        %964 = vmatprep.subr.bf16.mxu0 0
        %965 = vmatpush1.bf16.msra.mxu0 0
        %966 = vmatprep.mubr.bf16.mxu0 0
        %967 = vmatmul.mubr.bf16.gmra.mrb[0].mxu0 %v929
        %v968 = vpop.f32.mrb[0].mxu0
        %v969 = vadd.f32 0.0, %v968
        %v970 = vpop.f32.mrb[0].mxu0
        %v971 = vpop.f32.mrb[0].mxu0
        %v972 = vadd.f32 0.0, %v971
        %v973 = vpop.f32.mrb[0].mxu0
        %974 = vmatprep.mubr.bf16.mxu0 0
        %975 = vmatmul.mubr.bf16.gmra.mrb[0].mxu0 %v932
        %v976 = vpop.f32.mrb[0].mxu0
        %v977 = vadd.f32 0.0, %v976
        %v978 = vpop.f32.mrb[0].mxu0
        %v979 = vpop.f32.mrb[0].mxu0
        %v980 = vadd.f32 0.0, %v979
        %v981 = vpop.f32.mrb[0].mxu0
        %982 = vdwg.mxu0
        %v987 = vunpack.c.l.b16 %v632
        %v988 = vunpack.c.l.b16 %v633
        %v989 = vunpack.c.l.b16 %v634
        %v990 = vunpack.c.l.b16 %v635
        %v991 = vpack.c.b16 %v988, %v987
        %v992 = vpack.c.b16 %v990, %v989
        %v996 = vsel %vm708, %v908, 0
        %v999 = vsel %vm708, %v909, 0
        %1001 = vmatprep.subr.bf16.mxu0 0
        %1002 = vmatpush1.bf16.msra.mxu0 %v991
        %1003 = vmatprep.subr.bf16.mxu0 0
        %1004 = vmatpush1.bf16.msra.mxu0 %v992
        %1005 = vmatprep.subr.bf16.mxu0 0
        %1006 = vmatpush1.bf16.msra.mxu0 0
        %1007 = vmatprep.subr.bf16.mxu0 0
        %1008 = vmatpush1.bf16.msra.mxu0 0
        %1009 = vmatprep.subr.bf16.mxu0 0
        %1010 = vmatpush1.bf16.msra.mxu0 0
        %1011 = vmatprep.subr.bf16.mxu0 0
        %1012 = vmatpush1.bf16.msra.mxu0 0
        %1013 = vmatprep.subr.bf16.mxu0 0
        %1014 = vmatpush1.bf16.msra.mxu0 0
        %1015 = vmatprep.subr.bf16.mxu0 0
        %1016 = vmatpush1.bf16.msra.mxu0 0
        %1017 = vmatprep.subr.bf16.mxu0 0
        %1018 = vmatpush1.bf16.msra.mxu0 0
        %1019 = vmatprep.subr.bf16.mxu0 0
        %1020 = vmatpush1.bf16.msra.mxu0 0
        %1021 = vmatprep.subr.bf16.mxu0 0
        %1022 = vmatpush1.bf16.msra.mxu0 0
        %1023 = vmatprep.subr.bf16.mxu0 0
        %1024 = vmatpush1.bf16.msra.mxu0 0
        %1025 = vmatprep.subr.bf16.mxu0 0
        %1026 = vmatpush1.bf16.msra.mxu0 0
        %1027 = vmatprep.subr.bf16.mxu0 0
        %1028 = vmatpush1.bf16.msra.mxu0 0
        %1029 = vmatprep.subr.bf16.mxu0 0
        %1030 = vmatpush1.bf16.msra.mxu0 0
        %1031 = vmatprep.subr.bf16.mxu0 0
        %1032 = vmatpush1.bf16.msra.mxu0 0
        %1033 = vmatprep.mubr.bf16.mxu0 0
        %1034 = vmatmul.mubr.bf16.gmra.mrb[0].mxu0 %v996
        %v1035 = vpop.f32.mrb[0].mxu0
        %v1036 = vadd.f32 0.0, %v1035
        %v1037 = vpop.f32.mrb[0].mxu0
        %v1038 = vpop.f32.mrb[0].mxu0
        %v1039 = vadd.f32 0.0, %v1038
        %v1040 = vpop.f32.mrb[0].mxu0
        %1041 = vmatprep.mubr.bf16.mxu0 0
        %1042 = vmatmul.mubr.bf16.gmra.mrb[0].mxu0 %v999
        %v1043 = vpop.f32.mrb[0].mxu0
        %v1044 = vadd.f32 0.0, %v1043
        %v1045 = vpop.f32.mrb[0].mxu0
        %v1046 = vpop.f32.mrb[0].mxu0
        %v1047 = vadd.f32 0.0, %v1046
        %v1048 = vpop.f32.mrb[0].mxu0
        %1049 = vdwg.mxu0
        %v1054 = vunpack.c.l.b16 %v636
        %v1055 = vunpack.c.l.b16 %v637
        %v1056 = vunpack.c.l.b16 %v638
        %v1057 = vunpack.c.l.b16 %v639
        %v1058 = vpack.c.b16 %v1055, %v1054
        %v1059 = vpack.c.b16 %v1057, %v1056
        %v1063 = vsel %vm708, %v914, 0
        %v1066 = vsel %vm708, %v915, 0
        %1068 = vmatprep.subr.bf16.mxu0 0
        %1069 = vmatpush1.bf16.msra.mxu0 %v1058
        %1070 = vmatprep.subr.bf16.mxu0 0
        %1071 = vmatpush1.bf16.msra.mxu0 %v1059
        %1072 = vmatprep.subr.bf16.mxu0 0
        %1073 = vmatpush1.bf16.msra.mxu0 0
        %1074 = vmatprep.subr.bf16.mxu0 0
        %1075 = vmatpush1.bf16.msra.mxu0 0
        %1076 = vmatprep.subr.bf16.mxu0 0
        %1077 = vmatpush1.bf16.msra.mxu0 0
        %1078 = vmatprep.subr.bf16.mxu0 0
        %1079 = vmatpush1.bf16.msra.mxu0 0
        %1080 = vmatprep.subr.bf16.mxu0 0
        %1081 = vmatpush1.bf16.msra.mxu0 0
        %1082 = vmatprep.subr.bf16.mxu0 0
        %1083 = vmatpush1.bf16.msra.mxu0 0
        %1084 = vmatprep.subr.bf16.mxu0 0
        %1085 = vmatpush1.bf16.msra.mxu0 0
        %1086 = vmatprep.subr.bf16.mxu0 0
        %1087 = vmatpush1.bf16.msra.mxu0 0
        %1088 = vmatprep.subr.bf16.mxu0 0
        %1089 = vmatpush1.bf16.msra.mxu0 0
        %1090 = vmatprep.subr.bf16.mxu0 0
        %1091 = vmatpush1.bf16.msra.mxu0 0
        %1092 = vmatprep.subr.bf16.mxu0 0
        %1093 = vmatpush1.bf16.msra.mxu0 0
        %1094 = vmatprep.subr.bf16.mxu0 0
        %1095 = vmatpush1.bf16.msra.mxu0 0
        %1096 = vmatprep.subr.bf16.mxu0 0
        %1097 = vmatpush1.bf16.msra.mxu0 0
        %1098 = vmatprep.subr.bf16.mxu0 0
        %1099 = vmatpush1.bf16.msra.mxu0 0
        %1100 = vmatprep.mubr.bf16.mxu0 0
        %1101 = vmatmul.mubr.bf16.gmra.mrb[0].mxu0 %v1063
        %v1102 = vpop.f32.mrb[0].mxu0
        %v1103 = vadd.f32 0.0, %v1102
        %v1104 = vpop.f32.mrb[0].mxu0
        %v1105 = vpop.f32.mrb[0].mxu0
        %v1106 = vadd.f32 0.0, %v1105
        %v1107 = vpop.f32.mrb[0].mxu0
        %1108 = vmatprep.mubr.bf16.mxu0 0
        %1109 = vmatmul.mubr.bf16.gmra.mrb[0].mxu0 %v1066
        %v1110 = vpop.f32.mrb[0].mxu0
        %v1111 = vadd.f32 0.0, %v1110
        %v1112 = vpop.f32.mrb[0].mxu0
        %v1113 = vpop.f32.mrb[0].mxu0
        %v1114 = vadd.f32 0.0, %v1113
        %v1115 = vpop.f32.mrb[0].mxu0
        %1116 = vdwg.mxu0
        %v1117 = vsub.f32 %v969, %v1036
        %v1118 = vsub.f32 %v972, %v1039
        %v1119 = vsub.f32 %v977, %v1044
        %v1120 = vsub.f32 %v980, %v1047
        %v1121 = vsub.f32 %v1103, %v969
        %v1122 = vsub.f32 %v1106, %v972
        %v1123 = vsub.f32 %v1111, %v977
        %v1124 = vsub.f32 %v1114, %v980
        %v1125 = vsub.f32 %v1121, %v1036
        %v1126 = vsub.f32 %v1122, %v1039
        %v1127 = vsub.f32 %v1123, %v1044
        %v1128 = vsub.f32 %v1124, %v1047
        %v1129 = vmul.f32 %v1117, %v1117
        %v1130 = vmul.f32 %v1118, %v1118
        %v1131 = vmul.f32 %v1119, %v1119
        %v1132 = vmul.f32 %v1120, %v1120
        %v1133 = vmul.f32 %v1125, %v1125
        %v1134 = vmul.f32 %v1126, %v1126
        %v1135 = vmul.f32 %v1127, %v1127
        %v1136 = vmul.f32 %v1128, %v1128
        %v1137 = vadd.f32 %v1129, %v1133
        %v1138 = vadd.f32 %v1130, %v1134
        %v1139 = vadd.f32 %v1131, %v1135
        %v1140 = vadd.f32 %v1132, %v1136
        %v1141 = vsel %vm708, %v1137, 0.0
        %v1142 = vsel %vm708, %v1138, 0.0
        %v1143 = vadd.f32 %v1141, %v1142
        %v1144 = vsel %vm708, %v1139, 0.0
        %v1145 = vadd.f32 %v1143, %v1144
        %v1146 = vsel %vm708, %v1140, 0.0
        %v1147 = vadd.f32 %v1145, %v1146
        %1148 = vadd.xlane.f32.xlu0 %v1147
        %v1149 = vpop.xlane.xlu0 %1148
        %v1150 = vrot.slane %v1149, 4
        %v1151 = vadd.f32 %v1149, %v1150
        %v1152 = vrot.slane %v1151, 2
        %v1153 = vadd.f32 %v1151, %v1152
        %v1154 = vrot.slane %v1153, 1
        %v1155 = vadd.f32 %v1153, %v1154
        %s1156 = vtos %v1155
        %v1157 = vstv %s1156
        %v1158 = vpack.c.bf16 %v1138, %v1137
        %v1159 = vpack.c.bf16 %v1140, %v1139
        %v1162 = vunpack.c.l.b16 %v640
        %v1163 = vunpack.c.l.b16 %v641
        %v1164 = vpack.c.b16 %v1163, %v1162
        %v1166 = vsel %vm708, %v1164, 0
        %1168 = vmatprep.subr.bf16.mxu0 0
        %1169 = vmatpush1.bf16.msra.mxu0 %v1158
        %1170 = vmatprep.subr.bf16.mxu0 0
        %1171 = vmatpush1.bf16.msra.mxu0 %v1159
        %1172 = vmatprep.subr.bf16.mxu0 0
        %1173 = vmatpush1.bf16.msra.mxu0 0
        %1174 = vmatprep.subr.bf16.mxu0 0
        %1175 = vmatpush1.bf16.msra.mxu0 0
        %1176 = vmatprep.subr.bf16.mxu0 0
        %1177 = vmatpush1.bf16.msra.mxu0 0
        %1178 = vmatprep.subr.bf16.mxu0 0
        %1179 = vmatpush1.bf16.msra.mxu0 0
        %1180 = vmatprep.subr.bf16.mxu0 0
        %1181 = vmatpush1.bf16.msra.mxu0 0
        %1182 = vmatprep.subr.bf16.mxu0 0
        %1183 = vmatpush1.bf16.msra.mxu0 0
        %1184 = vmatprep.subr.bf16.mxu0 0
        %1185 = vmatpush1.bf16.msra.mxu0 0
        %1186 = vmatprep.subr.bf16.mxu0 0
        %1187 = vmatpush1.bf16.msra.mxu0 0
        %1188 = vmatprep.subr.bf16.mxu0 0
        %1189 = vmatpush1.bf16.msra.mxu0 0
        %1190 = vmatprep.subr.bf16.mxu0 0
        %1191 = vmatpush1.bf16.msra.mxu0 0
        %1192 = vmatprep.subr.bf16.mxu0 0
        %1193 = vmatpush1.bf16.msra.mxu0 0
        %1194 = vmatprep.subr.bf16.mxu0 0
        %1195 = vmatpush1.bf16.msra.mxu0 0
        %1196 = vmatprep.subr.bf16.mxu0 0
        %1197 = vmatpush1.bf16.msra.mxu0 0
        %1198 = vmatprep.subr.bf16.mxu0 0
        %1199 = vmatpush1.bf16.msra.mxu0 0
        %1200 = vmatprep.mubr.bf16.mxu0 0
        %1201 = vmatmul.mubr.bf16.gmra.mrb[0].mxu0 %v1166
        %v1202 = vpop.f32.mrb[0].mxu0
        %v1203 = vadd.f32 0.0, %v1202
        %v1204 = vpop.f32.mrb[0].mxu0
        %v1205 = vpop.f32.mrb[0].mxu0
        %v1206 = vadd.f32 0.0, %v1205
        %v1207 = vpop.f32.mrb[0].mxu0
        %1208 = vdwg.mxu0
        %v1209 = vpack.c.bf16 %v1206, %v1203
        %v1214 = vunpack.c.l.b16 %v642
        %v1215 = vunpack.c.l.b16 %v643
        %v1216 = vunpack.c.l.b16 %v644
        %v1217 = vunpack.c.l.b16 %v645
        %v1218 = vpack.c.b16 %v1215, %v1214
        %v1219 = vpack.c.b16 %v1217, %v1216
        %v1223 = vsel %vm708, %v1209, 0
        %1225 = vmatprep.subr.bf16.mxu0 0
        %1226 = vmatpush1.bf16.msra.mxu0 %v1218
        %1227 = vmatprep.subr.bf16.mxu0 0
        %1228 = vmatpush1.bf16.msra.mxu0 %v1219
        %1229 = vmatprep.subr.bf16.mxu0 0
        %1230 = vmatpush1.bf16.msra.mxu0 0
        %1231 = vmatprep.subr.bf16.mxu0 0
        %1232 = vmatpush1.bf16.msra.mxu0 0
        %1233 = vmatprep.subr.bf16.mxu0 0
        %1234 = vmatpush1.bf16.msra.mxu0 0
        %1235 = vmatprep.subr.bf16.mxu0 0
        %1236 = vmatpush1.bf16.msra.mxu0 0
        %1237 = vmatprep.subr.bf16.mxu0 0
        %1238 = vmatpush1.bf16.msra.mxu0 0
        %1239 = vmatprep.subr.bf16.mxu0 0
        %1240 = vmatpush1.bf16.msra.mxu0 0
        %1241 = vmatprep.subr.bf16.mxu0 0
        %1242 = vmatpush1.bf16.msra.mxu0 0
        %1243 = vmatprep.subr.bf16.mxu0 0
        %1244 = vmatpush1.bf16.msra.mxu0 0
        %1245 = vmatprep.subr.bf16.mxu0 0
        %1246 = vmatpush1.bf16.msra.mxu0 0
        %1247 = vmatprep.subr.bf16.mxu0 0
        %1248 = vmatpush1.bf16.msra.mxu0 0
        %1249 = vmatprep.subr.bf16.mxu0 0
        %1250 = vmatpush1.bf16.msra.mxu0 0
        %1251 = vmatprep.subr.bf16.mxu0 0
        %1252 = vmatpush1.bf16.msra.mxu0 0
        %1253 = vmatprep.subr.bf16.mxu0 0
        %1254 = vmatpush1.bf16.msra.mxu0 0
        %1255 = vmatprep.subr.bf16.mxu0 0
        %1256 = vmatpush1.bf16.msra.mxu0 0
        %1257 = vmatprep.mubr.bf16.mxu0 0
        %1258 = vmatmul.mubr.bf16.gmra.mrb[0].mxu0 %v1223
        %v1259 = vpop.f32.mrb[0].mxu0
        %v1260 = vadd.f32 0.0, %v1259
        %v1261 = vpop.f32.mrb[0].mxu0
        %v1262 = vpop.f32.mrb[0].mxu0
        %v1263 = vadd.f32 0.0, %v1262
        %v1264 = vpop.f32.mrb[0].mxu0
        %1265 = vdwg.mxu0
        %s1266 = smul.u32 %s32, 128
        %s1267 = sld [smem:[#allocation10 + %s1266]]
        %v1268 = vstv %s1267
        %v1269 = vrcp.pop %v1157
        %v1270 = vmul.f32 %v1268, %v1269
        %v1271 = vmul.f32 %v1260, %v1270
        %v1272 = vmul.f32 %v1263, %v1270
        %1273 = vst [vmem:[%s606] sm:$0xff] %v1271
        %1274 = vst [vmem:[%s606 + $0x8] sm:$0xff] %v1272
        %vm1275 = vcmp.lt.s32.totalorder %v647, 16
        %v1276 = vsel %vm1275, %v1271, inf
        %v1277 = vsel %vm1275, %v1272, inf
        %v1278 = vmin.f32 %v1276, %v1277
        %1279 = vmin.xlane.f32.xlu0 %v1278
        %v1280 = vpop.xlane.xlu0 %1279
        %v1281 = vrot.slane %v1280, 4
        %v1282 = vmin.f32 %v1280, %v1281
        %v1283 = vrot.slane %v1282, 2
        %v1284 = vmin.f32 %v1282, %v1283
        %v1285 = vrot.slane %v1284, 1
        %v1286 = vmin.f32 %v1284, %v1285
        %s1287 = vtos %v1286
        %v1288 = vstv %s1287
        %v1289 = vmax.f32 %v1271, %v1272
        %1290 = vmax.xlane.f32.xlu0 %v1289
        %v1291 = vpop.xlane.xlu0 %1290
        %v1292 = vrot.slane %v1291, 4
        %v1293 = vmax.f32 %v1291, %v1292
        %v1294 = vrot.slane %v1293, 2
        %v1295 = vmax.f32 %v1293, %v1294
        %v1296 = vrot.slane %v1295, 1
        %v1297 = vmax.f32 %v1295, %v1296
        %s1298 = vtos %v1297
        %v1299 = vstv %s1298
        %s1300 = scalar_lea.vmem %s525, 16 [#allocation8]
        %v1301 = vld [vmem:[%s1300] sm:$0xf]
        %v1302 = vld [vmem:[%s1300 + $0x4] sm:$0xf]
        %v1303 = vld [vmem:[%s1300 + $0x8] sm:$0xf]
        %v1304 = vld [vmem:[%s1300 + $0xc] sm:$0xf]
        %v1305 = vunpack.c.l.bf16 %v1301
        %v1306 = vunpack.c.l.bf16 %v1302
        %v1307 = vunpack.c.l.bf16 %v1303
        %v1308 = vunpack.c.l.bf16 %v1304
        %s1309 = scalar_lea.vmem %s534, 16 [#allocation9]
        %v1310 = vld [vmem:[%s1309] sm:$0xf]
        %v1311 = vld [vmem:[%s1309 + $0x4] sm:$0xf]
        %v1312 = vld [vmem:[%s1309 + $0x8] sm:$0xf]
        %v1313 = vld [vmem:[%s1309 + $0xc] sm:$0xf]
        %v1314 = vunpack.c.l.bf16 %v1310
        %v1315 = vunpack.c.l.bf16 %v1311
        %v1316 = vunpack.c.l.bf16 %v1312
        %v1317 = vunpack.c.l.bf16 %v1313
        %v1318 = vmul.f32 %v608, %v1305
        %v1319 = vmul.f32 %v609, %v1306
        %v1320 = vmul.f32 %v610, %v1307
        %v1321 = vmul.f32 %v611, %v1308
        %v1322 = vmul.f32 %v612, %v1314
        %v1323 = vmul.f32 %v613, %v1315
        %v1324 = vmul.f32 %v614, %v1316
        %v1325 = vmul.f32 %v615, %v1317
        %v1326 = vsub.f32 %v1318, %v1322
        %v1327 = vsub.f32 %v1319, %v1323
        %v1328 = vsub.f32 %v1320, %v1324
        %v1329 = vsub.f32 %v1321, %v1325
        %v1330 = vmul.f32 %v608, %v1314
        %v1331 = vmul.f32 %v609, %v1315
        %v1332 = vmul.f32 %v610, %v1316
        %v1333 = vmul.f32 %v611, %v1317
        %v1334 = vmul.f32 %v612, %v1305
        %v1335 = vmul.f32 %v613, %v1306
        %v1336 = vmul.f32 %v614, %v1307
        %v1337 = vmul.f32 %v615, %v1308
        %v1338 = vadd.f32 %v1330, %v1334
        %v1339 = vadd.f32 %v1331, %v1335
        %v1340 = vadd.f32 %v1332, %v1336
        %v1341 = vadd.f32 %v1333, %v1337
        %v1342 = vpack.c.bf16 %v1327, %v1326
        %v1343 = vpack.c.bf16 %v1329, %v1328
        %v1344 = vpack.c.bf16 %v1339, %v1338
        %v1345 = vpack.c.bf16 %v1341, %v1340
        %v1346 = vadd.f32 %v1326, %v1338
        %v1347 = vadd.f32 %v1327, %v1339
        %v1348 = vadd.f32 %v1328, %v1340
        %v1349 = vadd.f32 %v1329, %v1341
        %v1350 = vpack.c.bf16 %v1347, %v1346
        %v1351 = vpack.c.bf16 %v1349, %v1348
        %1352 = vmatprep.subr.bf16.mxu0 0
        %1353 = vmatpush1.bf16.msra.mxu0 %v1342
        %1354 = vmatprep.subr.bf16.mxu0 0
        %1355 = vmatpush1.bf16.msra.mxu0 %v1343
        %1356 = vmatprep.subr.bf16.mxu0 0
        %1357 = vmatpush1.bf16.msra.mxu0 0
        %1358 = vmatprep.subr.bf16.mxu0 0
        %1359 = vmatpush1.bf16.msra.mxu0 0
        %1360 = vmatprep.subr.bf16.mxu0 0
        %1361 = vmatpush1.bf16.msra.mxu0 0
        %1362 = vmatprep.subr.bf16.mxu0 0
        %1363 = vmatpush1.bf16.msra.mxu0 0
        %1364 = vmatprep.subr.bf16.mxu0 0
        %1365 = vmatpush1.bf16.msra.mxu0 0
        %1366 = vmatprep.subr.bf16.mxu0 0
        %1367 = vmatpush1.bf16.msra.mxu0 0
        %1368 = vmatprep.subr.bf16.mxu0 0
        %1369 = vmatpush1.bf16.msra.mxu0 0
        %1370 = vmatprep.subr.bf16.mxu0 0
        %1371 = vmatpush1.bf16.msra.mxu0 0
        %1372 = vmatprep.subr.bf16.mxu0 0
        %1373 = vmatpush1.bf16.msra.mxu0 0
        %1374 = vmatprep.subr.bf16.mxu0 0
        %1375 = vmatpush1.bf16.msra.mxu0 0
        %1376 = vmatprep.subr.bf16.mxu0 0
        %1377 = vmatpush1.bf16.msra.mxu0 0
        %1378 = vmatprep.subr.bf16.mxu0 0
        %1379 = vmatpush1.bf16.msra.mxu0 0
        %1380 = vmatprep.subr.bf16.mxu0 0
        %1381 = vmatpush1.bf16.msra.mxu0 0
        %1382 = vmatprep.subr.bf16.mxu0 0
        %1383 = vmatpush1.bf16.msra.mxu0 0
        %1384 = vmatprep.mubr.bf16.mxu0 0
        %1385 = vmatmul.mubr.bf16.gmra.mrb[0].mxu0 %v710
        %v1386 = vpop.f32.mrb[0].mxu0
        %v1387 = vadd.f32 0.0, %v1386
        %v1388 = vpop.f32.mrb[0].mxu0
        %v1389 = vpop.f32.mrb[0].mxu0
        %v1390 = vadd.f32 0.0, %v1389
        %v1391 = vpop.f32.mrb[0].mxu0
        %1392 = vmatprep.mubr.bf16.mxu0 0
        %1393 = vmatmul.mubr.bf16.gmra.mrb[0].mxu0 %v713
        %v1394 = vpop.f32.mrb[0].mxu0
        %v1395 = vadd.f32 0.0, %v1394
        %v1396 = vpop.f32.mrb[0].mxu0
        %v1397 = vpop.f32.mrb[0].mxu0
        %v1398 = vadd.f32 0.0, %v1397
        %v1399 = vpop.f32.mrb[0].mxu0
        %1400 = vdwg.mxu0
        %1401 = vmatprep.subr.bf16.mxu0 0
        %1402 = vmatpush1.bf16.msra.mxu0 %v1344
        %1403 = vmatprep.subr.bf16.mxu0 0
        %1404 = vmatpush1.bf16.msra.mxu0 %v1345
        %1405 = vmatprep.subr.bf16.mxu0 0
        %1406 = vmatpush1.bf16.msra.mxu0 0
        %1407 = vmatprep.subr.bf16.mxu0 0
        %1408 = vmatpush1.bf16.msra.mxu0 0
        %1409 = vmatprep.subr.bf16.mxu0 0
        %1410 = vmatpush1.bf16.msra.mxu0 0
        %1411 = vmatprep.subr.bf16.mxu0 0
        %1412 = vmatpush1.bf16.msra.mxu0 0
        %1413 = vmatprep.subr.bf16.mxu0 0
        %1414 = vmatpush1.bf16.msra.mxu0 0
        %1415 = vmatprep.subr.bf16.mxu0 0
        %1416 = vmatpush1.bf16.msra.mxu0 0
        %1417 = vmatprep.subr.bf16.mxu0 0
        %1418 = vmatpush1.bf16.msra.mxu0 0
        %1419 = vmatprep.subr.bf16.mxu0 0
        %1420 = vmatpush1.bf16.msra.mxu0 0
        %1421 = vmatprep.subr.bf16.mxu0 0
        %1422 = vmatpush1.bf16.msra.mxu0 0
        %1423 = vmatprep.subr.bf16.mxu0 0
        %1424 = vmatpush1.bf16.msra.mxu0 0
        %1425 = vmatprep.subr.bf16.mxu0 0
        %1426 = vmatpush1.bf16.msra.mxu0 0
        %1427 = vmatprep.subr.bf16.mxu0 0
        %1428 = vmatpush1.bf16.msra.mxu0 0
        %1429 = vmatprep.subr.bf16.mxu0 0
        %1430 = vmatpush1.bf16.msra.mxu0 0
        %1431 = vmatprep.subr.bf16.mxu0 0
        %1432 = vmatpush1.bf16.msra.mxu0 0
        %1433 = vmatprep.mubr.bf16.mxu0 0
        %1434 = vmatmul.mubr.bf16.gmra.mrb[0].mxu0 %v775
        %v1435 = vpop.f32.mrb[0].mxu0
        %v1436 = vadd.f32 0.0, %v1435
        %v1437 = vpop.f32.mrb[0].mxu0
        %v1438 = vpop.f32.mrb[0].mxu0
        %v1439 = vadd.f32 0.0, %v1438
        %v1440 = vpop.f32.mrb[0].mxu0
        %1441 = vmatprep.mubr.bf16.mxu0 0
        %1442 = vmatmul.mubr.bf16.gmra.mrb[0].mxu0 %v778
        %v1443 = vpop.f32.mrb[0].mxu0
        %v1444 = vadd.f32 0.0, %v1443
        %v1445 = vpop.f32.mrb[0].mxu0
        %v1446 = vpop.f32.mrb[0].mxu0
        %v1447 = vadd.f32 0.0, %v1446
        %v1448 = vpop.f32.mrb[0].mxu0
        %1449 = vdwg.mxu0
        %1450 = vmatprep.subr.bf16.mxu0 0
        %1451 = vmatpush1.bf16.msra.mxu0 %v1350
        %1452 = vmatprep.subr.bf16.mxu0 0
        %1453 = vmatpush1.bf16.msra.mxu0 %v1351
        %1454 = vmatprep.subr.bf16.mxu0 0
        %1455 = vmatpush1.bf16.msra.mxu0 0
        %1456 = vmatprep.subr.bf16.mxu0 0
        %1457 = vmatpush1.bf16.msra.mxu0 0
        %1458 = vmatprep.subr.bf16.mxu0 0
        %1459 = vmatpush1.bf16.msra.mxu0 0
        %1460 = vmatprep.subr.bf16.mxu0 0
        %1461 = vmatpush1.bf16.msra.mxu0 0
        %1462 = vmatprep.subr.bf16.mxu0 0
        %1463 = vmatpush1.bf16.msra.mxu0 0
        %1464 = vmatprep.subr.bf16.mxu0 0
        %1465 = vmatpush1.bf16.msra.mxu0 0
        %1466 = vmatprep.subr.bf16.mxu0 0
        %1467 = vmatpush1.bf16.msra.mxu0 0
        %1468 = vmatprep.subr.bf16.mxu0 0
        %1469 = vmatpush1.bf16.msra.mxu0 0
        %1470 = vmatprep.subr.bf16.mxu0 0
        %1471 = vmatpush1.bf16.msra.mxu0 0
        %1472 = vmatprep.subr.bf16.mxu0 0
        %1473 = vmatpush1.bf16.msra.mxu0 0
        %1474 = vmatprep.subr.bf16.mxu0 0
        %1475 = vmatpush1.bf16.msra.mxu0 0
        %1476 = vmatprep.subr.bf16.mxu0 0
        %1477 = vmatpush1.bf16.msra.mxu0 0
        %1478 = vmatprep.subr.bf16.mxu0 0
        %1479 = vmatpush1.bf16.msra.mxu0 0
        %1480 = vmatprep.subr.bf16.mxu0 0
        %1481 = vmatpush1.bf16.msra.mxu0 0
        %1482 = vmatprep.mubr.bf16.mxu0 0
        %1483 = vmatmul.mubr.bf16.gmra.mrb[0].mxu0 %v840
        %v1484 = vpop.f32.mrb[0].mxu0
        %v1485 = vadd.f32 0.0, %v1484
        %v1486 = vpop.f32.mrb[0].mxu0
        %v1487 = vpop.f32.mrb[0].mxu0
        %v1488 = vadd.f32 0.0, %v1487
        %v1489 = vpop.f32.mrb[0].mxu0
        %1490 = vmatprep.mubr.bf16.mxu0 0
        %1491 = vmatmul.mubr.bf16.gmra.mrb[0].mxu0 %v843
        %v1492 = vpop.f32.mrb[0].mxu0
        %v1493 = vadd.f32 0.0, %v1492
        %v1494 = vpop.f32.mrb[0].mxu0
        %v1495 = vpop.f32.mrb[0].mxu0
        %v1496 = vadd.f32 0.0, %v1495
        %v1497 = vpop.f32.mrb[0].mxu0
        %1498 = vdwg.mxu0
        %v1499 = vsub.f32 %v1387, %v1436
        %v1500 = vsub.f32 %v1390, %v1439
        %v1501 = vsub.f32 %v1395, %v1444
        %v1502 = vsub.f32 %v1398, %v1447
        %v1503 = vsub.f32 %v1485, %v1387
        %v1504 = vsub.f32 %v1488, %v1390
        %v1505 = vsub.f32 %v1493, %v1395
        %v1506 = vsub.f32 %v1496, %v1398
        %v1507 = vsub.f32 %v1503, %v1436
        %v1508 = vsub.f32 %v1504, %v1439
        %v1509 = vsub.f32 %v1505, %v1444
        %v1510 = vsub.f32 %v1506, %v1447
        %v1511 = vpack.c.bf16 %v1500, %v1499
        %v1512 = vpack.c.bf16 %v1502, %v1501
        %v1513 = vpack.c.bf16 %v1508, %v1507
        %v1514 = vpack.c.bf16 %v1510, %v1509
        %v1515 = vadd.f32 %v1499, %v1507
        %v1516 = vadd.f32 %v1500, %v1508
        %v1517 = vadd.f32 %v1501, %v1509
        %v1518 = vadd.f32 %v1502, %v1510
        %v1519 = vpack.c.bf16 %v1516, %v1515
        %v1520 = vpack.c.bf16 %v1518, %v1517
        %v1522 = vsel %vm708, %v1511, 0
        %v1525 = vsel %vm708, %v1512, 0
        %1527 = vmatprep.subr.bf16.mxu0 0
        %1528 = vmatpush1.bf16.msra.mxu0 %v924
        %1529 = vmatprep.subr.bf16.mxu0 0
        %1530 = vmatpush1.bf16.msra.mxu0 %v925
        %1531 = vmatprep.subr.bf16.mxu0 0
        %1532 = vmatpush1.bf16.msra.mxu0 0
        %1533 = vmatprep.subr.bf16.mxu0 0
        %1534 = vmatpush1.bf16.msra.mxu0 0
        %1535 = vmatprep.subr.bf16.mxu0 0
        %1536 = vmatpush1.bf16.msra.mxu0 0
        %1537 = vmatprep.subr.bf16.mxu0 0
        %1538 = vmatpush1.bf16.msra.mxu0 0
        %1539 = vmatprep.subr.bf16.mxu0 0
        %1540 = vmatpush1.bf16.msra.mxu0 0
        %1541 = vmatprep.subr.bf16.mxu0 0
        %1542 = vmatpush1.bf16.msra.mxu0 0
        %1543 = vmatprep.subr.bf16.mxu0 0
        %1544 = vmatpush1.bf16.msra.mxu0 0
        %1545 = vmatprep.subr.bf16.mxu0 0
        %1546 = vmatpush1.bf16.msra.mxu0 0
        %1547 = vmatprep.subr.bf16.mxu0 0
        %1548 = vmatpush1.bf16.msra.mxu0 0
        %1549 = vmatprep.subr.bf16.mxu0 0
        %1550 = vmatpush1.bf16.msra.mxu0 0
        %1551 = vmatprep.subr.bf16.mxu0 0
        %1552 = vmatpush1.bf16.msra.mxu0 0
        %1553 = vmatprep.subr.bf16.mxu0 0
        %1554 = vmatpush1.bf16.msra.mxu0 0
        %1555 = vmatprep.subr.bf16.mxu0 0
        %1556 = vmatpush1.bf16.msra.mxu0 0
        %1557 = vmatprep.subr.bf16.mxu0 0
        %1558 = vmatpush1.bf16.msra.mxu0 0
        %1559 = vmatprep.mubr.bf16.mxu0 0
        %1560 = vmatmul.mubr.bf16.gmra.mrb[0].mxu0 %v1522
        %v1561 = vpop.f32.mrb[0].mxu0
        %v1562 = vadd.f32 0.0, %v1561
        %v1563 = vpop.f32.mrb[0].mxu0
        %v1564 = vpop.f32.mrb[0].mxu0
        %v1565 = vadd.f32 0.0, %v1564
        %v1566 = vpop.f32.mrb[0].mxu0
        %1567 = vmatprep.mubr.bf16.mxu0 0
        %1568 = vmatmul.mubr.bf16.gmra.mrb[0].mxu0 %v1525
        %v1569 = vpop.f32.mrb[0].mxu0
        %v1570 = vadd.f32 0.0, %v1569
        %v1571 = vpop.f32.mrb[0].mxu0
        %v1572 = vpop.f32.mrb[0].mxu0
        %v1573 = vadd.f32 0.0, %v1572
        %v1574 = vpop.f32.mrb[0].mxu0
        %1575 = vdwg.mxu0
        %v1577 = vsel %vm708, %v1513, 0
        %v1580 = vsel %vm708, %v1514, 0
        %1582 = vmatprep.subr.bf16.mxu0 0
        %1583 = vmatpush1.bf16.msra.mxu0 %v991
        %1584 = vmatprep.subr.bf16.mxu0 0
        %1585 = vmatpush1.bf16.msra.mxu0 %v992
        %1586 = vmatprep.subr.bf16.mxu0 0
        %1587 = vmatpush1.bf16.msra.mxu0 0
        %1588 = vmatprep.subr.bf16.mxu0 0
        %1589 = vmatpush1.bf16.msra.mxu0 0
        %1590 = vmatprep.subr.bf16.mxu0 0
        %1591 = vmatpush1.bf16.msra.mxu0 0
        %1592 = vmatprep.subr.bf16.mxu0 0
        %1593 = vmatpush1.bf16.msra.mxu0 0
        %1594 = vmatprep.subr.bf16.mxu0 0
        %1595 = vmatpush1.bf16.msra.mxu0 0
        %1596 = vmatprep.subr.bf16.mxu0 0
        %1597 = vmatpush1.bf16.msra.mxu0 0
        %1598 = vmatprep.subr.bf16.mxu0 0
        %1599 = vmatpush1.bf16.msra.mxu0 0
        %1600 = vmatprep.subr.bf16.mxu0 0
        %1601 = vmatpush1.bf16.msra.mxu0 0
        %1602 = vmatprep.subr.bf16.mxu0 0
        %1603 = vmatpush1.bf16.msra.mxu0 0
        %1604 = vmatprep.subr.bf16.mxu0 0
        %1605 = vmatpush1.bf16.msra.mxu0 0
        %1606 = vmatprep.subr.bf16.mxu0 0
        %1607 = vmatpush1.bf16.msra.mxu0 0
        %1608 = vmatprep.subr.bf16.mxu0 0
        %1609 = vmatpush1.bf16.msra.mxu0 0
        %1610 = vmatprep.subr.bf16.mxu0 0
        %1611 = vmatpush1.bf16.msra.mxu0 0
        %1612 = vmatprep.subr.bf16.mxu0 0
        %1613 = vmatpush1.bf16.msra.mxu0 0
        %1614 = vmatprep.mubr.bf16.mxu0 0
        %1615 = vmatmul.mubr.bf16.gmra.mrb[0].mxu0 %v1577
        %v1616 = vpop.f32.mrb[0].mxu0
        %v1617 = vadd.f32 0.0, %v1616
        %v1618 = vpop.f32.mrb[0].mxu0
        %v1619 = vpop.f32.mrb[0].mxu0
        %v1620 = vadd.f32 0.0, %v1619
        %v1621 = vpop.f32.mrb[0].mxu0
        %1622 = vmatprep.mubr.bf16.mxu0 0
        %1623 = vmatmul.mubr.bf16.gmra.mrb[0].mxu0 %v1580
        %v1624 = vpop.f32.mrb[0].mxu0
        %v1625 = vadd.f32 0.0, %v1624
        %v1626 = vpop.f32.mrb[0].mxu0
        %v1627 = vpop.f32.mrb[0].mxu0
        %v1628 = vadd.f32 0.0, %v1627
        %v1629 = vpop.f32.mrb[0].mxu0
        %1630 = vdwg.mxu0
        %v1632 = vsel %vm708, %v1519, 0
        %v1635 = vsel %vm708, %v1520, 0
        %1637 = vmatprep.subr.bf16.mxu0 0
        %1638 = vmatpush1.bf16.msra.mxu0 %v1058
        %1639 = vmatprep.subr.bf16.mxu0 0
        %1640 = vmatpush1.bf16.msra.mxu0 %v1059
        %1641 = vmatprep.subr.bf16.mxu0 0
        %1642 = vmatpush1.bf16.msra.mxu0 0
        %1643 = vmatprep.subr.bf16.mxu0 0
        %1644 = vmatpush1.bf16.msra.mxu0 0
        %1645 = vmatprep.subr.bf16.mxu0 0
        %1646 = vmatpush1.bf16.msra.mxu0 0
        %1647 = vmatprep.subr.bf16.mxu0 0
        %1648 = vmatpush1.bf16.msra.mxu0 0
        %1649 = vmatprep.subr.bf16.mxu0 0
        %1650 = vmatpush1.bf16.msra.mxu0 0
        %1651 = vmatprep.subr.bf16.mxu0 0
        %1652 = vmatpush1.bf16.msra.mxu0 0
        %1653 = vmatprep.subr.bf16.mxu0 0
        %1654 = vmatpush1.bf16.msra.mxu0 0
        %1655 = vmatprep.subr.bf16.mxu0 0
        %1656 = vmatpush1.bf16.msra.mxu0 0
        %1657 = vmatprep.subr.bf16.mxu0 0
        %1658 = vmatpush1.bf16.msra.mxu0 0
        %1659 = vmatprep.subr.bf16.mxu0 0
        %1660 = vmatpush1.bf16.msra.mxu0 0
        %1661 = vmatprep.subr.bf16.mxu0 0
        %1662 = vmatpush1.bf16.msra.mxu0 0
        %1663 = vmatprep.subr.bf16.mxu0 0
        %1664 = vmatpush1.bf16.msra.mxu0 0
        %1665 = vmatprep.subr.bf16.mxu0 0
        %1666 = vmatpush1.bf16.msra.mxu0 0
        %1667 = vmatprep.subr.bf16.mxu0 0
        %1668 = vmatpush1.bf16.msra.mxu0 0
        %1669 = vmatprep.mubr.bf16.mxu0 0
        %1670 = vmatmul.mubr.bf16.gmra.mrb[0].mxu0 %v1632
        %v1671 = vpop.f32.mrb[0].mxu0
        %v1672 = vadd.f32 0.0, %v1671
        %v1673 = vpop.f32.mrb[0].mxu0
        %v1674 = vpop.f32.mrb[0].mxu0
        %v1675 = vadd.f32 0.0, %v1674
        %v1676 = vpop.f32.mrb[0].mxu0
        %1677 = vmatprep.mubr.bf16.mxu0 0
        %1678 = vmatmul.mubr.bf16.gmra.mrb[0].mxu0 %v1635
        %v1679 = vpop.f32.mrb[0].mxu0
        %v1680 = vadd.f32 0.0, %v1679
        %v1681 = vpop.f32.mrb[0].mxu0
        %v1682 = vpop.f32.mrb[0].mxu0
        %v1683 = vadd.f32 0.0, %v1682
        %v1684 = vpop.f32.mrb[0].mxu0
        %1685 = vdwg.mxu0
        %v1686 = vsub.f32 %v1562, %v1617
        %v1687 = vsub.f32 %v1565, %v1620
        %v1688 = vsub.f32 %v1570, %v1625
        %v1689 = vsub.f32 %v1573, %v1628
        %v1690 = vsub.f32 %v1672, %v1562
        %v1691 = vsub.f32 %v1675, %v1565
        %v1692 = vsub.f32 %v1680, %v1570
        %v1693 = vsub.f32 %v1683, %v1573
        %v1694 = vsub.f32 %v1690, %v1617
        %v1695 = vsub.f32 %v1691, %v1620
        %v1696 = vsub.f32 %v1692, %v1625
        %v1697 = vsub.f32 %v1693, %v1628
        %v1698 = vmul.f32 %v1686, %v1686
        %v1699 = vmul.f32 %v1687, %v1687
        %v1700 = vmul.f32 %v1688, %v1688
        %v1701 = vmul.f32 %v1689, %v1689
        %v1702 = vmul.f32 %v1694, %v1694
        %v1703 = vmul.f32 %v1695, %v1695
        %v1704 = vmul.f32 %v1696, %v1696
        %v1705 = vmul.f32 %v1697, %v1697
        %v1706 = vadd.f32 %v1698, %v1702
        %v1707 = vadd.f32 %v1699, %v1703
        %v1708 = vadd.f32 %v1700, %v1704
        %v1709 = vadd.f32 %v1701, %v1705
        %v1710 = vsel %vm708, %v1706, 0.0
        %v1711 = vsel %vm708, %v1707, 0.0
        %v1712 = vadd.f32 %v1710, %v1711
        %v1713 = vsel %vm708, %v1708, 0.0
        %v1714 = vadd.f32 %v1712, %v1713
        %v1715 = vsel %vm708, %v1709, 0.0
        %v1716 = vadd.f32 %v1714, %v1715
        %1717 = vadd.xlane.f32.xlu0 %v1716
        %v1718 = vpop.xlane.xlu0 %1717
        %v1719 = vrot.slane %v1718, 4
        %v1720 = vadd.f32 %v1718, %v1719
        %v1721 = vrot.slane %v1720, 2
        %v1722 = vadd.f32 %v1720, %v1721
        %v1723 = vrot.slane %v1722, 1
        %v1724 = vadd.f32 %v1722, %v1723
        %s1725 = vtos %v1724
        %v1726 = vstv %s1725
        %v1727 = vpack.c.bf16 %v1707, %v1706
        %v1728 = vpack.c.bf16 %v1709, %v1708
        %1729 = vmatprep.subr.bf16.mxu0 0
        %1730 = vmatpush1.bf16.msra.mxu0 %v1727
        %1731 = vmatprep.subr.bf16.mxu0 0
        %1732 = vmatpush1.bf16.msra.mxu0 %v1728
        %1733 = vmatprep.subr.bf16.mxu0 0
        %1734 = vmatpush1.bf16.msra.mxu0 0
        %1735 = vmatprep.subr.bf16.mxu0 0
        %1736 = vmatpush1.bf16.msra.mxu0 0
        %1737 = vmatprep.subr.bf16.mxu0 0
        %1738 = vmatpush1.bf16.msra.mxu0 0
        %1739 = vmatprep.subr.bf16.mxu0 0
        %1740 = vmatpush1.bf16.msra.mxu0 0
        %1741 = vmatprep.subr.bf16.mxu0 0
        %1742 = vmatpush1.bf16.msra.mxu0 0
        %1743 = vmatprep.subr.bf16.mxu0 0
        %1744 = vmatpush1.bf16.msra.mxu0 0
        %1745 = vmatprep.subr.bf16.mxu0 0
        %1746 = vmatpush1.bf16.msra.mxu0 0
        %1747 = vmatprep.subr.bf16.mxu0 0
        %1748 = vmatpush1.bf16.msra.mxu0 0
        %1749 = vmatprep.subr.bf16.mxu0 0
        %1750 = vmatpush1.bf16.msra.mxu0 0
        %1751 = vmatprep.subr.bf16.mxu0 0
        %1752 = vmatpush1.bf16.msra.mxu0 0
        %1753 = vmatprep.subr.bf16.mxu0 0
        %1754 = vmatpush1.bf16.msra.mxu0 0
        %1755 = vmatprep.subr.bf16.mxu0 0
        %1756 = vmatpush1.bf16.msra.mxu0 0
        %1757 = vmatprep.subr.bf16.mxu0 0
        %1758 = vmatpush1.bf16.msra.mxu0 0
        %1759 = vmatprep.subr.bf16.mxu0 0
        %1760 = vmatpush1.bf16.msra.mxu0 0
        %1761 = vmatprep.mubr.bf16.mxu0 0
        %1762 = vmatmul.mubr.bf16.gmra.mrb[0].mxu0 %v1166
        %v1763 = vpop.f32.mrb[0].mxu0
        %v1764 = vadd.f32 0.0, %v1763
        %v1765 = vpop.f32.mrb[0].mxu0
        %v1766 = vpop.f32.mrb[0].mxu0
        %v1767 = vadd.f32 0.0, %v1766
        %v1768 = vpop.f32.mrb[0].mxu0
        %1769 = vdwg.mxu0
        %v1770 = vpack.c.bf16 %v1767, %v1764
        %v1772 = vsel %vm708, %v1770, 0
        %1774 = vmatprep.subr.bf16.mxu0 0
        %1775 = vmatpush1.bf16.msra.mxu0 %v1218
        %1776 = vmatprep.subr.bf16.mxu0 0
        %1777 = vmatpush1.bf16.msra.mxu0 %v1219
        %1778 = vmatprep.subr.bf16.mxu0 0
        %1779 = vmatpush1.bf16.msra.mxu0 0
        %1780 = vmatprep.subr.bf16.mxu0 0
        %1781 = vmatpush1.bf16.msra.mxu0 0
        %1782 = vmatprep.subr.bf16.mxu0 0
        %1783 = vmatpush1.bf16.msra.mxu0 0
        %1784 = vmatprep.subr.bf16.mxu0 0
        %1785 = vmatpush1.bf16.msra.mxu0 0
        %1786 = vmatprep.subr.bf16.mxu0 0
        %1787 = vmatpush1.bf16.msra.mxu0 0
        %1788 = vmatprep.subr.bf16.mxu0 0
        %1789 = vmatpush1.bf16.msra.mxu0 0
        %1790 = vmatprep.subr.bf16.mxu0 0
        %1791 = vmatpush1.bf16.msra.mxu0 0
        %1792 = vmatprep.subr.bf16.mxu0 0
        %1793 = vmatpush1.bf16.msra.mxu0 0
        %1794 = vmatprep.subr.bf16.mxu0 0
        %1795 = vmatpush1.bf16.msra.mxu0 0
        %1796 = vmatprep.subr.bf16.mxu0 0
        %1797 = vmatpush1.bf16.msra.mxu0 0
        %1798 = vmatprep.subr.bf16.mxu0 0
        %1799 = vmatpush1.bf16.msra.mxu0 0
        %1800 = vmatprep.subr.bf16.mxu0 0
        %1801 = vmatpush1.bf16.msra.mxu0 0
        %1802 = vmatprep.subr.bf16.mxu0 0
        %1803 = vmatpush1.bf16.msra.mxu0 0
        %1804 = vmatprep.subr.bf16.mxu0 0
        %1805 = vmatpush1.bf16.msra.mxu0 0
        %1806 = vmatprep.mubr.bf16.mxu0 0
        %1807 = vmatmul.mubr.bf16.gmra.mrb[0].mxu0 %v1772
        %v1808 = vpop.f32.mrb[0].mxu0
        %v1809 = vadd.f32 0.0, %v1808
        %v1810 = vpop.f32.mrb[0].mxu0
        %v1811 = vpop.f32.mrb[0].mxu0
        %v1812 = vadd.f32 0.0, %v1811
        %v1813 = vpop.f32.mrb[0].mxu0
        %1814 = vdwg.mxu0
        %s1815 = sadd.s32 %s1266, 1
        %s1816 = sld [smem:[#allocation10 + %s1815]]
        %v1817 = vstv %s1816
        %v1818 = vrcp.pop %v1726
        %v1819 = vmul.f32 %v1817, %v1818
        %v1820 = vmul.f32 %v1809, %v1819
        %v1821 = vmul.f32 %v1812, %v1819
        %s1822 = scalar_lea.vmem %s606, 16 [#allocation18]
        %1823 = vst [vmem:[%s1822] sm:$0xff] %v1820
        %1824 = vst [vmem:[%s1822 + $0x8] sm:$0xff] %v1821
        %v1825 = vsel %vm1275, %v1820, inf
        %v1826 = vsel %vm1275, %v1821, inf
        %v1827 = vmin.f32 %v1825, %v1826
        %1828 = vmin.xlane.f32.xlu0 %v1827
        %v1829 = vpop.xlane.xlu0 %1828
        %v1830 = vrot.slane %v1829, 4
        %v1831 = vmin.f32 %v1829, %v1830
        %v1832 = vrot.slane %v1831, 2
        %v1833 = vmin.f32 %v1831, %v1832
        %v1834 = vrot.slane %v1833, 1
        %v1835 = vmin.f32 %v1833, %v1834
        %s1836 = vtos %v1835
        %v1837 = vstv %s1836
        %v1838 = vmax.f32 %v1820, %v1821
        %1839 = vmax.xlane.f32.xlu0 %v1838
        %v1840 = vpop.xlane.xlu0 %1839
        %v1841 = vrot.slane %v1840, 4
        %v1842 = vmax.f32 %v1840, %v1841
        %v1843 = vrot.slane %v1842, 2
        %v1844 = vmax.f32 %v1842, %v1843
        %v1845 = vrot.slane %v1844, 1
        %v1846 = vmax.f32 %v1844, %v1845
        %s1847 = vtos %v1846
        %v1848 = vstv %s1847
        %v1849 = vmin.f32 %v1288, %v1837
        %v1850 = vmax.f32 %v1299, %v1848
        %s1851 = scalar_lea.vmem %s525, 32 [#allocation8]
        %v1852 = vld [vmem:[%s1851] sm:$0xf]
        %v1853 = vld [vmem:[%s1851 + $0x4] sm:$0xf]
        %v1854 = vld [vmem:[%s1851 + $0x8] sm:$0xf]
        %v1855 = vld [vmem:[%s1851 + $0xc] sm:$0xf]
        %v1856 = vunpack.c.l.bf16 %v1852
        %v1857 = vunpack.c.l.bf16 %v1853
        %v1858 = vunpack.c.l.bf16 %v1854
        %v1859 = vunpack.c.l.bf16 %v1855
        %s1860 = scalar_lea.vmem %s534, 32 [#allocation9]
        %v1861 = vld [vmem:[%s1860] sm:$0xf]
        %v1862 = vld [vmem:[%s1860 + $0x4] sm:$0xf]
        %v1863 = vld [vmem:[%s1860 + $0x8] sm:$0xf]
        %v1864 = vld [vmem:[%s1860 + $0xc] sm:$0xf]
        %v1865 = vunpack.c.l.bf16 %v1861
        %v1866 = vunpack.c.l.bf16 %v1862
        %v1867 = vunpack.c.l.bf16 %v1863
        %v1868 = vunpack.c.l.bf16 %v1864
        %v1869 = vmul.f32 %v608, %v1856
        %v1870 = vmul.f32 %v609, %v1857
        %v1871 = vmul.f32 %v610, %v1858
        %v1872 = vmul.f32 %v611, %v1859
        %v1873 = vmul.f32 %v612, %v1865
        %v1874 = vmul.f32 %v613, %v1866
        %v1875 = vmul.f32 %v614, %v1867
        %v1876 = vmul.f32 %v615, %v1868
        %v1877 = vsub.f32 %v1869, %v1873
        %v1878 = vsub.f32 %v1870, %v1874
        %v1879 = vsub.f32 %v1871, %v1875
        %v1880 = vsub.f32 %v1872, %v1876
        %v1881 = vmul.f32 %v608, %v1865
        %v1882 = vmul.f32 %v609, %v1866
        %v1883 = vmul.f32 %v610, %v1867
        %v1884 = vmul.f32 %v611, %v1868
        %v1885 = vmul.f32 %v612, %v1856
        %v1886 = vmul.f32 %v613, %v1857
        %v1887 = vmul.f32 %v614, %v1858
        %v1888 = vmul.f32 %v615, %v1859
        %v1889 = vadd.f32 %v1881, %v1885
        %v1890 = vadd.f32 %v1882, %v1886
        %v1891 = vadd.f32 %v1883, %v1887
        %v1892 = vadd.f32 %v1884, %v1888
        %v1893 = vpack.c.bf16 %v1878, %v1877
        %v1894 = vpack.c.bf16 %v1880, %v1879
        %v1895 = vpack.c.bf16 %v1890, %v1889
        %v1896 = vpack.c.bf16 %v1892, %v1891
        %v1897 = vadd.f32 %v1877, %v1889
        %v1898 = vadd.f32 %v1878, %v1890
        %v1899 = vadd.f32 %v1879, %v1891
        %v1900 = vadd.f32 %v1880, %v1892
        %v1901 = vpack.c.bf16 %v1898, %v1897
        %v1902 = vpack.c.bf16 %v1900, %v1899
        %1903 = vmatprep.subr.bf16.mxu0 0
        %1904 = vmatpush1.bf16.msra.mxu0 %v1893
        %1905 = vmatprep.subr.bf16.mxu0 0
        %1906 = vmatpush1.bf16.msra.mxu0 %v1894
        %1907 = vmatprep.subr.bf16.mxu0 0
        %1908 = vmatpush1.bf16.msra.mxu0 0
        %1909 = vmatprep.subr.bf16.mxu0 0
        %1910 = vmatpush1.bf16.msra.mxu0 0
        %1911 = vmatprep.subr.bf16.mxu0 0
        %1912 = vmatpush1.bf16.msra.mxu0 0
        %1913 = vmatprep.subr.bf16.mxu0 0
        %1914 = vmatpush1.bf16.msra.mxu0 0
        %1915 = vmatprep.subr.bf16.mxu0 0
        %1916 = vmatpush1.bf16.msra.mxu0 0
        %1917 = vmatprep.subr.bf16.mxu0 0
        %1918 = vmatpush1.bf16.msra.mxu0 0
        %1919 = vmatprep.subr.bf16.mxu0 0
        %1920 = vmatpush1.bf16.msra.mxu0 0
        %1921 = vmatprep.subr.bf16.mxu0 0
        %1922 = vmatpush1.bf16.msra.mxu0 0
        %1923 = vmatprep.subr.bf16.mxu0 0
        %1924 = vmatpush1.bf16.msra.mxu0 0
        %1925 = vmatprep.subr.bf16.mxu0 0
        %1926 = vmatpush1.bf16.msra.mxu0 0
        %1927 = vmatprep.subr.bf16.mxu0 0
        %1928 = vmatpush1.bf16.msra.mxu0 0
        %1929 = vmatprep.subr.bf16.mxu0 0
        %1930 = vmatpush1.bf16.msra.mxu0 0
        %1931 = vmatprep.subr.bf16.mxu0 0
        %1932 = vmatpush1.bf16.msra.mxu0 0
        %1933 = vmatprep.subr.bf16.mxu0 0
        %1934 = vmatpush1.bf16.msra.mxu0 0
        %1935 = vmatprep.mubr.bf16.mxu0 0
        %1936 = vmatmul.mubr.bf16.gmra.mrb[0].mxu0 %v710
        %v1937 = vpop.f32.mrb[0].mxu0
        %v1938 = vadd.f32 0.0, %v1937
        %v1939 = vpop.f32.mrb[0].mxu0
        %v1940 = vpop.f32.mrb[0].mxu0
        %v1941 = vadd.f32 0.0, %v1940
        %v1942 = vpop.f32.mrb[0].mxu0
        %1943 = vmatprep.mubr.bf16.mxu0 0
        %1944 = vmatmul.mubr.bf16.gmra.mrb[0].mxu0 %v713
        %v1945 = vpop.f32.mrb[0].mxu0
        %v1946 = vadd.f32 0.0, %v1945
        %v1947 = vpop.f32.mrb[0].mxu0
        %v1948 = vpop.f32.mrb[0].mxu0
        %v1949 = vadd.f32 0.0, %v1948
        %v1950 = vpop.f32.mrb[0].mxu0
        %1951 = vdwg.mxu0
        %1952 = vmatprep.subr.bf16.mxu0 0
        %1953 = vmatpush1.bf16.msra.mxu0 %v1895
        %1954 = vmatprep.subr.bf16.mxu0 0
        %1955 = vmatpush1.bf16.msra.mxu0 %v1896
        %1956 = vmatprep.subr.bf16.mxu0 0
        %1957 = vmatpush1.bf16.msra.mxu0 0
        %1958 = vmatprep.subr.bf16.mxu0 0
        %1959 = vmatpush1.bf16.msra.mxu0 0
        %1960 = vmatprep.subr.bf16.mxu0 0
        %1961 = vmatpush1.bf16.msra.mxu0 0
        %1962 = vmatprep.subr.bf16.mxu0 0
        %1963 = vmatpush1.bf16.msra.mxu0 0
        %1964 = vmatprep.subr.bf16.mxu0 0
        %1965 = vmatpush1.bf16.msra.mxu0 0
        %1966 = vmatprep.subr.bf16.mxu0 0
        %1967 = vmatpush1.bf16.msra.mxu0 0
        %1968 = vmatprep.subr.bf16.mxu0 0
        %1969 = vmatpush1.bf16.msra.mxu0 0
        %1970 = vmatprep.subr.bf16.mxu0 0
        %1971 = vmatpush1.bf16.msra.mxu0 0
        %1972 = vmatprep.subr.bf16.mxu0 0
        %1973 = vmatpush1.bf16.msra.mxu0 0
        %1974 = vmatprep.subr.bf16.mxu0 0
        %1975 = vmatpush1.bf16.msra.mxu0 0
        %1976 = vmatprep.subr.bf16.mxu0 0
        %1977 = vmatpush1.bf16.msra.mxu0 0
        %1978 = vmatprep.subr.bf16.mxu0 0
        %1979 = vmatpush1.bf16.msra.mxu0 0
        %1980 = vmatprep.subr.bf16.mxu0 0
        %1981 = vmatpush1.bf16.msra.mxu0 0
        %1982 = vmatprep.subr.bf16.mxu0 0
        %1983 = vmatpush1.bf16.msra.mxu0 0
        %1984 = vmatprep.mubr.bf16.mxu0 0
        %1985 = vmatmul.mubr.bf16.gmra.mrb[0].mxu0 %v775
        %v1986 = vpop.f32.mrb[0].mxu0
        %v1987 = vadd.f32 0.0, %v1986
        %v1988 = vpop.f32.mrb[0].mxu0
        %v1989 = vpop.f32.mrb[0].mxu0
        %v1990 = vadd.f32 0.0, %v1989
        %v1991 = vpop.f32.mrb[0].mxu0
        %1992 = vmatprep.mubr.bf16.mxu0 0
        %1993 = vmatmul.mubr.bf16.gmra.mrb[0].mxu0 %v778
        %v1994 = vpop.f32.mrb[0].mxu0
        %v1995 = vadd.f32 0.0, %v1994
        %v1996 = vpop.f32.mrb[0].mxu0
        %v1997 = vpop.f32.mrb[0].mxu0
        %v1998 = vadd.f32 0.0, %v1997
        %v1999 = vpop.f32.mrb[0].mxu0
        %2000 = vdwg.mxu0
        %2001 = vmatprep.subr.bf16.mxu0 0
        %2002 = vmatpush1.bf16.msra.mxu0 %v1901
        %2003 = vmatprep.subr.bf16.mxu0 0
        %2004 = vmatpush1.bf16.msra.mxu0 %v1902
        %2005 = vmatprep.subr.bf16.mxu0 0
        %2006 = vmatpush1.bf16.msra.mxu0 0
        %2007 = vmatprep.subr.bf16.mxu0 0
        %2008 = vmatpush1.bf16.msra.mxu0 0
        %2009 = vmatprep.subr.bf16.mxu0 0
        %2010 = vmatpush1.bf16.msra.mxu0 0
        %2011 = vmatprep.subr.bf16.mxu0 0
        %2012 = vmatpush1.bf16.msra.mxu0 0
        %2013 = vmatprep.subr.bf16.mxu0 0
        %2014 = vmatpush1.bf16.msra.mxu0 0
        %2015 = vmatprep.subr.bf16.mxu0 0
        %2016 = vmatpush1.bf16.msra.mxu0 0
        %2017 = vmatprep.subr.bf16.mxu0 0
        %2018 = vmatpush1.bf16.msra.mxu0 0
        %2019 = vmatprep.subr.bf16.mxu0 0
        %2020 = vmatpush1.bf16.msra.mxu0 0
        %2021 = vmatprep.subr.bf16.mxu0 0
        %2022 = vmatpush1.bf16.msra.mxu0 0
        %2023 = vmatprep.subr.bf16.mxu0 0
        %2024 = vmatpush1.bf16.msra.mxu0 0
        %2025 = vmatprep.subr.bf16.mxu0 0
        %2026 = vmatpush1.bf16.msra.mxu0 0
        %2027 = vmatprep.subr.bf16.mxu0 0
        %2028 = vmatpush1.bf16.msra.mxu0 0
        %2029 = vmatprep.subr.bf16.mxu0 0
        %2030 = vmatpush1.bf16.msra.mxu0 0
        %2031 = vmatprep.subr.bf16.mxu0 0
        %2032 = vmatpush1.bf16.msra.mxu0 0
        %2033 = vmatprep.mubr.bf16.mxu0 0
        %2034 = vmatmul.mubr.bf16.gmra.mrb[0].mxu0 %v840
        %v2035 = vpop.f32.mrb[0].mxu0
        %v2036 = vadd.f32 0.0, %v2035
        %v2037 = vpop.f32.mrb[0].mxu0
        %v2038 = vpop.f32.mrb[0].mxu0
        %v2039 = vadd.f32 0.0, %v2038
        %v2040 = vpop.f32.mrb[0].mxu0
        %2041 = vmatprep.mubr.bf16.mxu0 0
        %2042 = vmatmul.mubr.bf16.gmra.mrb[0].mxu0 %v843
        %v2043 = vpop.f32.mrb[0].mxu0
        %v2044 = vadd.f32 0.0, %v2043
        %v2045 = vpop.f32.mrb[0].mxu0
        %v2046 = vpop.f32.mrb[0].mxu0
        %v2047 = vadd.f32 0.0, %v2046
        %v2048 = vpop.f32.mrb[0].mxu0
        %2049 = vdwg.mxu0
        %v2050 = vsub.f32 %v1938, %v1987
        %v2051 = vsub.f32 %v1941, %v1990
        %v2052 = vsub.f32 %v1946, %v1995
        %v2053 = vsub.f32 %v1949, %v1998
        %v2054 = vsub.f32 %v2036, %v1938
        %v2055 = vsub.f32 %v2039, %v1941
        %v2056 = vsub.f32 %v2044, %v1946
        %v2057 = vsub.f32 %v2047, %v1949
        %v2058 = vsub.f32 %v2054, %v1987
        %v2059 = vsub.f32 %v2055, %v1990
        %v2060 = vsub.f32 %v2056, %v1995
        %v2061 = vsub.f32 %v2057, %v1998
        %v2062 = vpack.c.bf16 %v2051, %v2050
        %v2063 = vpack.c.bf16 %v2053, %v2052
        %v2064 = vpack.c.bf16 %v2059, %v2058
        %v2065 = vpack.c.bf16 %v2061, %v2060
        %v2066 = vadd.f32 %v2050, %v2058
        %v2067 = vadd.f32 %v2051, %v2059
        %v2068 = vadd.f32 %v2052, %v2060
        %v2069 = vadd.f32 %v2053, %v2061
        %v2070 = vpack.c.bf16 %v2067, %v2066
        %v2071 = vpack.c.bf16 %v2069, %v2068
        %v2073 = vsel %vm708, %v2062, 0
        %v2076 = vsel %vm708, %v2063, 0
        %2078 = vmatprep.subr.bf16.mxu0 0
        %2079 = vmatpush1.bf16.msra.mxu0 %v924
        %2080 = vmatprep.subr.bf16.mxu0 0
        %2081 = vmatpush1.bf16.msra.mxu0 %v925
        %2082 = vmatprep.subr.bf16.mxu0 0
        %2083 = vmatpush1.bf16.msra.mxu0 0
        %2084 = vmatprep.subr.bf16.mxu0 0
        %2085 = vmatpush1.bf16.msra.mxu0 0
        %2086 = vmatprep.subr.bf16.mxu0 0
        %2087 = vmatpush1.bf16.msra.mxu0 0
        %2088 = vmatprep.subr.bf16.mxu0 0
        %2089 = vmatpush1.bf16.msra.mxu0 0
        %2090 = vmatprep.subr.bf16.mxu0 0
        %2091 = vmatpush1.bf16.msra.mxu0 0
        %2092 = vmatprep.subr.bf16.mxu0 0
        %2093 = vmatpush1.bf16.msra.mxu0 0
        %2094 = vmatprep.subr.bf16.mxu0 0
        %2095 = vmatpush1.bf16.msra.mxu0 0
        %2096 = vmatprep.subr.bf16.mxu0 0
        %2097 = vmatpush1.bf16.msra.mxu0 0
        %2098 = vmatprep.subr.bf16.mxu0 0
        %2099 = vmatpush1.bf16.msra.mxu0 0
        %2100 = vmatprep.subr.bf16.mxu0 0
        %2101 = vmatpush1.bf16.msra.mxu0 0
        %2102 = vmatprep.subr.bf16.mxu0 0
        %2103 = vmatpush1.bf16.msra.mxu0 0
        %2104 = vmatprep.subr.bf16.mxu0 0
        %2105 = vmatpush1.bf16.msra.mxu0 0
        %2106 = vmatprep.subr.bf16.mxu0 0
        %2107 = vmatpush1.bf16.msra.mxu0 0
        %2108 = vmatprep.subr.bf16.mxu0 0
        %2109 = vmatpush1.bf16.msra.mxu0 0
        %2110 = vmatprep.mubr.bf16.mxu0 0
        %2111 = vmatmul.mubr.bf16.gmra.mrb[0].mxu0 %v2073
        %v2112 = vpop.f32.mrb[0].mxu0
        %v2113 = vadd.f32 0.0, %v2112
        %v2114 = vpop.f32.mrb[0].mxu0
        %v2115 = vpop.f32.mrb[0].mxu0
        %v2116 = vadd.f32 0.0, %v2115
        %v2117 = vpop.f32.mrb[0].mxu0
        %2118 = vmatprep.mubr.bf16.mxu0 0
        %2119 = vmatmul.mubr.bf16.gmra.mrb[0].mxu0 %v2076
        %v2120 = vpop.f32.mrb[0].mxu0
        %v2121 = vadd.f32 0.0, %v2120
        %v2122 = vpop.f32.mrb[0].mxu0
        %v2123 = vpop.f32.mrb[0].mxu0
        %v2124 = vadd.f32 0.0, %v2123
        %v2125 = vpop.f32.mrb[0].mxu0
        %2126 = vdwg.mxu0
        %v2128 = vsel %vm708, %v2064, 0
        %v2131 = vsel %vm708, %v2065, 0
        %2133 = vmatprep.subr.bf16.mxu0 0
        %2134 = vmatpush1.bf16.msra.mxu0 %v991
        %2135 = vmatprep.subr.bf16.mxu0 0
        %2136 = vmatpush1.bf16.msra.mxu0 %v992
        %2137 = vmatprep.subr.bf16.mxu0 0
        %2138 = vmatpush1.bf16.msra.mxu0 0
        %2139 = vmatprep.subr.bf16.mxu0 0
        %2140 = vmatpush1.bf16.msra.mxu0 0
        %2141 = vmatprep.subr.bf16.mxu0 0
        %2142 = vmatpush1.bf16.msra.mxu0 0
        %2143 = vmatprep.subr.bf16.mxu0 0
        %2144 = vmatpush1.bf16.msra.mxu0 0
        %2145 = vmatprep.subr.bf16.mxu0 0
        %2146 = vmatpush1.bf16.msra.mxu0 0
        %2147 = vmatprep.subr.bf16.mxu0 0
        %2148 = vmatpush1.bf16.msra.mxu0 0
        %2149 = vmatprep.subr.bf16.mxu0 0
        %2150 = vmatpush1.bf16.msra.mxu0 0
        %2151 = vmatprep.subr.bf16.mxu0 0
        %2152 = vmatpush1.bf16.msra.mxu0 0
        %2153 = vmatprep.subr.bf16.mxu0 0
        %2154 = vmatpush1.bf16.msra.mxu0 0
        %2155 = vmatprep.subr.bf16.mxu0 0
        %2156 = vmatpush1.bf16.msra.mxu0 0
        %2157 = vmatprep.subr.bf16.mxu0 0
        %2158 = vmatpush1.bf16.msra.mxu0 0
        %2159 = vmatprep.subr.bf16.mxu0 0
        %2160 = vmatpush1.bf16.msra.mxu0 0
        %2161 = vmatprep.subr.bf16.mxu0 0
        %2162 = vmatpush1.bf16.msra.mxu0 0
        %2163 = vmatprep.subr.bf16.mxu0 0
        %2164 = vmatpush1.bf16.msra.mxu0 0
        %2165 = vmatprep.mubr.bf16.mxu0 0
        %2166 = vmatmul.mubr.bf16.gmra.mrb[0].mxu0 %v2128
        %v2167 = vpop.f32.mrb[0].mxu0
        %v2168 = vadd.f32 0.0, %v2167
        %v2169 = vpop.f32.mrb[0].mxu0
        %v2170 = vpop.f32.mrb[0].mxu0
        %v2171 = vadd.f32 0.0, %v2170
        %v2172 = vpop.f32.mrb[0].mxu0
        %2173 = vmatprep.mubr.bf16.mxu0 0
        %2174 = vmatmul.mubr.bf16.gmra.mrb[0].mxu0 %v2131
        %v2175 = vpop.f32.mrb[0].mxu0
        %v2176 = vadd.f32 0.0, %v2175
        %v2177 = vpop.f32.mrb[0].mxu0
        %v2178 = vpop.f32.mrb[0].mxu0
        %v2179 = vadd.f32 0.0, %v2178
        %v2180 = vpop.f32.mrb[0].mxu0
        %2181 = vdwg.mxu0
        %v2183 = vsel %vm708, %v2070, 0
        %v2186 = vsel %vm708, %v2071, 0
        %2188 = vmatprep.subr.bf16.mxu0 0
        %2189 = vmatpush1.bf16.msra.mxu0 %v1058
        %2190 = vmatprep.subr.bf16.mxu0 0
        %2191 = vmatpush1.bf16.msra.mxu0 %v1059
        %2192 = vmatprep.subr.bf16.mxu0 0
        %2193 = vmatpush1.bf16.msra.mxu0 0
        %2194 = vmatprep.subr.bf16.mxu0 0
        %2195 = vmatpush1.bf16.msra.mxu0 0
        %2196 = vmatprep.subr.bf16.mxu0 0
        %2197 = vmatpush1.bf16.msra.mxu0 0
        %2198 = vmatprep.subr.bf16.mxu0 0
        %2199 = vmatpush1.bf16.msra.mxu0 0
        %2200 = vmatprep.subr.bf16.mxu0 0
        %2201 = vmatpush1.bf16.msra.mxu0 0
        %2202 = vmatprep.subr.bf16.mxu0 0
        %2203 = vmatpush1.bf16.msra.mxu0 0
        %2204 = vmatprep.subr.bf16.mxu0 0
        %2205 = vmatpush1.bf16.msra.mxu0 0
        %2206 = vmatprep.subr.bf16.mxu0 0
        %2207 = vmatpush1.bf16.msra.mxu0 0
        %2208 = vmatprep.subr.bf16.mxu0 0
        %2209 = vmatpush1.bf16.msra.mxu0 0
        %2210 = vmatprep.subr.bf16.mxu0 0
        %2211 = vmatpush1.bf16.msra.mxu0 0
        %2212 = vmatprep.subr.bf16.mxu0 0
        %2213 = vmatpush1.bf16.msra.mxu0 0
        %2214 = vmatprep.subr.bf16.mxu0 0
        %2215 = vmatpush1.bf16.msra.mxu0 0
        %2216 = vmatprep.subr.bf16.mxu0 0
        %2217 = vmatpush1.bf16.msra.mxu0 0
        %2218 = vmatprep.subr.bf16.mxu0 0
        %2219 = vmatpush1.bf16.msra.mxu0 0
        %2220 = vmatprep.mubr.bf16.mxu0 0
        %2221 = vmatmul.mubr.bf16.gmra.mrb[0].mxu0 %v2183
        %v2222 = vpop.f32.mrb[0].mxu0
        %v2223 = vadd.f32 0.0, %v2222
        %v2224 = vpop.f32.mrb[0].mxu0
        %v2225 = vpop.f32.mrb[0].mxu0
        %v2226 = vadd.f32 0.0, %v2225
        %v2227 = vpop.f32.mrb[0].mxu0
        %2228 = vmatprep.mubr.bf16.mxu0 0
        %2229 = vmatmul.mubr.bf16.gmra.mrb[0].mxu0 %v2186
        %v2230 = vpop.f32.mrb[0].mxu0
        %v2231 = vadd.f32 0.0, %v2230
        %v2232 = vpop.f32.mrb[0].mxu0
        %v2233 = vpop.f32.mrb[0].mxu0
        %v2234 = vadd.f32 0.0, %v2233
        %v2235 = vpop.f32.mrb[0].mxu0
        %2236 = vdwg.mxu0
        %v2237 = vsub.f32 %v2113, %v2168
        %v2238 = vsub.f32 %v2116, %v2171
        %v2239 = vsub.f32 %v2121, %v2176
        %v2240 = vsub.f32 %v2124, %v2179
        %v2241 = vsub.f32 %v2223, %v2113
        %v2242 = vsub.f32 %v2226, %v2116
        %v2243 = vsub.f32 %v2231, %v2121
        %v2244 = vsub.f32 %v2234, %v2124
        %v2245 = vsub.f32 %v2241, %v2168
        %v2246 = vsub.f32 %v2242, %v2171
        %v2247 = vsub.f32 %v2243, %v2176
        %v2248 = vsub.f32 %v2244, %v2179
        %v2249 = vmul.f32 %v2237, %v2237
        %v2250 = vmul.f32 %v2238, %v2238
        %v2251 = vmul.f32 %v2239, %v2239
        %v2252 = vmul.f32 %v2240, %v2240
        %v2253 = vmul.f32 %v2245, %v2245
        %v2254 = vmul.f32 %v2246, %v2246
        %v2255 = vmul.f32 %v2247, %v2247
        %v2256 = vmul.f32 %v2248, %v2248
        %v2257 = vadd.f32 %v2249, %v2253
        %v2258 = vadd.f32 %v2250, %v2254
        %v2259 = vadd.f32 %v2251, %v2255
        %v2260 = vadd.f32 %v2252, %v2256
        %v2261 = vsel %vm708, %v2257, 0.0
        %v2262 = vsel %vm708, %v2258, 0.0
        %v2263 = vadd.f32 %v2261, %v2262
        %v2264 = vsel %vm708, %v2259, 0.0
        %v2265 = vadd.f32 %v2263, %v2264
        %v2266 = vsel %vm708, %v2260, 0.0
        %v2267 = vadd.f32 %v2265, %v2266
        %2268 = vadd.xlane.f32.xlu0 %v2267
        %v2269 = vpop.xlane.xlu0 %2268
        %v2270 = vrot.slane %v2269, 4
        %v2271 = vadd.f32 %v2269, %v2270
        %v2272 = vrot.slane %v2271, 2
        %v2273 = vadd.f32 %v2271, %v2272
        %v2274 = vrot.slane %v2273, 1
        %v2275 = vadd.f32 %v2273, %v2274
        %s2276 = vtos %v2275
        %v2277 = vstv %s2276
        %v2278 = vpack.c.bf16 %v2258, %v2257
        %v2279 = vpack.c.bf16 %v2260, %v2259
        %2280 = vmatprep.subr.bf16.mxu0 0
        %2281 = vmatpush1.bf16.msra.mxu0 %v2278
        %2282 = vmatprep.subr.bf16.mxu0 0
        %2283 = vmatpush1.bf16.msra.mxu0 %v2279
        %2284 = vmatprep.subr.bf16.mxu0 0
        %2285 = vmatpush1.bf16.msra.mxu0 0
        %2286 = vmatprep.subr.bf16.mxu0 0
        %2287 = vmatpush1.bf16.msra.mxu0 0
        %2288 = vmatprep.subr.bf16.mxu0 0
        %2289 = vmatpush1.bf16.msra.mxu0 0
        %2290 = vmatprep.subr.bf16.mxu0 0
        %2291 = vmatpush1.bf16.msra.mxu0 0
        %2292 = vmatprep.subr.bf16.mxu0 0
        %2293 = vmatpush1.bf16.msra.mxu0 0
        %2294 = vmatprep.subr.bf16.mxu0 0
        %2295 = vmatpush1.bf16.msra.mxu0 0
        %2296 = vmatprep.subr.bf16.mxu0 0
        %2297 = vmatpush1.bf16.msra.mxu0 0
        %2298 = vmatprep.subr.bf16.mxu0 0
        %2299 = vmatpush1.bf16.msra.mxu0 0
        %2300 = vmatprep.subr.bf16.mxu0 0
        %2301 = vmatpush1.bf16.msra.mxu0 0
        %2302 = vmatprep.subr.bf16.mxu0 0
        %2303 = vmatpush1.bf16.msra.mxu0 0
        %2304 = vmatprep.subr.bf16.mxu0 0
        %2305 = vmatpush1.bf16.msra.mxu0 0
        %2306 = vmatprep.subr.bf16.mxu0 0
        %2307 = vmatpush1.bf16.msra.mxu0 0
        %2308 = vmatprep.subr.bf16.mxu0 0
        %2309 = vmatpush1.bf16.msra.mxu0 0
        %2310 = vmatprep.subr.bf16.mxu0 0
        %2311 = vmatpush1.bf16.msra.mxu0 0
        %2312 = vmatprep.mubr.bf16.mxu0 0
        %2313 = vmatmul.mubr.bf16.gmra.mrb[0].mxu0 %v1166
        %v2314 = vpop.f32.mrb[0].mxu0
        %v2315 = vadd.f32 0.0, %v2314
        %v2316 = vpop.f32.mrb[0].mxu0
        %v2317 = vpop.f32.mrb[0].mxu0
        %v2318 = vadd.f32 0.0, %v2317
        %v2319 = vpop.f32.mrb[0].mxu0
        %2320 = vdwg.mxu0
        %v2321 = vpack.c.bf16 %v2318, %v2315
        %v2323 = vsel %vm708, %v2321, 0
        %2325 = vmatprep.subr.bf16.mxu0 0
        %2326 = vmatpush1.bf16.msra.mxu0 %v1218
        %2327 = vmatprep.subr.bf16.mxu0 0
        %2328 = vmatpush1.bf16.msra.mxu0 %v1219
        %2329 = vmatprep.subr.bf16.mxu0 0
        %2330 = vmatpush1.bf16.msra.mxu0 0
        %2331 = vmatprep.subr.bf16.mxu0 0
        %2332 = vmatpush1.bf16.msra.mxu0 0
        %2333 = vmatprep.subr.bf16.mxu0 0
        %2334 = vmatpush1.bf16.msra.mxu0 0
        %2335 = vmatprep.subr.bf16.mxu0 0
        %2336 = vmatpush1.bf16.msra.mxu0 0
        %2337 = vmatprep.subr.bf16.mxu0 0
        %2338 = vmatpush1.bf16.msra.mxu0 0
        %2339 = vmatprep.subr.bf16.mxu0 0
        %2340 = vmatpush1.bf16.msra.mxu0 0
        %2341 = vmatprep.subr.bf16.mxu0 0
        %2342 = vmatpush1.bf16.msra.mxu0 0
        %2343 = vmatprep.subr.bf16.mxu0 0
        %2344 = vmatpush1.bf16.msra.mxu0 0
        %2345 = vmatprep.subr.bf16.mxu0 0
        %2346 = vmatpush1.bf16.msra.mxu0 0
        %2347 = vmatprep.subr.bf16.mxu0 0
        %2348 = vmatpush1.bf16.msra.mxu0 0
        %2349 = vmatprep.subr.bf16.mxu0 0
        %2350 = vmatpush1.bf16.msra.mxu0 0
        %2351 = vmatprep.subr.bf16.mxu0 0
        %2352 = vmatpush1.bf16.msra.mxu0 0
        %2353 = vmatprep.subr.bf16.mxu0 0
        %2354 = vmatpush1.bf16.msra.mxu0 0
        %2355 = vmatprep.subr.bf16.mxu0 0
        %2356 = vmatpush1.bf16.msra.mxu0 0
        %2357 = vmatprep.mubr.bf16.mxu0 0
        %2358 = vmatmul.mubr.bf16.gmra.mrb[0].mxu0 %v2323
        %v2359 = vpop.f32.mrb[0].mxu0
        %v2360 = vadd.f32 0.0, %v2359
        %v2361 = vpop.f32.mrb[0].mxu0
        %v2362 = vpop.f32.mrb[0].mxu0
        %v2363 = vadd.f32 0.0, %v2362
        %v2364 = vpop.f32.mrb[0].mxu0
        %2365 = vdwg.mxu0
        %s2366 = sadd.s32 %s1266, 2
        %s2367 = sld [smem:[#allocation10 + %s2366]]
        %v2368 = vstv %s2367
        %v2369 = vrcp.pop %v2277
        %v2370 = vmul.f32 %v2368, %v2369
        %v2371 = vmul.f32 %v2360, %v2370
        %v2372 = vmul.f32 %v2363, %v2370
        %s2373 = scalar_lea.vmem %s606, 32 [#allocation18]
        %2374 = vst [vmem:[%s2373] sm:$0xff] %v2371
        %2375 = vst [vmem:[%s2373 + $0x8] sm:$0xff] %v2372
        %v2376 = vsel %vm1275, %v2371, inf
        %v2377 = vsel %vm1275, %v2372, inf
        %v2378 = vmin.f32 %v2376, %v2377
        %2379 = vmin.xlane.f32.xlu0 %v2378
        %v2380 = vpop.xlane.xlu0 %2379
        %v2381 = vrot.slane %v2380, 4
        %v2382 = vmin.f32 %v2380, %v2381
        %v2383 = vrot.slane %v2382, 2
        %v2384 = vmin.f32 %v2382, %v2383
        %v2385 = vrot.slane %v2384, 1
        %v2386 = vmin.f32 %v2384, %v2385
        %s2387 = vtos %v2386
        %v2388 = vstv %s2387
        %v2389 = vmax.f32 %v2371, %v2372
        %2390 = vmax.xlane.f32.xlu0 %v2389
        %v2391 = vpop.xlane.xlu0 %2390
        %v2392 = vrot.slane %v2391, 4
        %v2393 = vmax.f32 %v2391, %v2392
        %v2394 = vrot.slane %v2393, 2
        %v2395 = vmax.f32 %v2393, %v2394
        %v2396 = vrot.slane %v2395, 1
        %v2397 = vmax.f32 %v2395, %v2396
        %s2398 = vtos %v2397
        %v2399 = vstv %s2398
        %v2400 = vmin.f32 %v1849, %v2388
        %v2401 = vmax.f32 %v1850, %v2399
        %s2402 = scalar_lea.vmem %s525, 48 [#allocation8]
        %v2403 = vld [vmem:[%s2402] sm:$0xf]
        %v2404 = vld [vmem:[%s2402 + $0x4] sm:$0xf]
        %v2405 = vld [vmem:[%s2402 + $0x8] sm:$0xf]
        %v2406 = vld [vmem:[%s2402 + $0xc] sm:$0xf]
        %v2407 = vunpack.c.l.bf16 %v2403
        %v2408 = vunpack.c.l.bf16 %v2404
        %v2409 = vunpack.c.l.bf16 %v2405
        %v2410 = vunpack.c.l.bf16 %v2406
        %s2411 = scalar_lea.vmem %s534, 48 [#allocation9]
        %v2412 = vld [vmem:[%s2411] sm:$0xf]
        %v2413 = vld [vmem:[%s2411 + $0x4] sm:$0xf]
        %v2414 = vld [vmem:[%s2411 + $0x8] sm:$0xf]
        %v2415 = vld [vmem:[%s2411 + $0xc] sm:$0xf]
        %v2416 = vunpack.c.l.bf16 %v2412
        %v2417 = vunpack.c.l.bf16 %v2413
        %v2418 = vunpack.c.l.bf16 %v2414
        %v2419 = vunpack.c.l.bf16 %v2415
        %v2420 = vmul.f32 %v608, %v2407
        %v2421 = vmul.f32 %v609, %v2408
        %v2422 = vmul.f32 %v610, %v2409
        %v2423 = vmul.f32 %v611, %v2410
        %v2424 = vmul.f32 %v612, %v2416
        %v2425 = vmul.f32 %v613, %v2417
        %v2426 = vmul.f32 %v614, %v2418
        %v2427 = vmul.f32 %v615, %v2419
        %v2428 = vsub.f32 %v2420, %v2424
        %v2429 = vsub.f32 %v2421, %v2425
        %v2430 = vsub.f32 %v2422, %v2426
        %v2431 = vsub.f32 %v2423, %v2427
        %v2432 = vmul.f32 %v608, %v2416
        %v2433 = vmul.f32 %v609, %v2417
        %v2434 = vmul.f32 %v610, %v2418
        %v2435 = vmul.f32 %v611, %v2419
        %v2436 = vmul.f32 %v612, %v2407
        %v2437 = vmul.f32 %v613, %v2408
        %v2438 = vmul.f32 %v614, %v2409
        %v2439 = vmul.f32 %v615, %v2410
        %v2440 = vadd.f32 %v2432, %v2436
        %v2441 = vadd.f32 %v2433, %v2437
        %v2442 = vadd.f32 %v2434, %v2438
        %v2443 = vadd.f32 %v2435, %v2439
        %v2444 = vpack.c.bf16 %v2429, %v2428
        %v2445 = vpack.c.bf16 %v2431, %v2430
        %v2446 = vpack.c.bf16 %v2441, %v2440
        %v2447 = vpack.c.bf16 %v2443, %v2442
        %v2448 = vadd.f32 %v2428, %v2440
        %v2449 = vadd.f32 %v2429, %v2441
        %v2450 = vadd.f32 %v2430, %v2442
        %v2451 = vadd.f32 %v2431, %v2443
        %v2452 = vpack.c.bf16 %v2449, %v2448
        %v2453 = vpack.c.bf16 %v2451, %v2450
        %2454 = vmatprep.subr.bf16.mxu0 0
        %2455 = vmatpush1.bf16.msra.mxu0 %v2444
        %2456 = vmatprep.subr.bf16.mxu0 0
        %2457 = vmatpush1.bf16.msra.mxu0 %v2445
        %2458 = vmatprep.subr.bf16.mxu0 0
        %2459 = vmatpush1.bf16.msra.mxu0 0
        %2460 = vmatprep.subr.bf16.mxu0 0
        %2461 = vmatpush1.bf16.msra.mxu0 0
        %2462 = vmatprep.subr.bf16.mxu0 0
        %2463 = vmatpush1.bf16.msra.mxu0 0
        %2464 = vmatprep.subr.bf16.mxu0 0
        %2465 = vmatpush1.bf16.msra.mxu0 0
        %2466 = vmatprep.subr.bf16.mxu0 0
        %2467 = vmatpush1.bf16.msra.mxu0 0
        %2468 = vmatprep.subr.bf16.mxu0 0
        %2469 = vmatpush1.bf16.msra.mxu0 0
        %2470 = vmatprep.subr.bf16.mxu0 0
        %2471 = vmatpush1.bf16.msra.mxu0 0
        %2472 = vmatprep.subr.bf16.mxu0 0
        %2473 = vmatpush1.bf16.msra.mxu0 0
        %2474 = vmatprep.subr.bf16.mxu0 0
        %2475 = vmatpush1.bf16.msra.mxu0 0
        %2476 = vmatprep.subr.bf16.mxu0 0
        %2477 = vmatpush1.bf16.msra.mxu0 0
        %2478 = vmatprep.subr.bf16.mxu0 0
        %2479 = vmatpush1.bf16.msra.mxu0 0
        %2480 = vmatprep.subr.bf16.mxu0 0
        %2481 = vmatpush1.bf16.msra.mxu0 0
        %2482 = vmatprep.subr.bf16.mxu0 0
        %2483 = vmatpush1.bf16.msra.mxu0 0
        %2484 = vmatprep.subr.bf16.mxu0 0
        %2485 = vmatpush1.bf16.msra.mxu0 0
        %2486 = vmatprep.mubr.bf16.mxu0 0
        %2487 = vmatmul.mubr.bf16.gmra.mrb[0].mxu0 %v710
        %v2488 = vpop.f32.mrb[0].mxu0
        %v2489 = vadd.f32 0.0, %v2488
        %v2490 = vpop.f32.mrb[0].mxu0
        %v2491 = vpop.f32.mrb[0].mxu0
        %v2492 = vadd.f32 0.0, %v2491
        %v2493 = vpop.f32.mrb[0].mxu0
        %2494 = vmatprep.mubr.bf16.mxu0 0
        %2495 = vmatmul.mubr.bf16.gmra.mrb[0].mxu0 %v713
        %v2496 = vpop.f32.mrb[0].mxu0
        %v2497 = vadd.f32 0.0, %v2496
        %v2498 = vpop.f32.mrb[0].mxu0
        %v2499 = vpop.f32.mrb[0].mxu0
        %v2500 = vadd.f32 0.0, %v2499
        %v2501 = vpop.f32.mrb[0].mxu0
        %2502 = vdwg.mxu0
        %2503 = vmatprep.subr.bf16.mxu0 0
        %2504 = vmatpush1.bf16.msra.mxu0 %v2446
        %2505 = vmatprep.subr.bf16.mxu0 0
        %2506 = vmatpush1.bf16.msra.mxu0 %v2447
        %2507 = vmatprep.subr.bf16.mxu0 0
        %2508 = vmatpush1.bf16.msra.mxu0 0
        %2509 = vmatprep.subr.bf16.mxu0 0
        %2510 = vmatpush1.bf16.msra.mxu0 0
        %2511 = vmatprep.subr.bf16.mxu0 0
        %2512 = vmatpush1.bf16.msra.mxu0 0
        %2513 = vmatprep.subr.bf16.mxu0 0
        %2514 = vmatpush1.bf16.msra.mxu0 0
        %2515 = vmatprep.subr.bf16.mxu0 0
        %2516 = vmatpush1.bf16.msra.mxu0 0
        %2517 = vmatprep.subr.bf16.mxu0 0
        %2518 = vmatpush1.bf16.msra.mxu0 0
        %2519 = vmatprep.subr.bf16.mxu0 0
        %2520 = vmatpush1.bf16.msra.mxu0 0
        %2521 = vmatprep.subr.bf16.mxu0 0
        %2522 = vmatpush1.bf16.msra.mxu0 0
        %2523 = vmatprep.subr.bf16.mxu0 0
        %2524 = vmatpush1.bf16.msra.mxu0 0
        %2525 = vmatprep.subr.bf16.mxu0 0
        %2526 = vmatpush1.bf16.msra.mxu0 0
        %2527 = vmatprep.subr.bf16.mxu0 0
        %2528 = vmatpush1.bf16.msra.mxu0 0
        %2529 = vmatprep.subr.bf16.mxu0 0
        %2530 = vmatpush1.bf16.msra.mxu0 0
        %2531 = vmatprep.subr.bf16.mxu0 0
        %2532 = vmatpush1.bf16.msra.mxu0 0
        %2533 = vmatprep.subr.bf16.mxu0 0
        %2534 = vmatpush1.bf16.msra.mxu0 0
        %2535 = vmatprep.mubr.bf16.mxu0 0
        %2536 = vmatmul.mubr.bf16.gmra.mrb[0].mxu0 %v775
        %v2537 = vpop.f32.mrb[0].mxu0
        %v2538 = vadd.f32 0.0, %v2537
        %v2539 = vpop.f32.mrb[0].mxu0
        %v2540 = vpop.f32.mrb[0].mxu0
        %v2541 = vadd.f32 0.0, %v2540
        %v2542 = vpop.f32.mrb[0].mxu0
        %2543 = vmatprep.mubr.bf16.mxu0 0
        %2544 = vmatmul.mubr.bf16.gmra.mrb[0].mxu0 %v778
        %v2545 = vpop.f32.mrb[0].mxu0
        %v2546 = vadd.f32 0.0, %v2545
        %v2547 = vpop.f32.mrb[0].mxu0
        %v2548 = vpop.f32.mrb[0].mxu0
        %v2549 = vadd.f32 0.0, %v2548
        %v2550 = vpop.f32.mrb[0].mxu0
        %2551 = vdwg.mxu0
        %2552 = vmatprep.subr.bf16.mxu0 0
        %2553 = vmatpush1.bf16.msra.mxu0 %v2452
        %2554 = vmatprep.subr.bf16.mxu0 0
        %2555 = vmatpush1.bf16.msra.mxu0 %v2453
        %2556 = vmatprep.subr.bf16.mxu0 0
        %2557 = vmatpush1.bf16.msra.mxu0 0
        %2558 = vmatprep.subr.bf16.mxu0 0
        %2559 = vmatpush1.bf16.msra.mxu0 0
        %2560 = vmatprep.subr.bf16.mxu0 0
        %2561 = vmatpush1.bf16.msra.mxu0 0
        %2562 = vmatprep.subr.bf16.mxu0 0
        %2563 = vmatpush1.bf16.msra.mxu0 0
        %2564 = vmatprep.subr.bf16.mxu0 0
        %2565 = vmatpush1.bf16.msra.mxu0 0
        %2566 = vmatprep.subr.bf16.mxu0 0
        %2567 = vmatpush1.bf16.msra.mxu0 0
        %2568 = vmatprep.subr.bf16.mxu0 0
        %2569 = vmatpush1.bf16.msra.mxu0 0
        %2570 = vmatprep.subr.bf16.mxu0 0
        %2571 = vmatpush1.bf16.msra.mxu0 0
        %2572 = vmatprep.subr.bf16.mxu0 0
        %2573 = vmatpush1.bf16.msra.mxu0 0
        %2574 = vmatprep.subr.bf16.mxu0 0
        %2575 = vmatpush1.bf16.msra.mxu0 0
        %2576 = vmatprep.subr.bf16.mxu0 0
        %2577 = vmatpush1.bf16.msra.mxu0 0
        %2578 = vmatprep.subr.bf16.mxu0 0
        %2579 = vmatpush1.bf16.msra.mxu0 0
        %2580 = vmatprep.subr.bf16.mxu0 0
        %2581 = vmatpush1.bf16.msra.mxu0 0
        %2582 = vmatprep.subr.bf16.mxu0 0
        %2583 = vmatpush1.bf16.msra.mxu0 0
        %2584 = vmatprep.mubr.bf16.mxu0 0
        %2585 = vmatmul.mubr.bf16.gmra.mrb[0].mxu0 %v840
        %v2586 = vpop.f32.mrb[0].mxu0
        %v2587 = vadd.f32 0.0, %v2586
        %v2588 = vpop.f32.mrb[0].mxu0
        %v2589 = vpop.f32.mrb[0].mxu0
        %v2590 = vadd.f32 0.0, %v2589
        %v2591 = vpop.f32.mrb[0].mxu0
        %2592 = vmatprep.mubr.bf16.mxu0 0
        %2593 = vmatmul.mubr.bf16.gmra.mrb[0].mxu0 %v843
        %v2594 = vpop.f32.mrb[0].mxu0
        %v2595 = vadd.f32 0.0, %v2594
        %v2596 = vpop.f32.mrb[0].mxu0
        %v2597 = vpop.f32.mrb[0].mxu0
        %v2598 = vadd.f32 0.0, %v2597
        %v2599 = vpop.f32.mrb[0].mxu0
        %2600 = vdwg.mxu0
        %v2601 = vsub.f32 %v2489, %v2538
        %v2602 = vsub.f32 %v2492, %v2541
        %v2603 = vsub.f32 %v2497, %v2546
        %v2604 = vsub.f32 %v2500, %v2549
        %v2605 = vsub.f32 %v2587, %v2489
        %v2606 = vsub.f32 %v2590, %v2492
        %v2607 = vsub.f32 %v2595, %v2497
        %v2608 = vsub.f32 %v2598, %v2500
        %v2609 = vsub.f32 %v2605, %v2538
        %v2610 = vsub.f32 %v2606, %v2541
        %v2611 = vsub.f32 %v2607, %v2546
        %v2612 = vsub.f32 %v2608, %v2549
        %v2613 = vpack.c.bf16 %v2602, %v2601
        %v2614 = vpack.c.bf16 %v2604, %v2603
        %v2615 = vpack.c.bf16 %v2610, %v2609
        %v2616 = vpack.c.bf16 %v2612, %v2611
        %v2617 = vadd.f32 %v2601, %v2609
        %v2618 = vadd.f32 %v2602, %v2610
        %v2619 = vadd.f32 %v2603, %v2611
        %v2620 = vadd.f32 %v2604, %v2612
        %v2621 = vpack.c.bf16 %v2618, %v2617
        %v2622 = vpack.c.bf16 %v2620, %v2619
        %v2624 = vsel %vm708, %v2613, 0
        %v2627 = vsel %vm708, %v2614, 0
        %2629 = vmatprep.subr.bf16.mxu0 0
        %2630 = vmatpush1.bf16.msra.mxu0 %v924
        %2631 = vmatprep.subr.bf16.mxu0 0
        %2632 = vmatpush1.bf16.msra.mxu0 %v925
        %2633 = vmatprep.subr.bf16.mxu0 0
        %2634 = vmatpush1.bf16.msra.mxu0 0
        %2635 = vmatprep.subr.bf16.mxu0 0
        %2636 = vmatpush1.bf16.msra.mxu0 0
        %2637 = vmatprep.subr.bf16.mxu0 0
        %2638 = vmatpush1.bf16.msra.mxu0 0
        %2639 = vmatprep.subr.bf16.mxu0 0
        %2640 = vmatpush1.bf16.msra.mxu0 0
        %2641 = vmatprep.subr.bf16.mxu0 0
        %2642 = vmatpush1.bf16.msra.mxu0 0
        %2643 = vmatprep.subr.bf16.mxu0 0
        %2644 = vmatpush1.bf16.msra.mxu0 0
        %2645 = vmatprep.subr.bf16.mxu0 0
        %2646 = vmatpush1.bf16.msra.mxu0 0
        %2647 = vmatprep.subr.bf16.mxu0 0
        %2648 = vmatpush1.bf16.msra.mxu0 0
        %2649 = vmatprep.subr.bf16.mxu0 0
        %2650 = vmatpush1.bf16.msra.mxu0 0
        %2651 = vmatprep.subr.bf16.mxu0 0
        %2652 = vmatpush1.bf16.msra.mxu0 0
        %2653 = vmatprep.subr.bf16.mxu0 0
        %2654 = vmatpush1.bf16.msra.mxu0 0
        %2655 = vmatprep.subr.bf16.mxu0 0
        %2656 = vmatpush1.bf16.msra.mxu0 0
        %2657 = vmatprep.subr.bf16.mxu0 0
        %2658 = vmatpush1.bf16.msra.mxu0 0
        %2659 = vmatprep.subr.bf16.mxu0 0
        %2660 = vmatpush1.bf16.msra.mxu0 0
        %2661 = vmatprep.mubr.bf16.mxu0 0
        %2662 = vmatmul.mubr.bf16.gmra.mrb[0].mxu0 %v2624
        %v2663 = vpop.f32.mrb[0].mxu0
        %v2664 = vadd.f32 0.0, %v2663
        %v2665 = vpop.f32.mrb[0].mxu0
        %v2666 = vpop.f32.mrb[0].mxu0
        %v2667 = vadd.f32 0.0, %v2666
        %v2668 = vpop.f32.mrb[0].mxu0
        %2669 = vmatprep.mubr.bf16.mxu0 0
        %2670 = vmatmul.mubr.bf16.gmra.mrb[0].mxu0 %v2627
        %v2671 = vpop.f32.mrb[0].mxu0
        %v2672 = vadd.f32 0.0, %v2671
        %v2673 = vpop.f32.mrb[0].mxu0
        %v2674 = vpop.f32.mrb[0].mxu0
        %v2675 = vadd.f32 0.0, %v2674
        %v2676 = vpop.f32.mrb[0].mxu0
        %2677 = vdwg.mxu0
        %v2679 = vsel %vm708, %v2615, 0
        %v2682 = vsel %vm708, %v2616, 0
        %2684 = vmatprep.subr.bf16.mxu0 0
        %2685 = vmatpush1.bf16.msra.mxu0 %v991
        %2686 = vmatprep.subr.bf16.mxu0 0
        %2687 = vmatpush1.bf16.msra.mxu0 %v992
        %2688 = vmatprep.subr.bf16.mxu0 0
        %2689 = vmatpush1.bf16.msra.mxu0 0
        %2690 = vmatprep.subr.bf16.mxu0 0
        %2691 = vmatpush1.bf16.msra.mxu0 0
        %2692 = vmatprep.subr.bf16.mxu0 0
        %2693 = vmatpush1.bf16.msra.mxu0 0
        %2694 = vmatprep.subr.bf16.mxu0 0
        %2695 = vmatpush1.bf16.msra.mxu0 0
        %2696 = vmatprep.subr.bf16.mxu0 0
        %2697 = vmatpush1.bf16.msra.mxu0 0
        %2698 = vmatprep.subr.bf16.mxu0 0
        %2699 = vmatpush1.bf16.msra.mxu0 0
        %2700 = vmatprep.subr.bf16.mxu0 0
        %2701 = vmatpush1.bf16.msra.mxu0 0
        %2702 = vmatprep.subr.bf16.mxu0 0
        %2703 = vmatpush1.bf16.msra.mxu0 0
        %2704 = vmatprep.subr.bf16.mxu0 0
        %2705 = vmatpush1.bf16.msra.mxu0 0
        %2706 = vmatprep.subr.bf16.mxu0 0
        %2707 = vmatpush1.bf16.msra.mxu0 0
        %2708 = vmatprep.subr.bf16.mxu0 0
        %2709 = vmatpush1.bf16.msra.mxu0 0
        %2710 = vmatprep.subr.bf16.mxu0 0
        %2711 = vmatpush1.bf16.msra.mxu0 0
        %2712 = vmatprep.subr.bf16.mxu0 0
        %2713 = vmatpush1.bf16.msra.mxu0 0
        %2714 = vmatprep.subr.bf16.mxu0 0
        %2715 = vmatpush1.bf16.msra.mxu0 0
        %2716 = vmatprep.mubr.bf16.mxu0 0
        %2717 = vmatmul.mubr.bf16.gmra.mrb[0].mxu0 %v2679
        %v2718 = vpop.f32.mrb[0].mxu0
        %v2719 = vadd.f32 0.0, %v2718
        %v2720 = vpop.f32.mrb[0].mxu0
        %v2721 = vpop.f32.mrb[0].mxu0
        %v2722 = vadd.f32 0.0, %v2721
        %v2723 = vpop.f32.mrb[0].mxu0
        %2724 = vmatprep.mubr.bf16.mxu0 0
        %2725 = vmatmul.mubr.bf16.gmra.mrb[0].mxu0 %v2682
        %v2726 = vpop.f32.mrb[0].mxu0
        %v2727 = vadd.f32 0.0, %v2726
        %v2728 = vpop.f32.mrb[0].mxu0
        %v2729 = vpop.f32.mrb[0].mxu0
        %v2730 = vadd.f32 0.0, %v2729
        %v2731 = vpop.f32.mrb[0].mxu0
        %2732 = vdwg.mxu0
        %v2734 = vsel %vm708, %v2621, 0
        %v2737 = vsel %vm708, %v2622, 0
        %2739 = vmatprep.subr.bf16.mxu0 0
        %2740 = vmatpush1.bf16.msra.mxu0 %v1058
        %2741 = vmatprep.subr.bf16.mxu0 0
        %2742 = vmatpush1.bf16.msra.mxu0 %v1059
        %2743 = vmatprep.subr.bf16.mxu0 0
        %2744 = vmatpush1.bf16.msra.mxu0 0
        %2745 = vmatprep.subr.bf16.mxu0 0
        %2746 = vmatpush1.bf16.msra.mxu0 0
        %2747 = vmatprep.subr.bf16.mxu0 0
        %2748 = vmatpush1.bf16.msra.mxu0 0
        %2749 = vmatprep.subr.bf16.mxu0 0
        %2750 = vmatpush1.bf16.msra.mxu0 0
        %2751 = vmatprep.subr.bf16.mxu0 0
        %2752 = vmatpush1.bf16.msra.mxu0 0
        %2753 = vmatprep.subr.bf16.mxu0 0
        %2754 = vmatpush1.bf16.msra.mxu0 0
        %2755 = vmatprep.subr.bf16.mxu0 0
        %2756 = vmatpush1.bf16.msra.mxu0 0
        %2757 = vmatprep.subr.bf16.mxu0 0
        %2758 = vmatpush1.bf16.msra.mxu0 0
        %2759 = vmatprep.subr.bf16.mxu0 0
        %2760 = vmatpush1.bf16.msra.mxu0 0
        %2761 = vmatprep.subr.bf16.mxu0 0
        %2762 = vmatpush1.bf16.msra.mxu0 0
        %2763 = vmatprep.subr.bf16.mxu0 0
        %2764 = vmatpush1.bf16.msra.mxu0 0
        %2765 = vmatprep.subr.bf16.mxu0 0
        %2766 = vmatpush1.bf16.msra.mxu0 0
        %2767 = vmatprep.subr.bf16.mxu0 0
        %2768 = vmatpush1.bf16.msra.mxu0 0
        %2769 = vmatprep.subr.bf16.mxu0 0
        %2770 = vmatpush1.bf16.msra.mxu0 0
        %2771 = vmatprep.mubr.bf16.mxu0 0
        %2772 = vmatmul.mubr.bf16.gmra.mrb[0].mxu0 %v2734
        %v2773 = vpop.f32.mrb[0].mxu0
        %v2774 = vadd.f32 0.0, %v2773
        %v2775 = vpop.f32.mrb[0].mxu0
        %v2776 = vpop.f32.mrb[0].mxu0
        %v2777 = vadd.f32 0.0, %v2776
        %v2778 = vpop.f32.mrb[0].mxu0
        %2779 = vmatprep.mubr.bf16.mxu0 0
        %2780 = vmatmul.mubr.bf16.gmra.mrb[0].mxu0 %v2737
        %v2781 = vpop.f32.mrb[0].mxu0
        %v2782 = vadd.f32 0.0, %v2781
        %v2783 = vpop.f32.mrb[0].mxu0
        %v2784 = vpop.f32.mrb[0].mxu0
        %v2785 = vadd.f32 0.0, %v2784
        %v2786 = vpop.f32.mrb[0].mxu0
        %2787 = vdwg.mxu0
        %v2788 = vsub.f32 %v2664, %v2719
        %v2789 = vsub.f32 %v2667, %v2722
        %v2790 = vsub.f32 %v2672, %v2727
        %v2791 = vsub.f32 %v2675, %v2730
        %v2792 = vsub.f32 %v2774, %v2664
        %v2793 = vsub.f32 %v2777, %v2667
        %v2794 = vsub.f32 %v2782, %v2672
        %v2795 = vsub.f32 %v2785, %v2675
        %v2796 = vsub.f32 %v2792, %v2719
        %v2797 = vsub.f32 %v2793, %v2722
        %v2798 = vsub.f32 %v2794, %v2727
        %v2799 = vsub.f32 %v2795, %v2730
        %v2800 = vmul.f32 %v2788, %v2788
        %v2801 = vmul.f32 %v2789, %v2789
        %v2802 = vmul.f32 %v2790, %v2790
        %v2803 = vmul.f32 %v2791, %v2791
        %v2804 = vmul.f32 %v2796, %v2796
        %v2805 = vmul.f32 %v2797, %v2797
        %v2806 = vmul.f32 %v2798, %v2798
        %v2807 = vmul.f32 %v2799, %v2799
        %v2808 = vadd.f32 %v2800, %v2804
        %v2809 = vadd.f32 %v2801, %v2805
        %v2810 = vadd.f32 %v2802, %v2806
        %v2811 = vadd.f32 %v2803, %v2807
        %v2812 = vsel %vm708, %v2808, 0.0
        %v2813 = vsel %vm708, %v2809, 0.0
        %v2814 = vadd.f32 %v2812, %v2813
        %v2815 = vsel %vm708, %v2810, 0.0
        %v2816 = vadd.f32 %v2814, %v2815
        %v2817 = vsel %vm708, %v2811, 0.0
        %v2818 = vadd.f32 %v2816, %v2817
        %2819 = vadd.xlane.f32.xlu0 %v2818
        %v2820 = vpop.xlane.xlu0 %2819
        %v2821 = vrot.slane %v2820, 4
        %v2822 = vadd.f32 %v2820, %v2821
        %v2823 = vrot.slane %v2822, 2
        %v2824 = vadd.f32 %v2822, %v2823
        %v2825 = vrot.slane %v2824, 1
        %v2826 = vadd.f32 %v2824, %v2825
        %s2827 = vtos %v2826
        %v2828 = vstv %s2827
        %v2829 = vpack.c.bf16 %v2809, %v2808
        %v2830 = vpack.c.bf16 %v2811, %v2810
        %2831 = vmatprep.subr.bf16.mxu0 0
        %2832 = vmatpush1.bf16.msra.mxu0 %v2829
        %2833 = vmatprep.subr.bf16.mxu0 0
        %2834 = vmatpush1.bf16.msra.mxu0 %v2830
        %2835 = vmatprep.subr.bf16.mxu0 0
        %2836 = vmatpush1.bf16.msra.mxu0 0
        %2837 = vmatprep.subr.bf16.mxu0 0
        %2838 = vmatpush1.bf16.msra.mxu0 0
        %2839 = vmatprep.subr.bf16.mxu0 0
        %2840 = vmatpush1.bf16.msra.mxu0 0
        %2841 = vmatprep.subr.bf16.mxu0 0
        %2842 = vmatpush1.bf16.msra.mxu0 0
        %2843 = vmatprep.subr.bf16.mxu0 0
        %2844 = vmatpush1.bf16.msra.mxu0 0
        %2845 = vmatprep.subr.bf16.mxu0 0
        %2846 = vmatpush1.bf16.msra.mxu0 0
        %2847 = vmatprep.subr.bf16.mxu0 0
        %2848 = vmatpush1.bf16.msra.mxu0 0
        %2849 = vmatprep.subr.bf16.mxu0 0
        %2850 = vmatpush1.bf16.msra.mxu0 0
        %2851 = vmatprep.subr.bf16.mxu0 0
        %2852 = vmatpush1.bf16.msra.mxu0 0
        %2853 = vmatprep.subr.bf16.mxu0 0
        %2854 = vmatpush1.bf16.msra.mxu0 0
        %2855 = vmatprep.subr.bf16.mxu0 0
        %2856 = vmatpush1.bf16.msra.mxu0 0
        %2857 = vmatprep.subr.bf16.mxu0 0
        %2858 = vmatpush1.bf16.msra.mxu0 0
        %2859 = vmatprep.subr.bf16.mxu0 0
        %2860 = vmatpush1.bf16.msra.mxu0 0
        %2861 = vmatprep.subr.bf16.mxu0 0
        %2862 = vmatpush1.bf16.msra.mxu0 0
        %2863 = vmatprep.mubr.bf16.mxu0 0
        %2864 = vmatmul.mubr.bf16.gmra.mrb[0].mxu0 %v1166
        %v2865 = vpop.f32.mrb[0].mxu0
        %v2866 = vadd.f32 0.0, %v2865
        %v2867 = vpop.f32.mrb[0].mxu0
        %v2868 = vpop.f32.mrb[0].mxu0
        %v2869 = vadd.f32 0.0, %v2868
        %v2870 = vpop.f32.mrb[0].mxu0
        %2871 = vdwg.mxu0
        %v2872 = vpack.c.bf16 %v2869, %v2866
        %v2874 = vsel %vm708, %v2872, 0
        %2876 = vmatprep.subr.bf16.mxu0 0
        %2877 = vmatpush1.bf16.msra.mxu0 %v1218
        %2878 = vmatprep.subr.bf16.mxu0 0
        %2879 = vmatpush1.bf16.msra.mxu0 %v1219
        %2880 = vmatprep.subr.bf16.mxu0 0
        %2881 = vmatpush1.bf16.msra.mxu0 0
        %2882 = vmatprep.subr.bf16.mxu0 0
        %2883 = vmatpush1.bf16.msra.mxu0 0
        %2884 = vmatprep.subr.bf16.mxu0 0
        %2885 = vmatpush1.bf16.msra.mxu0 0
        %2886 = vmatprep.subr.bf16.mxu0 0
        %2887 = vmatpush1.bf16.msra.mxu0 0
        %2888 = vmatprep.subr.bf16.mxu0 0
        %2889 = vmatpush1.bf16.msra.mxu0 0
        %2890 = vmatprep.subr.bf16.mxu0 0
        %2891 = vmatpush1.bf16.msra.mxu0 0
        %2892 = vmatprep.subr.bf16.mxu0 0
        %2893 = vmatpush1.bf16.msra.mxu0 0
        %2894 = vmatprep.subr.bf16.mxu0 0
        %2895 = vmatpush1.bf16.msra.mxu0 0
        %2896 = vmatprep.subr.bf16.mxu0 0
        %2897 = vmatpush1.bf16.msra.mxu0 0
        %2898 = vmatprep.subr.bf16.mxu0 0
        %2899 = vmatpush1.bf16.msra.mxu0 0
        %2900 = vmatprep.subr.bf16.mxu0 0
        %2901 = vmatpush1.bf16.msra.mxu0 0
        %2902 = vmatprep.subr.bf16.mxu0 0
        %2903 = vmatpush1.bf16.msra.mxu0 0
        %2904 = vmatprep.subr.bf16.mxu0 0
        %2905 = vmatpush1.bf16.msra.mxu0 0
        %2906 = vmatprep.subr.bf16.mxu0 0
        %2907 = vmatpush1.bf16.msra.mxu0 0
        %2908 = vmatprep.mubr.bf16.mxu0 0
        %2909 = vmatmul.mubr.bf16.gmra.mrb[0].mxu0 %v2874
        %v2910 = vpop.f32.mrb[0].mxu0
        %v2911 = vadd.f32 0.0, %v2910
        %v2912 = vpop.f32.mrb[0].mxu0
        %v2913 = vpop.f32.mrb[0].mxu0
        %v2914 = vadd.f32 0.0, %v2913
        %v2915 = vpop.f32.mrb[0].mxu0
        %2916 = vdwg.mxu0
        %s2917 = sadd.s32 %s1266, 3
        %s2918 = sld [smem:[#allocation10 + %s2917]]
        %v2919 = vstv %s2918
        %v2920 = vrcp.pop %v2828
        %v2921 = vmul.f32 %v2919, %v2920
        %v2922 = vmul.f32 %v2911, %v2921
        %v2923 = vmul.f32 %v2914, %v2921
        %s2924 = scalar_lea.vmem %s606, 48 [#allocation18]
        %2925 = vst [vmem:[%s2924] sm:$0xff] %v2922
        %2926 = vst [vmem:[%s2924 + $0x8] sm:$0xff] %v2923
        %v2927 = vsel %vm1275, %v2922, inf
        %v2928 = vsel %vm1275, %v2923, inf
        %v2929 = vmin.f32 %v2927, %v2928
        %2930 = vmin.xlane.f32.xlu0 %v2929
        %v2931 = vpop.xlane.xlu0 %2930
        %v2932 = vrot.slane %v2931, 4
        %v2933 = vmin.f32 %v2931, %v2932
        %v2934 = vrot.slane %v2933, 2
        %v2935 = vmin.f32 %v2933, %v2934
        %v2936 = vrot.slane %v2935, 1
        %v2937 = vmin.f32 %v2935, %v2936
        %s2938 = vtos %v2937
        %v2939 = vstv %s2938
        %v2940 = vmax.f32 %v2922, %v2923
        %2941 = vmax.xlane.f32.xlu0 %v2940
        %v2942 = vpop.xlane.xlu0 %2941
        %v2943 = vrot.slane %v2942, 4
        %v2944 = vmax.f32 %v2942, %v2943
        %v2945 = vrot.slane %v2944, 2
        %v2946 = vmax.f32 %v2944, %v2945
        %v2947 = vrot.slane %v2946, 1
        %v2948 = vmax.f32 %v2946, %v2947
        %s2949 = vtos %v2948
        %v2950 = vstv %s2949
        %v2951 = vmin.f32 %v2400, %v2939
        %v2952 = vmax.f32 %v2401, %v2950
        %v2953 = vsub.f32 %v2952, %v2951
        %v2954 = vmax.f32 %v2953, 1e-30
        %v2955 = vrcp.pop %v2954
        %v2956 = vmul.f32 1.0, %v2955
        %v2957 = vld [vmem:[%s606] sm:$0xff]
        %v2958 = vld [vmem:[%s606 + $0x8] sm:$0xff]
        %v2959 = vsub.f32 %v2957, %v2951
        %v2960 = vsub.f32 %v2958, %v2951
        %v2961 = vmul.f32 %v2959, %v2956
        %v2962 = vmul.f32 %v2960, %v2956
        %2963 = vst [vmem:[%s606] sm:$0xff] %v2961
        %2964 = vst [vmem:[%s606 + $0x8] sm:$0xff] %v2962
        %v2965 = vld [vmem:[%s1822] sm:$0xff]
        %v2966 = vld [vmem:[%s1822 + $0x8] sm:$0xff]
        %v2967 = vsub.f32 %v2965, %v2951
        %v2968 = vsub.f32 %v2966, %v2951
        %v2969 = vmul.f32 %v2967, %v2956
        %v2970 = vmul.f32 %v2968, %v2956
        %2971 = vst [vmem:[%s1822] sm:$0xff] %v2969
        %2972 = vst [vmem:[%s1822 + $0x8] sm:$0xff] %v2970
        %v2973 = vld [vmem:[%s2373] sm:$0xff]
        %v2974 = vld [vmem:[%s2373 + $0x8] sm:$0xff]
        %v2975 = vsub.f32 %v2973, %v2951
        %v2976 = vsub.f32 %v2974, %v2951
        %v2977 = vmul.f32 %v2975, %v2956
        %v2978 = vmul.f32 %v2976, %v2956
        %2979 = vst [vmem:[%s2373] sm:$0xff] %v2977
        %2980 = vst [vmem:[%s2373 + $0x8] sm:$0xff] %v2978
        %v2981 = vld [vmem:[%s2924] sm:$0xff]
        %v2982 = vld [vmem:[%s2924 + $0x8] sm:$0xff]
        %v2983 = vsub.f32 %v2981, %v2951
        %v2984 = vsub.f32 %v2982, %v2951
        %v2985 = vmul.f32 %v2983, %v2956
        %v2986 = vmul.f32 %v2984, %v2956
        %2987 = vst [vmem:[%s2924] sm:$0xff] %v2985
        %2988 = vst [vmem:[%s2924 + $0x8] sm:$0xff] %v2986
        %s2989 = sand.u32 %s323, 1
        %s2990 = scalar_lea.sflag [#allocation4], %s2989
        %s2991 = sand.u32 %s323, 1
        %s2992 = smul.addr %s2991, 64
        %s2993 = scalar_lea.vmem [#allocation18], %s2992
        // Predicated region
        $region113: #{tpu_custom_call.1} parent=71 // pred_check
          %p2994 = pneg %p333
        $region114: #{tpu_custom_call.1} parent=71 // pred_check_branch
          %2996 = sbr.rel (%p2994) target = $region116
        $region115: #{tpu_custom_call.1} parent=71 // pred_region
          %s2998 = ssub.s32 1024, 1024
          %2999 = vsyncadd %s2990, %s2998
          %s3000 = smul.addr %s32, 8
          %s3001 = smul.addr %s3000, 128
          %s3002 = scalar_lea.hbm %s13, %s3001
          %s3003 = sshll.u32 %s2993, 4
          %s3004 = int_to_ptr.vmem [resolvable:$true] %s3003
          %3009 = dma.vmem_to_hbm [thread:$0]  %s3004, 1024, %s3002, %s2990, 128, 128, 8
        $region116: #{tpu_custom_call.1} parent=71 // pred_fallthru
          _
      $region72: #{tpu_custom_call.1} parent=5 // pred_fallthru
        _
      %p3010 = scmp.le.s32.totalorder 2, %s27
      // Predicated region
      $region117: #{tpu_custom_call.1} parent=5 // pred_check
        %p3011 = pneg %p3010
      $region118: #{tpu_custom_call.1} parent=5 // pred_check_branch
        %3013 = sbr.rel (%p3011) target = $region120
      $region119: #{tpu_custom_call.1} parent=5 // pred_region
        %s3014 = ssub.s32 %s27, 2
        // Predicated region
        $region121: #{tpu_custom_call.1} parent=119 // pred_check
          %p3015 = pneg %p339
        $region122: #{tpu_custom_call.1} parent=119 // pred_check_branch
          %3017 = sbr.rel (%p3015) target = $region124
        $region123: #{tpu_custom_call.1} parent=119 // pred_region
          %s3018 = sand.u32 %s324, 1
          %s3019 = scalar_lea.sflag [#allocation4], %s3018
          %s3020 = sand.u32 %s324, 1
          %s3021 = smul.addr %s3020, 64
          %s3022 = scalar_lea.vmem [#allocation18], %s3021
          %3023 = dma.done %s3019, 1024
        $region124: #{tpu_custom_call.1} parent=119 // pred_fallthru
          _
      $region120: #{tpu_custom_call.1} parent=5 // pred_fallthru
        _
    $region6: #{tpu_custom_call.1} parent=1 // loop_footer
      %s31 = sadd.s32 1, %s27
    $region7: #{tpu_custom_call.1} parent=1 // loop_footer_branch
      %26 = sbr.rel target = $region3
    $region8: #{tpu_custom_call.1} parent=1 // loop_exit
      _
    %3024 = vsyncpa [#allocation3], 1
    %s3025 = scalar_lea.sflag [#allocation3], 1
    %3026 = vsyncpa %s3025, 1
    %3027 = vsyncpa [#allocation7], 1
    %3028 = vsyncpa [#allocation13], 1
    %3029 = vsyncpa [#allocation16], 1
    %3030 = vsyncpa [#allocation4], 1
    %s3031 = scalar_lea.sflag [#allocation4], 1
    %3032 = vsyncpa %s3031, 1
    %3033 = vsyncpa [#allocation5], 1
    %s3034 = scalar_lea.sflag [#allocation5], 1
    %3035 = vsyncpa %s3034, 1

// kernel: tpu_custom_call.1
$region0: #{tpu_custom_call.1}
  #allocation0 [shape = 'u32[]', space=smem, size = 0x4, offset = 0x4, fixed_abs, tag = 'smem constant byte address 0x4 - core index']
  #allocation1 [shape = 'u32[144,128]{1,0:T(1,128)}', space=vmem, size = 0x12000, scoped, tag = 'internal scratch']
  %s0 = inlined_call_operand.hbm [shape: f32[32,32], index: 0, kind: input, shape index: {}]
  %s1 = inlined_call_operand.hbm [shape: f32[32,32], index: 1, kind: input, shape index: {}]
  %s2 = inlined_call_operand.hbm [shape: bf16[2,4,32,32], index: 2, kind: input, shape index: {}]
  %s3 = inlined_call_operand.hbm [shape: bf16[2,4,32,32], index: 3, kind: input, shape index: {}]
  %s4 = inlined_call_operand.hbm [shape: f32[2,4], index: 4, kind: input, shape index: {}]
  %s5 = inlined_call_operand.vmem [shape: bf16[32,32], index: 5, kind: input, shape index: {}]
  %s6 = inlined_call_operand.hbm [shape: bf16[32,32], index: 6, kind: input, shape index: {}]
  %s7 = inlined_call_operand.hbm [shape: bf16[32,32], index: 7, kind: input, shape index: {}]
  %s8 = inlined_call_operand.hbm [shape: bf16[32,32], index: 8, kind: input, shape index: {}]
  %s9 = inlined_call_operand.vmem [shape: bf16[32,32], index: 9, kind: input, shape index: {}]
  %s10 = inlined_call_operand.hbm [shape: bf16[32,32], index: 10, kind: input, shape index: {}]
  %s11 = inlined_call_operand.vmem [shape: bf16[16,32], index: 11, kind: input, shape index: {}]
  %s12 = inlined_call_operand.hbm [shape: bf16[32,128], index: 12, kind: input, shape index: {}]
  %s13 = inlined_call_operand.hbm [shape: f32[2,4,16,128], index: 13, kind: output, shape index: {}]
  %s14 = sld [smem:[#allocation0]]
  $region125: #{tpu_custom_call.1} parent=0
    _
  %s16 = ssub.s32 1, %s14
  %s17 = scalar_select 0, %s16, %s14
  $region1: #{tpu_custom_call.1} parent=0
    #allocation2 [shape = 'u8[16384]{0}', space=vmem, size = 0x4000, scoped, tag = 'input window, operand 0, single buffered']
    #allocation3 [shape = 's32[2]{0}', space=sflag, size = 0x8, scoped, tag = 'scoped memory for tpu_custom_call.1']
    #allocation4 [shape = 's32[2]{0}', space=sflag, size = 0x8, scoped, tag = 'scoped memory for tpu_custom_call.1']
    #allocation5 [shape = 's32[2]{0}', space=sflag, size = 0x8, scoped, tag = 'scoped memory for tpu_custom_call.1']
    #allocation6 [shape = 'u8[16384]{0}', space=vmem, size = 0x4000, scoped, tag = 'input window, operand 1, single buffered']
    #allocation7 [shape = 's32[1]{0}', space=sflag, size = 0x4, scoped, tag = 'scoped memory for tpu_custom_call.1']
    #allocation8 [shape = 'u8[65536]{0}', space=vmem, size = 0x10000, scoped, tag = 'input window, operand 2']
    #allocation9 [shape = 'u8[65536]{0}', space=vmem, size = 0x10000, scoped, tag = 'input window, operand 3']
    #allocation10 [shape = 'u8[1024]{0}', space=smem, size = 0x400, scoped, tag = 'input window, operand 4, single buffered']
    #allocation11 [shape = 'u8[8192]{0}', space=vmem, size = 0x2000, scoped, tag = 'input window, operand 6, single buffered']
    #allocation12 [shape = 'u8[8192]{0}', space=vmem, size = 0x2000, scoped, tag = 'input window, operand 7, single buffered']
    #allocation13 [shape = 's32[1]{0}', space=sflag, size = 0x4, scoped, tag = 'scoped memory for tpu_custom_call.1']
    #allocation14 [shape = 'u8[8192]{0}', space=vmem, size = 0x2000, scoped, tag = 'input window, operand 8, single buffered']
    #allocation15 [shape = 'u8[8192]{0}', space=vmem, size = 0x2000, scoped, tag = 'input window, operand 10, single buffered']
    #allocation16 [shape = 's32[1]{0}', space=sflag, size = 0x4, scoped, tag = 'scoped memory for tpu_custom_call.1']
    #allocation17 [shape = 'u8[8192]{0}', space=vmem, size = 0x2000, scoped, tag = 'input window, operand 12, single buffered']
    #allocation18 [shape = 'u8[65536]{0}', space=vmem, size = 0x10000, scoped, tag = 'output window, operand 0']
    %18 = vsyncpa [#allocation3], 0
    %19 = vsyncpa [#allocation7], 0
    %20 = vsyncpa [#allocation5], 0
    %21 = vsyncpa [#allocation13], 0
    %22 = vsyncpa [#allocation16], 0
    %23 = vsyncpa [#allocation4], 0
    %s24 = scalar_lea.sflag [#allocation4], 1
    %25 = vsyncpa %s24, 0
    loop: start=0, step=1, limit=4
    $region2: #{tpu_custom_call.1} parent=1 // loop_pre_header
      _
    $region3: #{tpu_custom_call.1} parent=1 // loop_header
      %s27 = sphi 0, %s31
      %p28 = scmp.ge.s32.totalorder %s27, 4
      %s35 = sphi 0, %s35
      %s37 = sphi 0, %s35
      %s38 = sphi 0, %s37
      %s52 = sphi 0, %s38
      %s56 = sphi 0, %s56
      %s58 = sphi 0, %s56
      %s59 = sphi 0, %s58
      %s73 = sphi 0, %s59
      %s79 = sphi 0, %s81
      %s82 = sphi 0, %s79
      %s83 = sphi 0, %s82
      %s99 = sphi 0, %s83
      %s105 = sphi 0, %s107
      %s108 = sphi 0, %s105
      %s109 = sphi 0, %s108
      %s125 = sphi 0, %s109
      %s129 = sphi 0, %s129
      %s131 = sphi 0, %s129
      %s132 = sphi 0, %s131
      %s146 = sphi 0, %s132
      %s150 = sphi 0, %s150
      %s152 = sphi 0, %s150
      %s153 = sphi 0, %s152
      %s167 = sphi 0, %s153
      %s171 = sphi 0, %s171
      %s173 = sphi 0, %s171
      %s174 = sphi 0, %s173
      %s188 = sphi 0, %s174
      %s192 = sphi 0, %s192
      %s194 = sphi 0, %s192
      %s195 = sphi 0, %s194
      %s209 = sphi 0, %s195
      %s213 = sphi 0, %s213
      %s215 = sphi 0, %s213
      %s216 = sphi 0, %s215
      %s230 = sphi 0, %s216
      %s234 = sphi 0, %s234
      %s236 = sphi 0, %s234
      %s237 = sphi 0, %s236
      %s251 = sphi 0, %s237
      %s255 = sphi 0, %s255
      %s257 = sphi 0, %s255
      %s258 = sphi 0, %s257
      %s272 = sphi 0, %s258
      %s276 = sphi 0, %s276
      %s278 = sphi 0, %s276
      %s279 = sphi 0, %s278
      %s293 = sphi 0, %s279
      %s297 = sphi 0, %s297
      %s299 = sphi 0, %s297
      %s300 = sphi 0, %s299
      %s314 = sphi 0, %s300
      %s320 = sphi 0, %s322
      %s323 = sphi 0, %s320
      %s324 = sphi 0, %s323
      %s340 = sphi 0, %s324
    $region4: #{tpu_custom_call.1} parent=1 // loop_header_branch
      %30 = sbr.rel (%p28) target = $region8
    $region5: #{tpu_custom_call.1} parent=1 // loop_body
      %s32 = ssub.s32 %s27, 1
      %s33 = ssub.s32 %s27, 2
      %s34 = sadd.s32 %s27, 1
      %s36 = sadd.s32 %s35, 1
      %p39 = scmp.eq.s32.totalorder %s27, 1
      %p40 = scmp.ne.s32.totalorder %s35, %s37
      %p41 = scmp.eq.s32.totalorder %s27, 0
      %p42 = por %p40, %p41
      %p43 = scmp.ne.s32.totalorder %s35, %s37
      %p44 = scmp.eq.s32.totalorder %s32, 1
      %p45 = por %p43, %p44
      %p46 = scmp.ne.s32.totalorder %s37, %s38
      %p47 = scmp.eq.s32.totalorder %s32, 0
      %p48 = por %p46, %p47
      %p49 = scmp.ne.s32.totalorder %s37, %s38
      %p50 = scmp.eq.s32.totalorder %s33, 1
      %p51 = por %p49, %p50
      %p53 = scmp.ne.s32.totalorder %s38, %s52
      %p54 = scmp.eq.s32.totalorder %s33, 0
      %p55 = por %p53, %p54
      %s57 = sadd.s32 %s56, 1
      %p60 = scmp.eq.s32.totalorder %s27, 1
      %p61 = scmp.ne.s32.totalorder %s56, %s58
      %p62 = scmp.eq.s32.totalorder %s27, 0
      %p63 = por %p61, %p62
      %p64 = scmp.ne.s32.totalorder %s56, %s58
      %p65 = scmp.eq.s32.totalorder %s32, 1
      %p66 = por %p64, %p65
      %p67 = scmp.ne.s32.totalorder %s58, %s59
      %p68 = scmp.eq.s32.totalorder %s32, 0
      %p69 = por %p67, %p68
      %p70 = scmp.ne.s32.totalorder %s58, %s59
      %p71 = scmp.eq.s32.totalorder %s33, 1
      %p72 = por %p70, %p71
      %p74 = scmp.ne.s32.totalorder %s59, %s73
      %p75 = scmp.eq.s32.totalorder %s33, 0
      %p76 = por %p74, %p75
      %s77 = ssub.s32 %s27, %s34
      %p78 = scmp.eq.s32.totalorder %s77, 0
      %s80 = sadd.s32 %s79, 1
      %s81 = scalar_select %p78, %s79, %s80
      %p84 = pneg %p78
      %p85 = scmp.eq.s32.totalorder %s27, 1
      %p86 = por %p84, %p85
      %p87 = scmp.ne.s32.totalorder %s79, %s82
      %p88 = scmp.eq.s32.totalorder %s27, 0
      %p89 = por %p87, %p88
      %p90 = scmp.ne.s32.totalorder %s79, %s82
      %p91 = scmp.eq.s32.totalorder %s32, 1
      %p92 = por %p90, %p91
      %p93 = scmp.ne.s32.totalorder %s82, %s83
      %p94 = scmp.eq.s32.totalorder %s32, 0
      %p95 = por %p93, %p94
      %p96 = scmp.ne.s32.totalorder %s82, %s83
      %p97 = scmp.eq.s32.totalorder %s33, 1
      %p98 = por %p96, %p97
      %p100 = scmp.ne.s32.totalorder %s83, %s99
      %p101 = scmp.eq.s32.totalorder %s33, 0
      %p102 = por %p100, %p101
      %s103 = ssub.s32 %s27, %s34
      %p104 = scmp.eq.s32.totalorder %s103, 0
      %s106 = sadd.s32 %s105, 1
      %s107 = scalar_select %p104, %s105, %s106
      %p110 = pneg %p104
      %p111 = scmp.eq.s32.totalorder %s27, 1
      %p112 = por %p110, %p111
      %p113 = scmp.ne.s32.totalorder %s105, %s108
      %p114 = scmp.eq.s32.totalorder %s27, 0
      %p115 = por %p113, %p114
      %p116 = scmp.ne.s32.totalorder %s105, %s108
      %p117 = scmp.eq.s32.totalorder %s32, 1
      %p118 = por %p116, %p117
      %p119 = scmp.ne.s32.totalorder %s108, %s109
      %p120 = scmp.eq.s32.totalorder %s32, 0
      %p121 = por %p119, %p120
      %p122 = scmp.ne.s32.totalorder %s108, %s109
      %p123 = scmp.eq.s32.totalorder %s33, 1
      %p124 = por %p122, %p123
      %p126 = scmp.ne.s32.totalorder %s109, %s125
      %p127 = scmp.eq.s32.totalorder %s33, 0
      %p128 = por %p126, %p127
      %s130 = sadd.s32 %s129, 1
      %p133 = scmp.eq.s32.totalorder %s27, 1
      %p134 = scmp.ne.s32.totalorder %s129, %s131
      %p135 = scmp.eq.s32.totalorder %s27, 0
      %p136 = por %p134, %p135
      %p137 = scmp.ne.s32.totalorder %s129, %s131
      %p138 = scmp.eq.s32.totalorder %s32, 1
      %p139 = por %p137, %p138
      %p140 = scmp.ne.s32.totalorder %s131, %s132
      %p141 = scmp.eq.s32.totalorder %s32, 0
      %p142 = por %p140, %p141
      %p143 = scmp.ne.s32.totalorder %s131, %s132
      %p144 = scmp.eq.s32.totalorder %s33, 1
      %p145 = por %p143, %p144
      %p147 = scmp.ne.s32.totalorder %s132, %s146
      %p148 = scmp.eq.s32.totalorder %s33, 0
      %p149 = por %p147, %p148
      %s151 = sadd.s32 %s150, 1
      %p154 = scmp.eq.s32.totalorder %s27, 1
      %p155 = scmp.ne.s32.totalorder %s150, %s152
      %p156 = scmp.eq.s32.totalorder %s27, 0
      %p157 = por %p155, %p156
      %p158 = scmp.ne.s32.totalorder %s150, %s152
      %p159 = scmp.eq.s32.totalorder %s32, 1
      %p160 = por %p158, %p159
      %p161 = scmp.ne.s32.totalorder %s152, %s153
      %p162 = scmp.eq.s32.totalorder %s32, 0
      %p163 = por %p161, %p162
      %p164 = scmp.ne.s32.totalorder %s152, %s153
      %p165 = scmp.eq.s32.totalorder %s33, 1
      %p166 = por %p164, %p165
      %p168 = scmp.ne.s32.totalorder %s153, %s167
      %p169 = scmp.eq.s32.totalorder %s33, 0
      %p170 = por %p168, %p169
      %s172 = sadd.s32 %s171, 1
      %p175 = scmp.eq.s32.totalorder %s27, 1
      %p176 = scmp.ne.s32.totalorder %s171, %s173
      %p177 = scmp.eq.s32.totalorder %s27, 0
      %p178 = por %p176, %p177
      %p179 = scmp.ne.s32.totalorder %s171, %s173
      %p180 = scmp.eq.s32.totalorder %s32, 1
      %p181 = por %p179, %p180
      %p182 = scmp.ne.s32.totalorder %s173, %s174
      %p183 = scmp.eq.s32.totalorder %s32, 0
      %p184 = por %p182, %p183
      %p185 = scmp.ne.s32.totalorder %s173, %s174
      %p186 = scmp.eq.s32.totalorder %s33, 1
      %p187 = por %p185, %p186
      %p189 = scmp.ne.s32.totalorder %s174, %s188
      %p190 = scmp.eq.s32.totalorder %s33, 0
      %p191 = por %p189, %p190
      %s193 = sadd.s32 %s192, 1
      %p196 = scmp.eq.s32.totalorder %s27, 1
      %p197 = scmp.ne.s32.totalorder %s192, %s194
      %p198 = scmp.eq.s32.totalorder %s27, 0
      %p199 = por %p197, %p198
      %p200 = scmp.ne.s32.totalorder %s192, %s194
      %p201 = scmp.eq.s32.totalorder %s32, 1
      %p202 = por %p200, %p201
      %p203 = scmp.ne.s32.totalorder %s194, %s195
      %p204 = scmp.eq.s32.totalorder %s32, 0
      %p205 = por %p203, %p204
      %p206 = scmp.ne.s32.totalorder %s194, %s195
      %p207 = scmp.eq.s32.totalorder %s33, 1
      %p208 = por %p206, %p207
      %p210 = scmp.ne.s32.totalorder %s195, %s209
      %p211 = scmp.eq.s32.totalorder %s33, 0
      %p212 = por %p210, %p211
      %s214 = sadd.s32 %s213, 1
      %p217 = scmp.eq.s32.totalorder %s27, 1
      %p218 = scmp.ne.s32.totalorder %s213, %s215
      %p219 = scmp.eq.s32.totalorder %s27, 0
      %p220 = por %p218, %p219
      %p221 = scmp.ne.s32.totalorder %s213, %s215
      %p222 = scmp.eq.s32.totalorder %s32, 1
      %p223 = por %p221, %p222
      %p224 = scmp.ne.s32.totalorder %s215, %s216
      %p225 = scmp.eq.s32.totalorder %s32, 0
      %p226 = por %p224, %p225
      %p227 = scmp.ne.s32.totalorder %s215, %s216
      %p228 = scmp.eq.s32.totalorder %s33, 1
      %p229 = por %p227, %p228
      %p231 = scmp.ne.s32.totalorder %s216, %s230
      %p232 = scmp.eq.s32.totalorder %s33, 0
      %p233 = por %p231, %p232
      %s235 = sadd.s32 %s234, 1
      %p238 = scmp.eq.s32.totalorder %s27, 1
      %p239 = scmp.ne.s32.totalorder %s234, %s236
      %p240 = scmp.eq.s32.totalorder %s27, 0
      %p241 = por %p239, %p240
      %p242 = scmp.ne.s32.totalorder %s234, %s236
      %p243 = scmp.eq.s32.totalorder %s32, 1
      %p244 = por %p242, %p243
      %p245 = scmp.ne.s32.totalorder %s236, %s237
      %p246 = scmp.eq.s32.totalorder %s32, 0
      %p247 = por %p245, %p246
      %p248 = scmp.ne.s32.totalorder %s236, %s237
      %p249 = scmp.eq.s32.totalorder %s33, 1
      %p250 = por %p248, %p249
      %p252 = scmp.ne.s32.totalorder %s237, %s251
      %p253 = scmp.eq.s32.totalorder %s33, 0
      %p254 = por %p252, %p253
      %s256 = sadd.s32 %s255, 1
      %p259 = scmp.eq.s32.totalorder %s27, 1
      %p260 = scmp.ne.s32.totalorder %s255, %s257
      %p261 = scmp.eq.s32.totalorder %s27, 0
      %p262 = por %p260, %p261
      %p263 = scmp.ne.s32.totalorder %s255, %s257
      %p264 = scmp.eq.s32.totalorder %s32, 1
      %p265 = por %p263, %p264
      %p266 = scmp.ne.s32.totalorder %s257, %s258
      %p267 = scmp.eq.s32.totalorder %s32, 0
      %p268 = por %p266, %p267
      %p269 = scmp.ne.s32.totalorder %s257, %s258
      %p270 = scmp.eq.s32.totalorder %s33, 1
      %p271 = por %p269, %p270
      %p273 = scmp.ne.s32.totalorder %s258, %s272
      %p274 = scmp.eq.s32.totalorder %s33, 0
      %p275 = por %p273, %p274
      %s277 = sadd.s32 %s276, 1
      %p280 = scmp.eq.s32.totalorder %s27, 1
      %p281 = scmp.ne.s32.totalorder %s276, %s278
      %p282 = scmp.eq.s32.totalorder %s27, 0
      %p283 = por %p281, %p282
      %p284 = scmp.ne.s32.totalorder %s276, %s278
      %p285 = scmp.eq.s32.totalorder %s32, 1
      %p286 = por %p284, %p285
      %p287 = scmp.ne.s32.totalorder %s278, %s279
      %p288 = scmp.eq.s32.totalorder %s32, 0
      %p289 = por %p287, %p288
      %p290 = scmp.ne.s32.totalorder %s278, %s279
      %p291 = scmp.eq.s32.totalorder %s33, 1
      %p292 = por %p290, %p291
      %p294 = scmp.ne.s32.totalorder %s279, %s293
      %p295 = scmp.eq.s32.totalorder %s33, 0
      %p296 = por %p294, %p295
      %s298 = sadd.s32 %s297, 1
      %p301 = scmp.eq.s32.totalorder %s27, 1
      %p302 = scmp.ne.s32.totalorder %s297, %s299
      %p303 = scmp.eq.s32.totalorder %s27, 0
      %p304 = por %p302, %p303
      %p305 = scmp.ne.s32.totalorder %s297, %s299
      %p306 = scmp.eq.s32.totalorder %s32, 1
      %p307 = por %p305, %p306
      %p308 = scmp.ne.s32.totalorder %s299, %s300
      %p309 = scmp.eq.s32.totalorder %s32, 0
      %p310 = por %p308, %p309
      %p311 = scmp.ne.s32.totalorder %s299, %s300
      %p312 = scmp.eq.s32.totalorder %s33, 1
      %p313 = por %p311, %p312
      %p315 = scmp.ne.s32.totalorder %s300, %s314
      %p316 = scmp.eq.s32.totalorder %s33, 0
      %p317 = por %p315, %p316
      %s318 = ssub.s32 %s27, %s34
      %p319 = scmp.eq.s32.totalorder %s318, 0
      %s321 = sadd.s32 %s320, 1
      %s322 = scalar_select %p319, %s320, %s321
      %p325 = pneg %p319
      %p326 = scmp.eq.s32.totalorder %s27, 1
      %p327 = por %p325, %p326
      %p328 = scmp.ne.s32.totalorder %s320, %s323
      %p329 = scmp.eq.s32.totalorder %s27, 0
      %p330 = por %p328, %p329
      %p331 = scmp.ne.s32.totalorder %s320, %s323
      %p332 = scmp.eq.s32.totalorder %s32, 1
      %p333 = por %p331, %p332
      %p334 = scmp.ne.s32.totalorder %s323, %s324
      %p335 = scmp.eq.s32.totalorder %s32, 0
      %p336 = por %p334, %p335
      %p337 = scmp.ne.s32.totalorder %s323, %s324
      %p338 = scmp.eq.s32.totalorder %s33, 1
      %p339 = por %p337, %p338
      %p341 = scmp.ne.s32.totalorder %s324, %s340
      %p342 = scmp.eq.s32.totalorder %s33, 0
      %p343 = por %p341, %p342
      %p344 = scmp.le.s32.totalorder 1, %s27
      %p345 = scmp.lt.s32.totalorder %s27, 3
      %p346 = pnand %p344, %p345
      %p347 = pneg %p346
      // Predicated region
      $region9: #{tpu_custom_call.1} parent=5 // pred_check
        _
      $region10: #{tpu_custom_call.1} parent=5 // pred_check_branch
        %349 = sbr.rel (%p346) target = $region12
      $region11: #{tpu_custom_call.1} parent=5 // pred_region
        %s350 = ssub.s32 %s27, 1
        // Predicated region
        $region13: #{tpu_custom_call.1} parent=11 // pred_check
          %p351 = pneg %p48
        $region14: #{tpu_custom_call.1} parent=11 // pred_check_branch
          %353 = sbr.rel (%p351) target = $region16
        $region15: #{tpu_custom_call.1} parent=11 // pred_region
          %s355 = ssub.s32 512, 512
          %356 = vsyncadd [#allocation3], %s355
          %s357 = sshll.u32 [#allocation2], 4
          %s358 = int_to_ptr.vmem [resolvable:$true] %s357
          %363 = dma.hbm_to_vmem [thread:$0]  %s0, 512, %s358, [#allocation3], 128, 128, 8
        $region16: #{tpu_custom_call.1} parent=11 // pred_fallthru
          _
        // Predicated region
        $region17: #{tpu_custom_call.1} parent=11 // pred_check
          %p364 = pneg %p69
        $region18: #{tpu_custom_call.1} parent=11 // pred_check_branch
          %366 = sbr.rel (%p364) target = $region20
        $region19: #{tpu_custom_call.1} parent=11 // pred_region
          %s368 = ssub.s32 512, 512
          %369 = vsyncadd [#allocation7], %s368
          %s370 = sshll.u32 [#allocation6], 4
          %s371 = int_to_ptr.vmem [resolvable:$true] %s370
          %376 = dma.hbm_to_vmem [thread:$0]  %s1, 512, %s371, [#allocation7], 128, 128, 8
        $region20: #{tpu_custom_call.1} parent=11 // pred_fallthru
          _
        // Predicated region
        $region21: #{tpu_custom_call.1} parent=11 // pred_check
          %p377 = pneg %p142
        $region22: #{tpu_custom_call.1} parent=11 // pred_check_branch
          %379 = sbr.rel (%p377) target = $region24
        $region23: #{tpu_custom_call.1} parent=11 // pred_region
          %s381 = ssub.s32 32, 32
          %382 = vsyncadd [#allocation5], %s381
          %385 = dma.hbm_to_smem %s4, 32, [#allocation10], [#allocation5]
        $region24: #{tpu_custom_call.1} parent=11 // pred_fallthru
          _
        // Predicated region
        $region25: #{tpu_custom_call.1} parent=11 // pred_check
          %p386 = pneg %p163
        $region26: #{tpu_custom_call.1} parent=11 // pred_check_branch
          %388 = sbr.rel (%p386) target = $region28
        $region27: #{tpu_custom_call.1} parent=11 // pred_region
          _
        $region28: #{tpu_custom_call.1} parent=11 // pred_fallthru
          _
        // Predicated region
        $region29: #{tpu_custom_call.1} parent=11 // pred_check
          %p389 = pneg %p184
        $region30: #{tpu_custom_call.1} parent=11 // pred_check_branch
          %391 = sbr.rel (%p389) target = $region32
        $region31: #{tpu_custom_call.1} parent=11 // pred_region
          %s393 = ssub.s32 256, 256
          %394 = vsyncadd [#allocation7], %s393
          %s395 = sshll.u32 [#allocation11], 4
          %s396 = int_to_ptr.vmem [resolvable:$true] %s395
          %401 = dma.hbm_to_vmem [thread:$0]  %s6, 256, %s396, [#allocation7], 64, 64, 4
        $region32: #{tpu_custom_call.1} parent=11 // pred_fallthru
          _
        // Predicated region
        $region33: #{tpu_custom_call.1} parent=11 // pred_check
          %p402 = pneg %p205
        $region34: #{tpu_custom_call.1} parent=11 // pred_check_branch
          %404 = sbr.rel (%p402) target = $region36
        $region35: #{tpu_custom_call.1} parent=11 // pred_region
          %s406 = ssub.s32 256, 256
          %407 = vsyncadd [#allocation13], %s406
          %s408 = sshll.u32 [#allocation12], 4
          %s409 = int_to_ptr.vmem [resolvable:$true] %s408
          %414 = dma.hbm_to_vmem [thread:$0]  %s7, 256, %s409, [#allocation13], 64, 64, 4
        $region36: #{tpu_custom_call.1} parent=11 // pred_fallthru
          _
        // Predicated region
        $region37: #{tpu_custom_call.1} parent=11 // pred_check
          %p415 = pneg %p226
        $region38: #{tpu_custom_call.1} parent=11 // pred_check_branch
          %417 = sbr.rel (%p415) target = $region40
        $region39: #{tpu_custom_call.1} parent=11 // pred_region
          %s419 = ssub.s32 256, 256
          %420 = vsyncadd [#allocation13], %s419
          %s421 = sshll.u32 [#allocation14], 4
          %s422 = int_to_ptr.vmem [resolvable:$true] %s421
          %427 = dma.hbm_to_vmem [thread:$0]  %s8, 256, %s422, [#allocation13], 64, 64, 4
        $region40: #{tpu_custom_call.1} parent=11 // pred_fallthru
          _
        // Predicated region
        $region41: #{tpu_custom_call.1} parent=11 // pred_check
          %p428 = pneg %p247
        $region42: #{tpu_custom_call.1} parent=11 // pred_check_branch
          %430 = sbr.rel (%p428) target = $region44
        $region43: #{tpu_custom_call.1} parent=11 // pred_region
          _
        $region44: #{tpu_custom_call.1} parent=11 // pred_fallthru
          _
        // Predicated region
        $region45: #{tpu_custom_call.1} parent=11 // pred_check
          %p431 = pneg %p268
        $region46: #{tpu_custom_call.1} parent=11 // pred_check_branch
          %433 = sbr.rel (%p431) target = $region48
        $region47: #{tpu_custom_call.1} parent=11 // pred_region
          %s435 = ssub.s32 256, 256
          %436 = vsyncadd [#allocation16], %s435
          %s437 = sshll.u32 [#allocation15], 4
          %s438 = int_to_ptr.vmem [resolvable:$true] %s437
          %443 = dma.hbm_to_vmem [thread:$0]  %s10, 256, %s438, [#allocation16], 64, 64, 4
        $region48: #{tpu_custom_call.1} parent=11 // pred_fallthru
          _
        // Predicated region
        $region49: #{tpu_custom_call.1} parent=11 // pred_check
          %p444 = pneg %p289
        $region50: #{tpu_custom_call.1} parent=11 // pred_check_branch
          %446 = sbr.rel (%p444) target = $region52
        $region51: #{tpu_custom_call.1} parent=11 // pred_region
          _
        $region52: #{tpu_custom_call.1} parent=11 // pred_fallthru
          _
        // Predicated region
        $region53: #{tpu_custom_call.1} parent=11 // pred_check
          %p447 = pneg %p310
        $region54: #{tpu_custom_call.1} parent=11 // pred_check_branch
          %449 = sbr.rel (%p447) target = $region56
        $region55: #{tpu_custom_call.1} parent=11 // pred_region
          %s451 = ssub.s32 256, 256
          %452 = vsyncadd [#allocation16], %s451
          %s453 = sshll.u32 [#allocation17], 4
          %s454 = int_to_ptr.vmem [resolvable:$true] %s453
          %459 = dma.hbm_to_vmem [thread:$0]  %s12, 256, %s454, [#allocation16], 64, 64, 4
        $region56: #{tpu_custom_call.1} parent=11 // pred_fallthru
          _
      $region12: #{tpu_custom_call.1} parent=5 // pred_fallthru
        _
      %p460 = scmp.lt.s32.totalorder %s27, 2
      // Predicated region
      $region57: #{tpu_custom_call.1} parent=5 // pred_check
        %p461 = pneg %p460
      $region58: #{tpu_custom_call.1} parent=5 // pred_check_branch
        %463 = sbr.rel (%p461) target = $region60
      $region59: #{tpu_custom_call.1} parent=5 // pred_region
        // Predicated region
        $region61: #{tpu_custom_call.1} parent=59 // pred_check
          %p464 = pneg %p89
        $region62: #{tpu_custom_call.1} parent=59 // pred_check_branch
          %466 = sbr.rel (%p464) target = $region64
        $region63: #{tpu_custom_call.1} parent=59 // pred_region
          %s467 = sand.u32 %s27, 1
          %s468 = scalar_lea.sflag [#allocation3], %s467
          %s469 = sand.u32 %s79, 1
          %s470 = smul.addr %s469, 64
          %s471 = scalar_lea.vmem [#allocation8], %s470
          %s473 = ssub.s32 1024, 1024
          %474 = vsyncadd %s468, %s473
          %s475 = smul.addr %s27, 16
          %s476 = smul.addr %s475, 64
          %s477 = scalar_lea.hbm %s2, %s476
          %s478 = sshll.u32 %s471, 4
          %s479 = int_to_ptr.vmem [resolvable:$true] %s478
          %484 = dma.hbm_to_vmem [thread:$0]  %s477, 1024, %s479, %s468, 64, 64, 4
        $region64: #{tpu_custom_call.1} parent=59 // pred_fallthru
          _
        // Predicated region
        $region65: #{tpu_custom_call.1} parent=59 // pred_check
          %p485 = pneg %p115
        $region66: #{tpu_custom_call.1} parent=59 // pred_check_branch
          %487 = sbr.rel (%p485) target = $region68
        $region67: #{tpu_custom_call.1} parent=59 // pred_region
          %s488 = sand.u32 %s27, 1
          %s489 = scalar_lea.sflag [#allocation3], %s488
          %s490 = sand.u32 %s105, 1
          %s491 = smul.addr %s490, 64
          %s492 = scalar_lea.vmem [#allocation9], %s491
          %s494 = ssub.s32 1024, 1024
          %495 = vsyncadd %s489, %s494
          %s496 = smul.addr %s27, 16
          %s497 = smul.addr %s496, 64
          %s498 = scalar_lea.hbm %s3, %s497
          %s499 = sshll.u32 %s492, 4
          %s500 = int_to_ptr.vmem [resolvable:$true] %s499
          %505 = dma.hbm_to_vmem [thread:$0]  %s498, 1024, %s500, %s489, 64, 64, 4
        $region68: #{tpu_custom_call.1} parent=59 // pred_fallthru
          _
      $region60: #{tpu_custom_call.1} parent=5 // pred_fallthru
        _
      %p506 = scmp.le.s32.totalorder 1, %s27
      %p507 = scmp.lt.s32.totalorder %s27, 3
      %p508 = pnand %p506, %p507
      %p509 = pneg %p508
      // Predicated region
      $region69: #{tpu_custom_call.1} parent=5 // pred_check
        _
      $region70: #{tpu_custom_call.1} parent=5 // pred_check_branch
        %511 = sbr.rel (%p508) target = $region72
      $region71: #{tpu_custom_call.1} parent=5 // pred_region
        %s512 = ssub.s32 %s27, 1
        // Predicated region
        $region73: #{tpu_custom_call.1} parent=71 // pred_check
          %p513 = pneg %p48
        $region74: #{tpu_custom_call.1} parent=71 // pred_check_branch
          %515 = sbr.rel (%p513) target = $region76
        $region75: #{tpu_custom_call.1} parent=71 // pred_region
          %516 = dma.done [#allocation3], 512
        $region76: #{tpu_custom_call.1} parent=71 // pred_fallthru
          _
        // Predicated region
        $region77: #{tpu_custom_call.1} parent=71 // pred_check
          %p517 = pneg %p69
        $region78: #{tpu_custom_call.1} parent=71 // pred_check_branch
          %519 = sbr.rel (%p517) target = $region80
        $region79: #{tpu_custom_call.1} parent=71 // pred_region
          %520 = dma.done [#allocation7], 512
        $region80: #{tpu_custom_call.1} parent=71 // pred_fallthru
          _
        %s521 = sand.u32 %s32, 1
        %s522 = scalar_lea.sflag [#allocation3], %s521
        %s523 = sand.u32 %s82, 1
        %s524 = smul.addr %s523, 64
        %s525 = scalar_lea.vmem [#allocation8], %s524
        // Predicated region
        $region81: #{tpu_custom_call.1} parent=71 // pred_check
          %p526 = pneg %p95
        $region82: #{tpu_custom_call.1} parent=71 // pred_check_branch
          %528 = sbr.rel (%p526) target = $region84
        $region83: #{tpu_custom_call.1} parent=71 // pred_region
          %529 = dma.done %s522, 1024
        $region84: #{tpu_custom_call.1} parent=71 // pred_fallthru
          _
        %s530 = sand.u32 %s32, 1
        %s531 = scalar_lea.sflag [#allocation3], %s530
        %s532 = sand.u32 %s108, 1
        %s533 = smul.addr %s532, 64
        %s534 = scalar_lea.vmem [#allocation9], %s533
        // Predicated region
        $region85: #{tpu_custom_call.1} parent=71 // pred_check
          %p535 = pneg %p121
        $region86: #{tpu_custom_call.1} parent=71 // pred_check_branch
          %537 = sbr.rel (%p535) target = $region88
        $region87: #{tpu_custom_call.1} parent=71 // pred_region
          %538 = dma.done %s531, 1024
        $region88: #{tpu_custom_call.1} parent=71 // pred_fallthru
          _
        // Predicated region
        $region89: #{tpu_custom_call.1} parent=71 // pred_check
          %p539 = pneg %p142
        $region90: #{tpu_custom_call.1} parent=71 // pred_check_branch
          %541 = sbr.rel (%p539) target = $region92
        $region91: #{tpu_custom_call.1} parent=71 // pred_region
          %542 = dma.done [#allocation5], 32
        $region92: #{tpu_custom_call.1} parent=71 // pred_fallthru
          _
        // Predicated region
        $region93: #{tpu_custom_call.1} parent=71 // pred_check
          %p543 = pneg %p184
        $region94: #{tpu_custom_call.1} parent=71 // pred_check_branch
          %545 = sbr.rel (%p543) target = $region96
        $region95: #{tpu_custom_call.1} parent=71 // pred_region
          %546 = dma.done [#allocation7], 256
        $region96: #{tpu_custom_call.1} parent=71 // pred_fallthru
          _
        // Predicated region
        $region97: #{tpu_custom_call.1} parent=71 // pred_check
          %p547 = pneg %p205
        $region98: #{tpu_custom_call.1} parent=71 // pred_check_branch
          %549 = sbr.rel (%p547) target = $region100
        $region99: #{tpu_custom_call.1} parent=71 // pred_region
          %550 = dma.done [#allocation13], 256
        $region100: #{tpu_custom_call.1} parent=71 // pred_fallthru
          _
        // Predicated region
        $region101: #{tpu_custom_call.1} parent=71 // pred_check
          %p551 = pneg %p226
        $region102: #{tpu_custom_call.1} parent=71 // pred_check_branch
          %553 = sbr.rel (%p551) target = $region104
        $region103: #{tpu_custom_call.1} parent=71 // pred_region
          %554 = dma.done [#allocation13], 256
        $region104: #{tpu_custom_call.1} parent=71 // pred_fallthru
          _
        // Predicated region
        $region105: #{tpu_custom_call.1} parent=71 // pred_check
          %p555 = pneg %p268
        $region106: #{tpu_custom_call.1} parent=71 // pred_check_branch
          %557 = sbr.rel (%p555) target = $region108
        $region107: #{tpu_custom_call.1} parent=71 // pred_region
          %558 = dma.done [#allocation16], 256
        $region108: #{tpu_custom_call.1} parent=71 // pred_fallthru
          _
        // Predicated region
        $region109: #{tpu_custom_call.1} parent=71 // pred_check
          %p559 = pneg %p310
        $region110: #{tpu_custom_call.1} parent=71 // pred_check_branch
          %561 = sbr.rel (%p559) target = $region112
        $region111: #{tpu_custom_call.1} parent=71 // pred_region
          %562 = dma.done [#allocation16], 256
        $region112: #{tpu_custom_call.1} parent=71 // pred_fallthru
          _
        %563 = sfence
        %p564 = pneg %p48
        %p565 = pneg %p45
        %p566 = pneg %p69
        %p567 = pneg %p66
        %s568 = sand.u32 %s32, 1
        %s569 = scalar_lea.sflag [#allocation3], %s568
        %s570 = sand.u32 %s82, 1
        %s571 = smul.addr %s570, 64
        %s572 = scalar_lea.vmem [#allocation8], %s571
        %p573 = pneg %p95
        %p574 = pneg %p92
        %s575 = sand.u32 %s32, 1
        %s576 = scalar_lea.sflag [#allocation3], %s575
        %s577 = sand.u32 %s108, 1
        %s578 = smul.addr %s577, 64
        %s579 = scalar_lea.vmem [#allocation9], %s578
        %p580 = pneg %p121
        %p581 = pneg %p118
        %p582 = pneg %p142
        %p583 = pneg %p139
        %p584 = pneg %p163
        %p585 = pneg %p160
        %p586 = pneg %p184
        %p587 = pneg %p181
        %p588 = pneg %p205
        %p589 = pneg %p202
        %p590 = pneg %p226
        %p591 = pneg %p223
        %p592 = pneg %p247
        %p593 = pneg %p244
        %p594 = pneg %p268
        %p595 = pneg %p265
        %p596 = pneg %p289
        %p597 = pneg %p286
        %p598 = pneg %p310
        %p599 = pneg %p307
        %p600 = pneg %p336
        %p601 = pneg %p333
        %s602 = sand.u32 %s323, 1
        %s603 = scalar_lea.sflag [#allocation4], %s602
        %s604 = sand.u32 %s323, 1
        %s605 = smul.addr %s604, 64
        %s606 = scalar_lea.vmem [#allocation18], %s605
        %v608 = vld [vmem:[#allocation2] sm:$0xff]
        %v609 = vld [vmem:[#allocation2 + $0x8] sm:$0xff]
        %v610 = vld [vmem:[#allocation2 + $0x10] sm:$0xff]
        %v611 = vld [vmem:[#allocation2 + $0x18] sm:$0xff]
        %v612 = vld [vmem:[#allocation6] sm:$0xff]
        %v613 = vld [vmem:[#allocation6 + $0x8] sm:$0xff]
        %v614 = vld [vmem:[#allocation6 + $0x10] sm:$0xff]
        %v615 = vld [vmem:[#allocation6 + $0x18] sm:$0xff]
        %v616 = vld [vmem:[%s5] sm:$0xf]
        %v617 = vld [vmem:[%s5 + $0x4] sm:$0xf]
        %v618 = vld [vmem:[%s5 + $0x8] sm:$0xf]
        %v619 = vld [vmem:[%s5 + $0xc] sm:$0xf]
        %v620 = vld [vmem:[#allocation11] sm:$0xf]
        %v621 = vld [vmem:[#allocation11 + $0x4] sm:$0xf]
        %v622 = vld [vmem:[#allocation11 + $0x8] sm:$0xf]
        %v623 = vld [vmem:[#allocation11 + $0xc] sm:$0xf]
        %v624 = vld [vmem:[#allocation12] sm:$0xf]
        %v625 = vld [vmem:[#allocation12 + $0x4] sm:$0xf]
        %v626 = vld [vmem:[#allocation12 + $0x8] sm:$0xf]
        %v627 = vld [vmem:[#allocation12 + $0xc] sm:$0xf]
        %v628 = vld [vmem:[#allocation14] sm:$0xf]
        %v629 = vld [vmem:[#allocation14 + $0x4] sm:$0xf]
        %v630 = vld [vmem:[#allocation14 + $0x8] sm:$0xf]
        %v631 = vld [vmem:[#allocation14 + $0xc] sm:$0xf]
        %v632 = vld [vmem:[%s9] sm:$0xf]
        %v633 = vld [vmem:[%s9 + $0x4] sm:$0xf]
        %v634 = vld [vmem:[%s9 + $0x8] sm:$0xf]
        %v635 = vld [vmem:[%s9 + $0xc] sm:$0xf]
        %v636 = vld [vmem:[#allocation15] sm:$0xf]
        %v637 = vld [vmem:[#allocation15 + $0x4] sm:$0xf]
        %v638 = vld [vmem:[#allocation15 + $0x8] sm:$0xf]
        %v639 = vld [vmem:[#allocation15 + $0xc] sm:$0xf]
        %v640 = vld [vmem:[%s11] sm:$0xf]
        %v641 = vld [vmem:[%s11 + $0x4] sm:$0xf]
        %v642 = vld [vmem:[#allocation17] sm:$0xf]
        %v643 = vld [vmem:[#allocation17 + $0x4] sm:$0xf]
        %v644 = vld [vmem:[#allocation17 + $0x8] sm:$0xf]
        %v645 = vld [vmem:[#allocation17 + $0xc] sm:$0xf]
        %v646 = vlaneseq
        %v647 = vand.u32 %v646, 127
        %v648 = vld [vmem:[%s525] sm:$0xf]
        %v649 = vld [vmem:[%s525 + $0x4] sm:$0xf]
        %v650 = vld [vmem:[%s525 + $0x8] sm:$0xf]
        %v651 = vld [vmem:[%s525 + $0xc] sm:$0xf]
        %v652 = vunpack.c.l.bf16 %v648
        %v653 = vunpack.c.l.bf16 %v649
        %v654 = vunpack.c.l.bf16 %v650
        %v655 = vunpack.c.l.bf16 %v651
        %v656 = vld [vmem:[%s534] sm:$0xf]
        %v657 = vld [vmem:[%s534 + $0x4] sm:$0xf]
        %v658 = vld [vmem:[%s534 + $0x8] sm:$0xf]
        %v659 = vld [vmem:[%s534 + $0xc] sm:$0xf]
        %v660 = vunpack.c.l.bf16 %v656
        %v661 = vunpack.c.l.bf16 %v657
        %v662 = vunpack.c.l.bf16 %v658
        %v663 = vunpack.c.l.bf16 %v659
        %v664 = vmul.f32 %v608, %v652
        %v665 = vmul.f32 %v609, %v653
        %v666 = vmul.f32 %v610, %v654
        %v667 = vmul.f32 %v611, %v655
        %v668 = vmul.f32 %v612, %v660
        %v669 = vmul.f32 %v613, %v661
        %v670 = vmul.f32 %v614, %v662
        %v671 = vmul.f32 %v615, %v663
        %v672 = vsub.f32 %v664, %v668
        %v673 = vsub.f32 %v665, %v669
        %v674 = vsub.f32 %v666, %v670
        %v675 = vsub.f32 %v667, %v671
        %v676 = vmul.f32 %v608, %v660
        %v677 = vmul.f32 %v609, %v661
        %v678 = vmul.f32 %v610, %v662
        %v679 = vmul.f32 %v611, %v663
        %v680 = vmul.f32 %v612, %v652
        %v681 = vmul.f32 %v613, %v653
        %v682 = vmul.f32 %v614, %v654
        %v683 = vmul.f32 %v615, %v655
        %v684 = vadd.f32 %v676, %v680
        %v685 = vadd.f32 %v677, %v681
        %v686 = vadd.f32 %v678, %v682
        %v687 = vadd.f32 %v679, %v683
        %v688 = vpack.c.bf16 %v673, %v672
        %v689 = vpack.c.bf16 %v675, %v674
        %v690 = vpack.c.bf16 %v685, %v684
        %v691 = vpack.c.bf16 %v687, %v686
        %v692 = vadd.f32 %v672, %v684
        %v693 = vadd.f32 %v673, %v685
        %v694 = vadd.f32 %v674, %v686
        %v695 = vadd.f32 %v675, %v687
        %v696 = vpack.c.bf16 %v693, %v692
        %v697 = vpack.c.bf16 %v695, %v694
        %v702 = vunpack.c.l.b16 %v616
        %v703 = vunpack.c.l.b16 %v617
        %v704 = vunpack.c.l.b16 %v618
        %v705 = vunpack.c.l.b16 %v619
        %v706 = vpack.c.b16 %v703, %v702
        %v707 = vpack.c.b16 %v705, %v704
        %vm708 = vcmask 261120
        %v710 = vsel %vm708, %v706, 0
        %v713 = vsel %vm708, %v707, 0
        %715 = vmatprep.subr.bf16.mxu0 0
        %716 = vmatpush1.bf16.msra.mxu0 %v688
        %717 = vmatprep.subr.bf16.mxu0 0
        %718 = vmatpush1.bf16.msra.mxu0 %v689
        %719 = vmatprep.subr.bf16.mxu0 0
        %720 = vmatpush1.bf16.msra.mxu0 0
        %721 = vmatprep.subr.bf16.mxu0 0
        %722 = vmatpush1.bf16.msra.mxu0 0
        %723 = vmatprep.subr.bf16.mxu0 0
        %724 = vmatpush1.bf16.msra.mxu0 0
        %725 = vmatprep.subr.bf16.mxu0 0
        %726 = vmatpush1.bf16.msra.mxu0 0
        %727 = vmatprep.subr.bf16.mxu0 0
        %728 = vmatpush1.bf16.msra.mxu0 0
        %729 = vmatprep.subr.bf16.mxu0 0
        %730 = vmatpush1.bf16.msra.mxu0 0
        %731 = vmatprep.subr.bf16.mxu0 0
        %732 = vmatpush1.bf16.msra.mxu0 0
        %733 = vmatprep.subr.bf16.mxu0 0
        %734 = vmatpush1.bf16.msra.mxu0 0
        %735 = vmatprep.subr.bf16.mxu0 0
        %736 = vmatpush1.bf16.msra.mxu0 0
        %737 = vmatprep.subr.bf16.mxu0 0
        %738 = vmatpush1.bf16.msra.mxu0 0
        %739 = vmatprep.subr.bf16.mxu0 0
        %740 = vmatpush1.bf16.msra.mxu0 0
        %741 = vmatprep.subr.bf16.mxu0 0
        %742 = vmatpush1.bf16.msra.mxu0 0
        %743 = vmatprep.subr.bf16.mxu0 0
        %744 = vmatpush1.bf16.msra.mxu0 0
        %745 = vmatprep.subr.bf16.mxu0 0
        %746 = vmatpush1.bf16.msra.mxu0 0
        %747 = vmatprep.mubr.bf16.mxu0 0
        %748 = vmatmul.mubr.bf16.gmra.mrb[0].mxu0 %v710
        %v749 = vpop.f32.mrb[0].mxu0
        %v750 = vadd.f32 0.0, %v749
        %v751 = vpop.f32.mrb[0].mxu0
        %v752 = vpop.f32.mrb[0].mxu0
        %v753 = vadd.f32 0.0, %v752
        %v754 = vpop.f32.mrb[0].mxu0
        %755 = vmatprep.mubr.bf16.mxu0 0
        %756 = vmatmul.mubr.bf16.gmra.mrb[0].mxu0 %v713
        %v757 = vpop.f32.mrb[0].mxu0
        %v758 = vadd.f32 0.0, %v757
        %v759 = vpop.f32.mrb[0].mxu0
        %v760 = vpop.f32.mrb[0].mxu0
        %v761 = vadd.f32 0.0, %v760
        %v762 = vpop.f32.mrb[0].mxu0
        %763 = vdwg.mxu0
        %v768 = vunpack.c.l.b16 %v620
        %v769 = vunpack.c.l.b16 %v621
        %v770 = vunpack.c.l.b16 %v622
        %v771 = vunpack.c.l.b16 %v623
        %v772 = vpack.c.b16 %v769, %v768
        %v773 = vpack.c.b16 %v771, %v770
        %v775 = vsel %vm708, %v772, 0
        %v778 = vsel %vm708, %v773, 0
        %780 = vmatprep.subr.bf16.mxu0 0
        %781 = vmatpush1.bf16.msra.mxu0 %v690
        %782 = vmatprep.subr.bf16.mxu0 0
        %783 = vmatpush1.bf16.msra.mxu0 %v691
        %784 = vmatprep.subr.bf16.mxu0 0
        %785 = vmatpush1.bf16.msra.mxu0 0
        %786 = vmatprep.subr.bf16.mxu0 0
        %787 = vmatpush1.bf16.msra.mxu0 0
        %788 = vmatprep.subr.bf16.mxu0 0
        %789 = vmatpush1.bf16.msra.mxu0 0
        %790 = vmatprep.subr.bf16.mxu0 0
        %791 = vmatpush1.bf16.msra.mxu0 0
        %792 = vmatprep.subr.bf16.mxu0 0
        %793 = vmatpush1.bf16.msra.mxu0 0
        %794 = vmatprep.subr.bf16.mxu0 0
        %795 = vmatpush1.bf16.msra.mxu0 0
        %796 = vmatprep.subr.bf16.mxu0 0
        %797 = vmatpush1.bf16.msra.mxu0 0
        %798 = vmatprep.subr.bf16.mxu0 0
        %799 = vmatpush1.bf16.msra.mxu0 0
        %800 = vmatprep.subr.bf16.mxu0 0
        %801 = vmatpush1.bf16.msra.mxu0 0
        %802 = vmatprep.subr.bf16.mxu0 0
        %803 = vmatpush1.bf16.msra.mxu0 0
        %804 = vmatprep.subr.bf16.mxu0 0
        %805 = vmatpush1.bf16.msra.mxu0 0
        %806 = vmatprep.subr.bf16.mxu0 0
        %807 = vmatpush1.bf16.msra.mxu0 0
        %808 = vmatprep.subr.bf16.mxu0 0
        %809 = vmatpush1.bf16.msra.mxu0 0
        %810 = vmatprep.subr.bf16.mxu0 0
        %811 = vmatpush1.bf16.msra.mxu0 0
        %812 = vmatprep.mubr.bf16.mxu0 0
        %813 = vmatmul.mubr.bf16.gmra.mrb[0].mxu0 %v775
        %v814 = vpop.f32.mrb[0].mxu0
        %v815 = vadd.f32 0.0, %v814
        %v816 = vpop.f32.mrb[0].mxu0
        %v817 = vpop.f32.mrb[0].mxu0
        %v818 = vadd.f32 0.0, %v817
        %v819 = vpop.f32.mrb[0].mxu0
        %820 = vmatprep.mubr.bf16.mxu0 0
        %821 = vmatmul.mubr.bf16.gmra.mrb[0].mxu0 %v778
        %v822 = vpop.f32.mrb[0].mxu0
        %v823 = vadd.f32 0.0, %v822
        %v824 = vpop.f32.mrb[0].mxu0
        %v825 = vpop.f32.mrb[0].mxu0
        %v826 = vadd.f32 0.0, %v825
        %v827 = vpop.f32.mrb[0].mxu0
        %828 = vdwg.mxu0
        %v833 = vunpack.c.l.b16 %v624
        %v834 = vunpack.c.l.b16 %v625
        %v835 = vunpack.c.l.b16 %v626
        %v836 = vunpack.c.l.b16 %v627
        %v837 = vpack.c.b16 %v834, %v833
        %v838 = vpack.c.b16 %v836, %v835
        %v840 = vsel %vm708, %v837, 0
        %v843 = vsel %vm708, %v838, 0
        %845 = vmatprep.subr.bf16.mxu0 0
        %846 = vmatpush1.bf16.msra.mxu0 %v696
        %847 = vmatprep.subr.bf16.mxu0 0
        %848 = vmatpush1.bf16.msra.mxu0 %v697
        %849 = vmatprep.subr.bf16.mxu0 0
        %850 = vmatpush1.bf16.msra.mxu0 0
        %851 = vmatprep.subr.bf16.mxu0 0
        %852 = vmatpush1.bf16.msra.mxu0 0
        %853 = vmatprep.subr.bf16.mxu0 0
        %854 = vmatpush1.bf16.msra.mxu0 0
        %855 = vmatprep.subr.bf16.mxu0 0
        %856 = vmatpush1.bf16.msra.mxu0 0
        %857 = vmatprep.subr.bf16.mxu0 0
        %858 = vmatpush1.bf16.msra.mxu0 0
        %859 = vmatprep.subr.bf16.mxu0 0
        %860 = vmatpush1.bf16.msra.mxu0 0
        %861 = vmatprep.subr.bf16.mxu0 0
        %862 = vmatpush1.bf16.msra.mxu0 0
        %863 = vmatprep.subr.bf16.mxu0 0
        %864 = vmatpush1.bf16.msra.mxu0 0
        %865 = vmatprep.subr.bf16.mxu0 0
        %866 = vmatpush1.bf16.msra.mxu0 0
        %867 = vmatprep.subr.bf16.mxu0 0
        %868 = vmatpush1.bf16.msra.mxu0 0
        %869 = vmatprep.subr.bf16.mxu0 0
        %870 = vmatpush1.bf16.msra.mxu0 0
        %871 = vmatprep.subr.bf16.mxu0 0
        %872 = vmatpush1.bf16.msra.mxu0 0
        %873 = vmatprep.subr.bf16.mxu0 0
        %874 = vmatpush1.bf16.msra.mxu0 0
        %875 = vmatprep.subr.bf16.mxu0 0
        %876 = vmatpush1.bf16.msra.mxu0 0
        %877 = vmatprep.mubr.bf16.mxu0 0
        %878 = vmatmul.mubr.bf16.gmra.mrb[0].mxu0 %v840
        %v879 = vpop.f32.mrb[0].mxu0
        %v880 = vadd.f32 0.0, %v879
        %v881 = vpop.f32.mrb[0].mxu0
        %v882 = vpop.f32.mrb[0].mxu0
        %v883 = vadd.f32 0.0, %v882
        %v884 = vpop.f32.mrb[0].mxu0
        %885 = vmatprep.mubr.bf16.mxu0 0
        %886 = vmatmul.mubr.bf16.gmra.mrb[0].mxu0 %v843
        %v887 = vpop.f32.mrb[0].mxu0
        %v888 = vadd.f32 0.0, %v887
        %v889 = vpop.f32.mrb[0].mxu0
        %v890 = vpop.f32.mrb[0].mxu0
        %v891 = vadd.f32 0.0, %v890
        %v892 = vpop.f32.mrb[0].mxu0
        %893 = vdwg.mxu0
        %v894 = vsub.f32 %v750, %v815
        %v895 = vsub.f32 %v753, %v818
        %v896 = vsub.f32 %v758, %v823
        %v897 = vsub.f32 %v761, %v826
        %v898 = vsub.f32 %v880, %v750
        %v899 = vsub.f32 %v883, %v753
        %v900 = vsub.f32 %v888, %v758
        %v901 = vsub.f32 %v891, %v761
        %v902 = vsub.f32 %v898, %v815
        %v903 = vsub.f32 %v899, %v818
        %v904 = vsub.f32 %v900, %v823
        %v905 = vsub.f32 %v901, %v826
        %v906 = vpack.c.bf16 %v895, %v894
        %v907 = vpack.c.bf16 %v897, %v896
        %v908 = vpack.c.bf16 %v903, %v902
        %v909 = vpack.c.bf16 %v905, %v904
        %v910 = vadd.f32 %v894, %v902
        %v911 = vadd.f32 %v895, %v903
        %v912 = vadd.f32 %v896, %v904
        %v913 = vadd.f32 %v897, %v905
        %v914 = vpack.c.bf16 %v911, %v910
        %v915 = vpack.c.bf16 %v913, %v912
        %v920 = vunpack.c.l.b16 %v628
        %v921 = vunpack.c.l.b16 %v629
        %v922 = vunpack.c.l.b16 %v630
        %v923 = vunpack.c.l.b16 %v631
        %v924 = vpack.c.b16 %v921, %v920
        %v925 = vpack.c.b16 %v923, %v922
        %v929 = vsel %vm708, %v906, 0
        %v932 = vsel %vm708, %v907, 0
        %934 = vmatprep.subr.bf16.mxu0 0
        %935 = vmatpush1.bf16.msra.mxu0 %v924
        %936 = vmatprep.subr.bf16.mxu0 0
        %937 = vmatpush1.bf16.msra.mxu0 %v925
        %938 = vmatprep.subr.bf16.mxu0 0
        %939 = vmatpush1.bf16.msra.mxu0 0
        %940 = vmatprep.subr.bf16.mxu0 0
        %941 = vmatpush1.bf16.msra.mxu0 0
        %942 = vmatprep.subr.bf16.mxu0 0
        %943 = vmatpush1.bf16.msra.mxu0 0
        %944 = vmatprep.subr.bf16.mxu0 0
        %945 = vmatpush1.bf16.msra.mxu0 0
        %946 = vmatprep.subr.bf16.mxu0 0
        %947 = vmatpush1.bf16.msra.mxu0 0
        %948 = vmatprep.subr.bf16.mxu0 0
        %949 = vmatpush1.bf16.msra.mxu0 0
        %950 = vmatprep.subr.bf16.mxu0 0
        %951 = vmatpush1.bf16.msra.mxu0 0
        %952 = vmatprep.subr.bf16.mxu0 0
        %953 = vmatpush1.bf16.msra.mxu0 0
        %954 = vmatprep.subr.bf16.mxu0 0
        %955 = vmatpush1.bf16.msra.mxu0 0
        %956 = vmatprep.subr.bf16.mxu0 0
        %957 = vmatpush1.bf16.msra.mxu0 0
        %958 = vmatprep.subr.bf16.mxu0 0
        %959 = vmatpush1.bf16.msra.mxu0 0
        %960 = vmatprep.subr.bf16.mxu0 0
        %961 = vmatpush1.bf16.msra.mxu0 0
        %962 = vmatprep.subr.bf16.mxu0 0
        %963 = vmatpush1.bf16.msra.mxu0 0
        %964 = vmatprep.subr.bf16.mxu0 0
        %965 = vmatpush1.bf16.msra.mxu0 0
        %966 = vmatprep.mubr.bf16.mxu0 0
        %967 = vmatmul.mubr.bf16.gmra.mrb[0].mxu0 %v929
        %v968 = vpop.f32.mrb[0].mxu0
        %v969 = vadd.f32 0.0, %v968
        %v970 = vpop.f32.mrb[0].mxu0
        %v971 = vpop.f32.mrb[0].mxu0
        %v972 = vadd.f32 0.0, %v971
        %v973 = vpop.f32.mrb[0].mxu0
        %974 = vmatprep.mubr.bf16.mxu0 0
        %975 = vmatmul.mubr.bf16.gmra.mrb[0].mxu0 %v932
        %v976 = vpop.f32.mrb[0].mxu0
        %v977 = vadd.f32 0.0, %v976
        %v978 = vpop.f32.mrb[0].mxu0
        %v979 = vpop.f32.mrb[0].mxu0
        %v980 = vadd.f32 0.0, %v979
        %v981 = vpop.f32.mrb[0].mxu0
        %982 = vdwg.mxu0
        %v987 = vunpack.c.l.b16 %v632
        %v988 = vunpack.c.l.b16 %v633
        %v989 = vunpack.c.l.b16 %v634
        %v990 = vunpack.c.l.b16 %v635
        %v991 = vpack.c.b16 %v988, %v987
        %v992 = vpack.c.b16 %v990, %v989
        %v996 = vsel %vm708, %v908, 0
        %v999 = vsel %vm708, %v909, 0
        %1001 = vmatprep.subr.bf16.mxu0 0
        %1002 = vmatpush1.bf16.msra.mxu0 %v991
        %1003 = vmatprep.subr.bf16.mxu0 0
        %1004 = vmatpush1.bf16.msra.mxu0 %v992
        %1005 = vmatprep.subr.bf16.mxu0 0
        %1006 = vmatpush1.bf16.msra.mxu0 0
        %1007 = vmatprep.subr.bf16.mxu0 0
        %1008 = vmatpush1.bf16.msra.mxu0 0
        %1009 = vmatprep.subr.bf16.mxu0 0
        %1010 = vmatpush1.bf16.msra.mxu0 0
        %1011 = vmatprep.subr.bf16.mxu0 0
        %1012 = vmatpush1.bf16.msra.mxu0 0
        %1013 = vmatprep.subr.bf16.mxu0 0
        %1014 = vmatpush1.bf16.msra.mxu0 0
        %1015 = vmatprep.subr.bf16.mxu0 0
        %1016 = vmatpush1.bf16.msra.mxu0 0
        %1017 = vmatprep.subr.bf16.mxu0 0
        %1018 = vmatpush1.bf16.msra.mxu0 0
        %1019 = vmatprep.subr.bf16.mxu0 0
        %1020 = vmatpush1.bf16.msra.mxu0 0
        %1021 = vmatprep.subr.bf16.mxu0 0
        %1022 = vmatpush1.bf16.msra.mxu0 0
        %1023 = vmatprep.subr.bf16.mxu0 0
        %1024 = vmatpush1.bf16.msra.mxu0 0
        %1025 = vmatprep.subr.bf16.mxu0 0
        %1026 = vmatpush1.bf16.msra.mxu0 0
        %1027 = vmatprep.subr.bf16.mxu0 0
        %1028 = vmatpush1.bf16.msra.mxu0 0
        %1029 = vmatprep.subr.bf16.mxu0 0
        %1030 = vmatpush1.bf16.msra.mxu0 0
        %1031 = vmatprep.subr.bf16.mxu0 0
        %1032 = vmatpush1.bf16.msra.mxu0 0
        %1033 = vmatprep.mubr.bf16.mxu0 0
        %1034 = vmatmul.mubr.bf16.gmra.mrb[0].mxu0 %v996
        %v1035 = vpop.f32.mrb[0].mxu0
        %v1036 = vadd.f32 0.0, %v1035
        %v1037 = vpop.f32.mrb[0].mxu0
        %v1038 = vpop.f32.mrb[0].mxu0
        %v1039 = vadd.f32 0.0, %v1038
        %v1040 = vpop.f32.mrb[0].mxu0
        %1041 = vmatprep.mubr.bf16.mxu0 0
        %1042 = vmatmul.mubr.bf16.gmra.mrb[0].mxu0 %v999
        %v1043 = vpop.f32.mrb[0].mxu0
        %v1044 = vadd.f32 0.0, %v1043
        %v1045 = vpop.f32.mrb[0].mxu0
        %v1046 = vpop.f32.mrb[0].mxu0
        %v1047 = vadd.f32 0.0, %v1046
        %v1048 = vpop.f32.mrb[0].mxu0
        %1049 = vdwg.mxu0
        %v1054 = vunpack.c.l.b16 %v636
        %v1055 = vunpack.c.l.b16 %v637
        %v1056 = vunpack.c.l.b16 %v638
        %v1057 = vunpack.c.l.b16 %v639
        %v1058 = vpack.c.b16 %v1055, %v1054
        %v1059 = vpack.c.b16 %v1057, %v1056
        %v1063 = vsel %vm708, %v914, 0
        %v1066 = vsel %vm708, %v915, 0
        %1068 = vmatprep.subr.bf16.mxu0 0
        %1069 = vmatpush1.bf16.msra.mxu0 %v1058
        %1070 = vmatprep.subr.bf16.mxu0 0
        %1071 = vmatpush1.bf16.msra.mxu0 %v1059
        %1072 = vmatprep.subr.bf16.mxu0 0
        %1073 = vmatpush1.bf16.msra.mxu0 0
        %1074 = vmatprep.subr.bf16.mxu0 0
        %1075 = vmatpush1.bf16.msra.mxu0 0
        %1076 = vmatprep.subr.bf16.mxu0 0
        %1077 = vmatpush1.bf16.msra.mxu0 0
        %1078 = vmatprep.subr.bf16.mxu0 0
        %1079 = vmatpush1.bf16.msra.mxu0 0
        %1080 = vmatprep.subr.bf16.mxu0 0
        %1081 = vmatpush1.bf16.msra.mxu0 0
        %1082 = vmatprep.subr.bf16.mxu0 0
        %1083 = vmatpush1.bf16.msra.mxu0 0
        %1084 = vmatprep.subr.bf16.mxu0 0
        %1085 = vmatpush1.bf16.msra.mxu0 0
        %1086 = vmatprep.subr.bf16.mxu0 0
        %1087 = vmatpush1.bf16.msra.mxu0 0
        %1088 = vmatprep.subr.bf16.mxu0 0
        %1089 = vmatpush1.bf16.msra.mxu0 0
        %1090 = vmatprep.subr.bf16.mxu0 0
        %1091 = vmatpush1.bf16.msra.mxu0 0
        %1092 = vmatprep.subr.bf16.mxu0 0
        %1093 = vmatpush1.bf16.msra.mxu0 0
        %1094 = vmatprep.subr.bf16.mxu0 0
        %1095 = vmatpush1.bf16.msra.mxu0 0
        %1096 = vmatprep.subr.bf16.mxu0 0
        %1097 = vmatpush1.bf16.msra.mxu0 0
        %1098 = vmatprep.subr.bf16.mxu0 0
        %1099 = vmatpush1.bf16.msra.mxu0 0
        %1100 = vmatprep.mubr.bf16.mxu0 0
        %1101 = vmatmul.mubr.bf16.gmra.mrb[0].mxu0 %v1063
        %v1102 = vpop.f32.mrb[0].mxu0
        %v1103 = vadd.f32 0.0, %v1102
        %v1104 = vpop.f32.mrb[0].mxu0
        %v1105 = vpop.f32.mrb[0].mxu0
        %v1106 = vadd.f32 0.0, %v1105
        %v1107 = vpop.f32.mrb[0].mxu0
        %1108 = vmatprep.mubr.bf16.mxu0 0
        %1109 = vmatmul.mubr.bf16.gmra.mrb[0].mxu0 %v1066
        %v1110 = vpop.f32.mrb[0].mxu0
        %v1111 = vadd.f32 0.0, %v1110
        %v1112 = vpop.f32.mrb[0].mxu0
        %v1113 = vpop.f32.mrb[0].mxu0
        %v1114 = vadd.f32 0.0, %v1113
        %v1115 = vpop.f32.mrb[0].mxu0
        %1116 = vdwg.mxu0
        %v1117 = vsub.f32 %v969, %v1036
        %v1118 = vsub.f32 %v972, %v1039
        %v1119 = vsub.f32 %v977, %v1044
        %v1120 = vsub.f32 %v980, %v1047
        %v1121 = vsub.f32 %v1103, %v969
        %v1122 = vsub.f32 %v1106, %v972
        %v1123 = vsub.f32 %v1111, %v977
        %v1124 = vsub.f32 %v1114, %v980
        %v1125 = vsub.f32 %v1121, %v1036
        %v1126 = vsub.f32 %v1122, %v1039
        %v1127 = vsub.f32 %v1123, %v1044
        %v1128 = vsub.f32 %v1124, %v1047
        %v1129 = vmul.f32 %v1117, %v1117
        %v1130 = vmul.f32 %v1118, %v1118
        %v1131 = vmul.f32 %v1119, %v1119
        %v1132 = vmul.f32 %v1120, %v1120
        %v1133 = vmul.f32 %v1125, %v1125
        %v1134 = vmul.f32 %v1126, %v1126
        %v1135 = vmul.f32 %v1127, %v1127
        %v1136 = vmul.f32 %v1128, %v1128
        %v1137 = vadd.f32 %v1129, %v1133
        %v1138 = vadd.f32 %v1130, %v1134
        %v1139 = vadd.f32 %v1131, %v1135
        %v1140 = vadd.f32 %v1132, %v1136
        %v1141 = vsel %vm708, %v1137, 0.0
        %v1142 = vsel %vm708, %v1138, 0.0
        %v1143 = vadd.f32 %v1141, %v1142
        %v1144 = vsel %vm708, %v1139, 0.0
        %v1145 = vadd.f32 %v1143, %v1144
        %v1146 = vsel %vm708, %v1140, 0.0
        %v1147 = vadd.f32 %v1145, %v1146
        %1148 = vadd.xlane.f32.xlu0 %v1147
        %v1149 = vpop.xlane.xlu0 %1148
        %v1150 = vrot.slane %v1149, 4
        %v1151 = vadd.f32 %v1149, %v1150
        %v1152 = vrot.slane %v1151, 2
        %v1153 = vadd.f32 %v1151, %v1152
        %v1154 = vrot.slane %v1153, 1
        %v1155 = vadd.f32 %v1153, %v1154
        %s1156 = vtos %v1155
        %v1157 = vstv %s1156
        %v1158 = vpack.c.bf16 %v1138, %v1137
        %v1159 = vpack.c.bf16 %v1140, %v1139
        %v1162 = vunpack.c.l.b16 %v640
        %v1163 = vunpack.c.l.b16 %v641
        %v1164 = vpack.c.b16 %v1163, %v1162
        %v1166 = vsel %vm708, %v1164, 0
        %1168 = vmatprep.subr.bf16.mxu0 0
        %1169 = vmatpush1.bf16.msra.mxu0 %v1158
        %1170 = vmatprep.subr.bf16.mxu0 0
        %1171 = vmatpush1.bf16.msra.mxu0 %v1159
        %1172 = vmatprep.subr.bf16.mxu0 0
        %1173 = vmatpush1.bf16.msra.mxu0 0
        %1174 = vmatprep.subr.bf16.mxu0 0
        %1175 = vmatpush1.bf16.msra.mxu0 0
        %1176 = vmatprep.subr.bf16.mxu0 0
        %1177 = vmatpush1.bf16.msra.mxu0 0
        %1178 = vmatprep.subr.bf16.mxu0 0
        %1179 = vmatpush1.bf16.msra.mxu0 0
        %1180 = vmatprep.subr.bf16.mxu0 0
        %1181 = vmatpush1.bf16.msra.mxu0 0
        %1182 = vmatprep.subr.bf16.mxu0 0
        %1183 = vmatpush1.bf16.msra.mxu0 0
        %1184 = vmatprep.subr.bf16.mxu0 0
        %1185 = vmatpush1.bf16.msra.mxu0 0
        %1186 = vmatprep.subr.bf16.mxu0 0
        %1187 = vmatpush1.bf16.msra.mxu0 0
        %1188 = vmatprep.subr.bf16.mxu0 0
        %1189 = vmatpush1.bf16.msra.mxu0 0
        %1190 = vmatprep.subr.bf16.mxu0 0
        %1191 = vmatpush1.bf16.msra.mxu0 0
        %1192 = vmatprep.subr.bf16.mxu0 0
        %1193 = vmatpush1.bf16.msra.mxu0 0
        %1194 = vmatprep.subr.bf16.mxu0 0
        %1195 = vmatpush1.bf16.msra.mxu0 0
        %1196 = vmatprep.subr.bf16.mxu0 0
        %1197 = vmatpush1.bf16.msra.mxu0 0
        %1198 = vmatprep.subr.bf16.mxu0 0
        %1199 = vmatpush1.bf16.msra.mxu0 0
        %1200 = vmatprep.mubr.bf16.mxu0 0
        %1201 = vmatmul.mubr.bf16.gmra.mrb[0].mxu0 %v1166
        %v1202 = vpop.f32.mrb[0].mxu0
        %v1203 = vadd.f32 0.0, %v1202
        %v1204 = vpop.f32.mrb[0].mxu0
        %v1205 = vpop.f32.mrb[0].mxu0
        %v1206 = vadd.f32 0.0, %v1205
        %v1207 = vpop.f32.mrb[0].mxu0
        %1208 = vdwg.mxu0
        %v1209 = vpack.c.bf16 %v1206, %v1203
        %v1214 = vunpack.c.l.b16 %v642
        %v1215 = vunpack.c.l.b16 %v643
        %v1216 = vunpack.c.l.b16 %v644
        %v1217 = vunpack.c.l.b16 %v645
        %v1218 = vpack.c.b16 %v1215, %v1214
        %v1219 = vpack.c.b16 %v1217, %v1216
        %v1223 = vsel %vm708, %v1209, 0
        %1225 = vmatprep.subr.bf16.mxu0 0
        %1226 = vmatpush1.bf16.msra.mxu0 %v1218
        %1227 = vmatprep.subr.bf16.mxu0 0
        %1228 = vmatpush1.bf16.msra.mxu0 %v1219
        %1229 = vmatprep.subr.bf16.mxu0 0
        %1230 = vmatpush1.bf16.msra.mxu0 0
        %1231 = vmatprep.subr.bf16.mxu0 0
        %1232 = vmatpush1.bf16.msra.mxu0 0
        %1233 = vmatprep.subr.bf16.mxu0 0
        %1234 = vmatpush1.bf16.msra.mxu0 0
        %1235 = vmatprep.subr.bf16.mxu0 0
        %1236 = vmatpush1.bf16.msra.mxu0 0
        %1237 = vmatprep.subr.bf16.mxu0 0
        %1238 = vmatpush1.bf16.msra.mxu0 0
        %1239 = vmatprep.subr.bf16.mxu0 0
        %1240 = vmatpush1.bf16.msra.mxu0 0
        %1241 = vmatprep.subr.bf16.mxu0 0
        %1242 = vmatpush1.bf16.msra.mxu0 0
        %1243 = vmatprep.subr.bf16.mxu0 0
        %1244 = vmatpush1.bf16.msra.mxu0 0
        %1245 = vmatprep.subr.bf16.mxu0 0
        %1246 = vmatpush1.bf16.msra.mxu0 0
        %1247 = vmatprep.subr.bf16.mxu0 0
        %1248 = vmatpush1.bf16.msra.mxu0 0
        %1249 = vmatprep.subr.bf16.mxu0 0
        %1250 = vmatpush1.bf16.msra.mxu0 0
        %1251 = vmatprep.subr.bf16.mxu0 0
        %1252 = vmatpush1.bf16.msra.mxu0 0
        %1253 = vmatprep.subr.bf16.mxu0 0
        %1254 = vmatpush1.bf16.msra.mxu0 0
        %1255 = vmatprep.subr.bf16.mxu0 0
        %1256 = vmatpush1.bf16.msra.mxu0 0
        %1257 = vmatprep.mubr.bf16.mxu0 0
        %1258 = vmatmul.mubr.bf16.gmra.mrb[0].mxu0 %v1223
        %v1259 = vpop.f32.mrb[0].mxu0
        %v1260 = vadd.f32 0.0, %v1259
        %v1261 = vpop.f32.mrb[0].mxu0
        %v1262 = vpop.f32.mrb[0].mxu0
        %v1263 = vadd.f32 0.0, %v1262
        %v1264 = vpop.f32.mrb[0].mxu0
        %1265 = vdwg.mxu0
        %s1266 = smul.u32 %s32, 128
        %s1267 = sld [smem:[#allocation10 + %s1266]]
        %v1268 = vstv %s1267
        %v1269 = vrcp.pop %v1157
        %v1270 = vmul.f32 %v1268, %v1269
        %v1271 = vmul.f32 %v1260, %v1270
        %v1272 = vmul.f32 %v1263, %v1270
        %1273 = vst [vmem:[%s606] sm:$0xff] %v1271
        %1274 = vst [vmem:[%s606 + $0x8] sm:$0xff] %v1272
        %vm1275 = vcmp.lt.s32.totalorder %v647, 16
        %v1276 = vsel %vm1275, %v1271, inf
        %v1277 = vsel %vm1275, %v1272, inf
        %v1278 = vmin.f32 %v1276, %v1277
        %1279 = vmin.xlane.f32.xlu0 %v1278
        %v1280 = vpop.xlane.xlu0 %1279
        %v1281 = vrot.slane %v1280, 4
        %v1282 = vmin.f32 %v1280, %v1281
        %v1283 = vrot.slane %v1282, 2
        %v1284 = vmin.f32 %v1282, %v1283
        %v1285 = vrot.slane %v1284, 1
        %v1286 = vmin.f32 %v1284, %v1285
        %s1287 = vtos %v1286
        %v1288 = vstv %s1287
        %v1289 = vmax.f32 %v1271, %v1272
        %1290 = vmax.xlane.f32.xlu0 %v1289
        %v1291 = vpop.xlane.xlu0 %1290
        %v1292 = vrot.slane %v1291, 4
        %v1293 = vmax.f32 %v1291, %v1292
        %v1294 = vrot.slane %v1293, 2
        %v1295 = vmax.f32 %v1293, %v1294
        %v1296 = vrot.slane %v1295, 1
        %v1297 = vmax.f32 %v1295, %v1296
        %s1298 = vtos %v1297
        %v1299 = vstv %s1298
        %s1300 = scalar_lea.vmem %s525, 16 [#allocation8]
        %v1301 = vld [vmem:[%s1300] sm:$0xf]
        %v1302 = vld [vmem:[%s1300 + $0x4] sm:$0xf]
        %v1303 = vld [vmem:[%s1300 + $0x8] sm:$0xf]
        %v1304 = vld [vmem:[%s1300 + $0xc] sm:$0xf]
        %v1305 = vunpack.c.l.bf16 %v1301
        %v1306 = vunpack.c.l.bf16 %v1302
        %v1307 = vunpack.c.l.bf16 %v1303
        %v1308 = vunpack.c.l.bf16 %v1304
        %s1309 = scalar_lea.vmem %s534, 16 [#allocation9]
        %v1310 = vld [vmem:[%s1309] sm:$0xf]
        %v1311 = vld [vmem:[%s1309 + $0x4] sm:$0xf]
        %v1312 = vld [vmem:[%s1309 + $0x8] sm:$0xf]
        %v1313 = vld [vmem:[%s1309 + $0xc] sm:$0xf]
        %v1314 = vunpack.c.l.bf16 %v1310
        %v1315 = vunpack.c.l.bf16 %v1311
        %v1316 = vunpack.c.l.bf16 %v1312
        %v1317 = vunpack.c.l.bf16 %v1313
        %v1318 = vmul.f32 %v608, %v1305
        %v1319 = vmul.f32 %v609, %v1306
        %v1320 = vmul.f32 %v610, %v1307
        %v1321 = vmul.f32 %v611, %v1308
        %v1322 = vmul.f32 %v612, %v1314
        %v1323 = vmul.f32 %v613, %v1315
        %v1324 = vmul.f32 %v614, %v1316
        %v1325 = vmul.f32 %v615, %v1317
        %v1326 = vsub.f32 %v1318, %v1322
        %v1327 = vsub.f32 %v1319, %v1323
        %v1328 = vsub.f32 %v1320, %v1324
        %v1329 = vsub.f32 %v1321, %v1325
        %v1330 = vmul.f32 %v608, %v1314
        %v1331 = vmul.f32 %v609, %v1315
        %v1332 = vmul.f32 %v610, %v1316
        %v1333 = vmul.f32 %v611, %v1317
        %v1334 = vmul.f32 %v612, %v1305
        %v1335 = vmul.f32 %v613, %v1306
        %v1336 = vmul.f32 %v614, %v1307
        %v1337 = vmul.f32 %v615, %v1308
        %v1338 = vadd.f32 %v1330, %v1334
        %v1339 = vadd.f32 %v1331, %v1335
        %v1340 = vadd.f32 %v1332, %v1336
        %v1341 = vadd.f32 %v1333, %v1337
        %v1342 = vpack.c.bf16 %v1327, %v1326
        %v1343 = vpack.c.bf16 %v1329, %v1328
        %v1344 = vpack.c.bf16 %v1339, %v1338
        %v1345 = vpack.c.bf16 %v1341, %v1340
        %v1346 = vadd.f32 %v1326, %v1338
        %v1347 = vadd.f32 %v1327, %v1339
        %v1348 = vadd.f32 %v1328, %v1340
        %v1349 = vadd.f32 %v1329, %v1341
        %v1350 = vpack.c.bf16 %v1347, %v1346
        %v1351 = vpack.c.bf16 %v1349, %v1348
        %1352 = vmatprep.subr.bf16.mxu0 0
        %1353 = vmatpush1.bf16.msra.mxu0 %v1342
        %1354 = vmatprep.subr.bf16.mxu0 0
        %1355 = vmatpush1.bf16.msra.mxu0 %v1343
        %1356 = vmatprep.subr.bf16.mxu0 0
        %1357 = vmatpush1.bf16.msra.mxu0 0
        %1358 = vmatprep.subr.bf16.mxu0 0
        %1359 = vmatpush1.bf16.msra.mxu0 0
        %1360 = vmatprep.subr.bf16.mxu0 0
        %1361 = vmatpush1.bf16.msra.mxu0 0
        %1362 = vmatprep.subr.bf16.mxu0 0
        %1363 = vmatpush1.bf16.msra.mxu0 0
        %1364 = vmatprep.subr.bf16.mxu0 0
        %1365 = vmatpush1.bf16.msra.mxu0 0
        %1366 = vmatprep.subr.bf16.mxu0 0
        %1367 = vmatpush1.bf16.msra.mxu0 0
        %1368 = vmatprep.subr.bf16.mxu0 0
        %1369 = vmatpush1.bf16.msra.mxu0 0
        %1370 = vmatprep.subr.bf16.mxu0 0
        %1371 = vmatpush1.bf16.msra.mxu0 0
        %1372 = vmatprep.subr.bf16.mxu0 0
        %1373 = vmatpush1.bf16.msra.mxu0 0
        %1374 = vmatprep.subr.bf16.mxu0 0
        %1375 = vmatpush1.bf16.msra.mxu0 0
        %1376 = vmatprep.subr.bf16.mxu0 0
        %1377 = vmatpush1.bf16.msra.mxu0 0
        %1378 = vmatprep.subr.bf16.mxu0 0
        %1379 = vmatpush1.bf16.msra.mxu0 0
        %1380 = vmatprep.subr.bf16.mxu0 0
        %1381 = vmatpush1.bf16.msra.mxu0 0
        %1382 = vmatprep.subr.bf16.mxu0 0
        %1383 = vmatpush1.bf16.msra.mxu0 0
        %1384 = vmatprep.mubr.bf16.mxu0 0
        %1385 = vmatmul.mubr.bf16.gmra.mrb[0].mxu0 %v710
        %v1386 = vpop.f32.mrb[0].mxu0
        %v1387 = vadd.f32 0.0, %v1386
        %v1388 = vpop.f32.mrb[0].mxu0
        %v1389 = vpop.f32.mrb[0].mxu0
        %v1390 = vadd.f32 0.0, %v1389
        %v1391 = vpop.f32.mrb[0].mxu0
        %1392 = vmatprep.mubr.bf16.mxu0 0
        %1393 = vmatmul.mubr.bf16.gmra.mrb[0].mxu0 %v713
        %v1394 = vpop.f32.mrb[0].mxu0
        %v1395 = vadd.f32 0.0, %v1394
        %v1396 = vpop.f32.mrb[0].mxu0
        %v1397 = vpop.f32.mrb[0].mxu0
        %v1398 = vadd.f32 0.0, %v1397
        %v1399 = vpop.f32.mrb[0].mxu0
        %1400 = vdwg.mxu0
        %1401 = vmatprep.subr.bf16.mxu0 0
        %1402 = vmatpush1.bf16.msra.mxu0 %v1344
        %1403 = vmatprep.subr.bf16.mxu0 0
        %1404 = vmatpush1.bf16.msra.mxu0 %v1345
        %1405 = vmatprep.subr.bf16.mxu0 0
        %1406 = vmatpush1.bf16.msra.mxu0 0
        %1407 = vmatprep.subr.bf16.mxu0 0
        %1408 = vmatpush1.bf16.msra.mxu0 0
        %1409 = vmatprep.subr.bf16.mxu0 0
        %1410 = vmatpush1.bf16.msra.mxu0 0
        %1411 = vmatprep.subr.bf16.mxu0 0
        %1412 = vmatpush1.bf16.msra.mxu0 0
        %1413 = vmatprep.subr.bf16.mxu0 0
        %1414 = vmatpush1.bf16.msra.mxu0 0
        %1415 = vmatprep.subr.bf16.mxu0 0
        %1416 = vmatpush1.bf16.msra.mxu0 0
        %1417 = vmatprep.subr.bf16.mxu0 0
        %1418 = vmatpush1.bf16.msra.mxu0 0
        %1419 = vmatprep.subr.bf16.mxu0 0
        %1420 = vmatpush1.bf16.msra.mxu0 0
        %1421 = vmatprep.subr.bf16.mxu0 0
        %1422 = vmatpush1.bf16.msra.mxu0 0
        %1423 = vmatprep.subr.bf16.mxu0 0
        %1424 = vmatpush1.bf16.msra.mxu0 0
        %1425 = vmatprep.subr.bf16.mxu0 0
        %1426 = vmatpush1.bf16.msra.mxu0 0
        %1427 = vmatprep.subr.bf16.mxu0 0
        %1428 = vmatpush1.bf16.msra.mxu0 0
        %1429 = vmatprep.subr.bf16.mxu0 0
        %1430 = vmatpush1.bf16.msra.mxu0 0
        %1431 = vmatprep.subr.bf16.mxu0 0
        %1432 = vmatpush1.bf16.msra.mxu0 0
        %1433 = vmatprep.mubr.bf16.mxu0 0
        %1434 = vmatmul.mubr.bf16.gmra.mrb[0].mxu0 %v775
        %v1435 = vpop.f32.mrb[0].mxu0
        %v1436 = vadd.f32 0.0, %v1435
        %v1437 = vpop.f32.mrb[0].mxu0
        %v1438 = vpop.f32.mrb[0].mxu0
        %v1439 = vadd.f32 0.0, %v1438
        %v1440 = vpop.f32.mrb[0].mxu0
        %1441 = vmatprep.mubr.bf16.mxu0 0
        %1442 = vmatmul.mubr.bf16.gmra.mrb[0].mxu0 %v778
        %v1443 = vpop.f32.mrb[0].mxu0
        %v1444 = vadd.f32 0.0, %v1443
        %v1445 = vpop.f32.mrb[0].mxu0
        %v1446 = vpop.f32.mrb[0].mxu0
        %v1447 = vadd.f32 0.0, %v1446
        %v1448 = vpop.f32.mrb[0].mxu0
        %1449 = vdwg.mxu0
        %1450 = vmatprep.subr.bf16.mxu0 0
        %1451 = vmatpush1.bf16.msra.mxu0 %v1350
        %1452 = vmatprep.subr.bf16.mxu0 0
        %1453 = vmatpush1.bf16.msra.mxu0 %v1351
        %1454 = vmatprep.subr.bf16.mxu0 0
        %1455 = vmatpush1.bf16.msra.mxu0 0
        %1456 = vmatprep.subr.bf16.mxu0 0
        %1457 = vmatpush1.bf16.msra.mxu0 0
        %1458 = vmatprep.subr.bf16.mxu0 0
        %1459 = vmatpush1.bf16.msra.mxu0 0
        %1460 = vmatprep.subr.bf16.mxu0 0
        %1461 = vmatpush1.bf16.msra.mxu0 0
        %1462 = vmatprep.subr.bf16.mxu0 0
        %1463 = vmatpush1.bf16.msra.mxu0 0
        %1464 = vmatprep.subr.bf16.mxu0 0
        %1465 = vmatpush1.bf16.msra.mxu0 0
        %1466 = vmatprep.subr.bf16.mxu0 0
        %1467 = vmatpush1.bf16.msra.mxu0 0
        %1468 = vmatprep.subr.bf16.mxu0 0
        %1469 = vmatpush1.bf16.msra.mxu0 0
        %1470 = vmatprep.subr.bf16.mxu0 0
        %1471 = vmatpush1.bf16.msra.mxu0 0
        %1472 = vmatprep.subr.bf16.mxu0 0
        %1473 = vmatpush1.bf16.msra.mxu0 0
        %1474 = vmatprep.subr.bf16.mxu0 0
        %1475 = vmatpush1.bf16.msra.mxu0 0
        %1476 = vmatprep.subr.bf16.mxu0 0
        %1477 = vmatpush1.bf16.msra.mxu0 0
        %1478 = vmatprep.subr.bf16.mxu0 0
        %1479 = vmatpush1.bf16.msra.mxu0 0
        %1480 = vmatprep.subr.bf16.mxu0 0
        %1481 = vmatpush1.bf16.msra.mxu0 0
        %1482 = vmatprep.mubr.bf16.mxu0 0
        %1483 = vmatmul.mubr.bf16.gmra.mrb[0].mxu0 %v840
        %v1484 = vpop.f32.mrb[0].mxu0
        %v1485 = vadd.f32 0.0, %v1484
        %v1486 = vpop.f32.mrb[0].mxu0
        %v1487 = vpop.f32.mrb[0].mxu0
        %v1488 = vadd.f32 0.0, %v1487
        %v1489 = vpop.f32.mrb[0].mxu0
        %1490 = vmatprep.mubr.bf16.mxu0 0
        %1491 = vmatmul.mubr.bf16.gmra.mrb[0].mxu0 %v843
        %v1492 = vpop.f32.mrb[0].mxu0
        %v1493 = vadd.f32 0.0, %v1492
        %v1494 = vpop.f32.mrb[0].mxu0
        %v1495 = vpop.f32.mrb[0].mxu0
        %v1496 = vadd.f32 0.0, %v1495
        %v1497 = vpop.f32.mrb[0].mxu0
        %1498 = vdwg.mxu0
        %v1499 = vsub.f32 %v1387, %v1436
        %v1500 = vsub.f32 %v1390, %v1439
        %v1501 = vsub.f32 %v1395, %v1444
        %v1502 = vsub.f32 %v1398, %v1447
        %v1503 = vsub.f32 %v1485, %v1387
        %v1504 = vsub.f32 %v1488, %v1390
        %v1505 = vsub.f32 %v1493, %v1395
        %v1506 = vsub.f32 %v1496, %v1398
        %v1507 = vsub.f32 %v1503, %v1436
        %v1508 = vsub.f32 %v1504, %v1439
        %v1509 = vsub.f32 %v1505, %v1444
        %v1510 = vsub.f32 %v1506, %v1447
        %v1511 = vpack.c.bf16 %v1500, %v1499
        %v1512 = vpack.c.bf16 %v1502, %v1501
        %v1513 = vpack.c.bf16 %v1508, %v1507
        %v1514 = vpack.c.bf16 %v1510, %v1509
        %v1515 = vadd.f32 %v1499, %v1507
        %v1516 = vadd.f32 %v1500, %v1508
        %v1517 = vadd.f32 %v1501, %v1509
        %v1518 = vadd.f32 %v1502, %v1510
        %v1519 = vpack.c.bf16 %v1516, %v1515
        %v1520 = vpack.c.bf16 %v1518, %v1517
        %v1522 = vsel %vm708, %v1511, 0
        %v1525 = vsel %vm708, %v1512, 0
        %1527 = vmatprep.subr.bf16.mxu0 0
        %1528 = vmatpush1.bf16.msra.mxu0 %v924
        %1529 = vmatprep.subr.bf16.mxu0 0
        %1530 = vmatpush1.bf16.msra.mxu0 %v925
        %1531 = vmatprep.subr.bf16.mxu0 0
        %1532 = vmatpush1.bf16.msra.mxu0 0
        %1533 = vmatprep.subr.bf16.mxu0 0
        %1534 = vmatpush1.bf16.msra.mxu0 0
        %1535 = vmatprep.subr.bf16.mxu0 0
        %1536 = vmatpush1.bf16.msra.mxu0 0
        %1537 = vmatprep.subr.bf16.mxu0 0
        %1538 = vmatpush1.bf16.msra.mxu0 0
        %1539 = vmatprep.subr.bf16.mxu0 0
        %1540 = vmatpush1.bf16.msra.mxu0 0
        %1541 = vmatprep.subr.bf16.mxu0 0
        %1542 = vmatpush1.bf16.msra.mxu0 0
        %1543 = vmatprep.subr.bf16.mxu0 0
        %1544 = vmatpush1.bf16.msra.mxu0 0
        %1545 = vmatprep.subr.bf16.mxu0 0
        %1546 = vmatpush1.bf16.msra.mxu0 0
        %1547 = vmatprep.subr.bf16.mxu0 0
        %1548 = vmatpush1.bf16.msra.mxu0 0
        %1549 = vmatprep.subr.bf16.mxu0 0
        %1550 = vmatpush1.bf16.msra.mxu0 0
        %1551 = vmatprep.subr.bf16.mxu0 0
        %1552 = vmatpush1.bf16.msra.mxu0 0
        %1553 = vmatprep.subr.bf16.mxu0 0
        %1554 = vmatpush1.bf16.msra.mxu0 0
        %1555 = vmatprep.subr.bf16.mxu0 0
        %1556 = vmatpush1.bf16.msra.mxu0 0
        %1557 = vmatprep.subr.bf16.mxu0 0
        %1558 = vmatpush1.bf16.msra.mxu0 0
        %1559 = vmatprep.mubr.bf16.mxu0 0
        %1560 = vmatmul.mubr.bf16.gmra.mrb[0].mxu0 %v1522
        %v1561 = vpop.f32.mrb[0].mxu0
        %v1562 = vadd.f32 0.0, %v1561
        %v1563 = vpop.f32.mrb[0].mxu0
        %v1564 = vpop.f32.mrb[0].mxu0
        %v1565 = vadd.f32 0.0, %v1564
        %v1566 = vpop.f32.mrb[0].mxu0
        %1567 = vmatprep.mubr.bf16.mxu0 0
        %1568 = vmatmul.mubr.bf16.gmra.mrb[0].mxu0 %v1525
        %v1569 = vpop.f32.mrb[0].mxu0
        %v1570 = vadd.f32 0.0, %v1569
        %v1571 = vpop.f32.mrb[0].mxu0
        %v1572 = vpop.f32.mrb[0].mxu0
        %v1573 = vadd.f32 0.0, %v1572
        %v1574 = vpop.f32.mrb[0].mxu0
        %1575 = vdwg.mxu0
        %v1577 = vsel %vm708, %v1513, 0
        %v1580 = vsel %vm708, %v1514, 0
        %1582 = vmatprep.subr.bf16.mxu0 0
        %1583 = vmatpush1.bf16.msra.mxu0 %v991
        %1584 = vmatprep.subr.bf16.mxu0 0
        %1585 = vmatpush1.bf16.msra.mxu0 %v992
        %1586 = vmatprep.subr.bf16.mxu0 0
        %1587 = vmatpush1.bf16.msra.mxu0 0
        %1588 = vmatprep.subr.bf16.mxu0 0
        %1589 = vmatpush1.bf16.msra.mxu0 0
        %1590 = vmatprep.subr.bf16.mxu0 0
        %1591 = vmatpush1.bf16.msra.mxu0 0
        %1592 = vmatprep.subr.bf16.mxu0 0
        %1593 = vmatpush1.bf16.msra.mxu0 0
        %1594 = vmatprep.subr.bf16.mxu0 0
        %1595 = vmatpush1.bf16.msra.mxu0 0
        %1596 = vmatprep.subr.bf16.mxu0 0
        %1597 = vmatpush1.bf16.msra.mxu0 0
        %1598 = vmatprep.subr.bf16.mxu0 0
        %1599 = vmatpush1.bf16.msra.mxu0 0
        %1600 = vmatprep.subr.bf16.mxu0 0
        %1601 = vmatpush1.bf16.msra.mxu0 0
        %1602 = vmatprep.subr.bf16.mxu0 0
        %1603 = vmatpush1.bf16.msra.mxu0 0
        %1604 = vmatprep.subr.bf16.mxu0 0
        %1605 = vmatpush1.bf16.msra.mxu0 0
        %1606 = vmatprep.subr.bf16.mxu0 0
        %1607 = vmatpush1.bf16.msra.mxu0 0
        %1608 = vmatprep.subr.bf16.mxu0 0
        %1609 = vmatpush1.bf16.msra.mxu0 0
        %1610 = vmatprep.subr.bf16.mxu0 0
        %1611 = vmatpush1.bf16.msra.mxu0 0
        %1612 = vmatprep.subr.bf16.mxu0 0
        %1613 = vmatpush1.bf16.msra.mxu0 0
        %1614 = vmatprep.mubr.bf16.mxu0 0
        %1615 = vmatmul.mubr.bf16.gmra.mrb[0].mxu0 %v1577
        %v1616 = vpop.f32.mrb[0].mxu0
        %v1617 = vadd.f32 0.0, %v1616
        %v1618 = vpop.f32.mrb[0].mxu0
        %v1619 = vpop.f32.mrb[0].mxu0
        %v1620 = vadd.f32 0.0, %v1619
        %v1621 = vpop.f32.mrb[0].mxu0
        %1622 = vmatprep.mubr.bf16.mxu0 0
        %1623 = vmatmul.mubr.bf16.gmra.mrb[0].mxu0 %v1580
        %v1624 = vpop.f32.mrb[0].mxu0
        %v1625 = vadd.f32 0.0, %v1624
        %v1626 = vpop.f32.mrb[0].mxu0
        %v1627 = vpop.f32.mrb[0].mxu0
        %v1628 = vadd.f32 0.0, %v1627
        %v1629 = vpop.f32.mrb[0].mxu0
        %1630 = vdwg.mxu0
        %v1632 = vsel %vm708, %v1519, 0
        %v1635 = vsel %vm708, %v1520, 0
        %1637 = vmatprep.subr.bf16.mxu0 0
        %1638 = vmatpush1.bf16.msra.mxu0 %v1058
        %1639 = vmatprep.subr.bf16.mxu0 0
        %1640 = vmatpush1.bf16.msra.mxu0 %v1059
        %1641 = vmatprep.subr.bf16.mxu0 0
        %1642 = vmatpush1.bf16.msra.mxu0 0
        %1643 = vmatprep.subr.bf16.mxu0 0
        %1644 = vmatpush1.bf16.msra.mxu0 0
        %1645 = vmatprep.subr.bf16.mxu0 0
        %1646 = vmatpush1.bf16.msra.mxu0 0
        %1647 = vmatprep.subr.bf16.mxu0 0
        %1648 = vmatpush1.bf16.msra.mxu0 0
        %1649 = vmatprep.subr.bf16.mxu0 0
        %1650 = vmatpush1.bf16.msra.mxu0 0
        %1651 = vmatprep.subr.bf16.mxu0 0
        %1652 = vmatpush1.bf16.msra.mxu0 0
        %1653 = vmatprep.subr.bf16.mxu0 0
        %1654 = vmatpush1.bf16.msra.mxu0 0
        %1655 = vmatprep.subr.bf16.mxu0 0
        %1656 = vmatpush1.bf16.msra.mxu0 0
        %1657 = vmatprep.subr.bf16.mxu0 0
        %1658 = vmatpush1.bf16.msra.mxu0 0
        %1659 = vmatprep.subr.bf16.mxu0 0
        %1660 = vmatpush1.bf16.msra.mxu0 0
        %1661 = vmatprep.subr.bf16.mxu0 0
        %1662 = vmatpush1.bf16.msra.mxu0 0
        %1663 = vmatprep.subr.bf16.mxu0 0
        %1664 = vmatpush1.bf16.msra.mxu0 0
        %1665 = vmatprep.subr.bf16.mxu0 0
        %1666 = vmatpush1.bf16.msra.mxu0 0
        %1667 = vmatprep.subr.bf16.mxu0 0
        %1668 = vmatpush1.bf16.msra.mxu0 0
        %1669 = vmatprep.mubr.bf16.mxu0 0
        %1670 = vmatmul.mubr.bf16.gmra.mrb[0].mxu0 %v1632
        %v1671 = vpop.f32.mrb[0].mxu0
        %v1672 = vadd.f32 0.0, %v1671
        %v1673 = vpop.f32.mrb[0].mxu0
        %v1674 = vpop.f32.mrb[0].mxu0
        %v1675 = vadd.f32 0.0, %v1674
        %v1676 = vpop.f32.mrb[0].mxu0
        %1677 = vmatprep.mubr.bf16.mxu0 0
        %1678 = vmatmul.mubr.bf16.gmra.mrb[0].mxu0 %v1635
        %v1679 = vpop.f32.mrb[0].mxu0
        %v1680 = vadd.f32 0.0, %v1679
        %v1681 = vpop.f32.mrb[0].mxu0
        %v1682 = vpop.f32.mrb[0].mxu0
        %v1683 = vadd.f32 0.0, %v1682
        %v1684 = vpop.f32.mrb[0].mxu0
        %1685 = vdwg.mxu0
        %v1686 = vsub.f32 %v1562, %v1617
        %v1687 = vsub.f32 %v1565, %v1620
        %v1688 = vsub.f32 %v1570, %v1625
        %v1689 = vsub.f32 %v1573, %v1628
        %v1690 = vsub.f32 %v1672, %v1562
        %v1691 = vsub.f32 %v1675, %v1565
        %v1692 = vsub.f32 %v1680, %v1570
        %v1693 = vsub.f32 %v1683, %v1573
        %v1694 = vsub.f32 %v1690, %v1617
        %v1695 = vsub.f32 %v1691, %v1620
        %v1696 = vsub.f32 %v1692, %v1625
        %v1697 = vsub.f32 %v1693, %v1628
        %v1698 = vmul.f32 %v1686, %v1686
        %v1699 = vmul.f32 %v1687, %v1687
        %v1700 = vmul.f32 %v1688, %v1688
        %v1701 = vmul.f32 %v1689, %v1689
        %v1702 = vmul.f32 %v1694, %v1694
        %v1703 = vmul.f32 %v1695, %v1695
        %v1704 = vmul.f32 %v1696, %v1696
        %v1705 = vmul.f32 %v1697, %v1697
        %v1706 = vadd.f32 %v1698, %v1702
        %v1707 = vadd.f32 %v1699, %v1703
        %v1708 = vadd.f32 %v1700, %v1704
        %v1709 = vadd.f32 %v1701, %v1705
        %v1710 = vsel %vm708, %v1706, 0.0
        %v1711 = vsel %vm708, %v1707, 0.0
        %v1712 = vadd.f32 %v1710, %v1711
        %v1713 = vsel %vm708, %v1708, 0.0
        %v1714 = vadd.f32 %v1712, %v1713
        %v1715 = vsel %vm708, %v1709, 0.0
        %v1716 = vadd.f32 %v1714, %v1715
        %1717 = vadd.xlane.f32.xlu0 %v1716
        %v1718 = vpop.xlane.xlu0 %1717
        %v1719 = vrot.slane %v1718, 4
        %v1720 = vadd.f32 %v1718, %v1719
        %v1721 = vrot.slane %v1720, 2
        %v1722 = vadd.f32 %v1720, %v1721
        %v1723 = vrot.slane %v1722, 1
        %v1724 = vadd.f32 %v1722, %v1723
        %s1725 = vtos %v1724
        %v1726 = vstv %s1725
        %v1727 = vpack.c.bf16 %v1707, %v1706
        %v1728 = vpack.c.bf16 %v1709, %v1708
        %1729 = vmatprep.subr.bf16.mxu0 0
        %1730 = vmatpush1.bf16.msra.mxu0 %v1727
        %1731 = vmatprep.subr.bf16.mxu0 0
        %1732 = vmatpush1.bf16.msra.mxu0 %v1728
        %1733 = vmatprep.subr.bf16.mxu0 0
        %1734 = vmatpush1.bf16.msra.mxu0 0
        %1735 = vmatprep.subr.bf16.mxu0 0
        %1736 = vmatpush1.bf16.msra.mxu0 0
        %1737 = vmatprep.subr.bf16.mxu0 0
        %1738 = vmatpush1.bf16.msra.mxu0 0
        %1739 = vmatprep.subr.bf16.mxu0 0
        %1740 = vmatpush1.bf16.msra.mxu0 0
        %1741 = vmatprep.subr.bf16.mxu0 0
        %1742 = vmatpush1.bf16.msra.mxu0 0
        %1743 = vmatprep.subr.bf16.mxu0 0
        %1744 = vmatpush1.bf16.msra.mxu0 0
        %1745 = vmatprep.subr.bf16.mxu0 0
        %1746 = vmatpush1.bf16.msra.mxu0 0
        %1747 = vmatprep.subr.bf16.mxu0 0
        %1748 = vmatpush1.bf16.msra.mxu0 0
        %1749 = vmatprep.subr.bf16.mxu0 0
        %1750 = vmatpush1.bf16.msra.mxu0 0
        %1751 = vmatprep.subr.bf16.mxu0 0
        %1752 = vmatpush1.bf16.msra.mxu0 0
        %1753 = vmatprep.subr.bf16.mxu0 0
        %1754 = vmatpush1.bf16.msra.mxu0 0
        %1755 = vmatprep.subr.bf16.mxu0 0
        %1756 = vmatpush1.bf16.msra.mxu0 0
        %1757 = vmatprep.subr.bf16.mxu0 0
        %1758 = vmatpush1.bf16.msra.mxu0 0
        %1759 = vmatprep.subr.bf16.mxu0 0
        %1760 = vmatpush1.bf16.msra.mxu0 0
        %1761 = vmatprep.mubr.bf16.mxu0 0
        %1762 = vmatmul.mubr.bf16.gmra.mrb[0].mxu0 %v1166
        %v1763 = vpop.f32.mrb[0].mxu0
        %v1764 = vadd.f32 0.0, %v1763
        %v1765 = vpop.f32.mrb[0].mxu0
        %v1766 = vpop.f32.mrb[0].mxu0
        %v1767 = vadd.f32 0.0, %v1766
        %v1768 = vpop.f32.mrb[0].mxu0
        %1769 = vdwg.mxu0
        %v1770 = vpack.c.bf16 %v1767, %v1764
        %v1772 = vsel %vm708, %v1770, 0
        %1774 = vmatprep.subr.bf16.mxu0 0
        %1775 = vmatpush1.bf16.msra.mxu0 %v1218
        %1776 = vmatprep.subr.bf16.mxu0 0
        %1777 = vmatpush1.bf16.msra.mxu0 %v1219
        %1778 = vmatprep.subr.bf16.mxu0 0
        %1779 = vmatpush1.bf16.msra.mxu0 0
        %1780 = vmatprep.subr.bf16.mxu0 0
        %1781 = vmatpush1.bf16.msra.mxu0 0
        %1782 = vmatprep.subr.bf16.mxu0 0
        %1783 = vmatpush1.bf16.msra.mxu0 0
        %1784 = vmatprep.subr.bf16.mxu0 0
        %1785 = vmatpush1.bf16.msra.mxu0 0
        %1786 = vmatprep.subr.bf16.mxu0 0
        %1787 = vmatpush1.bf16.msra.mxu0 0
        %1788 = vmatprep.subr.bf16.mxu0 0
        %1789 = vmatpush1.bf16.msra.mxu0 0
        %1790 = vmatprep.subr.bf16.mxu0 0
        %1791 = vmatpush1.bf16.msra.mxu0 0
        %1792 = vmatprep.subr.bf16.mxu0 0
        %1793 = vmatpush1.bf16.msra.mxu0 0
        %1794 = vmatprep.subr.bf16.mxu0 0
        %1795 = vmatpush1.bf16.msra.mxu0 0
        %1796 = vmatprep.subr.bf16.mxu0 0
        %1797 = vmatpush1.bf16.msra.mxu0 0
        %1798 = vmatprep.subr.bf16.mxu0 0
        %1799 = vmatpush1.bf16.msra.mxu0 0
        %1800 = vmatprep.subr.bf16.mxu0 0
        %1801 = vmatpush1.bf16.msra.mxu0 0
        %1802 = vmatprep.subr.bf16.mxu0 0
        %1803 = vmatpush1.bf16.msra.mxu0 0
        %1804 = vmatprep.subr.bf16.mxu0 0
        %1805 = vmatpush1.bf16.msra.mxu0 0
        %1806 = vmatprep.mubr.bf16.mxu0 0
        %1807 = vmatmul.mubr.bf16.gmra.mrb[0].mxu0 %v1772
        %v1808 = vpop.f32.mrb[0].mxu0
        %v1809 = vadd.f32 0.0, %v1808
        %v1810 = vpop.f32.mrb[0].mxu0
        %v1811 = vpop.f32.mrb[0].mxu0
        %v1812 = vadd.f32 0.0, %v1811
        %v1813 = vpop.f32.mrb[0].mxu0
        %1814 = vdwg.mxu0
        %s1815 = sadd.s32 %s1266, 1
        %s1816 = sld [smem:[#allocation10 + %s1815]]
        %v1817 = vstv %s1816
        %v1818 = vrcp.pop %v1726
        %v1819 = vmul.f32 %v1817, %v1818
        %v1820 = vmul.f32 %v1809, %v1819
        %v1821 = vmul.f32 %v1812, %v1819
        %s1822 = scalar_lea.vmem %s606, 16 [#allocation18]
        %1823 = vst [vmem:[%s1822] sm:$0xff] %v1820
        %1824 = vst [vmem:[%s1822 + $0x8] sm:$0xff] %v1821
        %v1825 = vsel %vm1275, %v1820, inf
        %v1826 = vsel %vm1275, %v1821, inf
        %v1827 = vmin.f32 %v1825, %v1826
        %1828 = vmin.xlane.f32.xlu0 %v1827
        %v1829 = vpop.xlane.xlu0 %1828
        %v1830 = vrot.slane %v1829, 4
        %v1831 = vmin.f32 %v1829, %v1830
        %v1832 = vrot.slane %v1831, 2
        %v1833 = vmin.f32 %v1831, %v1832
        %v1834 = vrot.slane %v1833, 1
        %v1835 = vmin.f32 %v1833, %v1834
        %s1836 = vtos %v1835
        %v1837 = vstv %s1836
        %v1838 = vmax.f32 %v1820, %v1821
        %1839 = vmax.xlane.f32.xlu0 %v1838
        %v1840 = vpop.xlane.xlu0 %1839
        %v1841 = vrot.slane %v1840, 4
        %v1842 = vmax.f32 %v1840, %v1841
        %v1843 = vrot.slane %v1842, 2
        %v1844 = vmax.f32 %v1842, %v1843
        %v1845 = vrot.slane %v1844, 1
        %v1846 = vmax.f32 %v1844, %v1845
        %s1847 = vtos %v1846
        %v1848 = vstv %s1847
        %v1849 = vmin.f32 %v1288, %v1837
        %v1850 = vmax.f32 %v1299, %v1848
        %s1851 = scalar_lea.vmem %s525, 32 [#allocation8]
        %v1852 = vld [vmem:[%s1851] sm:$0xf]
        %v1853 = vld [vmem:[%s1851 + $0x4] sm:$0xf]
        %v1854 = vld [vmem:[%s1851 + $0x8] sm:$0xf]
        %v1855 = vld [vmem:[%s1851 + $0xc] sm:$0xf]
        %v1856 = vunpack.c.l.bf16 %v1852
        %v1857 = vunpack.c.l.bf16 %v1853
        %v1858 = vunpack.c.l.bf16 %v1854
        %v1859 = vunpack.c.l.bf16 %v1855
        %s1860 = scalar_lea.vmem %s534, 32 [#allocation9]
        %v1861 = vld [vmem:[%s1860] sm:$0xf]
        %v1862 = vld [vmem:[%s1860 + $0x4] sm:$0xf]
        %v1863 = vld [vmem:[%s1860 + $0x8] sm:$0xf]
        %v1864 = vld [vmem:[%s1860 + $0xc] sm:$0xf]
        %v1865 = vunpack.c.l.bf16 %v1861
        %v1866 = vunpack.c.l.bf16 %v1862
        %v1867 = vunpack.c.l.bf16 %v1863
        %v1868 = vunpack.c.l.bf16 %v1864
        %v1869 = vmul.f32 %v608, %v1856
        %v1870 = vmul.f32 %v609, %v1857
        %v1871 = vmul.f32 %v610, %v1858
        %v1872 = vmul.f32 %v611, %v1859
        %v1873 = vmul.f32 %v612, %v1865
        %v1874 = vmul.f32 %v613, %v1866
        %v1875 = vmul.f32 %v614, %v1867
        %v1876 = vmul.f32 %v615, %v1868
        %v1877 = vsub.f32 %v1869, %v1873
        %v1878 = vsub.f32 %v1870, %v1874
        %v1879 = vsub.f32 %v1871, %v1875
        %v1880 = vsub.f32 %v1872, %v1876
        %v1881 = vmul.f32 %v608, %v1865
        %v1882 = vmul.f32 %v609, %v1866
        %v1883 = vmul.f32 %v610, %v1867
        %v1884 = vmul.f32 %v611, %v1868
        %v1885 = vmul.f32 %v612, %v1856
        %v1886 = vmul.f32 %v613, %v1857
        %v1887 = vmul.f32 %v614, %v1858
        %v1888 = vmul.f32 %v615, %v1859
        %v1889 = vadd.f32 %v1881, %v1885
        %v1890 = vadd.f32 %v1882, %v1886
        %v1891 = vadd.f32 %v1883, %v1887
        %v1892 = vadd.f32 %v1884, %v1888
        %v1893 = vpack.c.bf16 %v1878, %v1877
        %v1894 = vpack.c.bf16 %v1880, %v1879
        %v1895 = vpack.c.bf16 %v1890, %v1889
        %v1896 = vpack.c.bf16 %v1892, %v1891
        %v1897 = vadd.f32 %v1877, %v1889
        %v1898 = vadd.f32 %v1878, %v1890
        %v1899 = vadd.f32 %v1879, %v1891
        %v1900 = vadd.f32 %v1880, %v1892
        %v1901 = vpack.c.bf16 %v1898, %v1897
        %v1902 = vpack.c.bf16 %v1900, %v1899
        %1903 = vmatprep.subr.bf16.mxu0 0
        %1904 = vmatpush1.bf16.msra.mxu0 %v1893
        %1905 = vmatprep.subr.bf16.mxu0 0
        %1906 = vmatpush1.bf16.msra.mxu0 %v1894
        %1907 = vmatprep.subr.bf16.mxu0 0
        %1908 = vmatpush1.bf16.msra.mxu0 0
        %1909 = vmatprep.subr.bf16.mxu0 0
        %1910 = vmatpush1.bf16.msra.mxu0 0
        %1911 = vmatprep.subr.bf16.mxu0 0
        %1912 = vmatpush1.bf16.msra.mxu0 0
        %1913 = vmatprep.subr.bf16.mxu0 0
        %1914 = vmatpush1.bf16.msra.mxu0 0
        %1915 = vmatprep.subr.bf16.mxu0 0
        %1916 = vmatpush1.bf16.msra.mxu0 0
        %1917 = vmatprep.subr.bf16.mxu0 0
        %1918 = vmatpush1.bf16.msra.mxu0 0
        %1919 = vmatprep.subr.bf16.mxu0 0
        %1920 = vmatpush1.bf16.msra.mxu0 0
        %1921 = vmatprep.subr.bf16.mxu0 0
        %1922 = vmatpush1.bf16.msra.mxu0 0
        %1923 = vmatprep.subr.bf16.mxu0 0
        %1924 = vmatpush1.bf16.msra.mxu0 0
        %1925 = vmatprep.subr.bf16.mxu0 0
        %1926 = vmatpush1.bf16.msra.mxu0 0
        %1927 = vmatprep.subr.bf16.mxu0 0
        %1928 = vmatpush1.bf16.msra.mxu0 0
        %1929 = vmatprep.subr.bf16.mxu0 0
        %1930 = vmatpush1.bf16.msra.mxu0 0
        %1931 = vmatprep.subr.bf16.mxu0 0
        %1932 = vmatpush1.bf16.msra.mxu0 0
        %1933 = vmatprep.subr.bf16.mxu0 0
        %1934 = vmatpush1.bf16.msra.mxu0 0
        %1935 = vmatprep.mubr.bf16.mxu0 0
        %1936 = vmatmul.mubr.bf16.gmra.mrb[0].mxu0 %v710
        %v1937 = vpop.f32.mrb[0].mxu0
        %v1938 = vadd.f32 0.0, %v1937
        %v1939 = vpop.f32.mrb[0].mxu0
        %v1940 = vpop.f32.mrb[0].mxu0
        %v1941 = vadd.f32 0.0, %v1940
        %v1942 = vpop.f32.mrb[0].mxu0
        %1943 = vmatprep.mubr.bf16.mxu0 0
        %1944 = vmatmul.mubr.bf16.gmra.mrb[0].mxu0 %v713
        %v1945 = vpop.f32.mrb[0].mxu0
        %v1946 = vadd.f32 0.0, %v1945
        %v1947 = vpop.f32.mrb[0].mxu0
        %v1948 = vpop.f32.mrb[0].mxu0
        %v1949 = vadd.f32 0.0, %v1948
        %v1950 = vpop.f32.mrb[0].mxu0
        %1951 = vdwg.mxu0
        %1952 = vmatprep.subr.bf16.mxu0 0
        %1953 = vmatpush1.bf16.msra.mxu0 %v1895
        %1954 = vmatprep.subr.bf16.mxu0 0
        %1955 = vmatpush1.bf16.msra.mxu0 %v1896
        %1956 = vmatprep.subr.bf16.mxu0 0
        %1957 = vmatpush1.bf16.msra.mxu0 0
        %1958 = vmatprep.subr.bf16.mxu0 0
        %1959 = vmatpush1.bf16.msra.mxu0 0
        %1960 = vmatprep.subr.bf16.mxu0 0
        %1961 = vmatpush1.bf16.msra.mxu0 0
        %1962 = vmatprep.subr.bf16.mxu0 0
        %1963 = vmatpush1.bf16.msra.mxu0 0
        %1964 = vmatprep.subr.bf16.mxu0 0
        %1965 = vmatpush1.bf16.msra.mxu0 0
        %1966 = vmatprep.subr.bf16.mxu0 0
        %1967 = vmatpush1.bf16.msra.mxu0 0
        %1968 = vmatprep.subr.bf16.mxu0 0
        %1969 = vmatpush1.bf16.msra.mxu0 0
        %1970 = vmatprep.subr.bf16.mxu0 0
        %1971 = vmatpush1.bf16.msra.mxu0 0
        %1972 = vmatprep.subr.bf16.mxu0 0
        %1973 = vmatpush1.bf16.msra.mxu0 0
        %1974 = vmatprep.subr.bf16.mxu0 0
        %1975 = vmatpush1.bf16.msra.mxu0 0
        %1976 = vmatprep.subr.bf16.mxu0 0
        %1977 = vmatpush1.bf16.msra.mxu0 0
        %1978 = vmatprep.subr.bf16.mxu0 0
        %1979 = vmatpush1.bf16.msra.mxu0 0
        %1980 = vmatprep.subr.bf16.mxu0 0
        %1981 = vmatpush1.bf16.msra.mxu0 0
        %1982 = vmatprep.subr.bf16.mxu0 0
        %1983 = vmatpush1.bf16.msra.mxu0 0
        %1984 = vmatprep.mubr.bf16.mxu0 0
        %1985 = vmatmul.mubr.bf16.gmra.mrb[0].mxu0 %v775
        %v1986 = vpop.f32.mrb[0].mxu0
        %v1987 = vadd.f32 0.0, %v1986
        %v1988 = vpop.f32.mrb[0].mxu0
        %v1989 = vpop.f32.mrb[0].mxu0
        %v1990 = vadd.f32 0.0, %v1989
        %v1991 = vpop.f32.mrb[0].mxu0
        %1992 = vmatprep.mubr.bf16.mxu0 0
        %1993 = vmatmul.mubr.bf16.gmra.mrb[0].mxu0 %v778
        %v1994 = vpop.f32.mrb[0].mxu0
        %v1995 = vadd.f32 0.0, %v1994
        %v1996 = vpop.f32.mrb[0].mxu0
        %v1997 = vpop.f32.mrb[0].mxu0
        %v1998 = vadd.f32 0.0, %v1997
        %v1999 = vpop.f32.mrb[0].mxu0
        %2000 = vdwg.mxu0
        %2001 = vmatprep.subr.bf16.mxu0 0
        %2002 = vmatpush1.bf16.msra.mxu0 %v1901
        %2003 = vmatprep.subr.bf16.mxu0 0
        %2004 = vmatpush1.bf16.msra.mxu0 %v1902
        %2005 = vmatprep.subr.bf16.mxu0 0
        %2006 = vmatpush1.bf16.msra.mxu0 0
        %2007 = vmatprep.subr.bf16.mxu0 0
        %2008 = vmatpush1.bf16.msra.mxu0 0
        %2009 = vmatprep.subr.bf16.mxu0 0
        %2010 = vmatpush1.bf16.msra.mxu0 0
        %2011 = vmatprep.subr.bf16.mxu0 0
        %2012 = vmatpush1.bf16.msra.mxu0 0
        %2013 = vmatprep.subr.bf16.mxu0 0
        %2014 = vmatpush1.bf16.msra.mxu0 0
        %2015 = vmatprep.subr.bf16.mxu0 0
        %2016 = vmatpush1.bf16.msra.mxu0 0
        %2017 = vmatprep.subr.bf16.mxu0 0
        %2018 = vmatpush1.bf16.msra.mxu0 0
        %2019 = vmatprep.subr.bf16.mxu0 0
        %2020 = vmatpush1.bf16.msra.mxu0 0
        %2021 = vmatprep.subr.bf16.mxu0 0
        %2022 = vmatpush1.bf16.msra.mxu0 0
        %2023 = vmatprep.subr.bf16.mxu0 0
        %2024 = vmatpush1.bf16.msra.mxu0 0
        %2025 = vmatprep.subr.bf16.mxu0 0
        %2026 = vmatpush1.bf16.msra.mxu0 0
        %2027 = vmatprep.subr.bf16.mxu0 0
        %2028 = vmatpush1.bf16.msra.mxu0 0
        %2029 = vmatprep.subr.bf16.mxu0 0
        %2030 = vmatpush1.bf16.msra.mxu0 0
        %2031 = vmatprep.subr.bf16.mxu0 0
        %2032 = vmatpush1.bf16.msra.mxu0 0
        %2033 = vmatprep.mubr.bf16.mxu0 0
        %2034 = vmatmul.mubr.bf16.gmra.mrb[0].mxu0 %v840
        %v2035 = vpop.f32.mrb[0].mxu0
        %v2036 = vadd.f32 0.0, %v2035
        %v2037 = vpop.f32.mrb[0].mxu0
        %v2038 = vpop.f32.mrb[0].mxu0
        %v2039 = vadd.f32 0.0, %v2038
        %v2040 = vpop.f32.mrb[0].mxu0
        %2041 = vmatprep.mubr.bf16.mxu0 0
        %2042 = vmatmul.mubr.bf16.gmra.mrb[0].mxu0 %v843
        %v2043 = vpop.f32.mrb[0].mxu0
        %v2044 = vadd.f32 0.0, %v2043
        %v2045 = vpop.f32.mrb[0].mxu0
        %v2046 = vpop.f32.mrb[0].mxu0
        %v2047 = vadd.f32 0.0, %v2046
        %v2048 = vpop.f32.mrb[0].mxu0
        %2049 = vdwg.mxu0
        %v2050 = vsub.f32 %v1938, %v1987
        %v2051 = vsub.f32 %v1941, %v1990
        %v2052 = vsub.f32 %v1946, %v1995
        %v2053 = vsub.f32 %v1949, %v1998
        %v2054 = vsub.f32 %v2036, %v1938
        %v2055 = vsub.f32 %v2039, %v1941
        %v2056 = vsub.f32 %v2044, %v1946
        %v2057 = vsub.f32 %v2047, %v1949
        %v2058 = vsub.f32 %v2054, %v1987
        %v2059 = vsub.f32 %v2055, %v1990
        %v2060 = vsub.f32 %v2056, %v1995
        %v2061 = vsub.f32 %v2057, %v1998
        %v2062 = vpack.c.bf16 %v2051, %v2050
        %v2063 = vpack.c.bf16 %v2053, %v2052
        %v2064 = vpack.c.bf16 %v2059, %v2058
        %v2065 = vpack.c.bf16 %v2061, %v2060
        %v2066 = vadd.f32 %v2050, %v2058
        %v2067 = vadd.f32 %v2051, %v2059
        %v2068 = vadd.f32 %v2052, %v2060
        %v2069 = vadd.f32 %v2053, %v2061
        %v2070 = vpack.c.bf16 %v2067, %v2066
        %v2071 = vpack.c.bf16 %v2069, %v2068
        %v2073 = vsel %vm708, %v2062, 0
        %v2076 = vsel %vm708, %v2063, 0
        %2078 = vmatprep.subr.bf16.mxu0 0
        %2079 = vmatpush1.bf16.msra.mxu0 %v924
        %2080 = vmatprep.subr.bf16.mxu0 0
        %2081 = vmatpush1.bf16.msra.mxu0 %v925
        %2082 = vmatprep.subr.bf16.mxu0 0
        %2083 = vmatpush1.bf16.msra.mxu0 0
        %2084 = vmatprep.subr.bf16.mxu0 0
        %2085 = vmatpush1.bf16.msra.mxu0 0
        %2086 = vmatprep.subr.bf16.mxu0 0
        %2087 = vmatpush1.bf16.msra.mxu0 0
        %2088 = vmatprep.subr.bf16.mxu0 0
        %2089 = vmatpush1.bf16.msra.mxu0 0
        %2090 = vmatprep.subr.bf16.mxu0 0
        %2091 = vmatpush1.bf16.msra.mxu0 0
        %2092 = vmatprep.subr.bf16.mxu0 0
        %2093 = vmatpush1.bf16.msra.mxu0 0
        %2094 = vmatprep.subr.bf16.mxu0 0
        %2095 = vmatpush1.bf16.msra.mxu0 0
        %2096 = vmatprep.subr.bf16.mxu0 0
        %2097 = vmatpush1.bf16.msra.mxu0 0
        %2098 = vmatprep.subr.bf16.mxu0 0
        %2099 = vmatpush1.bf16.msra.mxu0 0
        %2100 = vmatprep.subr.bf16.mxu0 0
        %2101 = vmatpush1.bf16.msra.mxu0 0
        %2102 = vmatprep.subr.bf16.mxu0 0
        %2103 = vmatpush1.bf16.msra.mxu0 0
        %2104 = vmatprep.subr.bf16.mxu0 0
        %2105 = vmatpush1.bf16.msra.mxu0 0
        %2106 = vmatprep.subr.bf16.mxu0 0
        %2107 = vmatpush1.bf16.msra.mxu0 0
        %2108 = vmatprep.subr.bf16.mxu0 0
        %2109 = vmatpush1.bf16.msra.mxu0 0
        %2110 = vmatprep.mubr.bf16.mxu0 0
        %2111 = vmatmul.mubr.bf16.gmra.mrb[0].mxu0 %v2073
        %v2112 = vpop.f32.mrb[0].mxu0
        %v2113 = vadd.f32 0.0, %v2112
        %v2114 = vpop.f32.mrb[0].mxu0
        %v2115 = vpop.f32.mrb[0].mxu0
        %v2116 = vadd.f32 0.0, %v2115
        %v2117 = vpop.f32.mrb[0].mxu0
        %2118 = vmatprep.mubr.bf16.mxu0 0
        %2119 = vmatmul.mubr.bf16.gmra.mrb[0].mxu0 %v2076
        %v2120 = vpop.f32.mrb[0].mxu0
        %v2121 = vadd.f32 0.0, %v2120
        %v2122 = vpop.f32.mrb[0].mxu0
        %v2123 = vpop.f32.mrb[0].mxu0
        %v2124 = vadd.f32 0.0, %v2123
        %v2125 = vpop.f32.mrb[0].mxu0
        %2126 = vdwg.mxu0
        %v2128 = vsel %vm708, %v2064, 0
        %v2131 = vsel %vm708, %v2065, 0
        %2133 = vmatprep.subr.bf16.mxu0 0
        %2134 = vmatpush1.bf16.msra.mxu0 %v991
        %2135 = vmatprep.subr.bf16.mxu0 0
        %2136 = vmatpush1.bf16.msra.mxu0 %v992
        %2137 = vmatprep.subr.bf16.mxu0 0
        %2138 = vmatpush1.bf16.msra.mxu0 0
        %2139 = vmatprep.subr.bf16.mxu0 0
        %2140 = vmatpush1.bf16.msra.mxu0 0
        %2141 = vmatprep.subr.bf16.mxu0 0
        %2142 = vmatpush1.bf16.msra.mxu0 0
        %2143 = vmatprep.subr.bf16.mxu0 0
        %2144 = vmatpush1.bf16.msra.mxu0 0
        %2145 = vmatprep.subr.bf16.mxu0 0
        %2146 = vmatpush1.bf16.msra.mxu0 0
        %2147 = vmatprep.subr.bf16.mxu0 0
        %2148 = vmatpush1.bf16.msra.mxu0 0
        %2149 = vmatprep.subr.bf16.mxu0 0
        %2150 = vmatpush1.bf16.msra.mxu0 0
        %2151 = vmatprep.subr.bf16.mxu0 0
        %2152 = vmatpush1.bf16.msra.mxu0 0
        %2153 = vmatprep.subr.bf16.mxu0 0
        %2154 = vmatpush1.bf16.msra.mxu0 0
        %2155 = vmatprep.subr.bf16.mxu0 0
        %2156 = vmatpush1.bf16.msra.mxu0 0
        %2157 = vmatprep.subr.bf16.mxu0 0
        %2158 = vmatpush1.bf16.msra.mxu0 0
        %2159 = vmatprep.subr.bf16.mxu0 0
        %2160 = vmatpush1.bf16.msra.mxu0 0
        %2161 = vmatprep.subr.bf16.mxu0 0
        %2162 = vmatpush1.bf16.msra.mxu0 0
        %2163 = vmatprep.subr.bf16.mxu0 0
        %2164 = vmatpush1.bf16.msra.mxu0 0
        %2165 = vmatprep.mubr.bf16.mxu0 0
        %2166 = vmatmul.mubr.bf16.gmra.mrb[0].mxu0 %v2128
        %v2167 = vpop.f32.mrb[0].mxu0
        %v2168 = vadd.f32 0.0, %v2167
        %v2169 = vpop.f32.mrb[0].mxu0
        %v2170 = vpop.f32.mrb[0].mxu0
        %v2171 = vadd.f32 0.0, %v2170
        %v2172 = vpop.f32.mrb[0].mxu0
        %2173 = vmatprep.mubr.bf16.mxu0 0
        %2174 = vmatmul.mubr.bf16.gmra.mrb[0].mxu0 %v2131
        %v2175 = vpop.f32.mrb[0].mxu0
        %v2176 = vadd.f32 0.0, %v2175
        %v2177 = vpop.f32.mrb[0].mxu0
        %v2178 = vpop.f32.mrb[0].mxu0
        %v2179 = vadd.f32 0.0, %v2178
        %v2180 = vpop.f32.mrb[0].mxu0
        %2181 = vdwg.mxu0
        %v2183 = vsel %vm708, %v2070, 0
        %v2186 = vsel %vm708, %v2071, 0
        %2188 = vmatprep.subr.bf16.mxu0 0
        %2189 = vmatpush1.bf16.msra.mxu0 %v1058
        %2190 = vmatprep.subr.bf16.mxu0 0
        %2191 = vmatpush1.bf16.msra.mxu0 %v1059
        %2192 = vmatprep.subr.bf16.mxu0 0
        %2193 = vmatpush1.bf16.msra.mxu0 0
        %2194 = vmatprep.subr.bf16.mxu0 0
        %2195 = vmatpush1.bf16.msra.mxu0 0
        %2196 = vmatprep.subr.bf16.mxu0 0
        %2197 = vmatpush1.bf16.msra.mxu0 0
        %2198 = vmatprep.subr.bf16.mxu0 0
        %2199 = vmatpush1.bf16.msra.mxu0 0
        %2200 = vmatprep.subr.bf16.mxu0 0
        %2201 = vmatpush1.bf16.msra.mxu0 0
        %2202 = vmatprep.subr.bf16.mxu0 0
        %2203 = vmatpush1.bf16.msra.mxu0 0
        %2204 = vmatprep.subr.bf16.mxu0 0
        %2205 = vmatpush1.bf16.msra.mxu0 0
        %2206 = vmatprep.subr.bf16.mxu0 0
        %2207 = vmatpush1.bf16.msra.mxu0 0
        %2208 = vmatprep.subr.bf16.mxu0 0
        %2209 = vmatpush1.bf16.msra.mxu0 0
        %2210 = vmatprep.subr.bf16.mxu0 0
        %2211 = vmatpush1.bf16.msra.mxu0 0
        %2212 = vmatprep.subr.bf16.mxu0 0
        %2213 = vmatpush1.bf16.msra.mxu0 0
        %2214 = vmatprep.subr.bf16.mxu0 0
        %2215 = vmatpush1.bf16.msra.mxu0 0
        %2216 = vmatprep.subr.bf16.mxu0 0
        %2217 = vmatpush1.bf16.msra.mxu0 0
        %2218 = vmatprep.subr.bf16.mxu0 0
        %2219 = vmatpush1.bf16.msra.mxu0 0
        %2220 = vmatprep.mubr.bf16.mxu0 0
        %2221 = vmatmul.mubr.bf16.gmra.mrb[0].mxu0 %v2183
        %v2222 = vpop.f32.mrb[0].mxu0
        %v2223 = vadd.f32 0.0, %v2222
        %v2224 = vpop.f32.mrb[0].mxu0
        %v2225 = vpop.f32.mrb[0].mxu0
        %v2226 = vadd.f32 0.0, %v2225
        %v2227 = vpop.f32.mrb[0].mxu0
        %2228 = vmatprep.mubr.bf16.mxu0 0
        %2229 = vmatmul.mubr.bf16.gmra.mrb[0].mxu0 %v2186
        %v2230 = vpop.f32.mrb[0].mxu0
        %v2231 = vadd.f32 0.0, %v2230
        %v2232 = vpop.f32.mrb[0].mxu0
        %v2233 = vpop.f32.mrb[0].mxu0
        %v2234 = vadd.f32 0.0, %v2233
        %v2235 = vpop.f32.mrb[0].mxu0
        %2236 = vdwg.mxu0
        %v2237 = vsub.f32 %v2113, %v2168
        %v2238 = vsub.f32 %v2116, %v2171
        %v2239 = vsub.f32 %v2121, %v2176
        %v2240 = vsub.f32 %v2124, %v2179
        %v2241 = vsub.f32 %v2223, %v2113
        %v2242 = vsub.f32 %v2226, %v2116
        %v2243 = vsub.f32 %v2231, %v2121
        %v2244 = vsub.f32 %v2234, %v2124
        %v2245 = vsub.f32 %v2241, %v2168
        %v2246 = vsub.f32 %v2242, %v2171
        %v2247 = vsub.f32 %v2243, %v2176
        %v2248 = vsub.f32 %v2244, %v2179
        %v2249 = vmul.f32 %v2237, %v2237
        %v2250 = vmul.f32 %v2238, %v2238
        %v2251 = vmul.f32 %v2239, %v2239
        %v2252 = vmul.f32 %v2240, %v2240
        %v2253 = vmul.f32 %v2245, %v2245
        %v2254 = vmul.f32 %v2246, %v2246
        %v2255 = vmul.f32 %v2247, %v2247
        %v2256 = vmul.f32 %v2248, %v2248
        %v2257 = vadd.f32 %v2249, %v2253
        %v2258 = vadd.f32 %v2250, %v2254
        %v2259 = vadd.f32 %v2251, %v2255
        %v2260 = vadd.f32 %v2252, %v2256
        %v2261 = vsel %vm708, %v2257, 0.0
        %v2262 = vsel %vm708, %v2258, 0.0
        %v2263 = vadd.f32 %v2261, %v2262
        %v2264 = vsel %vm708, %v2259, 0.0
        %v2265 = vadd.f32 %v2263, %v2264
        %v2266 = vsel %vm708, %v2260, 0.0
        %v2267 = vadd.f32 %v2265, %v2266
        %2268 = vadd.xlane.f32.xlu0 %v2267
        %v2269 = vpop.xlane.xlu0 %2268
        %v2270 = vrot.slane %v2269, 4
        %v2271 = vadd.f32 %v2269, %v2270
        %v2272 = vrot.slane %v2271, 2
        %v2273 = vadd.f32 %v2271, %v2272
        %v2274 = vrot.slane %v2273, 1
        %v2275 = vadd.f32 %v2273, %v2274
        %s2276 = vtos %v2275
        %v2277 = vstv %s2276
        %v2278 = vpack.c.bf16 %v2258, %v2257
        %v2279 = vpack.c.bf16 %v2260, %v2259
        %2280 = vmatprep.subr.bf16.mxu0 0
        %2281 = vmatpush1.bf16.msra.mxu0 %v2278
        %2282 = vmatprep.subr.bf16.mxu0 0
        %2283 = vmatpush1.bf16.msra.mxu0 %v2279
        %2284 = vmatprep.subr.bf16.mxu0 0
        %2285 = vmatpush1.bf16.msra.mxu0 0
        %2286 = vmatprep.subr.bf16.mxu0 0
        %2287 = vmatpush1.bf16.msra.mxu0 0
        %2288 = vmatprep.subr.bf16.mxu0 0
        %2289 = vmatpush1.bf16.msra.mxu0 0
        %2290 = vmatprep.subr.bf16.mxu0 0
        %2291 = vmatpush1.bf16.msra.mxu0 0
        %2292 = vmatprep.subr.bf16.mxu0 0
        %2293 = vmatpush1.bf16.msra.mxu0 0
        %2294 = vmatprep.subr.bf16.mxu0 0
        %2295 = vmatpush1.bf16.msra.mxu0 0
        %2296 = vmatprep.subr.bf16.mxu0 0
        %2297 = vmatpush1.bf16.msra.mxu0 0
        %2298 = vmatprep.subr.bf16.mxu0 0
        %2299 = vmatpush1.bf16.msra.mxu0 0
        %2300 = vmatprep.subr.bf16.mxu0 0
        %2301 = vmatpush1.bf16.msra.mxu0 0
        %2302 = vmatprep.subr.bf16.mxu0 0
        %2303 = vmatpush1.bf16.msra.mxu0 0
        %2304 = vmatprep.subr.bf16.mxu0 0
        %2305 = vmatpush1.bf16.msra.mxu0 0
        %2306 = vmatprep.subr.bf16.mxu0 0
        %2307 = vmatpush1.bf16.msra.mxu0 0
        %2308 = vmatprep.subr.bf16.mxu0 0
        %2309 = vmatpush1.bf16.msra.mxu0 0
        %2310 = vmatprep.subr.bf16.mxu0 0
        %2311 = vmatpush1.bf16.msra.mxu0 0
        %2312 = vmatprep.mubr.bf16.mxu0 0
        %2313 = vmatmul.mubr.bf16.gmra.mrb[0].mxu0 %v1166
        %v2314 = vpop.f32.mrb[0].mxu0
        %v2315 = vadd.f32 0.0, %v2314
        %v2316 = vpop.f32.mrb[0].mxu0
        %v2317 = vpop.f32.mrb[0].mxu0
        %v2318 = vadd.f32 0.0, %v2317
        %v2319 = vpop.f32.mrb[0].mxu0
        %2320 = vdwg.mxu0
        %v2321 = vpack.c.bf16 %v2318, %v2315
        %v2323 = vsel %vm708, %v2321, 0
        %2325 = vmatprep.subr.bf16.mxu0 0
        %2326 = vmatpush1.bf16.msra.mxu0 %v1218
        %2327 = vmatprep.subr.bf16.mxu0 0
        %2328 = vmatpush1.bf16.msra.mxu0 %v1219
        %2329 = vmatprep.subr.bf16.mxu0 0
        %2330 = vmatpush1.bf16.msra.mxu0 0
        %2331 = vmatprep.subr.bf16.mxu0 0
        %2332 = vmatpush1.bf16.msra.mxu0 0
        %2333 = vmatprep.subr.bf16.mxu0 0
        %2334 = vmatpush1.bf16.msra.mxu0 0
        %2335 = vmatprep.subr.bf16.mxu0 0
        %2336 = vmatpush1.bf16.msra.mxu0 0
        %2337 = vmatprep.subr.bf16.mxu0 0
        %2338 = vmatpush1.bf16.msra.mxu0 0
        %2339 = vmatprep.subr.bf16.mxu0 0
        %2340 = vmatpush1.bf16.msra.mxu0 0
        %2341 = vmatprep.subr.bf16.mxu0 0
        %2342 = vmatpush1.bf16.msra.mxu0 0
        %2343 = vmatprep.subr.bf16.mxu0 0
        %2344 = vmatpush1.bf16.msra.mxu0 0
        %2345 = vmatprep.subr.bf16.mxu0 0
        %2346 = vmatpush1.bf16.msra.mxu0 0
        %2347 = vmatprep.subr.bf16.mxu0 0
        %2348 = vmatpush1.bf16.msra.mxu0 0
        %2349 = vmatprep.subr.bf16.mxu0 0
        %2350 = vmatpush1.bf16.msra.mxu0 0
        %2351 = vmatprep.subr.bf16.mxu0 0
        %2352 = vmatpush1.bf16.msra.mxu0 0
        %2353 = vmatprep.subr.bf16.mxu0 0
        %2354 = vmatpush1.bf16.msra.mxu0 0
        %2355 = vmatprep.subr.bf16.mxu0 0
        %2356 = vmatpush1.bf16.msra.mxu0 0
        %2357 = vmatprep.mubr.bf16.mxu0 0
        %2358 = vmatmul.mubr.bf16.gmra.mrb[0].mxu0 %v2323
        %v2359 = vpop.f32.mrb[0].mxu0
        %v2360 = vadd.f32 0.0, %v2359
        %v2361 = vpop.f32.mrb[0].mxu0
        %v2362 = vpop.f32.mrb[0].mxu0
        %v2363 = vadd.f32 0.0, %v2362
        %v2364 = vpop.f32.mrb[0].mxu0
        %2365 = vdwg.mxu0
        %s2366 = sadd.s32 %s1266, 2
        %s2367 = sld [smem:[#allocation10 + %s2366]]
        %v2368 = vstv %s2367
        %v2369 = vrcp.pop %v2277
        %v2370 = vmul.f32 %v2368, %v2369
        %v2371 = vmul.f32 %v2360, %v2370
        %v2372 = vmul.f32 %v2363, %v2370
        %s2373 = scalar_lea.vmem %s606, 32 [#allocation18]
        %2374 = vst [vmem:[%s2373] sm:$0xff] %v2371
        %2375 = vst [vmem:[%s2373 + $0x8] sm:$0xff] %v2372
        %v2376 = vsel %vm1275, %v2371, inf
        %v2377 = vsel %vm1275, %v2372, inf
        %v2378 = vmin.f32 %v2376, %v2377
        %2379 = vmin.xlane.f32.xlu0 %v2378
        %v2380 = vpop.xlane.xlu0 %2379
        %v2381 = vrot.slane %v2380, 4
        %v2382 = vmin.f32 %v2380, %v2381
        %v2383 = vrot.slane %v2382, 2
        %v2384 = vmin.f32 %v2382, %v2383
        %v2385 = vrot.slane %v2384, 1
        %v2386 = vmin.f32 %v2384, %v2385
        %s2387 = vtos %v2386
        %v2388 = vstv %s2387
        %v2389 = vmax.f32 %v2371, %v2372
        %2390 = vmax.xlane.f32.xlu0 %v2389
        %v2391 = vpop.xlane.xlu0 %2390
        %v2392 = vrot.slane %v2391, 4
        %v2393 = vmax.f32 %v2391, %v2392
        %v2394 = vrot.slane %v2393, 2
        %v2395 = vmax.f32 %v2393, %v2394
        %v2396 = vrot.slane %v2395, 1
        %v2397 = vmax.f32 %v2395, %v2396
        %s2398 = vtos %v2397
        %v2399 = vstv %s2398
        %v2400 = vmin.f32 %v1849, %v2388
        %v2401 = vmax.f32 %v1850, %v2399
        %s2402 = scalar_lea.vmem %s525, 48 [#allocation8]
        %v2403 = vld [vmem:[%s2402] sm:$0xf]
        %v2404 = vld [vmem:[%s2402 + $0x4] sm:$0xf]
        %v2405 = vld [vmem:[%s2402 + $0x8] sm:$0xf]
        %v2406 = vld [vmem:[%s2402 + $0xc] sm:$0xf]
        %v2407 = vunpack.c.l.bf16 %v2403
        %v2408 = vunpack.c.l.bf16 %v2404
        %v2409 = vunpack.c.l.bf16 %v2405
        %v2410 = vunpack.c.l.bf16 %v2406
        %s2411 = scalar_lea.vmem %s534, 48 [#allocation9]
        %v2412 = vld [vmem:[%s2411] sm:$0xf]
        %v2413 = vld [vmem:[%s2411 + $0x4] sm:$0xf]
        %v2414 = vld [vmem:[%s2411 + $0x8] sm:$0xf]
        %v2415 = vld [vmem:[%s2411 + $0xc] sm:$0xf]
        %v2416 = vunpack.c.l.bf16 %v2412
        %v2417 = vunpack.c.l.bf16 %v2413
        %v2418 = vunpack.c.l.bf16 %v2414
        %v2419 = vunpack.c.l.bf16 %v2415
        %v2420 = vmul.f32 %v608, %v2407
        %v2421 = vmul.f32 %v609, %v2408
        %v2422 = vmul.f32 %v610, %v2409
        %v2423 = vmul.f32 %v611, %v2410
        %v2424 = vmul.f32 %v612, %v2416
        %v2425 = vmul.f32 %v613, %v2417
        %v2426 = vmul.f32 %v614, %v2418
        %v2427 = vmul.f32 %v615, %v2419
        %v2428 = vsub.f32 %v2420, %v2424
        %v2429 = vsub.f32 %v2421, %v2425
        %v2430 = vsub.f32 %v2422, %v2426
        %v2431 = vsub.f32 %v2423, %v2427
        %v2432 = vmul.f32 %v608, %v2416
        %v2433 = vmul.f32 %v609, %v2417
        %v2434 = vmul.f32 %v610, %v2418
        %v2435 = vmul.f32 %v611, %v2419
        %v2436 = vmul.f32 %v612, %v2407
        %v2437 = vmul.f32 %v613, %v2408
        %v2438 = vmul.f32 %v614, %v2409
        %v2439 = vmul.f32 %v615, %v2410
        %v2440 = vadd.f32 %v2432, %v2436
        %v2441 = vadd.f32 %v2433, %v2437
        %v2442 = vadd.f32 %v2434, %v2438
        %v2443 = vadd.f32 %v2435, %v2439
        %v2444 = vpack.c.bf16 %v2429, %v2428
        %v2445 = vpack.c.bf16 %v2431, %v2430
        %v2446 = vpack.c.bf16 %v2441, %v2440
        %v2447 = vpack.c.bf16 %v2443, %v2442
        %v2448 = vadd.f32 %v2428, %v2440
        %v2449 = vadd.f32 %v2429, %v2441
        %v2450 = vadd.f32 %v2430, %v2442
        %v2451 = vadd.f32 %v2431, %v2443
        %v2452 = vpack.c.bf16 %v2449, %v2448
        %v2453 = vpack.c.bf16 %v2451, %v2450
        %2454 = vmatprep.subr.bf16.mxu0 0
        %2455 = vmatpush1.bf16.msra.mxu0 %v2444
        %2456 = vmatprep.subr.bf16.mxu0 0
        %2457 = vmatpush1.bf16.msra.mxu0 %v2445
        %2458 = vmatprep.subr.bf16.mxu0 0
        %2459 = vmatpush1.bf16.msra.mxu0 0
        %2460 = vmatprep.subr.bf16.mxu0 0
        %2461 = vmatpush1.bf16.msra.mxu0 0
        %2462 = vmatprep.subr.bf16.mxu0 0
        %2463 = vmatpush1.bf16.msra.mxu0 0
        %2464 = vmatprep.subr.bf16.mxu0 0
        %2465 = vmatpush1.bf16.msra.mxu0 0
        %2466 = vmatprep.subr.bf16.mxu0 0
        %2467 = vmatpush1.bf16.msra.mxu0 0
        %2468 = vmatprep.subr.bf16.mxu0 0
        %2469 = vmatpush1.bf16.msra.mxu0 0
        %2470 = vmatprep.subr.bf16.mxu0 0
        %2471 = vmatpush1.bf16.msra.mxu0 0
        %2472 = vmatprep.subr.bf16.mxu0 0
        %2473 = vmatpush1.bf16.msra.mxu0 0
        %2474 = vmatprep.subr.bf16.mxu0 0
        %2475 = vmatpush1.bf16.msra.mxu0 0
        %2476 = vmatprep.subr.bf16.mxu0 0
        %2477 = vmatpush1.bf16.msra.mxu0 0
        %2478 = vmatprep.subr.bf16.mxu0 0
        %2479 = vmatpush1.bf16.msra.mxu0 0
        %2480 = vmatprep.subr.bf16.mxu0 0
        %2481 = vmatpush1.bf16.msra.mxu0 0
        %2482 = vmatprep.subr.bf16.mxu0 0
        %2483 = vmatpush1.bf16.msra.mxu0 0
        %2484 = vmatprep.subr.bf16.mxu0 0
        %2485 = vmatpush1.bf16.msra.mxu0 0
        %2486 = vmatprep.mubr.bf16.mxu0 0
        %2487 = vmatmul.mubr.bf16.gmra.mrb[0].mxu0 %v710
        %v2488 = vpop.f32.mrb[0].mxu0
        %v2489 = vadd.f32 0.0, %v2488
        %v2490 = vpop.f32.mrb[0].mxu0
        %v2491 = vpop.f32.mrb[0].mxu0
        %v2492 = vadd.f32 0.0, %v2491
        %v2493 = vpop.f32.mrb[0].mxu0
        %2494 = vmatprep.mubr.bf16.mxu0 0
        %2495 = vmatmul.mubr.bf16.gmra.mrb[0].mxu0 %v713
        %v2496 = vpop.f32.mrb[0].mxu0
        %v2497 = vadd.f32 0.0, %v2496
        %v2498 = vpop.f32.mrb[0].mxu0
        %v2499 = vpop.f32.mrb[0].mxu0
        %v2500 = vadd.f32 0.0, %v2499
        %v2501 = vpop.f32.mrb[0].mxu0
        %2502 = vdwg.mxu0
        %2503 = vmatprep.subr.bf16.mxu0 0
        %2504 = vmatpush1.bf16.msra.mxu0 %v2446
        %2505 = vmatprep.subr.bf16.mxu0 0
        %2506 = vmatpush1.bf16.msra.mxu0 %v2447
        %2507 = vmatprep.subr.bf16.mxu0 0
        %2508 = vmatpush1.bf16.msra.mxu0 0
        %2509 = vmatprep.subr.bf16.mxu0 0
        %2510 = vmatpush1.bf16.msra.mxu0 0
        %2511 = vmatprep.subr.bf16.mxu0 0
        %2512 = vmatpush1.bf16.msra.mxu0 0
        %2513 = vmatprep.subr.bf16.mxu0 0
        %2514 = vmatpush1.bf16.msra.mxu0 0
        %2515 = vmatprep.subr.bf16.mxu0 0
        %2516 = vmatpush1.bf16.msra.mxu0 0
        %2517 = vmatprep.subr.bf16.mxu0 0
        %2518 = vmatpush1.bf16.msra.mxu0 0
        %2519 = vmatprep.subr.bf16.mxu0 0
        %2520 = vmatpush1.bf16.msra.mxu0 0
        %2521 = vmatprep.subr.bf16.mxu0 0
        %2522 = vmatpush1.bf16.msra.mxu0 0
        %2523 = vmatprep.subr.bf16.mxu0 0
        %2524 = vmatpush1.bf16.msra.mxu0 0
        %2525 = vmatprep.subr.bf16.mxu0 0
        %2526 = vmatpush1.bf16.msra.mxu0 0
        %2527 = vmatprep.subr.bf16.mxu0 0
        %2528 = vmatpush1.bf16.msra.mxu0 0
        %2529 = vmatprep.subr.bf16.mxu0 0
        %2530 = vmatpush1.bf16.msra.mxu0 0
        %2531 = vmatprep.subr.bf16.mxu0 0
        %2532 = vmatpush1.bf16.msra.mxu0 0
        %2533 = vmatprep.subr.bf16.mxu0 0
        %2534 = vmatpush1.bf16.msra.mxu0 0
        %2535 = vmatprep.mubr.bf16.mxu0 0
        %2536 = vmatmul.mubr.bf16.gmra.mrb[0].mxu0 %v775
        %v2537 = vpop.f32.mrb[0].mxu0
        %v2538 = vadd.f32 0.0, %v2537
        %v2539 = vpop.f32.mrb[0].mxu0
        %v2540 = vpop.f32.mrb[0].mxu0
        %v2541 = vadd.f32 0.0, %v2540
        %v2542 = vpop.f32.mrb[0].mxu0
        %2543 = vmatprep.mubr.bf16.mxu0 0
        %2544 = vmatmul.mubr.bf16.gmra.mrb[0].mxu0 %v778
        %v2545 = vpop.f32.mrb[0].mxu0
        %v2546 = vadd.f32 0.0, %v2545
        %v2547 = vpop.f32.mrb[0].mxu0
        %v2548 = vpop.f32.mrb[0].mxu0
        %v2549 = vadd.f32 0.0, %v2548
        %v2550 = vpop.f32.mrb[0].mxu0
        %2551 = vdwg.mxu0
        %2552 = vmatprep.subr.bf16.mxu0 0
        %2553 = vmatpush1.bf16.msra.mxu0 %v2452
        %2554 = vmatprep.subr.bf16.mxu0 0
        %2555 = vmatpush1.bf16.msra.mxu0 %v2453
        %2556 = vmatprep.subr.bf16.mxu0 0
        %2557 = vmatpush1.bf16.msra.mxu0 0
        %2558 = vmatprep.subr.bf16.mxu0 0
        %2559 = vmatpush1.bf16.msra.mxu0 0
        %2560 = vmatprep.subr.bf16.mxu0 0
        %2561 = vmatpush1.bf16.msra.mxu0 0
        %2562 = vmatprep.subr.bf16.mxu0 0
        %2563 = vmatpush1.bf16.msra.mxu0 0
        %2564 = vmatprep.subr.bf16.mxu0 0
        %2565 = vmatpush1.bf16.msra.mxu0 0
        %2566 = vmatprep.subr.bf16.mxu0 0
        %2567 = vmatpush1.bf16.msra.mxu0 0
        %2568 = vmatprep.subr.bf16.mxu0 0
        %2569 = vmatpush1.bf16.msra.mxu0 0
        %2570 = vmatprep.subr.bf16.mxu0 0
        %2571 = vmatpush1.bf16.msra.mxu0 0
        %2572 = vmatprep.subr.bf16.mxu0 0
        %2573 = vmatpush1.bf16.msra.mxu0 0
        %2574 = vmatprep.subr.bf16.mxu0 0
        %2575 = vmatpush1.bf16.msra.mxu0 0
        %2576 = vmatprep.subr.bf16.mxu0 0
        %2577 = vmatpush1.bf16.msra.mxu0 0
        %2578 = vmatprep.subr.bf16.mxu0 0
        %2579 = vmatpush1.bf16.msra.mxu0 0
        %2580 = vmatprep.subr.bf16.mxu0 0
        %2581 = vmatpush1.bf16.msra.mxu0 0
        %2582 = vmatprep.subr.bf16.mxu0 0
        %2583 = vmatpush1.bf16.msra.mxu0 0
        %2584 = vmatprep.mubr.bf16.mxu0 0
        %2585 = vmatmul.mubr.bf16.gmra.mrb[0].mxu0 %v840
        %v2586 = vpop.f32.mrb[0].mxu0
        %v2587 = vadd.f32 0.0, %v2586
        %v2588 = vpop.f32.mrb[0].mxu0
        %v2589 = vpop.f32.mrb[0].mxu0
        %v2590 = vadd.f32 0.0, %v2589
        %v2591 = vpop.f32.mrb[0].mxu0
        %2592 = vmatprep.mubr.bf16.mxu0 0
        %2593 = vmatmul.mubr.bf16.gmra.mrb[0].mxu0 %v843
        %v2594 = vpop.f32.mrb[0].mxu0
        %v2595 = vadd.f32 0.0, %v2594
        %v2596 = vpop.f32.mrb[0].mxu0
        %v2597 = vpop.f32.mrb[0].mxu0
        %v2598 = vadd.f32 0.0, %v2597
        %v2599 = vpop.f32.mrb[0].mxu0
        %2600 = vdwg.mxu0
        %v2601 = vsub.f32 %v2489, %v2538
        %v2602 = vsub.f32 %v2492, %v2541
        %v2603 = vsub.f32 %v2497, %v2546
        %v2604 = vsub.f32 %v2500, %v2549
        %v2605 = vsub.f32 %v2587, %v2489
        %v2606 = vsub.f32 %v2590, %v2492
        %v2607 = vsub.f32 %v2595, %v2497
        %v2608 = vsub.f32 %v2598, %v2500
        %v2609 = vsub.f32 %v2605, %v2538
        %v2610 = vsub.f32 %v2606, %v2541
        %v2611 = vsub.f32 %v2607, %v2546
        %v2612 = vsub.f32 %v2608, %v2549
        %v2613 = vpack.c.bf16 %v2602, %v2601
        %v2614 = vpack.c.bf16 %v2604, %v2603
        %v2615 = vpack.c.bf16 %v2610, %v2609
        %v2616 = vpack.c.bf16 %v2612, %v2611
        %v2617 = vadd.f32 %v2601, %v2609
        %v2618 = vadd.f32 %v2602, %v2610
        %v2619 = vadd.f32 %v2603, %v2611
        %v2620 = vadd.f32 %v2604, %v2612
        %v2621 = vpack.c.bf16 %v2618, %v2617
        %v2622 = vpack.c.bf16 %v2620, %v2619
        %v2624 = vsel %vm708, %v2613, 0
        %v2627 = vsel %vm708, %v2614, 0
        %2629 = vmatprep.subr.bf16.mxu0 0
        %2630 = vmatpush1.bf16.msra.mxu0 %v924
        %2631 = vmatprep.subr.bf16.mxu0 0
        %2632 = vmatpush1.bf16.msra.mxu0 %v925
        %2633 = vmatprep.subr.bf16.mxu0 0
        %2634 = vmatpush1.bf16.msra.mxu0 0
        %2635 = vmatprep.subr.bf16.mxu0 0
        %2636 = vmatpush1.bf16.msra.mxu0 0
        %2637 = vmatprep.subr.bf16.mxu0 0
        %2638 = vmatpush1.bf16.msra.mxu0 0
        %2639 = vmatprep.subr.bf16.mxu0 0
        %2640 = vmatpush1.bf16.msra.mxu0 0
        %2641 = vmatprep.subr.bf16.mxu0 0
        %2642 = vmatpush1.bf16.msra.mxu0 0
        %2643 = vmatprep.subr.bf16.mxu0 0
        %2644 = vmatpush1.bf16.msra.mxu0 0
        %2645 = vmatprep.subr.bf16.mxu0 0
        %2646 = vmatpush1.bf16.msra.mxu0 0
        %2647 = vmatprep.subr.bf16.mxu0 0
        %2648 = vmatpush1.bf16.msra.mxu0 0
        %2649 = vmatprep.subr.bf16.mxu0 0
        %2650 = vmatpush1.bf16.msra.mxu0 0
        %2651 = vmatprep.subr.bf16.mxu0 0
        %2652 = vmatpush1.bf16.msra.mxu0 0
        %2653 = vmatprep.subr.bf16.mxu0 0
        %2654 = vmatpush1.bf16.msra.mxu0 0
        %2655 = vmatprep.subr.bf16.mxu0 0
        %2656 = vmatpush1.bf16.msra.mxu0 0
        %2657 = vmatprep.subr.bf16.mxu0 0
        %2658 = vmatpush1.bf16.msra.mxu0 0
        %2659 = vmatprep.subr.bf16.mxu0 0
        %2660 = vmatpush1.bf16.msra.mxu0 0
        %2661 = vmatprep.mubr.bf16.mxu0 0
        %2662 = vmatmul.mubr.bf16.gmra.mrb[0].mxu0 %v2624
        %v2663 = vpop.f32.mrb[0].mxu0
        %v2664 = vadd.f32 0.0, %v2663
        %v2665 = vpop.f32.mrb[0].mxu0
        %v2666 = vpop.f32.mrb[0].mxu0
        %v2667 = vadd.f32 0.0, %v2666
        %v2668 = vpop.f32.mrb[0].mxu0
        %2669 = vmatprep.mubr.bf16.mxu0 0
        %2670 = vmatmul.mubr.bf16.gmra.mrb[0].mxu0 %v2627
        %v2671 = vpop.f32.mrb[0].mxu0
        %v2672 = vadd.f32 0.0, %v2671
        %v2673 = vpop.f32.mrb[0].mxu0
        %v2674 = vpop.f32.mrb[0].mxu0
        %v2675 = vadd.f32 0.0, %v2674
        %v2676 = vpop.f32.mrb[0].mxu0
        %2677 = vdwg.mxu0
        %v2679 = vsel %vm708, %v2615, 0
        %v2682 = vsel %vm708, %v2616, 0
        %2684 = vmatprep.subr.bf16.mxu0 0
        %2685 = vmatpush1.bf16.msra.mxu0 %v991
        %2686 = vmatprep.subr.bf16.mxu0 0
        %2687 = vmatpush1.bf16.msra.mxu0 %v992
        %2688 = vmatprep.subr.bf16.mxu0 0
        %2689 = vmatpush1.bf16.msra.mxu0 0
        %2690 = vmatprep.subr.bf16.mxu0 0
        %2691 = vmatpush1.bf16.msra.mxu0 0
        %2692 = vmatprep.subr.bf16.mxu0 0
        %2693 = vmatpush1.bf16.msra.mxu0 0
        %2694 = vmatprep.subr.bf16.mxu0 0
        %2695 = vmatpush1.bf16.msra.mxu0 0
        %2696 = vmatprep.subr.bf16.mxu0 0
        %2697 = vmatpush1.bf16.msra.mxu0 0
        %2698 = vmatprep.subr.bf16.mxu0 0
        %2699 = vmatpush1.bf16.msra.mxu0 0
        %2700 = vmatprep.subr.bf16.mxu0 0
        %2701 = vmatpush1.bf16.msra.mxu0 0
        %2702 = vmatprep.subr.bf16.mxu0 0
        %2703 = vmatpush1.bf16.msra.mxu0 0
        %2704 = vmatprep.subr.bf16.mxu0 0
        %2705 = vmatpush1.bf16.msra.mxu0 0
        %2706 = vmatprep.subr.bf16.mxu0 0
        %2707 = vmatpush1.bf16.msra.mxu0 0
        %2708 = vmatprep.subr.bf16.mxu0 0
        %2709 = vmatpush1.bf16.msra.mxu0 0
        %2710 = vmatprep.subr.bf16.mxu0 0
        %2711 = vmatpush1.bf16.msra.mxu0 0
        %2712 = vmatprep.subr.bf16.mxu0 0
        %2713 = vmatpush1.bf16.msra.mxu0 0
        %2714 = vmatprep.subr.bf16.mxu0 0
        %2715 = vmatpush1.bf16.msra.mxu0 0
        %2716 = vmatprep.mubr.bf16.mxu0 0
        %2717 = vmatmul.mubr.bf16.gmra.mrb[0].mxu0 %v2679
        %v2718 = vpop.f32.mrb[0].mxu0
        %v2719 = vadd.f32 0.0, %v2718
        %v2720 = vpop.f32.mrb[0].mxu0
        %v2721 = vpop.f32.mrb[0].mxu0
        %v2722 = vadd.f32 0.0, %v2721
        %v2723 = vpop.f32.mrb[0].mxu0
        %2724 = vmatprep.mubr.bf16.mxu0 0
        %2725 = vmatmul.mubr.bf16.gmra.mrb[0].mxu0 %v2682
        %v2726 = vpop.f32.mrb[0].mxu0
        %v2727 = vadd.f32 0.0, %v2726
        %v2728 = vpop.f32.mrb[0].mxu0
        %v2729 = vpop.f32.mrb[0].mxu0
        %v2730 = vadd.f32 0.0, %v2729
        %v2731 = vpop.f32.mrb[0].mxu0
        %2732 = vdwg.mxu0
        %v2734 = vsel %vm708, %v2621, 0
        %v2737 = vsel %vm708, %v2622, 0
        %2739 = vmatprep.subr.bf16.mxu0 0
        %2740 = vmatpush1.bf16.msra.mxu0 %v1058
        %2741 = vmatprep.subr.bf16.mxu0 0
        %2742 = vmatpush1.bf16.msra.mxu0 %v1059
        %2743 = vmatprep.subr.bf16.mxu0 0
        %2744 = vmatpush1.bf16.msra.mxu0 0
        %2745 = vmatprep.subr.bf16.mxu0 0
        %2746 = vmatpush1.bf16.msra.mxu0 0
        %2747 = vmatprep.subr.bf16.mxu0 0
        %2748 = vmatpush1.bf16.msra.mxu0 0
        %2749 = vmatprep.subr.bf16.mxu0 0
        %2750 = vmatpush1.bf16.msra.mxu0 0
        %2751 = vmatprep.subr.bf16.mxu0 0
        %2752 = vmatpush1.bf16.msra.mxu0 0
        %2753 = vmatprep.subr.bf16.mxu0 0
        %2754 = vmatpush1.bf16.msra.mxu0 0
        %2755 = vmatprep.subr.bf16.mxu0 0
        %2756 = vmatpush1.bf16.msra.mxu0 0
        %2757 = vmatprep.subr.bf16.mxu0 0
        %2758 = vmatpush1.bf16.msra.mxu0 0
        %2759 = vmatprep.subr.bf16.mxu0 0
        %2760 = vmatpush1.bf16.msra.mxu0 0
        %2761 = vmatprep.subr.bf16.mxu0 0
        %2762 = vmatpush1.bf16.msra.mxu0 0
        %2763 = vmatprep.subr.bf16.mxu0 0
        %2764 = vmatpush1.bf16.msra.mxu0 0
        %2765 = vmatprep.subr.bf16.mxu0 0
        %2766 = vmatpush1.bf16.msra.mxu0 0
        %2767 = vmatprep.subr.bf16.mxu0 0
        %2768 = vmatpush1.bf16.msra.mxu0 0
        %2769 = vmatprep.subr.bf16.mxu0 0
        %2770 = vmatpush1.bf16.msra.mxu0 0
        %2771 = vmatprep.mubr.bf16.mxu0 0
        %2772 = vmatmul.mubr.bf16.gmra.mrb[0].mxu0 %v2734
        %v2773 = vpop.f32.mrb[0].mxu0
        %v2774 = vadd.f32 0.0, %v2773
        %v2775 = vpop.f32.mrb[0].mxu0
        %v2776 = vpop.f32.mrb[0].mxu0
        %v2777 = vadd.f32 0.0, %v2776
        %v2778 = vpop.f32.mrb[0].mxu0
        %2779 = vmatprep.mubr.bf16.mxu0 0
        %2780 = vmatmul.mubr.bf16.gmra.mrb[0].mxu0 %v2737
        %v2781 = vpop.f32.mrb[0].mxu0
        %v2782 = vadd.f32 0.0, %v2781
        %v2783 = vpop.f32.mrb[0].mxu0
        %v2784 = vpop.f32.mrb[0].mxu0
        %v2785 = vadd.f32 0.0, %v2784
        %v2786 = vpop.f32.mrb[0].mxu0
        %2787 = vdwg.mxu0
        %v2788 = vsub.f32 %v2664, %v2719
        %v2789 = vsub.f32 %v2667, %v2722
        %v2790 = vsub.f32 %v2672, %v2727
        %v2791 = vsub.f32 %v2675, %v2730
        %v2792 = vsub.f32 %v2774, %v2664
        %v2793 = vsub.f32 %v2777, %v2667
        %v2794 = vsub.f32 %v2782, %v2672
        %v2795 = vsub.f32 %v2785, %v2675
        %v2796 = vsub.f32 %v2792, %v2719
        %v2797 = vsub.f32 %v2793, %v2722
        %v2798 = vsub.f32 %v2794, %v2727
        %v2799 = vsub.f32 %v2795, %v2730
        %v2800 = vmul.f32 %v2788, %v2788
        %v2801 = vmul.f32 %v2789, %v2789
        %v2802 = vmul.f32 %v2790, %v2790
        %v2803 = vmul.f32 %v2791, %v2791
        %v2804 = vmul.f32 %v2796, %v2796
        %v2805 = vmul.f32 %v2797, %v2797
        %v2806 = vmul.f32 %v2798, %v2798
        %v2807 = vmul.f32 %v2799, %v2799
        %v2808 = vadd.f32 %v2800, %v2804
        %v2809 = vadd.f32 %v2801, %v2805
        %v2810 = vadd.f32 %v2802, %v2806
        %v2811 = vadd.f32 %v2803, %v2807
        %v2812 = vsel %vm708, %v2808, 0.0
        %v2813 = vsel %vm708, %v2809, 0.0
        %v2814 = vadd.f32 %v2812, %v2813
        %v2815 = vsel %vm708, %v2810, 0.0
        %v2816 = vadd.f32 %v2814, %v2815
        %v2817 = vsel %vm708, %v2811, 0.0
        %v2818 = vadd.f32 %v2816, %v2817
        %2819 = vadd.xlane.f32.xlu0 %v2818
        %v2820 = vpop.xlane.xlu0 %2819
        %v2821 = vrot.slane %v2820, 4
        %v2822 = vadd.f32 %v2820, %v2821
        %v2823 = vrot.slane %v2822, 2
        %v2824 = vadd.f32 %v2822, %v2823
        %v2825 = vrot.slane %v2824, 1
        %v2826 = vadd.f32 %v2824, %v2825
        %s2827 = vtos %v2826
        %v2828 = vstv %s2827
        %v2829 = vpack.c.bf16 %v2809, %v2808
        %v2830 = vpack.c.bf16 %v2811, %v2810
        %2831 = vmatprep.subr.bf16.mxu0 0
        %2832 = vmatpush1.bf16.msra.mxu0 %v2829
        %2833 = vmatprep.subr.bf16.mxu0 0
        %2834 = vmatpush1.bf16.msra.mxu0 %v2830
        %2835 = vmatprep.subr.bf16.mxu0 0
        %2836 = vmatpush1.bf16.msra.mxu0 0
        %2837 = vmatprep.subr.bf16.mxu0 0
        %2838 = vmatpush1.bf16.msra.mxu0 0
        %2839 = vmatprep.subr.bf16.mxu0 0
        %2840 = vmatpush1.bf16.msra.mxu0 0
        %2841 = vmatprep.subr.bf16.mxu0 0
        %2842 = vmatpush1.bf16.msra.mxu0 0
        %2843 = vmatprep.subr.bf16.mxu0 0
        %2844 = vmatpush1.bf16.msra.mxu0 0
        %2845 = vmatprep.subr.bf16.mxu0 0
        %2846 = vmatpush1.bf16.msra.mxu0 0
        %2847 = vmatprep.subr.bf16.mxu0 0
        %2848 = vmatpush1.bf16.msra.mxu0 0
        %2849 = vmatprep.subr.bf16.mxu0 0
        %2850 = vmatpush1.bf16.msra.mxu0 0
        %2851 = vmatprep.subr.bf16.mxu0 0
        %2852 = vmatpush1.bf16.msra.mxu0 0
        %2853 = vmatprep.subr.bf16.mxu0 0
        %2854 = vmatpush1.bf16.msra.mxu0 0
        %2855 = vmatprep.subr.bf16.mxu0 0
        %2856 = vmatpush1.bf16.msra.mxu0 0
        %2857 = vmatprep.subr.bf16.mxu0 0
        %2858 = vmatpush1.bf16.msra.mxu0 0
        %2859 = vmatprep.subr.bf16.mxu0 0
        %2860 = vmatpush1.bf16.msra.mxu0 0
        %2861 = vmatprep.subr.bf16.mxu0 0
        %2862 = vmatpush1.bf16.msra.mxu0 0
        %2863 = vmatprep.mubr.bf16.mxu0 0
        %2864 = vmatmul.mubr.bf16.gmra.mrb[0].mxu0 %v1166
        %v2865 = vpop.f32.mrb[0].mxu0
        %v2866 = vadd.f32 0.0, %v2865
        %v2867 = vpop.f32.mrb[0].mxu0
        %v2868 = vpop.f32.mrb[0].mxu0
        %v2869 = vadd.f32 0.0, %v2868
        %v2870 = vpop.f32.mrb[0].mxu0
        %2871 = vdwg.mxu0
        %v2872 = vpack.c.bf16 %v2869, %v2866
        %v2874 = vsel %vm708, %v2872, 0
        %2876 = vmatprep.subr.bf16.mxu0 0
        %2877 = vmatpush1.bf16.msra.mxu0 %v1218
        %2878 = vmatprep.subr.bf16.mxu0 0
        %2879 = vmatpush1.bf16.msra.mxu0 %v1219
        %2880 = vmatprep.subr.bf16.mxu0 0
        %2881 = vmatpush1.bf16.msra.mxu0 0
        %2882 = vmatprep.subr.bf16.mxu0 0
        %2883 = vmatpush1.bf16.msra.mxu0 0
        %2884 = vmatprep.subr.bf16.mxu0 0
        %2885 = vmatpush1.bf16.msra.mxu0 0
        %2886 = vmatprep.subr.bf16.mxu0 0
        %2887 = vmatpush1.bf16.msra.mxu0 0
        %2888 = vmatprep.subr.bf16.mxu0 0
        %2889 = vmatpush1.bf16.msra.mxu0 0
        %2890 = vmatprep.subr.bf16.mxu0 0
        %2891 = vmatpush1.bf16.msra.mxu0 0
        %2892 = vmatprep.subr.bf16.mxu0 0
        %2893 = vmatpush1.bf16.msra.mxu0 0
        %2894 = vmatprep.subr.bf16.mxu0 0
        %2895 = vmatpush1.bf16.msra.mxu0 0
        %2896 = vmatprep.subr.bf16.mxu0 0
        %2897 = vmatpush1.bf16.msra.mxu0 0
        %2898 = vmatprep.subr.bf16.mxu0 0
        %2899 = vmatpush1.bf16.msra.mxu0 0
        %2900 = vmatprep.subr.bf16.mxu0 0
        %2901 = vmatpush1.bf16.msra.mxu0 0
        %2902 = vmatprep.subr.bf16.mxu0 0
        %2903 = vmatpush1.bf16.msra.mxu0 0
        %2904 = vmatprep.subr.bf16.mxu0 0
        %2905 = vmatpush1.bf16.msra.mxu0 0
        %2906 = vmatprep.subr.bf16.mxu0 0
        %2907 = vmatpush1.bf16.msra.mxu0 0
        %2908 = vmatprep.mubr.bf16.mxu0 0
        %2909 = vmatmul.mubr.bf16.gmra.mrb[0].mxu0 %v2874
        %v2910 = vpop.f32.mrb[0].mxu0
        %v2911 = vadd.f32 0.0, %v2910
        %v2912 = vpop.f32.mrb[0].mxu0
        %v2913 = vpop.f32.mrb[0].mxu0
        %v2914 = vadd.f32 0.0, %v2913
        %v2915 = vpop.f32.mrb[0].mxu0
        %2916 = vdwg.mxu0
        %s2917 = sadd.s32 %s1266, 3
        %s2918 = sld [smem:[#allocation10 + %s2917]]
        %v2919 = vstv %s2918
        %v2920 = vrcp.pop %v2828
        %v2921 = vmul.f32 %v2919, %v2920
        %v2922 = vmul.f32 %v2911, %v2921
        %v2923 = vmul.f32 %v2914, %v2921
        %s2924 = scalar_lea.vmem %s606, 48 [#allocation18]
        %2925 = vst [vmem:[%s2924] sm:$0xff] %v2922
        %2926 = vst [vmem:[%s2924 + $0x8] sm:$0xff] %v2923
        %v2927 = vsel %vm1275, %v2922, inf
        %v2928 = vsel %vm1275, %v2923, inf
        %v2929 = vmin.f32 %v2927, %v2928
        %2930 = vmin.xlane.f32.xlu0 %v2929
        %v2931 = vpop.xlane.xlu0 %2930
        %v2932 = vrot.slane %v2931, 4
        %v2933 = vmin.f32 %v2931, %v2932
        %v2934 = vrot.slane %v2933, 2
        %v2935 = vmin.f32 %v2933, %v2934
        %v2936 = vrot.slane %v2935, 1
        %v2937 = vmin.f32 %v2935, %v2936
        %s2938 = vtos %v2937
        %v2939 = vstv %s2938
        %v2940 = vmax.f32 %v2922, %v2923
        %2941 = vmax.xlane.f32.xlu0 %v2940
        %v2942 = vpop.xlane.xlu0 %2941
        %v2943 = vrot.slane %v2942, 4
        %v2944 = vmax.f32 %v2942, %v2943
        %v2945 = vrot.slane %v2944, 2
        %v2946 = vmax.f32 %v2944, %v2945
        %v2947 = vrot.slane %v2946, 1
        %v2948 = vmax.f32 %v2946, %v2947
        %s2949 = vtos %v2948
        %v2950 = vstv %s2949
        %v2951 = vmin.f32 %v2400, %v2939
        %v2952 = vmax.f32 %v2401, %v2950
        %v2953 = vsub.f32 %v2952, %v2951
        %v2954 = vmax.f32 %v2953, 1e-30
        %v2955 = vrcp.pop %v2954
        %v2956 = vmul.f32 1.0, %v2955
        %v2957 = vld [vmem:[%s606] sm:$0xff]
        %v2958 = vld [vmem:[%s606 + $0x8] sm:$0xff]
        %v2959 = vsub.f32 %v2957, %v2951
        %v2960 = vsub.f32 %v2958, %v2951
        %v2961 = vmul.f32 %v2959, %v2956
        %v2962 = vmul.f32 %v2960, %v2956
        %2963 = vst [vmem:[%s606] sm:$0xff] %v2961
        %2964 = vst [vmem:[%s606 + $0x8] sm:$0xff] %v2962
        %v2965 = vld [vmem:[%s1822] sm:$0xff]
        %v2966 = vld [vmem:[%s1822 + $0x8] sm:$0xff]
        %v2967 = vsub.f32 %v2965, %v2951
        %v2968 = vsub.f32 %v2966, %v2951
        %v2969 = vmul.f32 %v2967, %v2956
        %v2970 = vmul.f32 %v2968, %v2956
        %2971 = vst [vmem:[%s1822] sm:$0xff] %v2969
        %2972 = vst [vmem:[%s1822 + $0x8] sm:$0xff] %v2970
        %v2973 = vld [vmem:[%s2373] sm:$0xff]
        %v2974 = vld [vmem:[%s2373 + $0x8] sm:$0xff]
        %v2975 = vsub.f32 %v2973, %v2951
        %v2976 = vsub.f32 %v2974, %v2951
        %v2977 = vmul.f32 %v2975, %v2956
        %v2978 = vmul.f32 %v2976, %v2956
        %2979 = vst [vmem:[%s2373] sm:$0xff] %v2977
        %2980 = vst [vmem:[%s2373 + $0x8] sm:$0xff] %v2978
        %v2981 = vld [vmem:[%s2924] sm:$0xff]
        %v2982 = vld [vmem:[%s2924 + $0x8] sm:$0xff]
        %v2983 = vsub.f32 %v2981, %v2951
        %v2984 = vsub.f32 %v2982, %v2951
        %v2985 = vmul.f32 %v2983, %v2956
        %v2986 = vmul.f32 %v2984, %v2956
        %2987 = vst [vmem:[%s2924] sm:$0xff] %v2985
        %2988 = vst [vmem:[%s2924 + $0x8] sm:$0xff] %v2986
        %s2989 = sand.u32 %s323, 1
        %s2990 = scalar_lea.sflag [#allocation4], %s2989
        %s2991 = sand.u32 %s323, 1
        %s2992 = smul.addr %s2991, 64
        %s2993 = scalar_lea.vmem [#allocation18], %s2992
        // Predicated region
        $region113: #{tpu_custom_call.1} parent=71 // pred_check
          %p2994 = pneg %p333
        $region114: #{tpu_custom_call.1} parent=71 // pred_check_branch
          %2996 = sbr.rel (%p2994) target = $region116
        $region115: #{tpu_custom_call.1} parent=71 // pred_region
          %s2998 = ssub.s32 1024, 1024
          %2999 = vsyncadd %s2990, %s2998
          %s3000 = smul.addr %s32, 8
          %s3001 = smul.addr %s3000, 128
          %s3002 = scalar_lea.hbm %s13, %s3001
          %s3003 = sshll.u32 %s2993, 4
          %s3004 = int_to_ptr.vmem [resolvable:$true] %s3003
          %3009 = dma.vmem_to_hbm [thread:$0]  %s3004, 1024, %s3002, %s2990, 128, 128, 8
        $region116: #{tpu_custom_call.1} parent=71 // pred_fallthru
          _
      $region72: #{tpu_custom_call.1} parent=5 // pred_fallthru
        _
      %p3010 = scmp.le.s32.totalorder 2, %s27
      // Predicated region
      $region117: #{tpu_custom_call.1} parent=5 // pred_check
        %p3011 = pneg %p3010
      $region118: #{tpu_custom_call.1} parent=5 // pred_check_branch
        %3013 = sbr.rel (%p3011) target = $region120
      $region119: #{tpu_custom_call.1} parent=5 // pred_region
        %s3014 = ssub.s32 %s27, 2
        // Predicated region
        $region121: #{tpu_custom_call.1} parent=119 // pred_check
          %p3015 = pneg %p339
        $region122: #{tpu_custom_call.1} parent=119 // pred_check_branch
          %3017 = sbr.rel (%p3015) target = $region124
        $region123: #{tpu_custom_call.1} parent=119 // pred_region
          %s3018 = sand.u32 %s324, 1
          %s3019 = scalar_lea.sflag [#allocation4], %s3018
          %s3020 = sand.u32 %s324, 1
          %s3021 = smul.addr %s3020, 64
          %s3022 = scalar_lea.vmem [#allocation18], %s3021
          %3023 = dma.done %s3019, 1024
        $region124: #{tpu_custom_call.1} parent=119 // pred_fallthru
          _
      $region120: #{tpu_custom_call.1} parent=5 // pred_fallthru
        _
    $region6: #{tpu_custom_call.1} parent=1 // loop_footer
      %s31 = sadd.s32 1, %s27
    $region7: #{tpu_custom_call.1} parent=1 // loop_footer_branch
      %26 = sbr.rel target = $region3
    $region8: #{tpu_custom_call.1} parent=1 // loop_exit
      _
    %3024 = vsyncpa [#allocation3], 1
    %s3025 = scalar_lea.sflag [#allocation3], 1
    %3026 = vsyncpa %s3025, 1
    %3027 = vsyncpa [#allocation7], 1
    %3028 = vsyncpa [#allocation13], 1
    %3029 = vsyncpa [#allocation16], 1
    %3030 = vsyncpa [#allocation4], 1
    %s3031 = scalar_lea.sflag [#allocation4], 1
    %3032 = vsyncpa %s3031, 1
    %3033 = vsyncpa [#allocation5], 1
    %s3034 = scalar_lea.sflag [#allocation5], 1
    %3035 = vsyncpa %s3034, 1

</llo_original>
